<compile_context>
chip_gen: v7x
topology: tpu7x:2x2x1
jax: 0.10.0
libtpu: 0.0.40
codegen_flags: <defaults>
</compile_context>

<pallas_src>
import math

import jax
import jax.numpy as jnp
from jax import lax
from jax.experimental import pallas as pl
from jax.experimental.pallas import tpu as pltpu

# ----------------------------- model config (synthetic, small) -----------------------------
B = 2               # batch
FRAME = 128         # STFT frame length (window)
HOP = 64            # hop size
T = 16              # number of time frames
S = (T - 1) * HOP + FRAME   # samples = 1088
NFREQ = 64          # frequency bins kept
NMEL = 32           # mel bins -> transformer sequence length (tokens)
D_MODEL = 32        # transformer embed dim
N_HEADS = 4
HEAD_DIM = D_MODEL // N_HEADS
MLP_HIDDEN = 64
N_LAYERS = 2
SEQ_LEN = NMEL + 1  # tokens + CLS = 33 real positions
SEQ_PAD = 40        # padded to a multiple of 8 for clean sublane layout
NVEC = 16           # rows in packed per-layer vector table (padded to a multiple of 8)


# ----------------------------- in-kernel helpers -----------------------------
def _gelu(x):
    # TODO(synk): tanh approximation; torch.nn.GELU defaults to exact erf (tiny numeric delta).
    return 0.5 * x * (1.0 + jnp.tanh(0.7978845608028654 * (x + 0.044715 * x * x * x)))


def _layernorm(x, gamma, beta, eps=1e-5):
    mu = jnp.mean(x, axis=-1, keepdims=True)
    var = jnp.mean((x - mu) * (x - mu), axis=-1, keepdims=True)
    return (x - mu) * jax.lax.rsqrt(var + eps) * gamma + beta


# ----------------------------- fused forward kernel builder -----------------------------
def _make_kernel(nb):
    """Builds the fused kernel for `nb` batch elements per grid step (nb is static)."""
    f32 = jnp.float32

    def kernel(frames_ref, cosm_ref, sinm_ref, melfb_ref, w_in_ref, seq_init_ref,
               mask_ref, wq_ref, wk_ref, wv_ref, wo_ref, w1_ref, w2_ref,
               vecs_ref, fln_ref, out_ref):
        # ---- log-mel front-end (lane-dense orientation: rows = nb*T frames) ----
        fr = frames_ref[...]                                                  # (nb*T, FRAME)
        re = jnp.dot(fr, cosm_ref[...], preferred_element_type=f32)           # (nb*T, NFREQ)
        im = jnp.dot(fr, sinm_ref[...], preferred_element_type=f32)           # (nb*T, NFREQ)
        power = re * re + im * im
        mel = jnp.log(jnp.dot(power, melfb_ref[...],
                              preferred_element_type=f32) + 1e-6)             # (nb*T, NMEL)

        # ---- token projection + placement (statically unrolled over batch elements) ----
        # tokens_b = mel_b^T @ w_in, expressed as a dot_general contracting axis 0 with axis 0.
        w_in = w_in_ref[...]                                                  # (T, D)
        pieces = []
        for b in range(nb):
            mel_b = mel[b * T:(b + 1) * T, :]                                 # (T, NMEL)
            tok_b = lax.dot_general(mel_b, w_in, (((0,), (0,)), ((), ())),
                                    preferred_element_type=f32)               # (NMEL, D)
            # rows 0..NMEL-1: mel tokens (pos + b_in baked into seq_init)
            pieces.append(seq_init_ref[b * SEQ_PAD:b * SEQ_PAD + NMEL, :] + tok_b)
            # rows NMEL..SEQ_PAD-1: CLS row (cls + pos[0]) then zero pad rows
            pieces.append(seq_init_ref[b * SEQ_PAD + NMEL:(b + 1) * SEQ_PAD, :])
        seq = jnp.concatenate(pieces, axis=0)                                 # (nb*SEQ_PAD, D)

        # precomputed additive mask: block-diagonal over batch + pad-key masking
        mask = mask_ref[...]                                                  # (rows, rows)

        # ---- pre-LN transformer encoder, layers statically unrolled ----
        for li in range(N_LAYERS):
            vec = vecs_ref[li]                                                # (NVEC, MLP_HIDDEN)
            g1, b1 = vec[0:1, :D_MODEL], vec[1:2, :D_MODEL]
            bo = vec[5:6, :D_MODEL]
            g2, b2 = vec[6:7, :D_MODEL], vec[7:8, :D_MODEL]
            bb1 = vec[8:9, :]                                                 # (1, MLP_HIDDEN)
            bb2 = vec[9:10, :D_MODEL]

            xn = _layernorm(seq, g1, b1)                                      # (rows, D)

            # --- multi-head self attention: per-head 2-D matmuls, head-merge fused into wo ---
            attn = None
            for h in range(N_HEADS):
                sl = slice(h * HEAD_DIM, (h + 1) * HEAD_DIM)
                bq, bk, bv = vec[2:3, sl], vec[3:4, sl], vec[4:5, sl]          # (1, hd)
                q_h = jnp.dot(xn, wq_ref[li, h], preferred_element_type=f32) + bq   # (rows, hd)
                k_h = jnp.dot(xn, wk_ref[li, h], preferred_element_type=f32) + bk
                v_h = jnp.dot(xn, wv_ref[li, h], preferred_element_type=f32) + bv
                # scores: contract head_dim of q with head_dim of k (scale folded into wq/bq)
                s = lax.dot_general(q_h, k_h, (((1,), (1,)), ((), ())),
                                    preferred_element_type=f32)                # (rows, rows)
                s = s + mask
                s = s - jnp.max(s, axis=-1, keepdims=True)
                p = jnp.exp(s)
                p = p * pl.reciprocal(jnp.sum(p, axis=-1, keepdims=True), approx=True)
                ctx = jnp.dot(p, v_h, preferred_element_type=f32)              # (rows, hd)
                part = jnp.dot(ctx, wo_ref[li, h], preferred_element_type=f32) # (rows, D)
                attn = part if attn is None else attn + part
            seq = seq + attn + bo

            # --- MLP ---
            xn2 = _layernorm(seq, g2, b2)
            h1 = _gelu(jnp.dot(xn2, w1_ref[li], preferred_element_type=f32) + bb1)
            h2 = jnp.dot(h1, w2_ref[li], preferred_element_type=f32) + bb2
            seq = seq + h2

        # ---- final LN on the CLS rows only (row NMEL of each batch element) ----
        fln = fln_ref[...]                                                    # (2, D)
        cls_rows = [seq[b * SEQ_PAD + NMEL:b * SEQ_PAD + NMEL + 1, :] for b in range(nb)]
        cls = jnp.concatenate(cls_rows, axis=0) if nb > 1 else cls_rows[0]     # (nb, D)
        out_ref[0] = _layernorm(cls, fln[0:1, :], fln[1:2, :])

    return kernel


# ----------------------------- wrapper / packing -----------------------------
def _batch_per_step():
    """v7x has two TensorCores: keep one batch element per (parallel) grid step there.
    Single-TC chips (v5e/v6e): fold the whole batch into one grid step (sublane folding)."""
    try:
        kind = jax.devices()[0].device_kind.lower().replace(" ", "")
    except Exception:
        return B
    if "v7" in kind or "tpu7" in kind:
        return 1
    return B


def pack_params(params, nb):
    """One-time parameter packing (kept OUT of the per-call jit path)."""
    L = params["layers"]
    scale = 1.0 / math.sqrt(HEAD_DIM)

    def heads_in(w):   # (D, D) -> (H, D, hd)
        return jnp.stack([w[:, h * HEAD_DIM:(h + 1) * HEAD_DIM] for h in range(N_HEADS)])

    def heads_out(w):  # (D, D) -> (H, hd, D)
        return jnp.stack([w[h * HEAD_DIM:(h + 1) * HEAD_DIM, :] for h in range(N_HEADS)])

    wq = jnp.stack([heads_in(l["wq"] * scale) for l in L])        # scale folded into wq
    wk = jnp.stack([heads_in(l["wk"]) for l in L])
    wv = jnp.stack([heads_in(l["wv"]) for l in L])
    wo = jnp.stack([heads_out(l["wo"]) for l in L])
    w1 = jnp.stack([l["w1"] for l in L])
    w2 = jnp.stack([l["w2"] for l in L])

    def pad_row(v):
        return jnp.pad(v, (0, MLP_HIDDEN - v.shape[0]))

    vec_layers = []
    for l in L:
        rows = [pad_row(l["g1"]), pad_row(l["b1"]),
                pad_row(l["bq"] * scale),                          # scale folded into bq too
                pad_row(l["bk"]), pad_row(l["bv"]), pad_row(l["bo"]),
                pad_row(l["g2"]), pad_row(l["b2"]),
                l["bb1"], pad_row(l["bb2"])]
        rows.extend([jnp.zeros((MLP_HIDDEN,), jnp.float32)] * (NVEC - len(rows)))
        vec_layers.append(jnp.stack(rows))
    vecs = jnp.stack(vec_layers)                                   # (N_LAYERS, NVEC, MLP_HIDDEN)

    # sequence init: rows 0..NMEL-1 = pos+b_in (token rows), row NMEL = cls+pos[0], rest zero
    si = jnp.zeros((SEQ_PAD, D_MODEL), jnp.float32)
    si = si.at[:NMEL].set(params["pos"][1:] + params["b_in"])
    si = si.at[NMEL].set(params["cls"] + params["pos"][0])
    seq_init = jnp.tile(si, (nb, 1))                               # (nb*SEQ_PAD, D)

    # additive attention mask: same batch element AND real (non-pad) key position
    ridx = jnp.arange(nb * SEQ_PAD)
    same_batch = (ridx[:, None] // SEQ_PAD) == (ridx[None, :] // SEQ_PAD)
    key_real = (ridx[None, :] % SEQ_PAD) < SEQ_LEN
    mask = jnp.where(same_batch & key_real, 0.0, -1e30).astype(jnp.float32)

    fln = jnp.stack([params["gf"], params["bf"]])                  # (2, D)

    return dict(cosm=params["cosm"], sinm=params["sinm"], melfb=params["melfb"],
                w_in=params["w_in"], seq_init=seq_init, mask=mask,
                wq=wq, wk=wk, wv=wv, wo=wo, w1=w1, w2=w2, vecs=vecs, fln=fln)


def _full(shape):
    nd = len(shape)
    return pl.BlockSpec(shape, lambda g, _nd=nd: (0,) * _nd)


def make_forward(nb):
    """Mirrors HTSAT.forward:
         x = mel_extractor(x); x = x.transpose(1,3); x = x.reshape(B, x.shape[1], -1)
         x = transformer(x);   cls_feat = x[:, 0, :]
    """
    assert B % nb == 0
    g = B // nb
    kernel = _make_kernel(nb)

    call = pl.pallas_call(
        kernel,
        out_shape=jax.ShapeDtypeStruct((g, nb, D_MODEL), jnp.float32),
        grid=(g,),
        in_specs=[
            pl.BlockSpec((nb * T, FRAME), lambda i: (i, 0)),       # frames for this grid step
            _full((FRAME, NFREQ)),                                 # cos DFT (Hann folded in)
            _full((FRAME, NFREQ)),                                 # sin DFT
            _full((NFREQ, NMEL)),                                  # mel filterbank
            _full((T, D_MODEL)),                                   # token projection
            _full((nb * SEQ_PAD, D_MODEL)),                        # seq init (cls/pos/b_in)
            _full((nb * SEQ_PAD, nb * SEQ_PAD)),                   # additive attention mask
            _full((N_LAYERS, N_HEADS, D_MODEL, HEAD_DIM)),         # wq (1/sqrt(hd) folded in)
            _full((N_LAYERS, N_HEADS, D_MODEL, HEAD_DIM)),         # wk
            _full((N_LAYERS, N_HEADS, D_MODEL, HEAD_DIM)),         # wv
            _full((N_LAYERS, N_HEADS, HEAD_DIM, D_MODEL)),         # wo (head-merge fused)
            _full((N_LAYERS, D_MODEL, MLP_HIDDEN)),                # w1
            _full((N_LAYERS, MLP_HIDDEN, D_MODEL)),                # w2
            _full((N_LAYERS, NVEC, MLP_HIDDEN)),                   # packed per-layer vectors
            _full((2, D_MODEL)),                                   # final LN gamma/beta
        ],
        out_specs=pl.BlockSpec((1, nb, D_MODEL), lambda i: (i, 0, 0)),
        compiler_params=pltpu.CompilerParams(dimension_semantics=("parallel",)),
        # NOTE: at real HTS-AT sizes, mark the grid-invariant weight specs pl.Buffered(1) and
        # re-check VMEM against v7x's 64 MiB; at current sizes total state is <1 MiB.
    )

    @jax.jit
    def forward(wave, packed):
        wave2 = wave[:, 0, :]                                                 # (B, S)
        idx = HOP * jnp.arange(T)[:, None] + jnp.arange(FRAME)[None, :]       # (T, FRAME)
        frames = wave2[:, idx].reshape(B * T, FRAME)                          # (B*T, FRAME)
        # TODO(synk): for long real audio, replace this XLA gather with strided in-kernel reads
        # to avoid the FRAME/HOP=2x waveform duplication in HBM; negligible at S=1088.
        out = call(frames, packed["cosm"], packed["sinm"], packed["melfb"], packed["w_in"],
                   packed["seq_init"], packed["mask"], packed["wq"], packed["wk"], packed["wv"],
                   packed["wo"], packed["w1"], packed["w2"], packed["vecs"], packed["fln"])
        return out.reshape(B, D_MODEL)                                        # cls features

    return forward


# ----------------------------- deterministic parameter init -----------------------------
def init_params(key):
    # fixed (non-learned) DFT / mel matrices, stored lane-dense (FRAME x NFREQ), Hann folded in
    n = jnp.arange(FRAME, dtype=jnp.float32)
    kbin = jnp.arange(NFREQ, dtype=jnp.float32)
    win = 0.5 - 0.5 * jnp.cos(2.0 * jnp.pi * n / FRAME)
    ang = 2.0 * jnp.pi * n[:, None] * kbin[None, :] / FRAME                   # (FRAME, NFREQ)
    cosm = (win[:, None] * jnp.cos(ang)).astype(jnp.float32)
    sinm = (-win[:, None] * jnp.sin(ang)).astype(jnp.float32)

    keys = jax.random.split(key, 8 + N_LAYERS)
    melfb = jnp.abs(jax.random.normal(keys[0], (NFREQ, NMEL), jnp.float32)) * 0.05

    params = {
        "cosm": cosm, "sinm": sinm, "melfb": melfb,
        "w_in": jax.random.normal(keys[1], (T, D_MODEL), jnp.float32) * 0.05,
        "b_in": jnp.zeros((D_MODEL,), jnp.float32),
        "cls": jax.random.normal(keys[2], (D_MODEL,), jnp.float32) * 0.02,
        "pos": jax.random.normal(keys[3], (SEQ_LEN, D_MODEL), jnp.float32) * 0.02,
        "gf": jnp.ones((D_MODEL,), jnp.float32),
        "bf": jnp.zeros((D_MODEL,), jnp.float32),
        "layers": [],
    }
    for li in range(N_LAYERS):
        lk = jax.random.split(keys[8 + li], 6)
        params["layers"].append({
            "g1": jnp.ones((D_MODEL,), jnp.float32),
            "b1": jnp.zeros((D_MODEL,), jnp.float32),
            "wq": jax.random.normal(lk[0], (D_MODEL, D_MODEL), jnp.float32) * 0.05,
            "wk": jax.random.normal(lk[1], (D_MODEL, D_MODEL), jnp.float32) * 0.05,
            "wv": jax.random.normal(lk[2], (D_MODEL, D_MODEL), jnp.float32) * 0.05,
            "bq": jnp.zeros((D_MODEL,), jnp.float32),
            "bk": jnp.zeros((D_MODEL,), jnp.float32),
            "bv": jnp.zeros((D_MODEL,), jnp.float32),
            "wo": jax.random.normal(lk[3], (D_MODEL, D_MODEL), jnp.float32) * 0.05,
            "bo": jnp.zeros((D_MODEL,), jnp.float32),
            "g2": jnp.ones((D_MODEL,), jnp.float32),
            "b2": jnp.zeros((D_MODEL,), jnp.float32),
            "w1": jax.random.normal(lk[4], (D_MODEL, MLP_HIDDEN), jnp.float32) * 0.05,
            "bb1": jnp.zeros((MLP_HIDDEN,), jnp.float32),
            "w2": jax.random.normal(lk[5], (MLP_HIDDEN, D_MODEL), jnp.float32) * 0.05,
            "bb2": jnp.zeros((D_MODEL,), jnp.float32),
        })
    return params


# TODO(synk): the real `htsat` package's exact mel-extractor / Swin windowed-attention
# internals and checkpoint loading are not available; this reproduces the wrapper's
# forward semantics with a log-mel front-end and a pre-LN transformer encoder.

if __name__ == "__main__":
    key = jax.random.PRNGKey(0)
    pkey, wkey = jax.random.split(key)
    params = init_params(pkey)
    wave = jax.random.normal(wkey, (B, 1, S), jnp.float32)        # (batch, 1, samples)

    nb = _batch_per_step()             # 1 per grid step on v7x, full batch folded on v5e/v6e
    packed = pack_params(params, nb)   # one-time packing, outside the per-call jit path
    forward = make_forward(nb)

    feat = forward(wave, packed)                                  # (batch, embed_dim)
    jax.block_until_ready(feat)
    assert feat.shape == (B, D_MODEL) and feat.dtype == jnp.float32
    assert bool(jnp.all(jnp.isfinite(feat)))
    print("KERNEL_OK")
</pallas_src>

<mosaic_0001>
module attributes {stable_mosaic.version = 11 : i64} {
  func.func private @main(%arg0: i32) attributes {dimension_semantics = [#tpu.dimension_semantics<core_parallel>], iteration_bounds = array<i64: 2>, tpu.core_type = #tpu.core_type<sc_scalar_subcore>, window_params = []} {
    return
  }
}

module attributes {stable_mosaic.version = 11 : i64} {
  func.func private @main(%arg0: i32) attributes {dimension_semantics = [#tpu.dimension_semantics<core_parallel>], iteration_bounds = array<i64: 2>, tpu.core_type = #tpu.core_type<sc_scalar_subcore>, window_params = []} {
    return
  }
}

module attributes {stable_mosaic.version = 11 : i64} {
  func.func @kernel(%arg0: i32, %arg1: memref<32x128xf32, #tpu.memory_space<vmem>>, %arg2: memref<128x64xf32, #tpu.memory_space<vmem>>, %arg3: memref<128x64xf32, #tpu.memory_space<vmem>>, %arg4: memref<64x32xf32, #tpu.memory_space<vmem>>, %arg5: memref<16x32xf32, #tpu.memory_space<vmem>>, %arg6: memref<80x32xf32, #tpu.memory_space<vmem>>, %arg7: memref<80x80xf32, #tpu.memory_space<vmem>>, %arg8: memref<2x4x32x8xf32, #tpu.memory_space<vmem>>, %arg9: memref<2x4x32x8xf32, #tpu.memory_space<vmem>>, %arg10: memref<2x4x32x8xf32, #tpu.memory_space<vmem>>, %arg11: memref<2x4x8x32xf32, #tpu.memory_space<vmem>>, %arg12: memref<2x32x64xf32, #tpu.memory_space<vmem>>, %arg13: memref<2x64x32xf32, #tpu.memory_space<vmem>>, %arg14: memref<2x16x64xf32, #tpu.memory_space<vmem>>, %arg15: memref<2x32xf32, #tpu.memory_space<vmem>>, %arg16: memref<1x2x32xf32, #tpu.memory_space<vmem>>) attributes {dimension_semantics = [#tpu.dimension_semantics<parallel>], iteration_bounds = array<i64: 1>, scalar_prefetch = 0 : i64, scratch_operands = 0 : i64, tpu.core_type = #tpu.core_type<tc>, window_params = [{transform_indices = @transform_0, window_bounds = array<i64: 32, 128>}, {pipeline_mode = #tpu.pipeline_mode<synchronous>, transform_indices = @transform_1, window_bounds = array<i64: 128, 64>}, {pipeline_mode = #tpu.pipeline_mode<synchronous>, transform_indices = @transform_2, window_bounds = array<i64: 128, 64>}, {pipeline_mode = #tpu.pipeline_mode<synchronous>, transform_indices = @transform_3, window_bounds = array<i64: 64, 32>}, {pipeline_mode = #tpu.pipeline_mode<synchronous>, transform_indices = @transform_4, window_bounds = array<i64: 16, 32>}, {pipeline_mode = #tpu.pipeline_mode<synchronous>, transform_indices = @transform_5, window_bounds = array<i64: 80, 32>}, {pipeline_mode = #tpu.pipeline_mode<synchronous>, transform_indices = @transform_6, window_bounds = array<i64: 80, 80>}, {pipeline_mode = #tpu.pipeline_mode<synchronous>, transform_indices = @transform_7, window_bounds = array<i64: 2, 4, 32, 8>}, {pipeline_mode = #tpu.pipeline_mode<synchronous>, transform_indices = @transform_8, window_bounds = array<i64: 2, 4, 32, 8>}, {pipeline_mode = #tpu.pipeline_mode<synchronous>, transform_indices = @transform_9, window_bounds = array<i64: 2, 4, 32, 8>}, {pipeline_mode = #tpu.pipeline_mode<synchronous>, transform_indices = @transform_10, window_bounds = array<i64: 2, 4, 8, 32>}, {pipeline_mode = #tpu.pipeline_mode<synchronous>, transform_indices = @transform_11, window_bounds = array<i64: 2, 32, 64>}, {pipeline_mode = #tpu.pipeline_mode<synchronous>, transform_indices = @transform_12, window_bounds = array<i64: 2, 64, 32>}, {pipeline_mode = #tpu.pipeline_mode<synchronous>, transform_indices = @transform_13, window_bounds = array<i64: 2, 16, 64>}, {pipeline_mode = #tpu.pipeline_mode<synchronous>, transform_indices = @transform_14, window_bounds = array<i64: 2, 32>}, {transform_indices = @transform_15, window_bounds = array<i64: 1, 2, 32>}]} {
    %c0 = arith.constant 0 : index
    %c0_0 = arith.constant 0 : index
    %0 = vector.load %arg1[%c0, %c0_0] : memref<32x128xf32, #tpu.memory_space<vmem>>, vector<32x128xf32>
    %c0_1 = arith.constant 0 : index
    %c0_2 = arith.constant 0 : index
    %1 = vector.load %arg2[%c0_1, %c0_2] : memref<128x64xf32, #tpu.memory_space<vmem>>, vector<128x64xf32>
    %cst = arith.constant dense<0.000000e+00> : vector<32x64xf32>
    %2 = tpu.matmul %0, %1, %cst {dimension_numbers = #tpu.dot_dimension_numbers<[1], [0], [0], [1], [0, 0, 1, 1], [], []>} : vector<32x128xf32>, vector<128x64xf32>, vector<32x64xf32> -> vector<32x64xf32>
    %c0_3 = arith.constant 0 : index
    %c0_4 = arith.constant 0 : index
    %3 = vector.load %arg3[%c0_3, %c0_4] : memref<128x64xf32, #tpu.memory_space<vmem>>, vector<128x64xf32>
    %cst_5 = arith.constant dense<0.000000e+00> : vector<32x64xf32>
    %4 = tpu.matmul %0, %3, %cst_5 {dimension_numbers = #tpu.dot_dimension_numbers<[1], [0], [0], [1], [0, 0, 1, 1], [], []>} : vector<32x128xf32>, vector<128x64xf32>, vector<32x64xf32> -> vector<32x64xf32>
    %5 = arith.mulf %2, %2 : vector<32x64xf32>
    %6 = arith.mulf %4, %4 : vector<32x64xf32>
    %7 = arith.addf %5, %6 : vector<32x64xf32>
    %c0_6 = arith.constant 0 : index
    %c0_7 = arith.constant 0 : index
    %8 = vector.load %arg4[%c0_6, %c0_7] : memref<64x32xf32, #tpu.memory_space<vmem>>, vector<64x32xf32>
    %cst_8 = arith.constant dense<0.000000e+00> : vector<32x32xf32>
    %9 = tpu.matmul %7, %8, %cst_8 {dimension_numbers = #tpu.dot_dimension_numbers<[1], [0], [0], [1], [0, 0, 1, 1], [], []>} : vector<32x64xf32>, vector<64x32xf32>, vector<32x32xf32> -> vector<32x32xf32>
    %cst_9 = arith.constant 9.99999997E-7 : f32
    %10 = vector.broadcast %cst_9 : f32 to vector<32x32xf32>
    %11 = arith.addf %9, %10 : vector<32x32xf32>
    %12 = math.log %11 : vector<32x32xf32>
    %c0_10 = arith.constant 0 : index
    %c0_11 = arith.constant 0 : index
    %13 = vector.load %arg5[%c0_10, %c0_11] : memref<16x32xf32, #tpu.memory_space<vmem>>, vector<16x32xf32>
    %14 = vector.extract_strided_slice %12 {offsets = [0, 0], sizes = [16, 32], strides = [1, 1]} : vector<32x32xf32> to vector<16x32xf32>
    %cst_12 = arith.constant dense<0.000000e+00> : vector<32x32xf32>
    %15 = tpu.matmul %14, %13, %cst_12 {dimension_numbers = #tpu.dot_dimension_numbers<[0], [0], [1], [1], [0, 1, 1, 1], [], []>} : vector<16x32xf32>, vector<16x32xf32>, vector<32x32xf32> -> vector<32x32xf32>
    %c0_13 = arith.constant 0 : index
    %c0_14 = arith.constant 0 : index
    %16 = vector.load %arg6[%c0_13, %c0_14] : memref<80x32xf32, #tpu.memory_space<vmem>>, vector<32x32xf32>
    %17 = arith.addf %16, %15 : vector<32x32xf32>
    %c32 = arith.constant 32 : index
    %c0_15 = arith.constant 0 : index
    %18 = vector.load %arg6[%c32, %c0_15] : memref<80x32xf32, #tpu.memory_space<vmem>>, vector<8x32xf32>
    %19 = vector.extract_strided_slice %12 {offsets = [16, 0], sizes = [16, 32], strides = [1, 1]} : vector<32x32xf32> to vector<16x32xf32>
    %cst_16 = arith.constant dense<0.000000e+00> : vector<32x32xf32>
    %20 = tpu.matmul %19, %13, %cst_16 {dimension_numbers = #tpu.dot_dimension_numbers<[0], [0], [1], [1], [0, 1, 1, 1], [], []>} : vector<16x32xf32>, vector<16x32xf32>, vector<32x32xf32> -> vector<32x32xf32>
    %c40 = arith.constant 40 : index
    %c0_17 = arith.constant 0 : index
    %21 = vector.load %arg6[%c40, %c0_17] : memref<80x32xf32, #tpu.memory_space<vmem>>, vector<32x32xf32>
    %22 = arith.addf %21, %20 : vector<32x32xf32>
    %c72 = arith.constant 72 : index
    %c0_18 = arith.constant 0 : index
    %23 = vector.load %arg6[%c72, %c0_18] : memref<80x32xf32, #tpu.memory_space<vmem>>, vector<8x32xf32>
    %24 = tpu.concatenate %17, %18, %22, %23 in 0 : vector<32x32xf32>, vector<8x32xf32>, vector<32x32xf32>, vector<8x32xf32> -> vector<80x32xf32>
    %c0_19 = arith.constant 0 : index
    %c0_20 = arith.constant 0 : index
    %25 = vector.load %arg7[%c0_19, %c0_20] : memref<80x80xf32, #tpu.memory_space<vmem>>, vector<80x80xf32>
    %c0_21 = arith.constant 0 : index
    %c0_22 = arith.constant 0 : index
    %c0_23 = arith.constant 0 : index
    %26 = vector.load %arg14[%c0_21, %c0_22, %c0_23] : memref<2x16x64xf32, #tpu.memory_space<vmem>>, vector<1x16x64xf32>
    %27 = vector.shape_cast %26 : vector<1x16x64xf32> to vector<16x64xf32>
    %28 = vector.extract_strided_slice %27 {offsets = [0, 0], sizes = [1, 32], strides = [1, 1]} : vector<16x64xf32> to vector<1x32xf32>
    %29 = vector.extract_strided_slice %27 {offsets = [1, 0], sizes = [1, 32], strides = [1, 1]} : vector<16x64xf32> to vector<1x32xf32>
    %30 = vector.extract_strided_slice %27 {offsets = [5, 0], sizes = [1, 32], strides = [1, 1]} : vector<16x64xf32> to vector<1x32xf32>
    %31 = vector.extract_strided_slice %27 {offsets = [6, 0], sizes = [1, 32], strides = [1, 1]} : vector<16x64xf32> to vector<1x32xf32>
    %32 = vector.extract_strided_slice %27 {offsets = [7, 0], sizes = [1, 32], strides = [1, 1]} : vector<16x64xf32> to vector<1x32xf32>
    %33 = vector.extract_strided_slice %27 {offsets = [8, 0], sizes = [1, 64], strides = [1, 1]} : vector<16x64xf32> to vector<1x64xf32>
    %34 = vector.extract_strided_slice %27 {offsets = [9, 0], sizes = [1, 32], strides = [1, 1]} : vector<16x64xf32> to vector<1x32xf32>
    %cst_24 = arith.constant dense<0.000000e+00> : vector<80xf32>
    %35 = vector.multi_reduction <add>, %24, %cst_24 [1] : vector<80x32xf32> to vector<80xf32>
    %36 = vector.shape_cast %35 : vector<80xf32> to vector<80x1xf32>
    %cst_25 = arith.constant 3.200000e+01 : f32
    %37 = vector.broadcast %cst_25 : f32 to vector<80x1xf32>
    %38 = arith.divf %36, %37 : vector<80x1xf32>
    %39 = vector.broadcast %38 : vector<80x1xf32> to vector<80x32xf32>
    %40 = arith.subf %24, %39 : vector<80x32xf32>
    %41 = vector.broadcast %38 : vector<80x1xf32> to vector<80x32xf32>
    %42 = arith.subf %24, %41 : vector<80x32xf32>
    %43 = arith.mulf %40, %42 : vector<80x32xf32>
    %cst_26 = arith.constant dense<0.000000e+00> : vector<80xf32>
    %44 = vector.multi_reduction <add>, %43, %cst_26 [1] : vector<80x32xf32> to vector<80xf32>
    %45 = vector.shape_cast %44 : vector<80xf32> to vector<80x1xf32>
    %cst_27 = arith.constant 3.200000e+01 : f32
    %46 = vector.broadcast %cst_27 : f32 to vector<80x1xf32>
    %47 = arith.divf %45, %46 : vector<80x1xf32>
    %48 = vector.broadcast %38 : vector<80x1xf32> to vector<80x32xf32>
    %49 = arith.subf %24, %48 : vector<80x32xf32>
    %cst_28 = arith.constant 9.99999974E-6 : f32
    %50 = vector.broadcast %cst_28 : f32 to vector<80x1xf32>
    %51 = arith.addf %47, %50 : vector<80x1xf32>
    %52 = math.rsqrt %51 : vector<80x1xf32>
    %53 = vector.broadcast %52 : vector<80x1xf32> to vector<80x32xf32>
    %54 = arith.mulf %49, %53 : vector<80x32xf32>
    %55 = vector.broadcast %28 : vector<1x32xf32> to vector<80x32xf32>
    %56 = arith.mulf %54, %55 : vector<80x32xf32>
    %57 = vector.broadcast %29 : vector<1x32xf32> to vector<80x32xf32>
    %58 = arith.addf %56, %57 : vector<80x32xf32>
    %59 = vector.extract_strided_slice %27 {offsets = [2, 0], sizes = [1, 8], strides = [1, 1]} : vector<16x64xf32> to vector<1x8xf32>
    %60 = vector.extract_strided_slice %27 {offsets = [3, 0], sizes = [1, 8], strides = [1, 1]} : vector<16x64xf32> to vector<1x8xf32>
    %61 = vector.extract_strided_slice %27 {offsets = [4, 0], sizes = [1, 8], strides = [1, 1]} : vector<16x64xf32> to vector<1x8xf32>
    %c0_29 = arith.constant 0 : index
    %c0_30 = arith.constant 0 : index
    %c0_31 = arith.constant 0 : index
    %c0_32 = arith.constant 0 : index
    %62 = vector.load %arg8[%c0_29, %c0_30, %c0_31, %c0_32] : memref<2x4x32x8xf32, #tpu.memory_space<vmem>>, vector<1x1x32x8xf32>
    %63 = vector.shape_cast %62 : vector<1x1x32x8xf32> to vector<32x8xf32>
    %cst_33 = arith.constant dense<0.000000e+00> : vector<80x8xf32>
    %64 = tpu.matmul %58, %63, %cst_33 {dimension_numbers = #tpu.dot_dimension_numbers<[1], [0], [0], [1], [0, 0, 1, 1], [], []>} : vector<80x32xf32>, vector<32x8xf32>, vector<80x8xf32> -> vector<80x8xf32>
    %65 = vector.broadcast %59 : vector<1x8xf32> to vector<80x8xf32>
    %66 = arith.addf %64, %65 : vector<80x8xf32>
    %c0_34 = arith.constant 0 : index
    %c0_35 = arith.constant 0 : index
    %c0_36 = arith.constant 0 : index
    %c0_37 = arith.constant 0 : index
    %67 = vector.load %arg9[%c0_34, %c0_35, %c0_36, %c0_37] : memref<2x4x32x8xf32, #tpu.memory_space<vmem>>, vector<1x1x32x8xf32>
    %68 = vector.shape_cast %67 : vector<1x1x32x8xf32> to vector<32x8xf32>
    %cst_38 = arith.constant dense<0.000000e+00> : vector<80x8xf32>
    %69 = tpu.matmul %58, %68, %cst_38 {dimension_numbers = #tpu.dot_dimension_numbers<[1], [0], [0], [1], [0, 0, 1, 1], [], []>} : vector<80x32xf32>, vector<32x8xf32>, vector<80x8xf32> -> vector<80x8xf32>
    %70 = vector.broadcast %60 : vector<1x8xf32> to vector<80x8xf32>
    %71 = arith.addf %69, %70 : vector<80x8xf32>
    %c0_39 = arith.constant 0 : index
    %c0_40 = arith.constant 0 : index
    %c0_41 = arith.constant 0 : index
    %c0_42 = arith.constant 0 : index
    %72 = vector.load %arg10[%c0_39, %c0_40, %c0_41, %c0_42] : memref<2x4x32x8xf32, #tpu.memory_space<vmem>>, vector<1x1x32x8xf32>
    %73 = vector.shape_cast %72 : vector<1x1x32x8xf32> to vector<32x8xf32>
    %cst_43 = arith.constant dense<0.000000e+00> : vector<80x8xf32>
    %74 = tpu.matmul %58, %73, %cst_43 {dimension_numbers = #tpu.dot_dimension_numbers<[1], [0], [0], [1], [0, 0, 1, 1], [], []>} : vector<80x32xf32>, vector<32x8xf32>, vector<80x8xf32> -> vector<80x8xf32>
    %75 = vector.broadcast %61 : vector<1x8xf32> to vector<80x8xf32>
    %76 = arith.addf %74, %75 : vector<80x8xf32>
    %cst_44 = arith.constant dense<0.000000e+00> : vector<80x80xf32>
    %77 = tpu.matmul %66, %71, %cst_44 {dimension_numbers = #tpu.dot_dimension_numbers<[1], [1], [0], [0], [0, 0, 1, 0], [], []>} : vector<80x8xf32>, vector<80x8xf32>, vector<80x80xf32> -> vector<80x80xf32>
    %78 = arith.addf %77, %25 : vector<80x80xf32>
    %cst_45 = arith.constant dense<0xFF800000> : vector<80xf32>
    %79 = vector.multi_reduction <maximumf>, %78, %cst_45 [1] : vector<80x80xf32> to vector<80xf32>
    %80 = vector.shape_cast %79 : vector<80xf32> to vector<80x1xf32>
    %81 = vector.broadcast %80 : vector<80x1xf32> to vector<80x80xf32>
    %82 = arith.subf %78, %81 : vector<80x80xf32>
    %83 = math.exp %82 : vector<80x80xf32>
    %cst_46 = arith.constant dense<0.000000e+00> : vector<80xf32>
    %84 = vector.multi_reduction <add>, %83, %cst_46 [1] : vector<80x80xf32> to vector<80xf32>
    %85 = vector.shape_cast %84 : vector<80xf32> to vector<80x1xf32>
    %86 = tpu.reciprocal %85 {approx = true} : vector<80x1xf32> -> vector<80x1xf32>
    %87 = vector.broadcast %86 : vector<80x1xf32> to vector<80x80xf32>
    %88 = arith.mulf %83, %87 : vector<80x80xf32>
    %cst_47 = arith.constant dense<0.000000e+00> : vector<80x8xf32>
    %89 = tpu.matmul %88, %76, %cst_47 {dimension_numbers = #tpu.dot_dimension_numbers<[1], [0], [0], [1], [0, 0, 1, 1], [], []>} : vector<80x80xf32>, vector<80x8xf32>, vector<80x8xf32> -> vector<80x8xf32>
    %c0_48 = arith.constant 0 : index
    %c0_49 = arith.constant 0 : index
    %c0_50 = arith.constant 0 : index
    %c0_51 = arith.constant 0 : index
    %90 = vector.load %arg11[%c0_48, %c0_49, %c0_50, %c0_51] : memref<2x4x8x32xf32, #tpu.memory_space<vmem>>, vector<1x1x8x32xf32>
    %91 = vector.shape_cast %90 : vector<1x1x8x32xf32> to vector<8x32xf32>
    %cst_52 = arith.constant dense<0.000000e+00> : vector<80x32xf32>
    %92 = tpu.matmul %89, %91, %cst_52 {dimension_numbers = #tpu.dot_dimension_numbers<[1], [0], [0], [1], [0, 0, 1, 1], [], []>} : vector<80x8xf32>, vector<8x32xf32>, vector<80x32xf32> -> vector<80x32xf32>
    %93 = vector.extract_strided_slice %27 {offsets = [2, 8], sizes = [1, 8], strides = [1, 1]} : vector<16x64xf32> to vector<1x8xf32>
    %94 = vector.extract_strided_slice %27 {offsets = [3, 8], sizes = [1, 8], strides = [1, 1]} : vector<16x64xf32> to vector<1x8xf32>
    %95 = vector.extract_strided_slice %27 {offsets = [4, 8], sizes = [1, 8], strides = [1, 1]} : vector<16x64xf32> to vector<1x8xf32>
    %c0_53 = arith.constant 0 : index
    %c1 = arith.constant 1 : index
    %c0_54 = arith.constant 0 : index
    %c0_55 = arith.constant 0 : index
    %96 = vector.load %arg8[%c0_53, %c1, %c0_54, %c0_55] : memref<2x4x32x8xf32, #tpu.memory_space<vmem>>, vector<1x1x32x8xf32>
    %97 = vector.shape_cast %96 : vector<1x1x32x8xf32> to vector<32x8xf32>
    %cst_56 = arith.constant dense<0.000000e+00> : vector<80x8xf32>
    %98 = tpu.matmul %58, %97, %cst_56 {dimension_numbers = #tpu.dot_dimension_numbers<[1], [0], [0], [1], [0, 0, 1, 1], [], []>} : vector<80x32xf32>, vector<32x8xf32>, vector<80x8xf32> -> vector<80x8xf32>
    %99 = vector.broadcast %93 : vector<1x8xf32> to vector<80x8xf32>
    %100 = arith.addf %98, %99 : vector<80x8xf32>
    %c0_57 = arith.constant 0 : index
    %c1_58 = arith.constant 1 : index
    %c0_59 = arith.constant 0 : index
    %c0_60 = arith.constant 0 : index
    %101 = vector.load %arg9[%c0_57, %c1_58, %c0_59, %c0_60] : memref<2x4x32x8xf32, #tpu.memory_space<vmem>>, vector<1x1x32x8xf32>
    %102 = vector.shape_cast %101 : vector<1x1x32x8xf32> to vector<32x8xf32>
    %cst_61 = arith.constant dense<0.000000e+00> : vector<80x8xf32>
    %103 = tpu.matmul %58, %102, %cst_61 {dimension_numbers = #tpu.dot_dimension_numbers<[1], [0], [0], [1], [0, 0, 1, 1], [], []>} : vector<80x32xf32>, vector<32x8xf32>, vector<80x8xf32> -> vector<80x8xf32>
    %104 = vector.broadcast %94 : vector<1x8xf32> to vector<80x8xf32>
    %105 = arith.addf %103, %104 : vector<80x8xf32>
    %c0_62 = arith.constant 0 : index
    %c1_63 = arith.constant 1 : index
    %c0_64 = arith.constant 0 : index
    %c0_65 = arith.constant 0 : index
    %106 = vector.load %arg10[%c0_62, %c1_63, %c0_64, %c0_65] : memref<2x4x32x8xf32, #tpu.memory_space<vmem>>, vector<1x1x32x8xf32>
    %107 = vector.shape_cast %106 : vector<1x1x32x8xf32> to vector<32x8xf32>
    %cst_66 = arith.constant dense<0.000000e+00> : vector<80x8xf32>
    %108 = tpu.matmul %58, %107, %cst_66 {dimension_numbers = #tpu.dot_dimension_numbers<[1], [0], [0], [1], [0, 0, 1, 1], [], []>} : vector<80x32xf32>, vector<32x8xf32>, vector<80x8xf32> -> vector<80x8xf32>
    %109 = vector.broadcast %95 : vector<1x8xf32> to vector<80x8xf32>
    %110 = arith.addf %108, %109 : vector<80x8xf32>
    %cst_67 = arith.constant dense<0.000000e+00> : vector<80x80xf32>
    %111 = tpu.matmul %100, %105, %cst_67 {dimension_numbers = #tpu.dot_dimension_numbers<[1], [1], [0], [0], [0, 0, 1, 0], [], []>} : vector<80x8xf32>, vector<80x8xf32>, vector<80x80xf32> -> vector<80x80xf32>
    %112 = arith.addf %111, %25 : vector<80x80xf32>
    %cst_68 = arith.constant dense<0xFF800000> : vector<80xf32>
    %113 = vector.multi_reduction <maximumf>, %112, %cst_68 [1] : vector<80x80xf32> to vector<80xf32>
    %114 = vector.shape_cast %113 : vector<80xf32> to vector<80x1xf32>
    %115 = vector.broadcast %114 : vector<80x1xf32> to vector<80x80xf32>
    %116 = arith.subf %112, %115 : vector<80x80xf32>
    %117 = math.exp %116 : vector<80x80xf32>
    %cst_69 = arith.constant dense<0.000000e+00> : vector<80xf32>
    %118 = vector.multi_reduction <add>, %117, %cst_69 [1] : vector<80x80xf32> to vector<80xf32>
    %119 = vector.shape_cast %118 : vector<80xf32> to vector<80x1xf32>
    %120 = tpu.reciprocal %119 {approx = true} : vector<80x1xf32> -> vector<80x1xf32>
    %121 = vector.broadcast %120 : vector<80x1xf32> to vector<80x80xf32>
    %122 = arith.mulf %117, %121 : vector<80x80xf32>
    %cst_70 = arith.constant dense<0.000000e+00> : vector<80x8xf32>
    %123 = tpu.matmul %122, %110, %cst_70 {dimension_numbers = #tpu.dot_dimension_numbers<[1], [0], [0], [1], [0, 0, 1, 1], [], []>} : vector<80x80xf32>, vector<80x8xf32>, vector<80x8xf32> -> vector<80x8xf32>
    %c0_71 = arith.constant 0 : index
    %c1_72 = arith.constant 1 : index
    %c0_73 = arith.constant 0 : index
    %c0_74 = arith.constant 0 : index
    %124 = vector.load %arg11[%c0_71, %c1_72, %c0_73, %c0_74] : memref<2x4x8x32xf32, #tpu.memory_space<vmem>>, vector<1x1x8x32xf32>
    %125 = vector.shape_cast %124 : vector<1x1x8x32xf32> to vector<8x32xf32>
    %cst_75 = arith.constant dense<0.000000e+00> : vector<80x32xf32>
    %126 = tpu.matmul %123, %125, %cst_75 {dimension_numbers = #tpu.dot_dimension_numbers<[1], [0], [0], [1], [0, 0, 1, 1], [], []>} : vector<80x8xf32>, vector<8x32xf32>, vector<80x32xf32> -> vector<80x32xf32>
    %127 = arith.addf %92, %126 : vector<80x32xf32>
    %128 = vector.extract_strided_slice %27 {offsets = [2, 16], sizes = [1, 8], strides = [1, 1]} : vector<16x64xf32> to vector<1x8xf32>
    %129 = vector.extract_strided_slice %27 {offsets = [3, 16], sizes = [1, 8], strides = [1, 1]} : vector<16x64xf32> to vector<1x8xf32>
    %130 = vector.extract_strided_slice %27 {offsets = [4, 16], sizes = [1, 8], strides = [1, 1]} : vector<16x64xf32> to vector<1x8xf32>
    %c0_76 = arith.constant 0 : index
    %c2 = arith.constant 2 : index
    %c0_77 = arith.constant 0 : index
    %c0_78 = arith.constant 0 : index
    %131 = vector.load %arg8[%c0_76, %c2, %c0_77, %c0_78] : memref<2x4x32x8xf32, #tpu.memory_space<vmem>>, vector<1x1x32x8xf32>
    %132 = vector.shape_cast %131 : vector<1x1x32x8xf32> to vector<32x8xf32>
    %cst_79 = arith.constant dense<0.000000e+00> : vector<80x8xf32>
    %133 = tpu.matmul %58, %132, %cst_79 {dimension_numbers = #tpu.dot_dimension_numbers<[1], [0], [0], [1], [0, 0, 1, 1], [], []>} : vector<80x32xf32>, vector<32x8xf32>, vector<80x8xf32> -> vector<80x8xf32>
    %134 = vector.broadcast %128 : vector<1x8xf32> to vector<80x8xf32>
    %135 = arith.addf %133, %134 : vector<80x8xf32>
    %c0_80 = arith.constant 0 : index
    %c2_81 = arith.constant 2 : index
    %c0_82 = arith.constant 0 : index
    %c0_83 = arith.constant 0 : index
    %136 = vector.load %arg9[%c0_80, %c2_81, %c0_82, %c0_83] : memref<2x4x32x8xf32, #tpu.memory_space<vmem>>, vector<1x1x32x8xf32>
    %137 = vector.shape_cast %136 : vector<1x1x32x8xf32> to vector<32x8xf32>
    %cst_84 = arith.constant dense<0.000000e+00> : vector<80x8xf32>
    %138 = tpu.matmul %58, %137, %cst_84 {dimension_numbers = #tpu.dot_dimension_numbers<[1], [0], [0], [1], [0, 0, 1, 1], [], []>} : vector<80x32xf32>, vector<32x8xf32>, vector<80x8xf32> -> vector<80x8xf32>
    %139 = vector.broadcast %129 : vector<1x8xf32> to vector<80x8xf32>
    %140 = arith.addf %138, %139 : vector<80x8xf32>
    %c0_85 = arith.constant 0 : index
    %c2_86 = arith.constant 2 : index
    %c0_87 = arith.constant 0 : index
    %c0_88 = arith.constant 0 : index
    %141 = vector.load %arg10[%c0_85, %c2_86, %c0_87, %c0_88] : memref<2x4x32x8xf32, #tpu.memory_space<vmem>>, vector<1x1x32x8xf32>
    %142 = vector.shape_cast %141 : vector<1x1x32x8xf32> to vector<32x8xf32>
    %cst_89 = arith.constant dense<0.000000e+00> : vector<80x8xf32>
    %143 = tpu.matmul %58, %142, %cst_89 {dimension_numbers = #tpu.dot_dimension_numbers<[1], [0], [0], [1], [0, 0, 1, 1], [], []>} : vector<80x32xf32>, vector<32x8xf32>, vector<80x8xf32> -> vector<80x8xf32>
    %144 = vector.broadcast %130 : vector<1x8xf32> to vector<80x8xf32>
    %145 = arith.addf %143, %144 : vector<80x8xf32>
    %cst_90 = arith.constant dense<0.000000e+00> : vector<80x80xf32>
    %146 = tpu.matmul %135, %140, %cst_90 {dimension_numbers = #tpu.dot_dimension_numbers<[1], [1], [0], [0], [0, 0, 1, 0], [], []>} : vector<80x8xf32>, vector<80x8xf32>, vector<80x80xf32> -> vector<80x80xf32>
    %147 = arith.addf %146, %25 : vector<80x80xf32>
    %cst_91 = arith.constant dense<0xFF800000> : vector<80xf32>
    %148 = vector.multi_reduction <maximumf>, %147, %cst_91 [1] : vector<80x80xf32> to vector<80xf32>
    %149 = vector.shape_cast %148 : vector<80xf32> to vector<80x1xf32>
    %150 = vector.broadcast %149 : vector<80x1xf32> to vector<80x80xf32>
    %151 = arith.subf %147, %150 : vector<80x80xf32>
    %152 = math.exp %151 : vector<80x80xf32>
    %cst_92 = arith.constant dense<0.000000e+00> : vector<80xf32>
    %153 = vector.multi_reduction <add>, %152, %cst_92 [1] : vector<80x80xf32> to vector<80xf32>
    %154 = vector.shape_cast %153 : vector<80xf32> to vector<80x1xf32>
    %155 = tpu.reciprocal %154 {approx = true} : vector<80x1xf32> -> vector<80x1xf32>
    %156 = vector.broadcast %155 : vector<80x1xf32> to vector<80x80xf32>
    %157 = arith.mulf %152, %156 : vector<80x80xf32>
    %cst_93 = arith.constant dense<0.000000e+00> : vector<80x8xf32>
    %158 = tpu.matmul %157, %145, %cst_93 {dimension_numbers = #tpu.dot_dimension_numbers<[1], [0], [0], [1], [0, 0, 1, 1], [], []>} : vector<80x80xf32>, vector<80x8xf32>, vector<80x8xf32> -> vector<80x8xf32>
    %c0_94 = arith.constant 0 : index
    %c2_95 = arith.constant 2 : index
    %c0_96 = arith.constant 0 : index
    %c0_97 = arith.constant 0 : index
    %159 = vector.load %arg11[%c0_94, %c2_95, %c0_96, %c0_97] : memref<2x4x8x32xf32, #tpu.memory_space<vmem>>, vector<1x1x8x32xf32>
    %160 = vector.shape_cast %159 : vector<1x1x8x32xf32> to vector<8x32xf32>
    %cst_98 = arith.constant dense<0.000000e+00> : vector<80x32xf32>
    %161 = tpu.matmul %158, %160, %cst_98 {dimension_numbers = #tpu.dot_dimension_numbers<[1], [0], [0], [1], [0, 0, 1, 1], [], []>} : vector<80x8xf32>, vector<8x32xf32>, vector<80x32xf32> -> vector<80x32xf32>
    %162 = arith.addf %127, %161 : vector<80x32xf32>
    %163 = vector.extract_strided_slice %27 {offsets = [2, 24], sizes = [1, 8], strides = [1, 1]} : vector<16x64xf32> to vector<1x8xf32>
    %164 = vector.extract_strided_slice %27 {offsets = [3, 24], sizes = [1, 8], strides = [1, 1]} : vector<16x64xf32> to vector<1x8xf32>
    %165 = vector.extract_strided_slice %27 {offsets = [4, 24], sizes = [1, 8], strides = [1, 1]} : vector<16x64xf32> to vector<1x8xf32>
    %c0_99 = arith.constant 0 : index
    %c3 = arith.constant 3 : index
    %c0_100 = arith.constant 0 : index
    %c0_101 = arith.constant 0 : index
    %166 = vector.load %arg8[%c0_99, %c3, %c0_100, %c0_101] : memref<2x4x32x8xf32, #tpu.memory_space<vmem>>, vector<1x1x32x8xf32>
    %167 = vector.shape_cast %166 : vector<1x1x32x8xf32> to vector<32x8xf32>
    %cst_102 = arith.constant dense<0.000000e+00> : vector<80x8xf32>
    %168 = tpu.matmul %58, %167, %cst_102 {dimension_numbers = #tpu.dot_dimension_numbers<[1], [0], [0], [1], [0, 0, 1, 1], [], []>} : vector<80x32xf32>, vector<32x8xf32>, vector<80x8xf32> -> vector<80x8xf32>
    %169 = vector.broadcast %163 : vector<1x8xf32> to vector<80x8xf32>
    %170 = arith.addf %168, %169 : vector<80x8xf32>
    %c0_103 = arith.constant 0 : index
    %c3_104 = arith.constant 3 : index
    %c0_105 = arith.constant 0 : index
    %c0_106 = arith.constant 0 : index
    %171 = vector.load %arg9[%c0_103, %c3_104, %c0_105, %c0_106] : memref<2x4x32x8xf32, #tpu.memory_space<vmem>>, vector<1x1x32x8xf32>
    %172 = vector.shape_cast %171 : vector<1x1x32x8xf32> to vector<32x8xf32>
    %cst_107 = arith.constant dense<0.000000e+00> : vector<80x8xf32>
    %173 = tpu.matmul %58, %172, %cst_107 {dimension_numbers = #tpu.dot_dimension_numbers<[1], [0], [0], [1], [0, 0, 1, 1], [], []>} : vector<80x32xf32>, vector<32x8xf32>, vector<80x8xf32> -> vector<80x8xf32>
    %174 = vector.broadcast %164 : vector<1x8xf32> to vector<80x8xf32>
    %175 = arith.addf %173, %174 : vector<80x8xf32>
    %c0_108 = arith.constant 0 : index
    %c3_109 = arith.constant 3 : index
    %c0_110 = arith.constant 0 : index
    %c0_111 = arith.constant 0 : index
    %176 = vector.load %arg10[%c0_108, %c3_109, %c0_110, %c0_111] : memref<2x4x32x8xf32, #tpu.memory_space<vmem>>, vector<1x1x32x8xf32>
    %177 = vector.shape_cast %176 : vector<1x1x32x8xf32> to vector<32x8xf32>
    %cst_112 = arith.constant dense<0.000000e+00> : vector<80x8xf32>
    %178 = tpu.matmul %58, %177, %cst_112 {dimension_numbers = #tpu.dot_dimension_numbers<[1], [0], [0], [1], [0, 0, 1, 1], [], []>} : vector<80x32xf32>, vector<32x8xf32>, vector<80x8xf32> -> vector<80x8xf32>
    %179 = vector.broadcast %165 : vector<1x8xf32> to vector<80x8xf32>
    %180 = arith.addf %178, %179 : vector<80x8xf32>
    %cst_113 = arith.constant dense<0.000000e+00> : vector<80x80xf32>
    %181 = tpu.matmul %170, %175, %cst_113 {dimension_numbers = #tpu.dot_dimension_numbers<[1], [1], [0], [0], [0, 0, 1, 0], [], []>} : vector<80x8xf32>, vector<80x8xf32>, vector<80x80xf32> -> vector<80x80xf32>
    %182 = arith.addf %181, %25 : vector<80x80xf32>
    %cst_114 = arith.constant dense<0xFF800000> : vector<80xf32>
    %183 = vector.multi_reduction <maximumf>, %182, %cst_114 [1] : vector<80x80xf32> to vector<80xf32>
    %184 = vector.shape_cast %183 : vector<80xf32> to vector<80x1xf32>
    %185 = vector.broadcast %184 : vector<80x1xf32> to vector<80x80xf32>
    %186 = arith.subf %182, %185 : vector<80x80xf32>
    %187 = math.exp %186 : vector<80x80xf32>
    %cst_115 = arith.constant dense<0.000000e+00> : vector<80xf32>
    %188 = vector.multi_reduction <add>, %187, %cst_115 [1] : vector<80x80xf32> to vector<80xf32>
    %189 = vector.shape_cast %188 : vector<80xf32> to vector<80x1xf32>
    %190 = tpu.reciprocal %189 {approx = true} : vector<80x1xf32> -> vector<80x1xf32>
    %191 = vector.broadcast %190 : vector<80x1xf32> to vector<80x80xf32>
    %192 = arith.mulf %187, %191 : vector<80x80xf32>
    %cst_116 = arith.constant dense<0.000000e+00> : vector<80x8xf32>
    %193 = tpu.matmul %192, %180, %cst_116 {dimension_numbers = #tpu.dot_dimension_numbers<[1], [0], [0], [1], [0, 0, 1, 1], [], []>} : vector<80x80xf32>, vector<80x8xf32>, vector<80x8xf32> -> vector<80x8xf32>
    %c0_117 = arith.constant 0 : index
    %c3_118 = arith.constant 3 : index
    %c0_119 = arith.constant 0 : index
    %c0_120 = arith.constant 0 : index
    %194 = vector.load %arg11[%c0_117, %c3_118, %c0_119, %c0_120] : memref<2x4x8x32xf32, #tpu.memory_space<vmem>>, vector<1x1x8x32xf32>
    %195 = vector.shape_cast %194 : vector<1x1x8x32xf32> to vector<8x32xf32>
    %cst_121 = arith.constant dense<0.000000e+00> : vector<80x32xf32>
    %196 = tpu.matmul %193, %195, %cst_121 {dimension_numbers = #tpu.dot_dimension_numbers<[1], [0], [0], [1], [0, 0, 1, 1], [], []>} : vector<80x8xf32>, vector<8x32xf32>, vector<80x32xf32> -> vector<80x32xf32>
    %197 = arith.addf %162, %196 : vector<80x32xf32>
    %198 = arith.addf %24, %197 : vector<80x32xf32>
    %199 = vector.broadcast %30 : vector<1x32xf32> to vector<80x32xf32>
    %200 = arith.addf %198, %199 : vector<80x32xf32>
    %cst_122 = arith.constant dense<0.000000e+00> : vector<80xf32>
    %201 = vector.multi_reduction <add>, %200, %cst_122 [1] : vector<80x32xf32> to vector<80xf32>
    %202 = vector.shape_cast %201 : vector<80xf32> to vector<80x1xf32>
    %cst_123 = arith.constant 3.200000e+01 : f32
    %203 = vector.broadcast %cst_123 : f32 to vector<80x1xf32>
    %204 = arith.divf %202, %203 : vector<80x1xf32>
    %205 = vector.broadcast %204 : vector<80x1xf32> to vector<80x32xf32>
    %206 = arith.subf %200, %205 : vector<80x32xf32>
    %207 = vector.broadcast %204 : vector<80x1xf32> to vector<80x32xf32>
    %208 = arith.subf %200, %207 : vector<80x32xf32>
    %209 = arith.mulf %206, %208 : vector<80x32xf32>
    %cst_124 = arith.constant dense<0.000000e+00> : vector<80xf32>
    %210 = vector.multi_reduction <add>, %209, %cst_124 [1] : vector<80x32xf32> to vector<80xf32>
    %211 = vector.shape_cast %210 : vector<80xf32> to vector<80x1xf32>
    %cst_125 = arith.constant 3.200000e+01 : f32
    %212 = vector.broadcast %cst_125 : f32 to vector<80x1xf32>
    %213 = arith.divf %211, %212 : vector<80x1xf32>
    %214 = vector.broadcast %204 : vector<80x1xf32> to vector<80x32xf32>
    %215 = arith.subf %200, %214 : vector<80x32xf32>
    %cst_126 = arith.constant 9.99999974E-6 : f32
    %216 = vector.broadcast %cst_126 : f32 to vector<80x1xf32>
    %217 = arith.addf %213, %216 : vector<80x1xf32>
    %218 = math.rsqrt %217 : vector<80x1xf32>
    %219 = vector.broadcast %218 : vector<80x1xf32> to vector<80x32xf32>
    %220 = arith.mulf %215, %219 : vector<80x32xf32>
    %221 = vector.broadcast %31 : vector<1x32xf32> to vector<80x32xf32>
    %222 = arith.mulf %220, %221 : vector<80x32xf32>
    %223 = vector.broadcast %32 : vector<1x32xf32> to vector<80x32xf32>
    %224 = arith.addf %222, %223 : vector<80x32xf32>
    %c0_127 = arith.constant 0 : index
    %c0_128 = arith.constant 0 : index
    %c0_129 = arith.constant 0 : index
    %225 = vector.load %arg12[%c0_127, %c0_128, %c0_129] : memref<2x32x64xf32, #tpu.memory_space<vmem>>, vector<1x32x64xf32>
    %226 = vector.shape_cast %225 : vector<1x32x64xf32> to vector<32x64xf32>
    %cst_130 = arith.constant dense<0.000000e+00> : vector<80x64xf32>
    %227 = tpu.matmul %224, %226, %cst_130 {dimension_numbers = #tpu.dot_dimension_numbers<[1], [0], [0], [1], [0, 0, 1, 1], [], []>} : vector<80x32xf32>, vector<32x64xf32>, vector<80x64xf32> -> vector<80x64xf32>
    %228 = vector.broadcast %33 : vector<1x64xf32> to vector<80x64xf32>
    %229 = arith.addf %227, %228 : vector<80x64xf32>
    %cst_131 = arith.constant 5.000000e-01 : f32
    %230 = vector.broadcast %cst_131 : f32 to vector<80x64xf32>
    %231 = arith.mulf %230, %229 : vector<80x64xf32>
    %cst_132 = arith.constant 4.471500e-02 : f32
    %232 = vector.broadcast %cst_132 : f32 to vector<80x64xf32>
    %233 = arith.mulf %232, %229 : vector<80x64xf32>
    %234 = arith.mulf %233, %229 : vector<80x64xf32>
    %235 = arith.mulf %234, %229 : vector<80x64xf32>
    %236 = arith.addf %229, %235 : vector<80x64xf32>
    %cst_133 = arith.constant 0.797884583 : f32
    %237 = vector.broadcast %cst_133 : f32 to vector<80x64xf32>
    %238 = arith.mulf %237, %236 : vector<80x64xf32>
    %239 = math.tanh %238 : vector<80x64xf32>
    %cst_134 = arith.constant 1.000000e+00 : f32
    %240 = vector.broadcast %cst_134 : f32 to vector<80x64xf32>
    %241 = arith.addf %240, %239 : vector<80x64xf32>
    %242 = arith.mulf %231, %241 : vector<80x64xf32>
    %c0_135 = arith.constant 0 : index
    %c0_136 = arith.constant 0 : index
    %c0_137 = arith.constant 0 : index
    %243 = vector.load %arg13[%c0_135, %c0_136, %c0_137] : memref<2x64x32xf32, #tpu.memory_space<vmem>>, vector<1x64x32xf32>
    %244 = vector.shape_cast %243 : vector<1x64x32xf32> to vector<64x32xf32>
    %cst_138 = arith.constant dense<0.000000e+00> : vector<80x32xf32>
    %245 = tpu.matmul %242, %244, %cst_138 {dimension_numbers = #tpu.dot_dimension_numbers<[1], [0], [0], [1], [0, 0, 1, 1], [], []>} : vector<80x64xf32>, vector<64x32xf32>, vector<80x32xf32> -> vector<80x32xf32>
    %246 = vector.broadcast %34 : vector<1x32xf32> to vector<80x32xf32>
    %247 = arith.addf %245, %246 : vector<80x32xf32>
    %248 = arith.addf %200, %247 : vector<80x32xf32>
    %c1_139 = arith.constant 1 : index
    %c0_140 = arith.constant 0 : index
    %c0_141 = arith.constant 0 : index
    %249 = vector.load %arg14[%c1_139, %c0_140, %c0_141] : memref<2x16x64xf32, #tpu.memory_space<vmem>>, vector<1x16x64xf32>
    %250 = vector.shape_cast %249 : vector<1x16x64xf32> to vector<16x64xf32>
    %251 = vector.extract_strided_slice %250 {offsets = [0, 0], sizes = [1, 32], strides = [1, 1]} : vector<16x64xf32> to vector<1x32xf32>
    %252 = vector.extract_strided_slice %250 {offsets = [1, 0], sizes = [1, 32], strides = [1, 1]} : vector<16x64xf32> to vector<1x32xf32>
    %253 = vector.extract_strided_slice %250 {offsets = [5, 0], sizes = [1, 32], strides = [1, 1]} : vector<16x64xf32> to vector<1x32xf32>
    %254 = vector.extract_strided_slice %250 {offsets = [6, 0], sizes = [1, 32], strides = [1, 1]} : vector<16x64xf32> to vector<1x32xf32>
    %255 = vector.extract_strided_slice %250 {offsets = [7, 0], sizes = [1, 32], strides = [1, 1]} : vector<16x64xf32> to vector<1x32xf32>
    %256 = vector.extract_strided_slice %250 {offsets = [8, 0], sizes = [1, 64], strides = [1, 1]} : vector<16x64xf32> to vector<1x64xf32>
    %257 = vector.extract_strided_slice %250 {offsets = [9, 0], sizes = [1, 32], strides = [1, 1]} : vector<16x64xf32> to vector<1x32xf32>
    %cst_142 = arith.constant dense<0.000000e+00> : vector<80xf32>
    %258 = vector.multi_reduction <add>, %248, %cst_142 [1] : vector<80x32xf32> to vector<80xf32>
    %259 = vector.shape_cast %258 : vector<80xf32> to vector<80x1xf32>
    %cst_143 = arith.constant 3.200000e+01 : f32
    %260 = vector.broadcast %cst_143 : f32 to vector<80x1xf32>
    %261 = arith.divf %259, %260 : vector<80x1xf32>
    %262 = vector.broadcast %261 : vector<80x1xf32> to vector<80x32xf32>
    %263 = arith.subf %248, %262 : vector<80x32xf32>
    %264 = vector.broadcast %261 : vector<80x1xf32> to vector<80x32xf32>
    %265 = arith.subf %248, %264 : vector<80x32xf32>
    %266 = arith.mulf %263, %265 : vector<80x32xf32>
    %cst_144 = arith.constant dense<0.000000e+00> : vector<80xf32>
    %267 = vector.multi_reduction <add>, %266, %cst_144 [1] : vector<80x32xf32> to vector<80xf32>
    %268 = vector.shape_cast %267 : vector<80xf32> to vector<80x1xf32>
    %cst_145 = arith.constant 3.200000e+01 : f32
    %269 = vector.broadcast %cst_145 : f32 to vector<80x1xf32>
    %270 = arith.divf %268, %269 : vector<80x1xf32>
    %271 = vector.broadcast %261 : vector<80x1xf32> to vector<80x32xf32>
    %272 = arith.subf %248, %271 : vector<80x32xf32>
    %cst_146 = arith.constant 9.99999974E-6 : f32
    %273 = vector.broadcast %cst_146 : f32 to vector<80x1xf32>
    %274 = arith.addf %270, %273 : vector<80x1xf32>
    %275 = math.rsqrt %274 : vector<80x1xf32>
    %276 = vector.broadcast %275 : vector<80x1xf32> to vector<80x32xf32>
    %277 = arith.mulf %272, %276 : vector<80x32xf32>
    %278 = vector.broadcast %251 : vector<1x32xf32> to vector<80x32xf32>
    %279 = arith.mulf %277, %278 : vector<80x32xf32>
    %280 = vector.broadcast %252 : vector<1x32xf32> to vector<80x32xf32>
    %281 = arith.addf %279, %280 : vector<80x32xf32>
    %282 = vector.extract_strided_slice %250 {offsets = [2, 0], sizes = [1, 8], strides = [1, 1]} : vector<16x64xf32> to vector<1x8xf32>
    %283 = vector.extract_strided_slice %250 {offsets = [3, 0], sizes = [1, 8], strides = [1, 1]} : vector<16x64xf32> to vector<1x8xf32>
    %284 = vector.extract_strided_slice %250 {offsets = [4, 0], sizes = [1, 8], strides = [1, 1]} : vector<16x64xf32> to vector<1x8xf32>
    %c1_147 = arith.constant 1 : index
    %c0_148 = arith.constant 0 : index
    %c0_149 = arith.constant 0 : index
    %c0_150 = arith.constant 0 : index
    %285 = vector.load %arg8[%c1_147, %c0_148, %c0_149, %c0_150] : memref<2x4x32x8xf32, #tpu.memory_space<vmem>>, vector<1x1x32x8xf32>
    %286 = vector.shape_cast %285 : vector<1x1x32x8xf32> to vector<32x8xf32>
    %cst_151 = arith.constant dense<0.000000e+00> : vector<80x8xf32>
    %287 = tpu.matmul %281, %286, %cst_151 {dimension_numbers = #tpu.dot_dimension_numbers<[1], [0], [0], [1], [0, 0, 1, 1], [], []>} : vector<80x32xf32>, vector<32x8xf32>, vector<80x8xf32> -> vector<80x8xf32>
    %288 = vector.broadcast %282 : vector<1x8xf32> to vector<80x8xf32>
    %289 = arith.addf %287, %288 : vector<80x8xf32>
    %c1_152 = arith.constant 1 : index
    %c0_153 = arith.constant 0 : index
    %c0_154 = arith.constant 0 : index
    %c0_155 = arith.constant 0 : index
    %290 = vector.load %arg9[%c1_152, %c0_153, %c0_154, %c0_155] : memref<2x4x32x8xf32, #tpu.memory_space<vmem>>, vector<1x1x32x8xf32>
    %291 = vector.shape_cast %290 : vector<1x1x32x8xf32> to vector<32x8xf32>
    %cst_156 = arith.constant dense<0.000000e+00> : vector<80x8xf32>
    %292 = tpu.matmul %281, %291, %cst_156 {dimension_numbers = #tpu.dot_dimension_numbers<[1], [0], [0], [1], [0, 0, 1, 1], [], []>} : vector<80x32xf32>, vector<32x8xf32>, vector<80x8xf32> -> vector<80x8xf32>
    %293 = vector.broadcast %283 : vector<1x8xf32> to vector<80x8xf32>
    %294 = arith.addf %292, %293 : vector<80x8xf32>
    %c1_157 = arith.constant 1 : index
    %c0_158 = arith.constant 0 : index
    %c0_159 = arith.constant 0 : index
    %c0_160 = arith.constant 0 : index
    %295 = vector.load %arg10[%c1_157, %c0_158, %c0_159, %c0_160] : memref<2x4x32x8xf32, #tpu.memory_space<vmem>>, vector<1x1x32x8xf32>
    %296 = vector.shape_cast %295 : vector<1x1x32x8xf32> to vector<32x8xf32>
    %cst_161 = arith.constant dense<0.000000e+00> : vector<80x8xf32>
    %297 = tpu.matmul %281, %296, %cst_161 {dimension_numbers = #tpu.dot_dimension_numbers<[1], [0], [0], [1], [0, 0, 1, 1], [], []>} : vector<80x32xf32>, vector<32x8xf32>, vector<80x8xf32> -> vector<80x8xf32>
    %298 = vector.broadcast %284 : vector<1x8xf32> to vector<80x8xf32>
    %299 = arith.addf %297, %298 : vector<80x8xf32>
    %cst_162 = arith.constant dense<0.000000e+00> : vector<80x80xf32>
    %300 = tpu.matmul %289, %294, %cst_162 {dimension_numbers = #tpu.dot_dimension_numbers<[1], [1], [0], [0], [0, 0, 1, 0], [], []>} : vector<80x8xf32>, vector<80x8xf32>, vector<80x80xf32> -> vector<80x80xf32>
    %301 = arith.addf %300, %25 : vector<80x80xf32>
    %cst_163 = arith.constant dense<0xFF800000> : vector<80xf32>
    %302 = vector.multi_reduction <maximumf>, %301, %cst_163 [1] : vector<80x80xf32> to vector<80xf32>
    %303 = vector.shape_cast %302 : vector<80xf32> to vector<80x1xf32>
    %304 = vector.broadcast %303 : vector<80x1xf32> to vector<80x80xf32>
    %305 = arith.subf %301, %304 : vector<80x80xf32>
    %306 = math.exp %305 : vector<80x80xf32>
    %cst_164 = arith.constant dense<0.000000e+00> : vector<80xf32>
    %307 = vector.multi_reduction <add>, %306, %cst_164 [1] : vector<80x80xf32> to vector<80xf32>
    %308 = vector.shape_cast %307 : vector<80xf32> to vector<80x1xf32>
    %309 = tpu.reciprocal %308 {approx = true} : vector<80x1xf32> -> vector<80x1xf32>
    %310 = vector.broadcast %309 : vector<80x1xf32> to vector<80x80xf32>
    %311 = arith.mulf %306, %310 : vector<80x80xf32>
    %cst_165 = arith.constant dense<0.000000e+00> : vector<80x8xf32>
    %312 = tpu.matmul %311, %299, %cst_165 {dimension_numbers = #tpu.dot_dimension_numbers<[1], [0], [0], [1], [0, 0, 1, 1], [], []>} : vector<80x80xf32>, vector<80x8xf32>, vector<80x8xf32> -> vector<80x8xf32>
    %c1_166 = arith.constant 1 : index
    %c0_167 = arith.constant 0 : index
    %c0_168 = arith.constant 0 : index
    %c0_169 = arith.constant 0 : index
    %313 = vector.load %arg11[%c1_166, %c0_167, %c0_168, %c0_169] : memref<2x4x8x32xf32, #tpu.memory_space<vmem>>, vector<1x1x8x32xf32>
    %314 = vector.shape_cast %313 : vector<1x1x8x32xf32> to vector<8x32xf32>
    %cst_170 = arith.constant dense<0.000000e+00> : vector<80x32xf32>
    %315 = tpu.matmul %312, %314, %cst_170 {dimension_numbers = #tpu.dot_dimension_numbers<[1], [0], [0], [1], [0, 0, 1, 1], [], []>} : vector<80x8xf32>, vector<8x32xf32>, vector<80x32xf32> -> vector<80x32xf32>
    %316 = vector.extract_strided_slice %250 {offsets = [2, 8], sizes = [1, 8], strides = [1, 1]} : vector<16x64xf32> to vector<1x8xf32>
    %317 = vector.extract_strided_slice %250 {offsets = [3, 8], sizes = [1, 8], strides = [1, 1]} : vector<16x64xf32> to vector<1x8xf32>
    %318 = vector.extract_strided_slice %250 {offsets = [4, 8], sizes = [1, 8], strides = [1, 1]} : vector<16x64xf32> to vector<1x8xf32>
    %c1_171 = arith.constant 1 : index
    %c1_172 = arith.constant 1 : index
    %c0_173 = arith.constant 0 : index
    %c0_174 = arith.constant 0 : index
    %319 = vector.load %arg8[%c1_171, %c1_172, %c0_173, %c0_174] : memref<2x4x32x8xf32, #tpu.memory_space<vmem>>, vector<1x1x32x8xf32>
    %320 = vector.shape_cast %319 : vector<1x1x32x8xf32> to vector<32x8xf32>
    %cst_175 = arith.constant dense<0.000000e+00> : vector<80x8xf32>
    %321 = tpu.matmul %281, %320, %cst_175 {dimension_numbers = #tpu.dot_dimension_numbers<[1], [0], [0], [1], [0, 0, 1, 1], [], []>} : vector<80x32xf32>, vector<32x8xf32>, vector<80x8xf32> -> vector<80x8xf32>
    %322 = vector.broadcast %316 : vector<1x8xf32> to vector<80x8xf32>
    %323 = arith.addf %321, %322 : vector<80x8xf32>
    %c1_176 = arith.constant 1 : index
    %c1_177 = arith.constant 1 : index
    %c0_178 = arith.constant 0 : index
    %c0_179 = arith.constant 0 : index
    %324 = vector.load %arg9[%c1_176, %c1_177, %c0_178, %c0_179] : memref<2x4x32x8xf32, #tpu.memory_space<vmem>>, vector<1x1x32x8xf32>
    %325 = vector.shape_cast %324 : vector<1x1x32x8xf32> to vector<32x8xf32>
    %cst_180 = arith.constant dense<0.000000e+00> : vector<80x8xf32>
    %326 = tpu.matmul %281, %325, %cst_180 {dimension_numbers = #tpu.dot_dimension_numbers<[1], [0], [0], [1], [0, 0, 1, 1], [], []>} : vector<80x32xf32>, vector<32x8xf32>, vector<80x8xf32> -> vector<80x8xf32>
    %327 = vector.broadcast %317 : vector<1x8xf32> to vector<80x8xf32>
    %328 = arith.addf %326, %327 : vector<80x8xf32>
    %c1_181 = arith.constant 1 : index
    %c1_182 = arith.constant 1 : index
    %c0_183 = arith.constant 0 : index
    %c0_184 = arith.constant 0 : index
    %329 = vector.load %arg10[%c1_181, %c1_182, %c0_183, %c0_184] : memref<2x4x32x8xf32, #tpu.memory_space<vmem>>, vector<1x1x32x8xf32>
    %330 = vector.shape_cast %329 : vector<1x1x32x8xf32> to vector<32x8xf32>
    %cst_185 = arith.constant dense<0.000000e+00> : vector<80x8xf32>
    %331 = tpu.matmul %281, %330, %cst_185 {dimension_numbers = #tpu.dot_dimension_numbers<[1], [0], [0], [1], [0, 0, 1, 1], [], []>} : vector<80x32xf32>, vector<32x8xf32>, vector<80x8xf32> -> vector<80x8xf32>
    %332 = vector.broadcast %318 : vector<1x8xf32> to vector<80x8xf32>
    %333 = arith.addf %331, %332 : vector<80x8xf32>
    %cst_186 = arith.constant dense<0.000000e+00> : vector<80x80xf32>
    %334 = tpu.matmul %323, %328, %cst_186 {dimension_numbers = #tpu.dot_dimension_numbers<[1], [1], [0], [0], [0, 0, 1, 0], [], []>} : vector<80x8xf32>, vector<80x8xf32>, vector<80x80xf32> -> vector<80x80xf32>
    %335 = arith.addf %334, %25 : vector<80x80xf32>
    %cst_187 = arith.constant dense<0xFF800000> : vector<80xf32>
    %336 = vector.multi_reduction <maximumf>, %335, %cst_187 [1] : vector<80x80xf32> to vector<80xf32>
    %337 = vector.shape_cast %336 : vector<80xf32> to vector<80x1xf32>
    %338 = vector.broadcast %337 : vector<80x1xf32> to vector<80x80xf32>
    %339 = arith.subf %335, %338 : vector<80x80xf32>
    %340 = math.exp %339 : vector<80x80xf32>
    %cst_188 = arith.constant dense<0.000000e+00> : vector<80xf32>
    %341 = vector.multi_reduction <add>, %340, %cst_188 [1] : vector<80x80xf32> to vector<80xf32>
    %342 = vector.shape_cast %341 : vector<80xf32> to vector<80x1xf32>
    %343 = tpu.reciprocal %342 {approx = true} : vector<80x1xf32> -> vector<80x1xf32>
    %344 = vector.broadcast %343 : vector<80x1xf32> to vector<80x80xf32>
    %345 = arith.mulf %340, %344 : vector<80x80xf32>
    %cst_189 = arith.constant dense<0.000000e+00> : vector<80x8xf32>
    %346 = tpu.matmul %345, %333, %cst_189 {dimension_numbers = #tpu.dot_dimension_numbers<[1], [0], [0], [1], [0, 0, 1, 1], [], []>} : vector<80x80xf32>, vector<80x8xf32>, vector<80x8xf32> -> vector<80x8xf32>
    %c1_190 = arith.constant 1 : index
    %c1_191 = arith.constant 1 : index
    %c0_192 = arith.constant 0 : index
    %c0_193 = arith.constant 0 : index
    %347 = vector.load %arg11[%c1_190, %c1_191, %c0_192, %c0_193] : memref<2x4x8x32xf32, #tpu.memory_space<vmem>>, vector<1x1x8x32xf32>
    %348 = vector.shape_cast %347 : vector<1x1x8x32xf32> to vector<8x32xf32>
    %cst_194 = arith.constant dense<0.000000e+00> : vector<80x32xf32>
    %349 = tpu.matmul %346, %348, %cst_194 {dimension_numbers = #tpu.dot_dimension_numbers<[1], [0], [0], [1], [0, 0, 1, 1], [], []>} : vector<80x8xf32>, vector<8x32xf32>, vector<80x32xf32> -> vector<80x32xf32>
    %350 = arith.addf %315, %349 : vector<80x32xf32>
    %351 = vector.extract_strided_slice %250 {offsets = [2, 16], sizes = [1, 8], strides = [1, 1]} : vector<16x64xf32> to vector<1x8xf32>
    %352 = vector.extract_strided_slice %250 {offsets = [3, 16], sizes = [1, 8], strides = [1, 1]} : vector<16x64xf32> to vector<1x8xf32>
    %353 = vector.extract_strided_slice %250 {offsets = [4, 16], sizes = [1, 8], strides = [1, 1]} : vector<16x64xf32> to vector<1x8xf32>
    %c1_195 = arith.constant 1 : index
    %c2_196 = arith.constant 2 : index
    %c0_197 = arith.constant 0 : index
    %c0_198 = arith.constant 0 : index
    %354 = vector.load %arg8[%c1_195, %c2_196, %c0_197, %c0_198] : memref<2x4x32x8xf32, #tpu.memory_space<vmem>>, vector<1x1x32x8xf32>
    %355 = vector.shape_cast %354 : vector<1x1x32x8xf32> to vector<32x8xf32>
    %cst_199 = arith.constant dense<0.000000e+00> : vector<80x8xf32>
    %356 = tpu.matmul %281, %355, %cst_199 {dimension_numbers = #tpu.dot_dimension_numbers<[1], [0], [0], [1], [0, 0, 1, 1], [], []>} : vector<80x32xf32>, vector<32x8xf32>, vector<80x8xf32> -> vector<80x8xf32>
    %357 = vector.broadcast %351 : vector<1x8xf32> to vector<80x8xf32>
    %358 = arith.addf %356, %357 : vector<80x8xf32>
    %c1_200 = arith.constant 1 : index
    %c2_201 = arith.constant 2 : index
    %c0_202 = arith.constant 0 : index
    %c0_203 = arith.constant 0 : index
    %359 = vector.load %arg9[%c1_200, %c2_201, %c0_202, %c0_203] : memref<2x4x32x8xf32, #tpu.memory_space<vmem>>, vector<1x1x32x8xf32>
    %360 = vector.shape_cast %359 : vector<1x1x32x8xf32> to vector<32x8xf32>
    %cst_204 = arith.constant dense<0.000000e+00> : vector<80x8xf32>
    %361 = tpu.matmul %281, %360, %cst_204 {dimension_numbers = #tpu.dot_dimension_numbers<[1], [0], [0], [1], [0, 0, 1, 1], [], []>} : vector<80x32xf32>, vector<32x8xf32>, vector<80x8xf32> -> vector<80x8xf32>
    %362 = vector.broadcast %352 : vector<1x8xf32> to vector<80x8xf32>
    %363 = arith.addf %361, %362 : vector<80x8xf32>
    %c1_205 = arith.constant 1 : index
    %c2_206 = arith.constant 2 : index
    %c0_207 = arith.constant 0 : index
    %c0_208 = arith.constant 0 : index
    %364 = vector.load %arg10[%c1_205, %c2_206, %c0_207, %c0_208] : memref<2x4x32x8xf32, #tpu.memory_space<vmem>>, vector<1x1x32x8xf32>
    %365 = vector.shape_cast %364 : vector<1x1x32x8xf32> to vector<32x8xf32>
    %cst_209 = arith.constant dense<0.000000e+00> : vector<80x8xf32>
    %366 = tpu.matmul %281, %365, %cst_209 {dimension_numbers = #tpu.dot_dimension_numbers<[1], [0], [0], [1], [0, 0, 1, 1], [], []>} : vector<80x32xf32>, vector<32x8xf32>, vector<80x8xf32> -> vector<80x8xf32>
    %367 = vector.broadcast %353 : vector<1x8xf32> to vector<80x8xf32>
    %368 = arith.addf %366, %367 : vector<80x8xf32>
    %cst_210 = arith.constant dense<0.000000e+00> : vector<80x80xf32>
    %369 = tpu.matmul %358, %363, %cst_210 {dimension_numbers = #tpu.dot_dimension_numbers<[1], [1], [0], [0], [0, 0, 1, 0], [], []>} : vector<80x8xf32>, vector<80x8xf32>, vector<80x80xf32> -> vector<80x80xf32>
    %370 = arith.addf %369, %25 : vector<80x80xf32>
    %cst_211 = arith.constant dense<0xFF800000> : vector<80xf32>
    %371 = vector.multi_reduction <maximumf>, %370, %cst_211 [1] : vector<80x80xf32> to vector<80xf32>
    %372 = vector.shape_cast %371 : vector<80xf32> to vector<80x1xf32>
    %373 = vector.broadcast %372 : vector<80x1xf32> to vector<80x80xf32>
    %374 = arith.subf %370, %373 : vector<80x80xf32>
    %375 = math.exp %374 : vector<80x80xf32>
    %cst_212 = arith.constant dense<0.000000e+00> : vector<80xf32>
    %376 = vector.multi_reduction <add>, %375, %cst_212 [1] : vector<80x80xf32> to vector<80xf32>
    %377 = vector.shape_cast %376 : vector<80xf32> to vector<80x1xf32>
    %378 = tpu.reciprocal %377 {approx = true} : vector<80x1xf32> -> vector<80x1xf32>
    %379 = vector.broadcast %378 : vector<80x1xf32> to vector<80x80xf32>
    %380 = arith.mulf %375, %379 : vector<80x80xf32>
    %cst_213 = arith.constant dense<0.000000e+00> : vector<80x8xf32>
    %381 = tpu.matmul %380, %368, %cst_213 {dimension_numbers = #tpu.dot_dimension_numbers<[1], [0], [0], [1], [0, 0, 1, 1], [], []>} : vector<80x80xf32>, vector<80x8xf32>, vector<80x8xf32> -> vector<80x8xf32>
    %c1_214 = arith.constant 1 : index
    %c2_215 = arith.constant 2 : index
    %c0_216 = arith.constant 0 : index
    %c0_217 = arith.constant 0 : index
    %382 = vector.load %arg11[%c1_214, %c2_215, %c0_216, %c0_217] : memref<2x4x8x32xf32, #tpu.memory_space<vmem>>, vector<1x1x8x32xf32>
    %383 = vector.shape_cast %382 : vector<1x1x8x32xf32> to vector<8x32xf32>
    %cst_218 = arith.constant dense<0.000000e+00> : vector<80x32xf32>
    %384 = tpu.matmul %381, %383, %cst_218 {dimension_numbers = #tpu.dot_dimension_numbers<[1], [0], [0], [1], [0, 0, 1, 1], [], []>} : vector<80x8xf32>, vector<8x32xf32>, vector<80x32xf32> -> vector<80x32xf32>
    %385 = arith.addf %350, %384 : vector<80x32xf32>
    %386 = vector.extract_strided_slice %250 {offsets = [2, 24], sizes = [1, 8], strides = [1, 1]} : vector<16x64xf32> to vector<1x8xf32>
    %387 = vector.extract_strided_slice %250 {offsets = [3, 24], sizes = [1, 8], strides = [1, 1]} : vector<16x64xf32> to vector<1x8xf32>
    %388 = vector.extract_strided_slice %250 {offsets = [4, 24], sizes = [1, 8], strides = [1, 1]} : vector<16x64xf32> to vector<1x8xf32>
    %c1_219 = arith.constant 1 : index
    %c3_220 = arith.constant 3 : index
    %c0_221 = arith.constant 0 : index
    %c0_222 = arith.constant 0 : index
    %389 = vector.load %arg8[%c1_219, %c3_220, %c0_221, %c0_222] : memref<2x4x32x8xf32, #tpu.memory_space<vmem>>, vector<1x1x32x8xf32>
    %390 = vector.shape_cast %389 : vector<1x1x32x8xf32> to vector<32x8xf32>
    %cst_223 = arith.constant dense<0.000000e+00> : vector<80x8xf32>
    %391 = tpu.matmul %281, %390, %cst_223 {dimension_numbers = #tpu.dot_dimension_numbers<[1], [0], [0], [1], [0, 0, 1, 1], [], []>} : vector<80x32xf32>, vector<32x8xf32>, vector<80x8xf32> -> vector<80x8xf32>
    %392 = vector.broadcast %386 : vector<1x8xf32> to vector<80x8xf32>
    %393 = arith.addf %391, %392 : vector<80x8xf32>
    %c1_224 = arith.constant 1 : index
    %c3_225 = arith.constant 3 : index
    %c0_226 = arith.constant 0 : index
    %c0_227 = arith.constant 0 : index
    %394 = vector.load %arg9[%c1_224, %c3_225, %c0_226, %c0_227] : memref<2x4x32x8xf32, #tpu.memory_space<vmem>>, vector<1x1x32x8xf32>
    %395 = vector.shape_cast %394 : vector<1x1x32x8xf32> to vector<32x8xf32>
    %cst_228 = arith.constant dense<0.000000e+00> : vector<80x8xf32>
    %396 = tpu.matmul %281, %395, %cst_228 {dimension_numbers = #tpu.dot_dimension_numbers<[1], [0], [0], [1], [0, 0, 1, 1], [], []>} : vector<80x32xf32>, vector<32x8xf32>, vector<80x8xf32> -> vector<80x8xf32>
    %397 = vector.broadcast %387 : vector<1x8xf32> to vector<80x8xf32>
    %398 = arith.addf %396, %397 : vector<80x8xf32>
    %c1_229 = arith.constant 1 : index
    %c3_230 = arith.constant 3 : index
    %c0_231 = arith.constant 0 : index
    %c0_232 = arith.constant 0 : index
    %399 = vector.load %arg10[%c1_229, %c3_230, %c0_231, %c0_232] : memref<2x4x32x8xf32, #tpu.memory_space<vmem>>, vector<1x1x32x8xf32>
    %400 = vector.shape_cast %399 : vector<1x1x32x8xf32> to vector<32x8xf32>
    %cst_233 = arith.constant dense<0.000000e+00> : vector<80x8xf32>
    %401 = tpu.matmul %281, %400, %cst_233 {dimension_numbers = #tpu.dot_dimension_numbers<[1], [0], [0], [1], [0, 0, 1, 1], [], []>} : vector<80x32xf32>, vector<32x8xf32>, vector<80x8xf32> -> vector<80x8xf32>
    %402 = vector.broadcast %388 : vector<1x8xf32> to vector<80x8xf32>
    %403 = arith.addf %401, %402 : vector<80x8xf32>
    %cst_234 = arith.constant dense<0.000000e+00> : vector<80x80xf32>
    %404 = tpu.matmul %393, %398, %cst_234 {dimension_numbers = #tpu.dot_dimension_numbers<[1], [1], [0], [0], [0, 0, 1, 0], [], []>} : vector<80x8xf32>, vector<80x8xf32>, vector<80x80xf32> -> vector<80x80xf32>
    %405 = arith.addf %404, %25 : vector<80x80xf32>
    %cst_235 = arith.constant dense<0xFF800000> : vector<80xf32>
    %406 = vector.multi_reduction <maximumf>, %405, %cst_235 [1] : vector<80x80xf32> to vector<80xf32>
    %407 = vector.shape_cast %406 : vector<80xf32> to vector<80x1xf32>
    %408 = vector.broadcast %407 : vector<80x1xf32> to vector<80x80xf32>
    %409 = arith.subf %405, %408 : vector<80x80xf32>
    %410 = math.exp %409 : vector<80x80xf32>
    %cst_236 = arith.constant dense<0.000000e+00> : vector<80xf32>
    %411 = vector.multi_reduction <add>, %410, %cst_236 [1] : vector<80x80xf32> to vector<80xf32>
    %412 = vector.shape_cast %411 : vector<80xf32> to vector<80x1xf32>
    %413 = tpu.reciprocal %412 {approx = true} : vector<80x1xf32> -> vector<80x1xf32>
    %414 = vector.broadcast %413 : vector<80x1xf32> to vector<80x80xf32>
    %415 = arith.mulf %410, %414 : vector<80x80xf32>
    %cst_237 = arith.constant dense<0.000000e+00> : vector<80x8xf32>
    %416 = tpu.matmul %415, %403, %cst_237 {dimension_numbers = #tpu.dot_dimension_numbers<[1], [0], [0], [1], [0, 0, 1, 1], [], []>} : vector<80x80xf32>, vector<80x8xf32>, vector<80x8xf32> -> vector<80x8xf32>
    %c1_238 = arith.constant 1 : index
    %c3_239 = arith.constant 3 : index
    %c0_240 = arith.constant 0 : index
    %c0_241 = arith.constant 0 : index
    %417 = vector.load %arg11[%c1_238, %c3_239, %c0_240, %c0_241] : memref<2x4x8x32xf32, #tpu.memory_space<vmem>>, vector<1x1x8x32xf32>
    %418 = vector.shape_cast %417 : vector<1x1x8x32xf32> to vector<8x32xf32>
    %cst_242 = arith.constant dense<0.000000e+00> : vector<80x32xf32>
    %419 = tpu.matmul %416, %418, %cst_242 {dimension_numbers = #tpu.dot_dimension_numbers<[1], [0], [0], [1], [0, 0, 1, 1], [], []>} : vector<80x8xf32>, vector<8x32xf32>, vector<80x32xf32> -> vector<80x32xf32>
    %420 = arith.addf %385, %419 : vector<80x32xf32>
    %421 = arith.addf %248, %420 : vector<80x32xf32>
    %422 = vector.broadcast %253 : vector<1x32xf32> to vector<80x32xf32>
    %423 = arith.addf %421, %422 : vector<80x32xf32>
    %cst_243 = arith.constant dense<0.000000e+00> : vector<80xf32>
    %424 = vector.multi_reduction <add>, %423, %cst_243 [1] : vector<80x32xf32> to vector<80xf32>
    %425 = vector.shape_cast %424 : vector<80xf32> to vector<80x1xf32>
    %cst_244 = arith.constant 3.200000e+01 : f32
    %426 = vector.broadcast %cst_244 : f32 to vector<80x1xf32>
    %427 = arith.divf %425, %426 : vector<80x1xf32>
    %428 = vector.broadcast %427 : vector<80x1xf32> to vector<80x32xf32>
    %429 = arith.subf %423, %428 : vector<80x32xf32>
    %430 = vector.broadcast %427 : vector<80x1xf32> to vector<80x32xf32>
    %431 = arith.subf %423, %430 : vector<80x32xf32>
    %432 = arith.mulf %429, %431 : vector<80x32xf32>
    %cst_245 = arith.constant dense<0.000000e+00> : vector<80xf32>
    %433 = vector.multi_reduction <add>, %432, %cst_245 [1] : vector<80x32xf32> to vector<80xf32>
    %434 = vector.shape_cast %433 : vector<80xf32> to vector<80x1xf32>
    %cst_246 = arith.constant 3.200000e+01 : f32
    %435 = vector.broadcast %cst_246 : f32 to vector<80x1xf32>
    %436 = arith.divf %434, %435 : vector<80x1xf32>
    %437 = vector.broadcast %427 : vector<80x1xf32> to vector<80x32xf32>
    %438 = arith.subf %423, %437 : vector<80x32xf32>
    %cst_247 = arith.constant 9.99999974E-6 : f32
    %439 = vector.broadcast %cst_247 : f32 to vector<80x1xf32>
    %440 = arith.addf %436, %439 : vector<80x1xf32>
    %441 = math.rsqrt %440 : vector<80x1xf32>
    %442 = vector.broadcast %441 : vector<80x1xf32> to vector<80x32xf32>
    %443 = arith.mulf %438, %442 : vector<80x32xf32>
    %444 = vector.broadcast %254 : vector<1x32xf32> to vector<80x32xf32>
    %445 = arith.mulf %443, %444 : vector<80x32xf32>
    %446 = vector.broadcast %255 : vector<1x32xf32> to vector<80x32xf32>
    %447 = arith.addf %445, %446 : vector<80x32xf32>
    %c1_248 = arith.constant 1 : index
    %c0_249 = arith.constant 0 : index
    %c0_250 = arith.constant 0 : index
    %448 = vector.load %arg12[%c1_248, %c0_249, %c0_250] : memref<2x32x64xf32, #tpu.memory_space<vmem>>, vector<1x32x64xf32>
    %449 = vector.shape_cast %448 : vector<1x32x64xf32> to vector<32x64xf32>
    %cst_251 = arith.constant dense<0.000000e+00> : vector<80x64xf32>
    %450 = tpu.matmul %447, %449, %cst_251 {dimension_numbers = #tpu.dot_dimension_numbers<[1], [0], [0], [1], [0, 0, 1, 1], [], []>} : vector<80x32xf32>, vector<32x64xf32>, vector<80x64xf32> -> vector<80x64xf32>
    %451 = vector.broadcast %256 : vector<1x64xf32> to vector<80x64xf32>
    %452 = arith.addf %450, %451 : vector<80x64xf32>
    %cst_252 = arith.constant 5.000000e-01 : f32
    %453 = vector.broadcast %cst_252 : f32 to vector<80x64xf32>
    %454 = arith.mulf %453, %452 : vector<80x64xf32>
    %cst_253 = arith.constant 4.471500e-02 : f32
    %455 = vector.broadcast %cst_253 : f32 to vector<80x64xf32>
    %456 = arith.mulf %455, %452 : vector<80x64xf32>
    %457 = arith.mulf %456, %452 : vector<80x64xf32>
    %458 = arith.mulf %457, %452 : vector<80x64xf32>
    %459 = arith.addf %452, %458 : vector<80x64xf32>
    %cst_254 = arith.constant 0.797884583 : f32
    %460 = vector.broadcast %cst_254 : f32 to vector<80x64xf32>
    %461 = arith.mulf %460, %459 : vector<80x64xf32>
    %462 = math.tanh %461 : vector<80x64xf32>
    %cst_255 = arith.constant 1.000000e+00 : f32
    %463 = vector.broadcast %cst_255 : f32 to vector<80x64xf32>
    %464 = arith.addf %463, %462 : vector<80x64xf32>
    %465 = arith.mulf %454, %464 : vector<80x64xf32>
    %c1_256 = arith.constant 1 : index
    %c0_257 = arith.constant 0 : index
    %c0_258 = arith.constant 0 : index
    %466 = vector.load %arg13[%c1_256, %c0_257, %c0_258] : memref<2x64x32xf32, #tpu.memory_space<vmem>>, vector<1x64x32xf32>
    %467 = vector.shape_cast %466 : vector<1x64x32xf32> to vector<64x32xf32>
    %cst_259 = arith.constant dense<0.000000e+00> : vector<80x32xf32>
    %468 = tpu.matmul %465, %467, %cst_259 {dimension_numbers = #tpu.dot_dimension_numbers<[1], [0], [0], [1], [0, 0, 1, 1], [], []>} : vector<80x64xf32>, vector<64x32xf32>, vector<80x32xf32> -> vector<80x32xf32>
    %469 = vector.broadcast %257 : vector<1x32xf32> to vector<80x32xf32>
    %470 = arith.addf %468, %469 : vector<80x32xf32>
    %471 = arith.addf %423, %470 : vector<80x32xf32>
    %c0_260 = arith.constant 0 : index
    %c0_261 = arith.constant 0 : index
    %472 = vector.load %arg15[%c0_260, %c0_261] : memref<2x32xf32, #tpu.memory_space<vmem>>, vector<2x32xf32>
    %473 = vector.extract_strided_slice %471 {offsets = [32, 0], sizes = [1, 32], strides = [1, 1]} : vector<80x32xf32> to vector<1x32xf32>
    %474 = vector.extract_strided_slice %471 {offsets = [72, 0], sizes = [1, 32], strides = [1, 1]} : vector<80x32xf32> to vector<1x32xf32>
    %475 = tpu.concatenate %473, %474 in 0 : vector<1x32xf32>, vector<1x32xf32> -> vector<2x32xf32>
    %476 = vector.extract_strided_slice %472 {offsets = [0, 0], sizes = [1, 32], strides = [1, 1]} : vector<2x32xf32> to vector<1x32xf32>
    %477 = vector.extract_strided_slice %472 {offsets = [1, 0], sizes = [1, 32], strides = [1, 1]} : vector<2x32xf32> to vector<1x32xf32>
    %cst_262 = arith.constant dense<0.000000e+00> : vector<2xf32>
    %478 = vector.multi_reduction <add>, %475, %cst_262 [1] : vector<2x32xf32> to vector<2xf32>
    %479 = vector.shape_cast %478 : vector<2xf32> to vector<2x1xf32>
    %cst_263 = arith.constant 3.200000e+01 : f32
    %480 = vector.broadcast %cst_263 : f32 to vector<2x1xf32>
    %481 = arith.divf %479, %480 : vector<2x1xf32>
    %482 = vector.broadcast %481 : vector<2x1xf32> to vector<2x32xf32>
    %483 = arith.subf %475, %482 : vector<2x32xf32>
    %484 = vector.broadcast %481 : vector<2x1xf32> to vector<2x32xf32>
    %485 = arith.subf %475, %484 : vector<2x32xf32>
    %486 = arith.mulf %483, %485 : vector<2x32xf32>
    %cst_264 = arith.constant dense<0.000000e+00> : vector<2xf32>
    %487 = vector.multi_reduction <add>, %486, %cst_264 [1] : vector<2x32xf32> to vector<2xf32>
    %488 = vector.shape_cast %487 : vector<2xf32> to vector<2x1xf32>
    %cst_265 = arith.constant 3.200000e+01 : f32
    %489 = vector.broadcast %cst_265 : f32 to vector<2x1xf32>
    %490 = arith.divf %488, %489 : vector<2x1xf32>
    %491 = vector.broadcast %481 : vector<2x1xf32> to vector<2x32xf32>
    %492 = arith.subf %475, %491 : vector<2x32xf32>
    %cst_266 = arith.constant 9.99999974E-6 : f32
    %493 = vector.broadcast %cst_266 : f32 to vector<2x1xf32>
    %494 = arith.addf %490, %493 : vector<2x1xf32>
    %495 = math.rsqrt %494 : vector<2x1xf32>
    %496 = vector.broadcast %495 : vector<2x1xf32> to vector<2x32xf32>
    %497 = arith.mulf %492, %496 : vector<2x32xf32>
    %498 = vector.broadcast %476 : vector<1x32xf32> to vector<2x32xf32>
    %499 = arith.mulf %497, %498 : vector<2x32xf32>
    %500 = vector.broadcast %477 : vector<1x32xf32> to vector<2x32xf32>
    %501 = arith.addf %499, %500 : vector<2x32xf32>
    %c0_267 = arith.constant 0 : index
    %c0_268 = arith.constant 0 : index
    %c0_269 = arith.constant 0 : index
    %502 = vector.load %arg16[%c0_267, %c0_268, %c0_269] : memref<1x2x32xf32, #tpu.memory_space<vmem>>, vector<1x2x32xf32>
    %503 = vector.shape_cast %502 : vector<1x2x32xf32> to vector<2x32xf32>
    %504 = vector.shape_cast %501 : vector<2x32xf32> to vector<1x2x32xf32>
    tpu.vector_store %arg16[%c0_267, %c0_268, %c0_269], %504 {strides = array<i32>} : memref<1x2x32xf32, #tpu.memory_space<vmem>>, vector<1x2x32xf32>,
    return
  }
  func.func @transform_0(%arg0: i32) -> (i32, i32) {
    %c0_i32 = arith.constant 0 : i32
    %c0_i32_0 = arith.constant 0 : i32
    return %arg0, %c0_i32 : i32, i32
  }
  func.func @transform_1(%arg0: i32) -> (i32, i32) {
    %c0_i32 = arith.constant 0 : i32
    %c0_i32_0 = arith.constant 0 : i32
    %c0_i32_1 = arith.constant 0 : i32
    return %c0_i32, %c0_i32_0 : i32, i32
  }
  func.func @transform_2(%arg0: i32) -> (i32, i32) {
    %c0_i32 = arith.constant 0 : i32
    %c0_i32_0 = arith.constant 0 : i32
    %c0_i32_1 = arith.constant 0 : i32
    return %c0_i32, %c0_i32_0 : i32, i32
  }
  func.func @transform_3(%arg0: i32) -> (i32, i32) {
    %c0_i32 = arith.constant 0 : i32
    %c0_i32_0 = arith.constant 0 : i32
    %c0_i32_1 = arith.constant 0 : i32
    return %c0_i32, %c0_i32_0 : i32, i32
  }
  func.func @transform_4(%arg0: i32) -> (i32, i32) {
    %c0_i32 = arith.constant 0 : i32
    %c0_i32_0 = arith.constant 0 : i32
    %c0_i32_1 = arith.constant 0 : i32
    return %c0_i32, %c0_i32_0 : i32, i32
  }
  func.func @transform_5(%arg0: i32) -> (i32, i32) {
    %c0_i32 = arith.constant 0 : i32
    %c0_i32_0 = arith.constant 0 : i32
    %c0_i32_1 = arith.constant 0 : i32
    return %c0_i32, %c0_i32_0 : i32, i32
  }
  func.func @transform_6(%arg0: i32) -> (i32, i32) {
    %c0_i32 = arith.constant 0 : i32
    %c0_i32_0 = arith.constant 0 : i32
    %c0_i32_1 = arith.constant 0 : i32
    return %c0_i32, %c0_i32_0 : i32, i32
  }
  func.func @transform_7(%arg0: i32) -> (i32, i32, i32, i32) {
    %c0_i32 = arith.constant 0 : i32
    %c0_i32_0 = arith.constant 0 : i32
    %c0_i32_1 = arith.constant 0 : i32
    %c0_i32_2 = arith.constant 0 : i32
    %c0_i32_3 = arith.constant 0 : i32
    return %c0_i32, %c0_i32_0, %c0_i32_1, %c0_i32_2 : i32, i32, i32, i32
  }
  func.func @transform_8(%arg0: i32) -> (i32, i32, i32, i32) {
    %c0_i32 = arith.constant 0 : i32
    %c0_i32_0 = arith.constant 0 : i32
    %c0_i32_1 = arith.constant 0 : i32
    %c0_i32_2 = arith.constant 0 : i32
    %c0_i32_3 = arith.constant 0 : i32
    return %c0_i32, %c0_i32_0, %c0_i32_1, %c0_i32_2 : i32, i32, i32, i32
  }
  func.func @transform_9(%arg0: i32) -> (i32, i32, i32, i32) {
    %c0_i32 = arith.constant 0 : i32
    %c0_i32_0 = arith.constant 0 : i32
    %c0_i32_1 = arith.constant 0 : i32
    %c0_i32_2 = arith.constant 0 : i32
    %c0_i32_3 = arith.constant 0 : i32
    return %c0_i32, %c0_i32_0, %c0_i32_1, %c0_i32_2 : i32, i32, i32, i32
  }
  func.func @transform_10(%arg0: i32) -> (i32, i32, i32, i32) {
    %c0_i32 = arith.constant 0 : i32
    %c0_i32_0 = arith.constant 0 : i32
    %c0_i32_1 = arith.constant 0 : i32
    %c0_i32_2 = arith.constant 0 : i32
    %c0_i32_3 = arith.constant 0 : i32
    return %c0_i32, %c0_i32_0, %c0_i32_1, %c0_i32_2 : i32, i32, i32, i32
  }
  func.func @transform_11(%arg0: i32) -> (i32, i32, i32) {
    %c0_i32 = arith.constant 0 : i32
    %c0_i32_0 = arith.constant 0 : i32
    %c0_i32_1 = arith.constant 0 : i32
    %c0_i32_2 = arith.constant 0 : i32
    return %c0_i32, %c0_i32_0, %c0_i32_1 : i32, i32, i32
  }
  func.func @transform_12(%arg0: i32) -> (i32, i32, i32) {
    %c0_i32 = arith.constant 0 : i32
    %c0_i32_0 = arith.constant 0 : i32
    %c0_i32_1 = arith.constant 0 : i32
    %c0_i32_2 = arith.constant 0 : i32
    return %c0_i32, %c0_i32_0, %c0_i32_1 : i32, i32, i32
  }
  func.func @transform_13(%arg0: i32) -> (i32, i32, i32) {
    %c0_i32 = arith.constant 0 : i32
    %c0_i32_0 = arith.constant 0 : i32
    %c0_i32_1 = arith.constant 0 : i32
    %c0_i32_2 = arith.constant 0 : i32
    return %c0_i32, %c0_i32_0, %c0_i32_1 : i32, i32, i32
  }
  func.func @transform_14(%arg0: i32) -> (i32, i32) {
    %c0_i32 = arith.constant 0 : i32
    %c0_i32_0 = arith.constant 0 : i32
    %c0_i32_1 = arith.constant 0 : i32
    return %c0_i32, %c0_i32_0 : i32, i32
  }
  func.func @transform_15(%arg0: i32) -> (i32, i32, i32) {
    %c0_i32 = arith.constant 0 : i32
    %c0_i32_0 = arith.constant 0 : i32
    %c0_i32_1 = arith.constant 0 : i32
    return %arg0, %c0_i32, %c0_i32_0 : i32, i32, i32
  }
}

</mosaic_0001>

<llo_original>
// kernel: forward.1
$region0: #{forward.1}
  #allocation0 [shape = 'u32[]', space=smem, size = 0x4, offset = 0x4, fixed_abs, tag = 'smem constant byte address 0x4 - core index']
  #allocation1 [shape = 'u32[144,128]{1,0:T(1,128)}', space=vmem, size = 0x12000, scoped, tag = 'internal scratch']
  %s0 = inlined_call_operand.vmem [shape: f32[32,128], index: 0, kind: input, shape index: {}]
  %s1 = inlined_call_operand.vmem [shape: f32[128,64], index: 1, kind: input, shape index: {}]
  %s2 = inlined_call_operand.vmem [shape: f32[128,64], index: 2, kind: input, shape index: {}]
  %s3 = inlined_call_operand.vmem [shape: f32[64,32], index: 3, kind: input, shape index: {}]
  %s4 = inlined_call_operand.vmem [shape: f32[16,32], index: 4, kind: input, shape index: {}]
  %s5 = inlined_call_operand.vmem [shape: f32[80,32], index: 5, kind: input, shape index: {}]
  %s6 = inlined_call_operand.vmem [shape: f32[80,80], index: 6, kind: input, shape index: {}]
  %s7 = inlined_call_operand.vmem [shape: f32[2,4,32,8], index: 7, kind: input, shape index: {}]
  %s8 = inlined_call_operand.vmem [shape: f32[2,4,32,8], index: 8, kind: input, shape index: {}]
  %s9 = inlined_call_operand.vmem [shape: f32[2,4,32,8], index: 9, kind: input, shape index: {}]
  %s10 = inlined_call_operand.vmem [shape: f32[2,4,8,32], index: 10, kind: input, shape index: {}]
  %s11 = inlined_call_operand.vmem [shape: f32[2,32,64], index: 11, kind: input, shape index: {}]
  %s12 = inlined_call_operand.vmem [shape: f32[2,64,32], index: 12, kind: input, shape index: {}]
  %s13 = inlined_call_operand.vmem [shape: f32[2,16,64], index: 13, kind: input, shape index: {}]
  %s14 = inlined_call_operand.vmem [shape: f32[2,32], index: 14, kind: input, shape index: {}]
  %s15 = inlined_call_operand.hbm [shape: f32[1,2,32], index: 15, kind: output, shape index: {}]
  %s16 = sld [smem:[#allocation0]]
  $region70: #{forward.1} parent=0
    _
  %s18 = ssub.s32 1, %s16
  %s19 = scalar_select 0, %s18, %s16
  $region1: #{forward.1} parent=0
    #allocation2 [shape = 'u8[1024]{0}', space=vmem, size = 0x400, scoped, tag = 'output window, operand 0, single buffered']
    #allocation3 [shape = 's32[1]{0}', space=sflag, size = 0x4, scoped, tag = 'scoped memory for forward.1']
    %20 = vsyncpa [#allocation3], 0
    // Predicated region
    $region2: #{forward.1} parent=1 // pred_check
      _
    $region3: #{forward.1} parent=1 // pred_check_branch
      %22 = sbr.rel (0) target = $region5
    $region4: #{forward.1} parent=1 // pred_region
      _
    $region5: #{forward.1} parent=1 // pred_fallthru
      _
    // Predicated region
    $region6: #{forward.1} parent=1 // pred_check
      _
    $region7: #{forward.1} parent=1 // pred_check_branch
      %24 = sbr.rel (0) target = $region9
    $region8: #{forward.1} parent=1 // pred_region
      _
    $region9: #{forward.1} parent=1 // pred_fallthru
      _
    // Predicated region
    $region10: #{forward.1} parent=1 // pred_check
      _
    $region11: #{forward.1} parent=1 // pred_check_branch
      %26 = sbr.rel (0) target = $region13
    $region12: #{forward.1} parent=1 // pred_region
      _
    $region13: #{forward.1} parent=1 // pred_fallthru
      _
    // Predicated region
    $region14: #{forward.1} parent=1 // pred_check
      _
    $region15: #{forward.1} parent=1 // pred_check_branch
      %28 = sbr.rel (0) target = $region17
    $region16: #{forward.1} parent=1 // pred_region
      _
    $region17: #{forward.1} parent=1 // pred_fallthru
      _
    // Predicated region
    $region18: #{forward.1} parent=1 // pred_check
      _
    $region19: #{forward.1} parent=1 // pred_check_branch
      %30 = sbr.rel (0) target = $region21
    $region20: #{forward.1} parent=1 // pred_region
      _
    $region21: #{forward.1} parent=1 // pred_fallthru
      _
    // Predicated region
    $region22: #{forward.1} parent=1 // pred_check
      _
    $region23: #{forward.1} parent=1 // pred_check_branch
      %32 = sbr.rel (0) target = $region25
    $region24: #{forward.1} parent=1 // pred_region
      _
    $region25: #{forward.1} parent=1 // pred_fallthru
      _
    // Predicated region
    $region26: #{forward.1} parent=1 // pred_check
      _
    $region27: #{forward.1} parent=1 // pred_check_branch
      %34 = sbr.rel (0) target = $region29
    $region28: #{forward.1} parent=1 // pred_region
      _
    $region29: #{forward.1} parent=1 // pred_fallthru
      _
    // Predicated region
    $region30: #{forward.1} parent=1 // pred_check
      _
    $region31: #{forward.1} parent=1 // pred_check_branch
      %36 = sbr.rel (0) target = $region33
    $region32: #{forward.1} parent=1 // pred_region
      _
    $region33: #{forward.1} parent=1 // pred_fallthru
      _
    // Predicated region
    $region34: #{forward.1} parent=1 // pred_check
      _
    $region35: #{forward.1} parent=1 // pred_check_branch
      %38 = sbr.rel (0) target = $region37
    $region36: #{forward.1} parent=1 // pred_region
      _
    $region37: #{forward.1} parent=1 // pred_fallthru
      _
    // Predicated region
    $region38: #{forward.1} parent=1 // pred_check
      _
    $region39: #{forward.1} parent=1 // pred_check_branch
      %40 = sbr.rel (0) target = $region41
    $region40: #{forward.1} parent=1 // pred_region
      _
    $region41: #{forward.1} parent=1 // pred_fallthru
      _
    // Predicated region
    $region42: #{forward.1} parent=1 // pred_check
      _
    $region43: #{forward.1} parent=1 // pred_check_branch
      %42 = sbr.rel (0) target = $region45
    $region44: #{forward.1} parent=1 // pred_region
      _
    $region45: #{forward.1} parent=1 // pred_fallthru
      _
    // Predicated region
    $region46: #{forward.1} parent=1 // pred_check
      _
    $region47: #{forward.1} parent=1 // pred_check_branch
      %44 = sbr.rel (0) target = $region49
    $region48: #{forward.1} parent=1 // pred_region
      _
    $region49: #{forward.1} parent=1 // pred_fallthru
      _
    // Predicated region
    $region50: #{forward.1} parent=1 // pred_check
      _
    $region51: #{forward.1} parent=1 // pred_check_branch
      %46 = sbr.rel (0) target = $region53
    $region52: #{forward.1} parent=1 // pred_region
      _
    $region53: #{forward.1} parent=1 // pred_fallthru
      _
    // Predicated region
    $region54: #{forward.1} parent=1 // pred_check
      _
    $region55: #{forward.1} parent=1 // pred_check_branch
      %48 = sbr.rel (0) target = $region57
    $region56: #{forward.1} parent=1 // pred_region
      _
    $region57: #{forward.1} parent=1 // pred_fallthru
      _
    // Predicated region
    $region58: #{forward.1} parent=1 // pred_check
      _
    $region59: #{forward.1} parent=1 // pred_check_branch
      %50 = sbr.rel (0) target = $region61
    $region60: #{forward.1} parent=1 // pred_region
      _
    $region61: #{forward.1} parent=1 // pred_fallthru
      _
    %v51 = vld [vmem:[%s0] sm:$0xff]
    %v52 = vld [vmem:[%s0 + $0x8] sm:$0xff]
    %v53 = vld [vmem:[%s0 + $0x10] sm:$0xff]
    %v54 = vld [vmem:[%s0 + $0x18] sm:$0xff]
    %v55 = vld [vmem:[%s1] sm:$0xff]
    %v56 = vld [vmem:[%s1 + $0x8] sm:$0xff]
    %v57 = vld [vmem:[%s1 + $0x10] sm:$0xff]
    %v58 = vld [vmem:[%s1 + $0x18] sm:$0xff]
    %v59 = vld [vmem:[%s1 + $0x20] sm:$0xff]
    %v60 = vld [vmem:[%s1 + $0x28] sm:$0xff]
    %v61 = vld [vmem:[%s1 + $0x30] sm:$0xff]
    %v62 = vld [vmem:[%s1 + $0x38] sm:$0xff]
    %v63 = vld [vmem:[%s1 + $0x40] sm:$0xff]
    %v64 = vld [vmem:[%s1 + $0x48] sm:$0xff]
    %v65 = vld [vmem:[%s1 + $0x50] sm:$0xff]
    %v66 = vld [vmem:[%s1 + $0x58] sm:$0xff]
    %v67 = vld [vmem:[%s1 + $0x60] sm:$0xff]
    %v68 = vld [vmem:[%s1 + $0x68] sm:$0xff]
    %v69 = vld [vmem:[%s1 + $0x70] sm:$0xff]
    %v70 = vld [vmem:[%s1 + $0x78] sm:$0xff]
    %71 = vmatprep.subr.mxu0 0.0
    %72 = vmatpush1.msra.mxu0 %v55
    %73 = vmatprep.subr.mxu0 0.0
    %74 = vmatpush1.msra.mxu0 %v56
    %75 = vmatprep.subr.mxu0 0.0
    %76 = vmatpush1.msra.mxu0 %v57
    %77 = vmatprep.subr.mxu0 0.0
    %78 = vmatpush1.msra.mxu0 %v58
    %79 = vmatprep.subr.mxu0 0.0
    %80 = vmatpush1.msra.mxu0 %v59
    %81 = vmatprep.subr.mxu0 0.0
    %82 = vmatpush1.msra.mxu0 %v60
    %83 = vmatprep.subr.mxu0 0.0
    %84 = vmatpush1.msra.mxu0 %v61
    %85 = vmatprep.subr.mxu0 0.0
    %86 = vmatpush1.msra.mxu0 %v62
    %87 = vmatprep.subr.mxu0 0.0
    %88 = vmatpush1.msra.mxu0 %v63
    %89 = vmatprep.subr.mxu0 0.0
    %90 = vmatpush1.msra.mxu0 %v64
    %91 = vmatprep.subr.mxu0 0.0
    %92 = vmatpush1.msra.mxu0 %v65
    %93 = vmatprep.subr.mxu0 0.0
    %94 = vmatpush1.msra.mxu0 %v66
    %95 = vmatprep.subr.mxu0 0.0
    %96 = vmatpush1.msra.mxu0 %v67
    %97 = vmatprep.subr.mxu0 0.0
    %98 = vmatpush1.msra.mxu0 %v68
    %99 = vmatprep.subr.mxu0 0.0
    %100 = vmatpush1.msra.mxu0 %v69
    %101 = vmatprep.subr.mxu0 0.0
    %102 = vmatpush1.msra.mxu0 %v70
    %103 = vmatprep.subr.mxu0 0.0
    %104 = vmatpush1.msra.mxu0 0.0
    %105 = vmatprep.subr.mxu0 0.0
    %106 = vmatpush1.msra.mxu0 0.0
    %107 = vmatprep.subr.mxu0 0.0
    %108 = vmatpush1.msra.mxu0 0.0
    %109 = vmatprep.subr.mxu0 0.0
    %110 = vmatpush1.msra.mxu0 0.0
    %111 = vmatprep.subr.mxu0 0.0
    %112 = vmatpush1.msra.mxu0 0.0
    %113 = vmatprep.subr.mxu0 0.0
    %114 = vmatpush1.msra.mxu0 0.0
    %115 = vmatprep.subr.mxu0 0.0
    %116 = vmatpush1.msra.mxu0 0.0
    %117 = vmatprep.subr.mxu0 0.0
    %118 = vmatpush1.msra.mxu0 0.0
    %119 = vmatprep.subr.mxu0 0.0
    %120 = vmatpush1.msra.mxu0 0.0
    %121 = vmatprep.subr.mxu0 0.0
    %122 = vmatpush1.msra.mxu0 0.0
    %123 = vmatprep.subr.mxu0 0.0
    %124 = vmatpush1.msra.mxu0 0.0
    %125 = vmatprep.subr.mxu0 0.0
    %126 = vmatpush1.msra.mxu0 0.0
    %127 = vmatprep.subr.mxu0 0.0
    %128 = vmatpush1.msra.mxu0 0.0
    %129 = vmatprep.subr.mxu0 0.0
    %130 = vmatpush1.msra.mxu0 0.0
    %131 = vmatprep.subr.mxu0 0.0
    %132 = vmatpush1.msra.mxu0 0.0
    %133 = vmatprep.subr.mxu0 0.0
    %134 = vmatpush1.msra.mxu0 0.0
    %135 = vmatprep.mubr.f32.mxu0 0.0
    %136 = vmatmul.mubr.f32.gmra.mrb[0].mxu0 %v51
    %v137 = vpop.f32.mrb[0].mxu0
    %v138 = vadd.f32 0.0, %v137
    %v139 = vpop.f32.mrb[0].mxu0
    %140 = vmatprep.mubr.f32.mxu0 0.0
    %141 = vmatmul.mubr.f32.gmra.mrb[0].mxu0 %v52
    %v142 = vpop.f32.mrb[0].mxu0
    %v143 = vadd.f32 0.0, %v142
    %v144 = vpop.f32.mrb[0].mxu0
    %145 = vmatprep.mubr.f32.mxu0 0.0
    %146 = vmatmul.mubr.f32.gmra.mrb[0].mxu0 %v53
    %v147 = vpop.f32.mrb[0].mxu0
    %v148 = vadd.f32 0.0, %v147
    %v149 = vpop.f32.mrb[0].mxu0
    %150 = vmatprep.mubr.f32.mxu0 0.0
    %151 = vmatmul.mubr.f32.gmra.mrb[0].mxu0 %v54
    %v152 = vpop.f32.mrb[0].mxu0
    %v153 = vadd.f32 0.0, %v152
    %v154 = vpop.f32.mrb[0].mxu0
    %155 = vdwg.mxu0
    %v156 = vld [vmem:[%s2] sm:$0xff]
    %v157 = vld [vmem:[%s2 + $0x8] sm:$0xff]
    %v158 = vld [vmem:[%s2 + $0x10] sm:$0xff]
    %v159 = vld [vmem:[%s2 + $0x18] sm:$0xff]
    %v160 = vld [vmem:[%s2 + $0x20] sm:$0xff]
    %v161 = vld [vmem:[%s2 + $0x28] sm:$0xff]
    %v162 = vld [vmem:[%s2 + $0x30] sm:$0xff]
    %v163 = vld [vmem:[%s2 + $0x38] sm:$0xff]
    %v164 = vld [vmem:[%s2 + $0x40] sm:$0xff]
    %v165 = vld [vmem:[%s2 + $0x48] sm:$0xff]
    %v166 = vld [vmem:[%s2 + $0x50] sm:$0xff]
    %v167 = vld [vmem:[%s2 + $0x58] sm:$0xff]
    %v168 = vld [vmem:[%s2 + $0x60] sm:$0xff]
    %v169 = vld [vmem:[%s2 + $0x68] sm:$0xff]
    %v170 = vld [vmem:[%s2 + $0x70] sm:$0xff]
    %v171 = vld [vmem:[%s2 + $0x78] sm:$0xff]
    %172 = vmatprep.subr.mxu0 0.0
    %173 = vmatpush1.msra.mxu0 %v156
    %174 = vmatprep.subr.mxu0 0.0
    %175 = vmatpush1.msra.mxu0 %v157
    %176 = vmatprep.subr.mxu0 0.0
    %177 = vmatpush1.msra.mxu0 %v158
    %178 = vmatprep.subr.mxu0 0.0
    %179 = vmatpush1.msra.mxu0 %v159
    %180 = vmatprep.subr.mxu0 0.0
    %181 = vmatpush1.msra.mxu0 %v160
    %182 = vmatprep.subr.mxu0 0.0
    %183 = vmatpush1.msra.mxu0 %v161
    %184 = vmatprep.subr.mxu0 0.0
    %185 = vmatpush1.msra.mxu0 %v162
    %186 = vmatprep.subr.mxu0 0.0
    %187 = vmatpush1.msra.mxu0 %v163
    %188 = vmatprep.subr.mxu0 0.0
    %189 = vmatpush1.msra.mxu0 %v164
    %190 = vmatprep.subr.mxu0 0.0
    %191 = vmatpush1.msra.mxu0 %v165
    %192 = vmatprep.subr.mxu0 0.0
    %193 = vmatpush1.msra.mxu0 %v166
    %194 = vmatprep.subr.mxu0 0.0
    %195 = vmatpush1.msra.mxu0 %v167
    %196 = vmatprep.subr.mxu0 0.0
    %197 = vmatpush1.msra.mxu0 %v168
    %198 = vmatprep.subr.mxu0 0.0
    %199 = vmatpush1.msra.mxu0 %v169
    %200 = vmatprep.subr.mxu0 0.0
    %201 = vmatpush1.msra.mxu0 %v170
    %202 = vmatprep.subr.mxu0 0.0
    %203 = vmatpush1.msra.mxu0 %v171
    %204 = vmatprep.subr.mxu0 0.0
    %205 = vmatpush1.msra.mxu0 0.0
    %206 = vmatprep.subr.mxu0 0.0
    %207 = vmatpush1.msra.mxu0 0.0
    %208 = vmatprep.subr.mxu0 0.0
    %209 = vmatpush1.msra.mxu0 0.0
    %210 = vmatprep.subr.mxu0 0.0
    %211 = vmatpush1.msra.mxu0 0.0
    %212 = vmatprep.subr.mxu0 0.0
    %213 = vmatpush1.msra.mxu0 0.0
    %214 = vmatprep.subr.mxu0 0.0
    %215 = vmatpush1.msra.mxu0 0.0
    %216 = vmatprep.subr.mxu0 0.0
    %217 = vmatpush1.msra.mxu0 0.0
    %218 = vmatprep.subr.mxu0 0.0
    %219 = vmatpush1.msra.mxu0 0.0
    %220 = vmatprep.subr.mxu0 0.0
    %221 = vmatpush1.msra.mxu0 0.0
    %222 = vmatprep.subr.mxu0 0.0
    %223 = vmatpush1.msra.mxu0 0.0
    %224 = vmatprep.subr.mxu0 0.0
    %225 = vmatpush1.msra.mxu0 0.0
    %226 = vmatprep.subr.mxu0 0.0
    %227 = vmatpush1.msra.mxu0 0.0
    %228 = vmatprep.subr.mxu0 0.0
    %229 = vmatpush1.msra.mxu0 0.0
    %230 = vmatprep.subr.mxu0 0.0
    %231 = vmatpush1.msra.mxu0 0.0
    %232 = vmatprep.subr.mxu0 0.0
    %233 = vmatpush1.msra.mxu0 0.0
    %234 = vmatprep.subr.mxu0 0.0
    %235 = vmatpush1.msra.mxu0 0.0
    %236 = vmatprep.mubr.f32.mxu0 0.0
    %237 = vmatmul.mubr.f32.gmra.mrb[0].mxu0 %v51
    %v238 = vpop.f32.mrb[0].mxu0
    %v239 = vadd.f32 0.0, %v238
    %v240 = vpop.f32.mrb[0].mxu0
    %241 = vmatprep.mubr.f32.mxu0 0.0
    %242 = vmatmul.mubr.f32.gmra.mrb[0].mxu0 %v52
    %v243 = vpop.f32.mrb[0].mxu0
    %v244 = vadd.f32 0.0, %v243
    %v245 = vpop.f32.mrb[0].mxu0
    %246 = vmatprep.mubr.f32.mxu0 0.0
    %247 = vmatmul.mubr.f32.gmra.mrb[0].mxu0 %v53
    %v248 = vpop.f32.mrb[0].mxu0
    %v249 = vadd.f32 0.0, %v248
    %v250 = vpop.f32.mrb[0].mxu0
    %251 = vmatprep.mubr.f32.mxu0 0.0
    %252 = vmatmul.mubr.f32.gmra.mrb[0].mxu0 %v54
    %v253 = vpop.f32.mrb[0].mxu0
    %v254 = vadd.f32 0.0, %v253
    %v255 = vpop.f32.mrb[0].mxu0
    %256 = vdwg.mxu0
    %v257 = vmul.f32 %v138, %v138
    %v258 = vmul.f32 %v143, %v143
    %v259 = vmul.f32 %v148, %v148
    %v260 = vmul.f32 %v153, %v153
    %v261 = vmul.f32 %v239, %v239
    %v262 = vmul.f32 %v244, %v244
    %v263 = vmul.f32 %v249, %v249
    %v264 = vmul.f32 %v254, %v254
    %v265 = vadd.f32 %v257, %v261
    %v266 = vadd.f32 %v258, %v262
    %v267 = vadd.f32 %v259, %v263
    %v268 = vadd.f32 %v260, %v264
    %v269 = vld [vmem:[%s3] sm:$0xff]
    %v270 = vld [vmem:[%s3 + $0x8] sm:$0xff]
    %v271 = vld [vmem:[%s3 + $0x10] sm:$0xff]
    %v272 = vld [vmem:[%s3 + $0x18] sm:$0xff]
    %v273 = vld [vmem:[%s3 + $0x20] sm:$0xff]
    %v274 = vld [vmem:[%s3 + $0x28] sm:$0xff]
    %v275 = vld [vmem:[%s3 + $0x30] sm:$0xff]
    %v276 = vld [vmem:[%s3 + $0x38] sm:$0xff]
    %vm277 = vcmask 523264
    %v279 = vsel %vm277, %v265, 0
    %v282 = vsel %vm277, %v266, 0
    %v285 = vsel %vm277, %v267, 0
    %v288 = vsel %vm277, %v268, 0
    %290 = vmatprep.subr.mxu0 0.0
    %291 = vmatpush1.msra.mxu0 %v269
    %292 = vmatprep.subr.mxu0 0.0
    %293 = vmatpush1.msra.mxu0 %v270
    %294 = vmatprep.subr.mxu0 0.0
    %295 = vmatpush1.msra.mxu0 %v271
    %296 = vmatprep.subr.mxu0 0.0
    %297 = vmatpush1.msra.mxu0 %v272
    %298 = vmatprep.subr.mxu0 0.0
    %299 = vmatpush1.msra.mxu0 %v273
    %300 = vmatprep.subr.mxu0 0.0
    %301 = vmatpush1.msra.mxu0 %v274
    %302 = vmatprep.subr.mxu0 0.0
    %303 = vmatpush1.msra.mxu0 %v275
    %304 = vmatprep.subr.mxu0 0.0
    %305 = vmatpush1.msra.mxu0 %v276
    %306 = vmatprep.subr.mxu0 0.0
    %307 = vmatpush1.msra.mxu0 0.0
    %308 = vmatprep.subr.mxu0 0.0
    %309 = vmatpush1.msra.mxu0 0.0
    %310 = vmatprep.subr.mxu0 0.0
    %311 = vmatpush1.msra.mxu0 0.0
    %312 = vmatprep.subr.mxu0 0.0
    %313 = vmatpush1.msra.mxu0 0.0
    %314 = vmatprep.subr.mxu0 0.0
    %315 = vmatpush1.msra.mxu0 0.0
    %316 = vmatprep.subr.mxu0 0.0
    %317 = vmatpush1.msra.mxu0 0.0
    %318 = vmatprep.subr.mxu0 0.0
    %319 = vmatpush1.msra.mxu0 0.0
    %320 = vmatprep.subr.mxu0 0.0
    %321 = vmatpush1.msra.mxu0 0.0
    %322 = vmatprep.subr.mxu0 0.0
    %323 = vmatpush1.msra.mxu0 0.0
    %324 = vmatprep.subr.mxu0 0.0
    %325 = vmatpush1.msra.mxu0 0.0
    %326 = vmatprep.subr.mxu0 0.0
    %327 = vmatpush1.msra.mxu0 0.0
    %328 = vmatprep.subr.mxu0 0.0
    %329 = vmatpush1.msra.mxu0 0.0
    %330 = vmatprep.subr.mxu0 0.0
    %331 = vmatpush1.msra.mxu0 0.0
    %332 = vmatprep.subr.mxu0 0.0
    %333 = vmatpush1.msra.mxu0 0.0
    %334 = vmatprep.subr.mxu0 0.0
    %335 = vmatpush1.msra.mxu0 0.0
    %336 = vmatprep.subr.mxu0 0.0
    %337 = vmatpush1.msra.mxu0 0.0
    %338 = vmatprep.subr.mxu0 0.0
    %339 = vmatpush1.msra.mxu0 0.0
    %340 = vmatprep.subr.mxu0 0.0
    %341 = vmatpush1.msra.mxu0 0.0
    %342 = vmatprep.subr.mxu0 0.0
    %343 = vmatpush1.msra.mxu0 0.0
    %344 = vmatprep.subr.mxu0 0.0
    %345 = vmatpush1.msra.mxu0 0.0
    %346 = vmatprep.subr.mxu0 0.0
    %347 = vmatpush1.msra.mxu0 0.0
    %348 = vmatprep.subr.mxu0 0.0
    %349 = vmatpush1.msra.mxu0 0.0
    %350 = vmatprep.subr.mxu0 0.0
    %351 = vmatpush1.msra.mxu0 0.0
    %352 = vmatprep.subr.mxu0 0.0
    %353 = vmatpush1.msra.mxu0 0.0
    %354 = vmatprep.mubr.f32.mxu0 0.0
    %355 = vmatmul.mubr.f32.gmra.mrb[0].mxu0 %v279
    %v356 = vpop.f32.mrb[0].mxu0
    %v357 = vadd.f32 1e-06, %v356
    %v358 = vpop.f32.mrb[0].mxu0
    %359 = vmatprep.mubr.f32.mxu0 0.0
    %360 = vmatmul.mubr.f32.gmra.mrb[0].mxu0 %v282
    %v361 = vpop.f32.mrb[0].mxu0
    %v362 = vadd.f32 1e-06, %v361
    %v363 = vpop.f32.mrb[0].mxu0
    %364 = vmatprep.mubr.f32.mxu0 0.0
    %365 = vmatmul.mubr.f32.gmra.mrb[0].mxu0 %v285
    %v366 = vpop.f32.mrb[0].mxu0
    %v367 = vadd.f32 1e-06, %v366
    %v368 = vpop.f32.mrb[0].mxu0
    %369 = vmatprep.mubr.f32.mxu0 0.0
    %370 = vmatmul.mubr.f32.gmra.mrb[0].mxu0 %v288
    %v371 = vpop.f32.mrb[0].mxu0
    %v372 = vadd.f32 1e-06, %v371
    %v373 = vpop.f32.mrb[0].mxu0
    %374 = vdwg.mxu0
    %v375 = vlog2.pop %v357
    %v376 = vmul.f32 %v375, 0.6931472
    %v377 = vlog2.pop %v362
    %v378 = vmul.f32 %v377, 0.6931472
    %v379 = vlog2.pop %v367
    %v380 = vmul.f32 %v379, 0.6931472
    %v381 = vlog2.pop %v372
    %v382 = vmul.f32 %v381, 0.6931472
    %v383 = vld [vmem:[%s4] sm:$0xff]
    %v384 = vld [vmem:[%s4 + $0x8] sm:$0xff]
    %385 = vxpose.xlu0.b32.start [1/16] %v376, 128
    %386 = vxpose.xlu0.b32.cont [2/16] %v378, 128
    %387 = vxpose.xlu0.b32.cont [3/16] 0.0, 128
    %388 = vxpose.xlu0.b32.cont [4/16] 0.0, 128
    %389 = vxpose.xlu0.b32.cont [5/16] 0.0, 128
    %390 = vxpose.xlu0.b32.cont [6/16] 0.0, 128
    %391 = vxpose.xlu0.b32.cont [7/16] 0.0, 128
    %392 = vxpose.xlu0.b32.cont [8/16] 0.0, 128
    %393 = vxpose.xlu0.b32.cont [9/16] 0.0, 128
    %394 = vxpose.xlu0.b32.cont [10/16] 0.0, 128
    %395 = vxpose.xlu0.b32.cont [11/16] 0.0, 128
    %396 = vxpose.xlu0.b32.cont [12/16] 0.0, 128
    %397 = vxpose.xlu0.b32.cont [13/16] 0.0, 128
    %398 = vxpose.xlu0.b32.cont [14/16] 0.0, 128
    %399 = vxpose.xlu0.b32.cont [15/16] 0.0, 128
    %400 = vxpose.xlu0.b32.end [16/16] 0.0, 128
    %v401 = vpop.trf.xlu0
    %v402 = vpop.trf.xlu0
    %v403 = vpop.trf.xlu0
    %v404 = vpop.trf.xlu0
    %v405 = vpop.trf.xlu0
    %v406 = vpop.trf.xlu0
    %v407 = vpop.trf.xlu0
    %v408 = vpop.trf.xlu0
    %v409 = vpop.trf.xlu0
    %v410 = vpop.trf.xlu0
    %v411 = vpop.trf.xlu0
    %v412 = vpop.trf.xlu0
    %v413 = vpop.trf.xlu0
    %v414 = vpop.trf.xlu0
    %v415 = vpop.trf.xlu0
    %v416 = vpop.trf.xlu0
    %vm417 = vcmask 130048
    %v419 = vsel %vm417, %v401, 0
    %v422 = vsel %vm417, %v402, 0
    %v425 = vsel %vm417, %v403, 0
    %v428 = vsel %vm417, %v404, 0
    %430 = vmatprep.subr.mxu0 0.0
    %431 = vmatpush1.msra.mxu0 %v383
    %432 = vmatprep.subr.mxu0 0.0
    %433 = vmatpush1.msra.mxu0 %v384
    %434 = vmatprep.subr.mxu0 0.0
    %435 = vmatpush1.msra.mxu0 0.0
    %436 = vmatprep.subr.mxu0 0.0
    %437 = vmatpush1.msra.mxu0 0.0
    %438 = vmatprep.subr.mxu0 0.0
    %439 = vmatpush1.msra.mxu0 0.0
    %440 = vmatprep.subr.mxu0 0.0
    %441 = vmatpush1.msra.mxu0 0.0
    %442 = vmatprep.subr.mxu0 0.0
    %443 = vmatpush1.msra.mxu0 0.0
    %444 = vmatprep.subr.mxu0 0.0
    %445 = vmatpush1.msra.mxu0 0.0
    %446 = vmatprep.subr.mxu0 0.0
    %447 = vmatpush1.msra.mxu0 0.0
    %448 = vmatprep.subr.mxu0 0.0
    %449 = vmatpush1.msra.mxu0 0.0
    %450 = vmatprep.subr.mxu0 0.0
    %451 = vmatpush1.msra.mxu0 0.0
    %452 = vmatprep.subr.mxu0 0.0
    %453 = vmatpush1.msra.mxu0 0.0
    %454 = vmatprep.subr.mxu0 0.0
    %455 = vmatpush1.msra.mxu0 0.0
    %456 = vmatprep.subr.mxu0 0.0
    %457 = vmatpush1.msra.mxu0 0.0
    %458 = vmatprep.subr.mxu0 0.0
    %459 = vmatpush1.msra.mxu0 0.0
    %460 = vmatprep.subr.mxu0 0.0
    %461 = vmatpush1.msra.mxu0 0.0
    %462 = vmatprep.subr.mxu0 0.0
    %463 = vmatpush1.msra.mxu0 0.0
    %464 = vmatprep.subr.mxu0 0.0
    %465 = vmatpush1.msra.mxu0 0.0
    %466 = vmatprep.subr.mxu0 0.0
    %467 = vmatpush1.msra.mxu0 0.0
    %468 = vmatprep.subr.mxu0 0.0
    %469 = vmatpush1.msra.mxu0 0.0
    %470 = vmatprep.subr.mxu0 0.0
    %471 = vmatpush1.msra.mxu0 0.0
    %472 = vmatprep.subr.mxu0 0.0
    %473 = vmatpush1.msra.mxu0 0.0
    %474 = vmatprep.subr.mxu0 0.0
    %475 = vmatpush1.msra.mxu0 0.0
    %476 = vmatprep.subr.mxu0 0.0
    %477 = vmatpush1.msra.mxu0 0.0
    %478 = vmatprep.subr.mxu0 0.0
    %479 = vmatpush1.msra.mxu0 0.0
    %480 = vmatprep.subr.mxu0 0.0
    %481 = vmatpush1.msra.mxu0 0.0
    %482 = vmatprep.subr.mxu0 0.0
    %483 = vmatpush1.msra.mxu0 0.0
    %484 = vmatprep.subr.mxu0 0.0
    %485 = vmatpush1.msra.mxu0 0.0
    %486 = vmatprep.subr.mxu0 0.0
    %487 = vmatpush1.msra.mxu0 0.0
    %488 = vmatprep.subr.mxu0 0.0
    %489 = vmatpush1.msra.mxu0 0.0
    %490 = vmatprep.subr.mxu0 0.0
    %491 = vmatpush1.msra.mxu0 0.0
    %492 = vmatprep.subr.mxu0 0.0
    %493 = vmatpush1.msra.mxu0 0.0
    %494 = vmatprep.mubr.f32.mxu0 0.0
    %495 = vmatmul.mubr.f32.gmra.mrb[0].mxu0 %v419
    %v496 = vpop.f32.mrb[0].mxu0
    %v497 = vadd.f32 0.0, %v496
    %v498 = vpop.f32.mrb[0].mxu0
    %499 = vmatprep.mubr.f32.mxu0 0.0
    %500 = vmatmul.mubr.f32.gmra.mrb[0].mxu0 %v422
    %v501 = vpop.f32.mrb[0].mxu0
    %v502 = vadd.f32 0.0, %v501
    %v503 = vpop.f32.mrb[0].mxu0
    %504 = vmatprep.mubr.f32.mxu0 0.0
    %505 = vmatmul.mubr.f32.gmra.mrb[0].mxu0 %v425
    %v506 = vpop.f32.mrb[0].mxu0
    %v507 = vadd.f32 0.0, %v506
    %v508 = vpop.f32.mrb[0].mxu0
    %509 = vmatprep.mubr.f32.mxu0 0.0
    %510 = vmatmul.mubr.f32.gmra.mrb[0].mxu0 %v428
    %v511 = vpop.f32.mrb[0].mxu0
    %v512 = vadd.f32 0.0, %v511
    %v513 = vpop.f32.mrb[0].mxu0
    %514 = vdwg.mxu0
    %v515 = vld [vmem:[%s5] sm:$0xff]
    %v516 = vld [vmem:[%s5 + $0x8] sm:$0xff]
    %v517 = vld [vmem:[%s5 + $0x10] sm:$0xff]
    %v518 = vld [vmem:[%s5 + $0x18] sm:$0xff]
    %v519 = vadd.f32 %v515, %v497
    %v520 = vadd.f32 %v516, %v502
    %v521 = vadd.f32 %v517, %v507
    %v522 = vadd.f32 %v518, %v512
    %v523 = vld [vmem:[%s5 + $0x20] sm:$0xff]
    %524 = vxpose.xlu0.b32.start [1/16] %v380, 128
    %525 = vxpose.xlu0.b32.cont [2/16] %v382, 128
    %526 = vxpose.xlu0.b32.cont [3/16] 0.0, 128
    %527 = vxpose.xlu0.b32.cont [4/16] 0.0, 128
    %528 = vxpose.xlu0.b32.cont [5/16] 0.0, 128
    %529 = vxpose.xlu0.b32.cont [6/16] 0.0, 128
    %530 = vxpose.xlu0.b32.cont [7/16] 0.0, 128
    %531 = vxpose.xlu0.b32.cont [8/16] 0.0, 128
    %532 = vxpose.xlu0.b32.cont [9/16] 0.0, 128
    %533 = vxpose.xlu0.b32.cont [10/16] 0.0, 128
    %534 = vxpose.xlu0.b32.cont [11/16] 0.0, 128
    %535 = vxpose.xlu0.b32.cont [12/16] 0.0, 128
    %536 = vxpose.xlu0.b32.cont [13/16] 0.0, 128
    %537 = vxpose.xlu0.b32.cont [14/16] 0.0, 128
    %538 = vxpose.xlu0.b32.cont [15/16] 0.0, 128
    %539 = vxpose.xlu0.b32.end [16/16] 0.0, 128
    %v540 = vpop.trf.xlu0
    %v541 = vpop.trf.xlu0
    %v542 = vpop.trf.xlu0
    %v543 = vpop.trf.xlu0
    %v544 = vpop.trf.xlu0
    %v545 = vpop.trf.xlu0
    %v546 = vpop.trf.xlu0
    %v547 = vpop.trf.xlu0
    %v548 = vpop.trf.xlu0
    %v549 = vpop.trf.xlu0
    %v550 = vpop.trf.xlu0
    %v551 = vpop.trf.xlu0
    %v552 = vpop.trf.xlu0
    %v553 = vpop.trf.xlu0
    %v554 = vpop.trf.xlu0
    %v555 = vpop.trf.xlu0
    %v557 = vsel %vm417, %v540, 0
    %v560 = vsel %vm417, %v541, 0
    %v563 = vsel %vm417, %v542, 0
    %v566 = vsel %vm417, %v543, 0
    %568 = vmatprep.subr.mxu0 0.0
    %569 = vmatpush1.msra.mxu0 %v383
    %570 = vmatprep.subr.mxu0 0.0
    %571 = vmatpush1.msra.mxu0 %v384
    %572 = vmatprep.subr.mxu0 0.0
    %573 = vmatpush1.msra.mxu0 0.0
    %574 = vmatprep.subr.mxu0 0.0
    %575 = vmatpush1.msra.mxu0 0.0
    %576 = vmatprep.subr.mxu0 0.0
    %577 = vmatpush1.msra.mxu0 0.0
    %578 = vmatprep.subr.mxu0 0.0
    %579 = vmatpush1.msra.mxu0 0.0
    %580 = vmatprep.subr.mxu0 0.0
    %581 = vmatpush1.msra.mxu0 0.0
    %582 = vmatprep.subr.mxu0 0.0
    %583 = vmatpush1.msra.mxu0 0.0
    %584 = vmatprep.subr.mxu0 0.0
    %585 = vmatpush1.msra.mxu0 0.0
    %586 = vmatprep.subr.mxu0 0.0
    %587 = vmatpush1.msra.mxu0 0.0
    %588 = vmatprep.subr.mxu0 0.0
    %589 = vmatpush1.msra.mxu0 0.0
    %590 = vmatprep.subr.mxu0 0.0
    %591 = vmatpush1.msra.mxu0 0.0
    %592 = vmatprep.subr.mxu0 0.0
    %593 = vmatpush1.msra.mxu0 0.0
    %594 = vmatprep.subr.mxu0 0.0
    %595 = vmatpush1.msra.mxu0 0.0
    %596 = vmatprep.subr.mxu0 0.0
    %597 = vmatpush1.msra.mxu0 0.0
    %598 = vmatprep.subr.mxu0 0.0
    %599 = vmatpush1.msra.mxu0 0.0
    %600 = vmatprep.subr.mxu0 0.0
    %601 = vmatpush1.msra.mxu0 0.0
    %602 = vmatprep.subr.mxu0 0.0
    %603 = vmatpush1.msra.mxu0 0.0
    %604 = vmatprep.subr.mxu0 0.0
    %605 = vmatpush1.msra.mxu0 0.0
    %606 = vmatprep.subr.mxu0 0.0
    %607 = vmatpush1.msra.mxu0 0.0
    %608 = vmatprep.subr.mxu0 0.0
    %609 = vmatpush1.msra.mxu0 0.0
    %610 = vmatprep.subr.mxu0 0.0
    %611 = vmatpush1.msra.mxu0 0.0
    %612 = vmatprep.subr.mxu0 0.0
    %613 = vmatpush1.msra.mxu0 0.0
    %614 = vmatprep.subr.mxu0 0.0
    %615 = vmatpush1.msra.mxu0 0.0
    %616 = vmatprep.subr.mxu0 0.0
    %617 = vmatpush1.msra.mxu0 0.0
    %618 = vmatprep.subr.mxu0 0.0
    %619 = vmatpush1.msra.mxu0 0.0
    %620 = vmatprep.subr.mxu0 0.0
    %621 = vmatpush1.msra.mxu0 0.0
    %622 = vmatprep.subr.mxu0 0.0
    %623 = vmatpush1.msra.mxu0 0.0
    %624 = vmatprep.subr.mxu0 0.0
    %625 = vmatpush1.msra.mxu0 0.0
    %626 = vmatprep.subr.mxu0 0.0
    %627 = vmatpush1.msra.mxu0 0.0
    %628 = vmatprep.subr.mxu0 0.0
    %629 = vmatpush1.msra.mxu0 0.0
    %630 = vmatprep.subr.mxu0 0.0
    %631 = vmatpush1.msra.mxu0 0.0
    %632 = vmatprep.mubr.f32.mxu0 0.0
    %633 = vmatmul.mubr.f32.gmra.mrb[0].mxu0 %v557
    %v634 = vpop.f32.mrb[0].mxu0
    %v635 = vadd.f32 0.0, %v634
    %v636 = vpop.f32.mrb[0].mxu0
    %637 = vmatprep.mubr.f32.mxu0 0.0
    %638 = vmatmul.mubr.f32.gmra.mrb[0].mxu0 %v560
    %v639 = vpop.f32.mrb[0].mxu0
    %v640 = vadd.f32 0.0, %v639
    %v641 = vpop.f32.mrb[0].mxu0
    %642 = vmatprep.mubr.f32.mxu0 0.0
    %643 = vmatmul.mubr.f32.gmra.mrb[0].mxu0 %v563
    %v644 = vpop.f32.mrb[0].mxu0
    %v645 = vadd.f32 0.0, %v644
    %v646 = vpop.f32.mrb[0].mxu0
    %647 = vmatprep.mubr.f32.mxu0 0.0
    %648 = vmatmul.mubr.f32.gmra.mrb[0].mxu0 %v566
    %v649 = vpop.f32.mrb[0].mxu0
    %v650 = vadd.f32 0.0, %v649
    %v651 = vpop.f32.mrb[0].mxu0
    %652 = vdwg.mxu0
    %v653 = vld [vmem:[%s5 + $0x28] sm:$0xff]
    %v654 = vld [vmem:[%s5 + $0x30] sm:$0xff]
    %v655 = vld [vmem:[%s5 + $0x38] sm:$0xff]
    %v656 = vld [vmem:[%s5 + $0x40] sm:$0xff]
    %v657 = vadd.f32 %v653, %v635
    %v658 = vadd.f32 %v654, %v640
    %v659 = vadd.f32 %v655, %v645
    %v660 = vadd.f32 %v656, %v650
    %v661 = vld [vmem:[%s5 + $0x48] sm:$0xff]
    %v662 = vld [vmem:[%s6] sm:$0xff]
    %v663 = vld [vmem:[%s6 + $0x8] sm:$0xff]
    %v664 = vld [vmem:[%s6 + $0x10] sm:$0xff]
    %v665 = vld [vmem:[%s6 + $0x18] sm:$0xff]
    %v666 = vld [vmem:[%s6 + $0x20] sm:$0xff]
    %v667 = vld [vmem:[%s6 + $0x28] sm:$0xff]
    %v668 = vld [vmem:[%s6 + $0x30] sm:$0xff]
    %v669 = vld [vmem:[%s6 + $0x38] sm:$0xff]
    %v670 = vld [vmem:[%s6 + $0x40] sm:$0xff]
    %v671 = vld [vmem:[%s6 + $0x48] sm:$0xff]
    %v672 = vld [vmem:[%s13] sm:$0xff]
    %v673 = vld [vmem:[%s13 + $0x8] sm:$0xff]
    %vm674 = vcmask 261120
    %v675 = vsel %vm674, %v519, 0.0
    %676 = vadd.xlane.f32.xlu0 %v675
    %v677 = vpop.xlane.xlu0 %676
    %v678 = vsel %vm674, %v520, 0.0
    %679 = vadd.xlane.f32.xlu0 %v678
    %v680 = vpop.xlane.xlu0 %679
    %v681 = vsel %vm674, %v521, 0.0
    %682 = vadd.xlane.f32.xlu0 %v681
    %v683 = vpop.xlane.xlu0 %682
    %v684 = vsel %vm674, %v522, 0.0
    %685 = vadd.xlane.f32.xlu0 %v684
    %v686 = vpop.xlane.xlu0 %685
    %v687 = vsel %vm674, %v523, 0.0
    %688 = vadd.xlane.f32.xlu0 %v687
    %v689 = vpop.xlane.xlu0 %688
    %v690 = vsel %vm674, %v657, 0.0
    %691 = vadd.xlane.f32.xlu0 %v690
    %v692 = vpop.xlane.xlu0 %691
    %v693 = vsel %vm674, %v658, 0.0
    %694 = vadd.xlane.f32.xlu0 %v693
    %v695 = vpop.xlane.xlu0 %694
    %v696 = vsel %vm674, %v659, 0.0
    %697 = vadd.xlane.f32.xlu0 %v696
    %v698 = vpop.xlane.xlu0 %697
    %v699 = vsel %vm674, %v660, 0.0
    %700 = vadd.xlane.f32.xlu0 %v699
    %v701 = vpop.xlane.xlu0 %700
    %v702 = vsel %vm674, %v661, 0.0
    %703 = vadd.xlane.f32.xlu0 %v702
    %v704 = vpop.xlane.xlu0 %703
    %v705 = vrcp.pop 32.0
    %v706 = vmul.f32 %v677, %v705
    %v707 = vmul.f32 %v680, %v705
    %v708 = vmul.f32 %v683, %v705
    %v709 = vmul.f32 %v686, %v705
    %v710 = vmul.f32 %v689, %v705
    %v711 = vmul.f32 %v692, %v705
    %v712 = vmul.f32 %v695, %v705
    %v713 = vmul.f32 %v698, %v705
    %v714 = vmul.f32 %v701, %v705
    %v715 = vmul.f32 %v704, %v705
    %v716 = vsub.f32 %v519, %v706
    %v717 = vsub.f32 %v520, %v707
    %v718 = vsub.f32 %v521, %v708
    %v719 = vsub.f32 %v522, %v709
    %v720 = vsub.f32 %v523, %v710
    %v721 = vsub.f32 %v657, %v711
    %v722 = vsub.f32 %v658, %v712
    %v723 = vsub.f32 %v659, %v713
    %v724 = vsub.f32 %v660, %v714
    %v725 = vsub.f32 %v661, %v715
    %v726 = vmul.f32 %v716, %v716
    %v727 = vmul.f32 %v717, %v717
    %v728 = vmul.f32 %v718, %v718
    %v729 = vmul.f32 %v719, %v719
    %v730 = vmul.f32 %v720, %v720
    %v731 = vmul.f32 %v721, %v721
    %v732 = vmul.f32 %v722, %v722
    %v733 = vmul.f32 %v723, %v723
    %v734 = vmul.f32 %v724, %v724
    %v735 = vmul.f32 %v725, %v725
    %v736 = vsel %vm674, %v726, 0.0
    %737 = vadd.xlane.f32.xlu0 %v736
    %v738 = vpop.xlane.xlu0 %737
    %v739 = vsel %vm674, %v727, 0.0
    %740 = vadd.xlane.f32.xlu0 %v739
    %v741 = vpop.xlane.xlu0 %740
    %v742 = vsel %vm674, %v728, 0.0
    %743 = vadd.xlane.f32.xlu0 %v742
    %v744 = vpop.xlane.xlu0 %743
    %v745 = vsel %vm674, %v729, 0.0
    %746 = vadd.xlane.f32.xlu0 %v745
    %v747 = vpop.xlane.xlu0 %746
    %v748 = vsel %vm674, %v730, 0.0
    %749 = vadd.xlane.f32.xlu0 %v748
    %v750 = vpop.xlane.xlu0 %749
    %v751 = vsel %vm674, %v731, 0.0
    %752 = vadd.xlane.f32.xlu0 %v751
    %v753 = vpop.xlane.xlu0 %752
    %v754 = vsel %vm674, %v732, 0.0
    %755 = vadd.xlane.f32.xlu0 %v754
    %v756 = vpop.xlane.xlu0 %755
    %v757 = vsel %vm674, %v733, 0.0
    %758 = vadd.xlane.f32.xlu0 %v757
    %v759 = vpop.xlane.xlu0 %758
    %v760 = vsel %vm674, %v734, 0.0
    %761 = vadd.xlane.f32.xlu0 %v760
    %v762 = vpop.xlane.xlu0 %761
    %v763 = vsel %vm674, %v735, 0.0
    %764 = vadd.xlane.f32.xlu0 %v763
    %v765 = vpop.xlane.xlu0 %764
    %v766 = vmul.f32 %v738, %v705
    %v767 = vmul.f32 %v741, %v705
    %v768 = vmul.f32 %v744, %v705
    %v769 = vmul.f32 %v747, %v705
    %v770 = vmul.f32 %v750, %v705
    %v771 = vmul.f32 %v753, %v705
    %v772 = vmul.f32 %v756, %v705
    %v773 = vmul.f32 %v759, %v705
    %v774 = vmul.f32 %v762, %v705
    %v775 = vmul.f32 %v765, %v705
    %v776 = vadd.f32 %v766, 1e-05
    %v777 = vadd.f32 %v767, 1e-05
    %v778 = vadd.f32 %v768, 1e-05
    %v779 = vadd.f32 %v769, 1e-05
    %v780 = vadd.f32 %v770, 1e-05
    %v781 = vadd.f32 %v771, 1e-05
    %v782 = vadd.f32 %v772, 1e-05
    %v783 = vadd.f32 %v773, 1e-05
    %v784 = vadd.f32 %v774, 1e-05
    %v785 = vadd.f32 %v775, 1e-05
    %v786 = vrsqrt.pop %v776
    %v787 = vrsqrt.pop %v777
    %v788 = vrsqrt.pop %v778
    %v789 = vrsqrt.pop %v779
    %v790 = vrsqrt.pop %v780
    %v791 = vrsqrt.pop %v781
    %v792 = vrsqrt.pop %v782
    %v793 = vrsqrt.pop %v783
    %v794 = vrsqrt.pop %v784
    %v795 = vrsqrt.pop %v785
    %v796 = vmul.f32 %v716, %v786
    %v797 = vmul.f32 %v717, %v787
    %v798 = vmul.f32 %v718, %v788
    %v799 = vmul.f32 %v719, %v789
    %v800 = vmul.f32 %v720, %v790
    %v801 = vmul.f32 %v721, %v791
    %v802 = vmul.f32 %v722, %v792
    %v803 = vmul.f32 %v723, %v793
    %v804 = vmul.f32 %v724, %v794
    %v805 = vmul.f32 %v725, %v795
    %v806 = vlaneseq
    %v807 = vshrl.u32 %v806, 7
    %v808 = vsub.s32 0, %v807
    %v809 = vrot.slane %v672, %v808
    %v810 = vmul.f32 %v796, %v809
    %v811 = vmul.f32 %v797, %v809
    %v812 = vmul.f32 %v798, %v809
    %v813 = vmul.f32 %v799, %v809
    %v814 = vmul.f32 %v800, %v809
    %v815 = vmul.f32 %v801, %v809
    %v816 = vmul.f32 %v802, %v809
    %v817 = vmul.f32 %v803, %v809
    %v818 = vmul.f32 %v804, %v809
    %v819 = vmul.f32 %v805, %v809
    %v820 = vlaneseq
    %v821 = vshrl.u32 %v820, 7
    %v822 = vsub.s32 1, %v821
    %v823 = vrot.slane %v672, %v822
    %v824 = vadd.f32 %v810, %v823
    %v825 = vadd.f32 %v811, %v823
    %v826 = vadd.f32 %v812, %v823
    %v827 = vadd.f32 %v813, %v823
    %v828 = vadd.f32 %v814, %v823
    %v829 = vadd.f32 %v815, %v823
    %v830 = vadd.f32 %v816, %v823
    %v831 = vadd.f32 %v817, %v823
    %v832 = vadd.f32 %v818, %v823
    %v833 = vadd.f32 %v819, %v823
    %v834 = vld [vmem:[%s7] sm:$0xff]
    %v835 = vld [vmem:[%s7 + $0x8] sm:$0xff]
    %v836 = vld [vmem:[%s7 + $0x10] sm:$0xff]
    %v837 = vld [vmem:[%s7 + $0x18] sm:$0xff]
    %v838 = vlaneseq
    %v839 = vshrl.u32 %v838, 7
    %v840 = vsub.s32 2, %v839
    %v841 = vrot.slane %v672, %v840
    %v843 = vsel %vm674, %v824, 0
    %v846 = vsel %vm674, %v825, 0
    %v849 = vsel %vm674, %v826, 0
    %v852 = vsel %vm674, %v827, 0
    %v855 = vsel %vm674, %v828, 0
    %v858 = vsel %vm674, %v829, 0
    %v861 = vsel %vm674, %v830, 0
    %v864 = vsel %vm674, %v831, 0
    %v867 = vsel %vm674, %v832, 0
    %v870 = vsel %vm674, %v833, 0
    %872 = vmatprep.subr.mxu0 0.0
    %873 = vmatpush1.msra.mxu0 %v834
    %874 = vmatprep.subr.mxu0 0.0
    %875 = vmatpush1.msra.mxu0 %v835
    %876 = vmatprep.subr.mxu0 0.0
    %877 = vmatpush1.msra.mxu0 %v836
    %878 = vmatprep.subr.mxu0 0.0
    %879 = vmatpush1.msra.mxu0 %v837
    %880 = vmatprep.subr.mxu0 0.0
    %881 = vmatpush1.msra.mxu0 0.0
    %882 = vmatprep.subr.mxu0 0.0
    %883 = vmatpush1.msra.mxu0 0.0
    %884 = vmatprep.subr.mxu0 0.0
    %885 = vmatpush1.msra.mxu0 0.0
    %886 = vmatprep.subr.mxu0 0.0
    %887 = vmatpush1.msra.mxu0 0.0
    %888 = vmatprep.subr.mxu0 0.0
    %889 = vmatpush1.msra.mxu0 0.0
    %890 = vmatprep.subr.mxu0 0.0
    %891 = vmatpush1.msra.mxu0 0.0
    %892 = vmatprep.subr.mxu0 0.0
    %893 = vmatpush1.msra.mxu0 0.0
    %894 = vmatprep.subr.mxu0 0.0
    %895 = vmatpush1.msra.mxu0 0.0
    %896 = vmatprep.subr.mxu0 0.0
    %897 = vmatpush1.msra.mxu0 0.0
    %898 = vmatprep.subr.mxu0 0.0
    %899 = vmatpush1.msra.mxu0 0.0
    %900 = vmatprep.subr.mxu0 0.0
    %901 = vmatpush1.msra.mxu0 0.0
    %902 = vmatprep.subr.mxu0 0.0
    %903 = vmatpush1.msra.mxu0 0.0
    %904 = vmatprep.subr.mxu0 0.0
    %905 = vmatpush1.msra.mxu0 0.0
    %906 = vmatprep.subr.mxu0 0.0
    %907 = vmatpush1.msra.mxu0 0.0
    %908 = vmatprep.subr.mxu0 0.0
    %909 = vmatpush1.msra.mxu0 0.0
    %910 = vmatprep.subr.mxu0 0.0
    %911 = vmatpush1.msra.mxu0 0.0
    %912 = vmatprep.subr.mxu0 0.0
    %913 = vmatpush1.msra.mxu0 0.0
    %914 = vmatprep.subr.mxu0 0.0
    %915 = vmatpush1.msra.mxu0 0.0
    %916 = vmatprep.subr.mxu0 0.0
    %917 = vmatpush1.msra.mxu0 0.0
    %918 = vmatprep.subr.mxu0 0.0
    %919 = vmatpush1.msra.mxu0 0.0
    %920 = vmatprep.subr.mxu0 0.0
    %921 = vmatpush1.msra.mxu0 0.0
    %922 = vmatprep.subr.mxu0 0.0
    %923 = vmatpush1.msra.mxu0 0.0
    %924 = vmatprep.subr.mxu0 0.0
    %925 = vmatpush1.msra.mxu0 0.0
    %926 = vmatprep.subr.mxu0 0.0
    %927 = vmatpush1.msra.mxu0 0.0
    %928 = vmatprep.subr.mxu0 0.0
    %929 = vmatpush1.msra.mxu0 0.0
    %930 = vmatprep.subr.mxu0 0.0
    %931 = vmatpush1.msra.mxu0 0.0
    %932 = vmatprep.subr.mxu0 0.0
    %933 = vmatpush1.msra.mxu0 0.0
    %934 = vmatprep.subr.mxu0 0.0
    %935 = vmatpush1.msra.mxu0 0.0
    %936 = vmatprep.mubr.f32.mxu0 0.0
    %937 = vmatmul.mubr.f32.gmra.mrb[0].mxu0 %v843
    %v938 = vpop.f32.mrb[0].mxu0
    %v939 = vadd.f32 %v841, %v938
    %v940 = vpop.f32.mrb[0].mxu0
    %941 = vmatprep.mubr.f32.mxu0 0.0
    %942 = vmatmul.mubr.f32.gmra.mrb[0].mxu0 %v846
    %v943 = vpop.f32.mrb[0].mxu0
    %v944 = vadd.f32 %v841, %v943
    %v945 = vpop.f32.mrb[0].mxu0
    %946 = vmatprep.mubr.f32.mxu0 0.0
    %947 = vmatmul.mubr.f32.gmra.mrb[0].mxu0 %v849
    %v948 = vpop.f32.mrb[0].mxu0
    %v949 = vadd.f32 %v841, %v948
    %v950 = vpop.f32.mrb[0].mxu0
    %951 = vmatprep.mubr.f32.mxu0 0.0
    %952 = vmatmul.mubr.f32.gmra.mrb[0].mxu0 %v852
    %v953 = vpop.f32.mrb[0].mxu0
    %v954 = vadd.f32 %v841, %v953
    %v955 = vpop.f32.mrb[0].mxu0
    %956 = vmatprep.mubr.f32.mxu0 0.0
    %957 = vmatmul.mubr.f32.gmra.mrb[0].mxu0 %v855
    %v958 = vpop.f32.mrb[0].mxu0
    %v959 = vadd.f32 %v841, %v958
    %v960 = vpop.f32.mrb[0].mxu0
    %961 = vmatprep.mubr.f32.mxu0 0.0
    %962 = vmatmul.mubr.f32.gmra.mrb[0].mxu0 %v858
    %v963 = vpop.f32.mrb[0].mxu0
    %v964 = vadd.f32 %v841, %v963
    %v965 = vpop.f32.mrb[0].mxu0
    %966 = vmatprep.mubr.f32.mxu0 0.0
    %967 = vmatmul.mubr.f32.gmra.mrb[0].mxu0 %v861
    %v968 = vpop.f32.mrb[0].mxu0
    %v969 = vadd.f32 %v841, %v968
    %v970 = vpop.f32.mrb[0].mxu0
    %971 = vmatprep.mubr.f32.mxu0 0.0
    %972 = vmatmul.mubr.f32.gmra.mrb[0].mxu0 %v864
    %v973 = vpop.f32.mrb[0].mxu0
    %v974 = vadd.f32 %v841, %v973
    %v975 = vpop.f32.mrb[0].mxu0
    %976 = vmatprep.mubr.f32.mxu0 0.0
    %977 = vmatmul.mubr.f32.gmra.mrb[0].mxu0 %v867
    %v978 = vpop.f32.mrb[0].mxu0
    %v979 = vadd.f32 %v841, %v978
    %v980 = vpop.f32.mrb[0].mxu0
    %981 = vmatprep.mubr.f32.mxu0 0.0
    %982 = vmatmul.mubr.f32.gmra.mrb[0].mxu0 %v870
    %v983 = vpop.f32.mrb[0].mxu0
    %v984 = vadd.f32 %v841, %v983
    %v985 = vpop.f32.mrb[0].mxu0
    %986 = vdwg.mxu0
    %v987 = vld [vmem:[%s8] sm:$0xff]
    %v988 = vld [vmem:[%s8 + $0x8] sm:$0xff]
    %v989 = vld [vmem:[%s8 + $0x10] sm:$0xff]
    %v990 = vld [vmem:[%s8 + $0x18] sm:$0xff]
    %v991 = vlaneseq
    %v992 = vshrl.u32 %v991, 7
    %v993 = vsub.s32 3, %v992
    %v994 = vrot.slane %v672, %v993
    %995 = vmatprep.subr.mxu0 0.0
    %996 = vmatpush1.msra.mxu0 %v987
    %997 = vmatprep.subr.mxu0 0.0
    %998 = vmatpush1.msra.mxu0 %v988
    %999 = vmatprep.subr.mxu0 0.0
    %1000 = vmatpush1.msra.mxu0 %v989
    %1001 = vmatprep.subr.mxu0 0.0
    %1002 = vmatpush1.msra.mxu0 %v990
    %1003 = vmatprep.subr.mxu0 0.0
    %1004 = vmatpush1.msra.mxu0 0.0
    %1005 = vmatprep.subr.mxu0 0.0
    %1006 = vmatpush1.msra.mxu0 0.0
    %1007 = vmatprep.subr.mxu0 0.0
    %1008 = vmatpush1.msra.mxu0 0.0
    %1009 = vmatprep.subr.mxu0 0.0
    %1010 = vmatpush1.msra.mxu0 0.0
    %1011 = vmatprep.subr.mxu0 0.0
    %1012 = vmatpush1.msra.mxu0 0.0
    %1013 = vmatprep.subr.mxu0 0.0
    %1014 = vmatpush1.msra.mxu0 0.0
    %1015 = vmatprep.subr.mxu0 0.0
    %1016 = vmatpush1.msra.mxu0 0.0
    %1017 = vmatprep.subr.mxu0 0.0
    %1018 = vmatpush1.msra.mxu0 0.0
    %1019 = vmatprep.subr.mxu0 0.0
    %1020 = vmatpush1.msra.mxu0 0.0
    %1021 = vmatprep.subr.mxu0 0.0
    %1022 = vmatpush1.msra.mxu0 0.0
    %1023 = vmatprep.subr.mxu0 0.0
    %1024 = vmatpush1.msra.mxu0 0.0
    %1025 = vmatprep.subr.mxu0 0.0
    %1026 = vmatpush1.msra.mxu0 0.0
    %1027 = vmatprep.subr.mxu0 0.0
    %1028 = vmatpush1.msra.mxu0 0.0
    %1029 = vmatprep.subr.mxu0 0.0
    %1030 = vmatpush1.msra.mxu0 0.0
    %1031 = vmatprep.subr.mxu0 0.0
    %1032 = vmatpush1.msra.mxu0 0.0
    %1033 = vmatprep.subr.mxu0 0.0
    %1034 = vmatpush1.msra.mxu0 0.0
    %1035 = vmatprep.subr.mxu0 0.0
    %1036 = vmatpush1.msra.mxu0 0.0
    %1037 = vmatprep.subr.mxu0 0.0
    %1038 = vmatpush1.msra.mxu0 0.0
    %1039 = vmatprep.subr.mxu0 0.0
    %1040 = vmatpush1.msra.mxu0 0.0
    %1041 = vmatprep.subr.mxu0 0.0
    %1042 = vmatpush1.msra.mxu0 0.0
    %1043 = vmatprep.subr.mxu0 0.0
    %1044 = vmatpush1.msra.mxu0 0.0
    %1045 = vmatprep.subr.mxu0 0.0
    %1046 = vmatpush1.msra.mxu0 0.0
    %1047 = vmatprep.subr.mxu0 0.0
    %1048 = vmatpush1.msra.mxu0 0.0
    %1049 = vmatprep.subr.mxu0 0.0
    %1050 = vmatpush1.msra.mxu0 0.0
    %1051 = vmatprep.subr.mxu0 0.0
    %1052 = vmatpush1.msra.mxu0 0.0
    %1053 = vmatprep.subr.mxu0 0.0
    %1054 = vmatpush1.msra.mxu0 0.0
    %1055 = vmatprep.subr.mxu0 0.0
    %1056 = vmatpush1.msra.mxu0 0.0
    %1057 = vmatprep.subr.mxu0 0.0
    %1058 = vmatpush1.msra.mxu0 0.0
    %1059 = vmatprep.mubr.f32.mxu0 0.0
    %1060 = vmatmul.mubr.f32.gmra.mrb[0].mxu0 %v843
    %v1061 = vpop.f32.mrb[0].mxu0
    %v1062 = vadd.f32 %v994, %v1061
    %v1063 = vpop.f32.mrb[0].mxu0
    %1064 = vmatprep.mubr.f32.mxu0 0.0
    %1065 = vmatmul.mubr.f32.gmra.mrb[0].mxu0 %v846
    %v1066 = vpop.f32.mrb[0].mxu0
    %v1067 = vadd.f32 %v994, %v1066
    %v1068 = vpop.f32.mrb[0].mxu0
    %1069 = vmatprep.mubr.f32.mxu0 0.0
    %1070 = vmatmul.mubr.f32.gmra.mrb[0].mxu0 %v849
    %v1071 = vpop.f32.mrb[0].mxu0
    %v1072 = vadd.f32 %v994, %v1071
    %v1073 = vpop.f32.mrb[0].mxu0
    %1074 = vmatprep.mubr.f32.mxu0 0.0
    %1075 = vmatmul.mubr.f32.gmra.mrb[0].mxu0 %v852
    %v1076 = vpop.f32.mrb[0].mxu0
    %v1077 = vadd.f32 %v994, %v1076
    %v1078 = vpop.f32.mrb[0].mxu0
    %1079 = vmatprep.mubr.f32.mxu0 0.0
    %1080 = vmatmul.mubr.f32.gmra.mrb[0].mxu0 %v855
    %v1081 = vpop.f32.mrb[0].mxu0
    %v1082 = vadd.f32 %v994, %v1081
    %v1083 = vpop.f32.mrb[0].mxu0
    %1084 = vmatprep.mubr.f32.mxu0 0.0
    %1085 = vmatmul.mubr.f32.gmra.mrb[0].mxu0 %v858
    %v1086 = vpop.f32.mrb[0].mxu0
    %v1087 = vadd.f32 %v994, %v1086
    %v1088 = vpop.f32.mrb[0].mxu0
    %1089 = vmatprep.mubr.f32.mxu0 0.0
    %1090 = vmatmul.mubr.f32.gmra.mrb[0].mxu0 %v861
    %v1091 = vpop.f32.mrb[0].mxu0
    %v1092 = vadd.f32 %v994, %v1091
    %v1093 = vpop.f32.mrb[0].mxu0
    %1094 = vmatprep.mubr.f32.mxu0 0.0
    %1095 = vmatmul.mubr.f32.gmra.mrb[0].mxu0 %v864
    %v1096 = vpop.f32.mrb[0].mxu0
    %v1097 = vadd.f32 %v994, %v1096
    %v1098 = vpop.f32.mrb[0].mxu0
    %1099 = vmatprep.mubr.f32.mxu0 0.0
    %1100 = vmatmul.mubr.f32.gmra.mrb[0].mxu0 %v867
    %v1101 = vpop.f32.mrb[0].mxu0
    %v1102 = vadd.f32 %v994, %v1101
    %v1103 = vpop.f32.mrb[0].mxu0
    %1104 = vmatprep.mubr.f32.mxu0 0.0
    %1105 = vmatmul.mubr.f32.gmra.mrb[0].mxu0 %v870
    %v1106 = vpop.f32.mrb[0].mxu0
    %v1107 = vadd.f32 %v994, %v1106
    %v1108 = vpop.f32.mrb[0].mxu0
    %1109 = vdwg.mxu0
    %v1110 = vld [vmem:[%s9] sm:$0xff]
    %v1111 = vld [vmem:[%s9 + $0x8] sm:$0xff]
    %v1112 = vld [vmem:[%s9 + $0x10] sm:$0xff]
    %v1113 = vld [vmem:[%s9 + $0x18] sm:$0xff]
    %v1114 = vlaneseq
    %v1115 = vshrl.u32 %v1114, 7
    %v1116 = vsub.s32 4, %v1115
    %v1117 = vrot.slane %v672, %v1116
    %1118 = vmatprep.subr.mxu0 0.0
    %1119 = vmatpush1.msra.mxu0 %v1110
    %1120 = vmatprep.subr.mxu0 0.0
    %1121 = vmatpush1.msra.mxu0 %v1111
    %1122 = vmatprep.subr.mxu0 0.0
    %1123 = vmatpush1.msra.mxu0 %v1112
    %1124 = vmatprep.subr.mxu0 0.0
    %1125 = vmatpush1.msra.mxu0 %v1113
    %1126 = vmatprep.subr.mxu0 0.0
    %1127 = vmatpush1.msra.mxu0 0.0
    %1128 = vmatprep.subr.mxu0 0.0
    %1129 = vmatpush1.msra.mxu0 0.0
    %1130 = vmatprep.subr.mxu0 0.0
    %1131 = vmatpush1.msra.mxu0 0.0
    %1132 = vmatprep.subr.mxu0 0.0
    %1133 = vmatpush1.msra.mxu0 0.0
    %1134 = vmatprep.subr.mxu0 0.0
    %1135 = vmatpush1.msra.mxu0 0.0
    %1136 = vmatprep.subr.mxu0 0.0
    %1137 = vmatpush1.msra.mxu0 0.0
    %1138 = vmatprep.subr.mxu0 0.0
    %1139 = vmatpush1.msra.mxu0 0.0
    %1140 = vmatprep.subr.mxu0 0.0
    %1141 = vmatpush1.msra.mxu0 0.0
    %1142 = vmatprep.subr.mxu0 0.0
    %1143 = vmatpush1.msra.mxu0 0.0
    %1144 = vmatprep.subr.mxu0 0.0
    %1145 = vmatpush1.msra.mxu0 0.0
    %1146 = vmatprep.subr.mxu0 0.0
    %1147 = vmatpush1.msra.mxu0 0.0
    %1148 = vmatprep.subr.mxu0 0.0
    %1149 = vmatpush1.msra.mxu0 0.0
    %1150 = vmatprep.subr.mxu0 0.0
    %1151 = vmatpush1.msra.mxu0 0.0
    %1152 = vmatprep.subr.mxu0 0.0
    %1153 = vmatpush1.msra.mxu0 0.0
    %1154 = vmatprep.subr.mxu0 0.0
    %1155 = vmatpush1.msra.mxu0 0.0
    %1156 = vmatprep.subr.mxu0 0.0
    %1157 = vmatpush1.msra.mxu0 0.0
    %1158 = vmatprep.subr.mxu0 0.0
    %1159 = vmatpush1.msra.mxu0 0.0
    %1160 = vmatprep.subr.mxu0 0.0
    %1161 = vmatpush1.msra.mxu0 0.0
    %1162 = vmatprep.subr.mxu0 0.0
    %1163 = vmatpush1.msra.mxu0 0.0
    %1164 = vmatprep.subr.mxu0 0.0
    %1165 = vmatpush1.msra.mxu0 0.0
    %1166 = vmatprep.subr.mxu0 0.0
    %1167 = vmatpush1.msra.mxu0 0.0
    %1168 = vmatprep.subr.mxu0 0.0
    %1169 = vmatpush1.msra.mxu0 0.0
    %1170 = vmatprep.subr.mxu0 0.0
    %1171 = vmatpush1.msra.mxu0 0.0
    %1172 = vmatprep.subr.mxu0 0.0
    %1173 = vmatpush1.msra.mxu0 0.0
    %1174 = vmatprep.subr.mxu0 0.0
    %1175 = vmatpush1.msra.mxu0 0.0
    %1176 = vmatprep.subr.mxu0 0.0
    %1177 = vmatpush1.msra.mxu0 0.0
    %1178 = vmatprep.subr.mxu0 0.0
    %1179 = vmatpush1.msra.mxu0 0.0
    %1180 = vmatprep.subr.mxu0 0.0
    %1181 = vmatpush1.msra.mxu0 0.0
    %1182 = vmatprep.mubr.f32.mxu0 0.0
    %1183 = vmatmul.mubr.f32.gmra.mrb[0].mxu0 %v843
    %v1184 = vpop.f32.mrb[0].mxu0
    %v1185 = vadd.f32 %v1117, %v1184
    %v1186 = vpop.f32.mrb[0].mxu0
    %1187 = vmatprep.mubr.f32.mxu0 0.0
    %1188 = vmatmul.mubr.f32.gmra.mrb[0].mxu0 %v846
    %v1189 = vpop.f32.mrb[0].mxu0
    %v1190 = vadd.f32 %v1117, %v1189
    %v1191 = vpop.f32.mrb[0].mxu0
    %1192 = vmatprep.mubr.f32.mxu0 0.0
    %1193 = vmatmul.mubr.f32.gmra.mrb[0].mxu0 %v849
    %v1194 = vpop.f32.mrb[0].mxu0
    %v1195 = vadd.f32 %v1117, %v1194
    %v1196 = vpop.f32.mrb[0].mxu0
    %1197 = vmatprep.mubr.f32.mxu0 0.0
    %1198 = vmatmul.mubr.f32.gmra.mrb[0].mxu0 %v852
    %v1199 = vpop.f32.mrb[0].mxu0
    %v1200 = vadd.f32 %v1117, %v1199
    %v1201 = vpop.f32.mrb[0].mxu0
    %1202 = vmatprep.mubr.f32.mxu0 0.0
    %1203 = vmatmul.mubr.f32.gmra.mrb[0].mxu0 %v855
    %v1204 = vpop.f32.mrb[0].mxu0
    %v1205 = vadd.f32 %v1117, %v1204
    %v1206 = vpop.f32.mrb[0].mxu0
    %1207 = vmatprep.mubr.f32.mxu0 0.0
    %1208 = vmatmul.mubr.f32.gmra.mrb[0].mxu0 %v858
    %v1209 = vpop.f32.mrb[0].mxu0
    %v1210 = vadd.f32 %v1117, %v1209
    %v1211 = vpop.f32.mrb[0].mxu0
    %1212 = vmatprep.mubr.f32.mxu0 0.0
    %1213 = vmatmul.mubr.f32.gmra.mrb[0].mxu0 %v861
    %v1214 = vpop.f32.mrb[0].mxu0
    %v1215 = vadd.f32 %v1117, %v1214
    %v1216 = vpop.f32.mrb[0].mxu0
    %1217 = vmatprep.mubr.f32.mxu0 0.0
    %1218 = vmatmul.mubr.f32.gmra.mrb[0].mxu0 %v864
    %v1219 = vpop.f32.mrb[0].mxu0
    %v1220 = vadd.f32 %v1117, %v1219
    %v1221 = vpop.f32.mrb[0].mxu0
    %1222 = vmatprep.mubr.f32.mxu0 0.0
    %1223 = vmatmul.mubr.f32.gmra.mrb[0].mxu0 %v867
    %v1224 = vpop.f32.mrb[0].mxu0
    %v1225 = vadd.f32 %v1117, %v1224
    %v1226 = vpop.f32.mrb[0].mxu0
    %1227 = vmatprep.mubr.f32.mxu0 0.0
    %1228 = vmatmul.mubr.f32.gmra.mrb[0].mxu0 %v870
    %v1229 = vpop.f32.mrb[0].mxu0
    %v1230 = vadd.f32 %v1117, %v1229
    %v1231 = vpop.f32.mrb[0].mxu0
    %1232 = vdwg.mxu0
    %vm1233 = vcmask 64512
    %v1235 = vsel %vm1233, %v939, 0
    %v1238 = vsel %vm1233, %v944, 0
    %v1241 = vsel %vm1233, %v949, 0
    %v1244 = vsel %vm1233, %v954, 0
    %v1247 = vsel %vm1233, %v959, 0
    %v1250 = vsel %vm1233, %v964, 0
    %v1253 = vsel %vm1233, %v969, 0
    %v1256 = vsel %vm1233, %v974, 0
    %v1259 = vsel %vm1233, %v979, 0
    %v1262 = vsel %vm1233, %v984, 0
    %v1265 = vsel %vm1233, %v1062, 0
    %v1268 = vsel %vm1233, %v1067, 0
    %v1271 = vsel %vm1233, %v1072, 0
    %v1274 = vsel %vm1233, %v1077, 0
    %v1277 = vsel %vm1233, %v1082, 0
    %v1280 = vsel %vm1233, %v1087, 0
    %v1283 = vsel %vm1233, %v1092, 0
    %v1286 = vsel %vm1233, %v1097, 0
    %v1289 = vsel %vm1233, %v1102, 0
    %v1292 = vsel %vm1233, %v1107, 0
    %1294 = vmatprep.subr.mxu0 0.0
    %1295 = vmatpush1.xpose.msra.mxu0 %v1265
    %1296 = vmatprep.subr.mxu0 0.0
    %1297 = vmatpush1.xpose.msra.mxu0 %v1268
    %1298 = vmatprep.subr.mxu0 0.0
    %1299 = vmatpush1.xpose.msra.mxu0 %v1271
    %1300 = vmatprep.subr.mxu0 0.0
    %1301 = vmatpush1.xpose.msra.mxu0 %v1274
    %1302 = vmatprep.subr.mxu0 0.0
    %1303 = vmatpush1.xpose.msra.mxu0 %v1277
    %1304 = vmatprep.subr.mxu0 0.0
    %1305 = vmatpush1.xpose.msra.mxu0 %v1280
    %1306 = vmatprep.subr.mxu0 0.0
    %1307 = vmatpush1.xpose.msra.mxu0 %v1283
    %1308 = vmatprep.subr.mxu0 0.0
    %1309 = vmatpush1.xpose.msra.mxu0 %v1286
    %1310 = vmatprep.subr.mxu0 0.0
    %1311 = vmatpush1.xpose.msra.mxu0 %v1289
    %1312 = vmatprep.subr.mxu0 0.0
    %1313 = vmatpush1.xpose.msra.mxu0 %v1292
    %1314 = vmatprep.subr.mxu0 0.0
    %1315 = vmatpush1.xpose.msra.mxu0 0.0
    %1316 = vmatprep.subr.mxu0 0.0
    %1317 = vmatpush1.xpose.msra.mxu0 0.0
    %1318 = vmatprep.subr.mxu0 0.0
    %1319 = vmatpush1.xpose.msra.mxu0 0.0
    %1320 = vmatprep.subr.mxu0 0.0
    %1321 = vmatpush1.xpose.msra.mxu0 0.0
    %1322 = vmatprep.subr.mxu0 0.0
    %1323 = vmatpush1.xpose.msra.mxu0 0.0
    %1324 = vmatprep.subr.mxu0 0.0
    %1325 = vmatpush1.xpose.msra.mxu0 0.0
    %1326 = vmatprep.subr.mxu0 0.0
    %1327 = vmatpush1.xpose.msra.mxu0 0.0
    %1328 = vmatprep.subr.mxu0 0.0
    %1329 = vmatpush1.xpose.msra.mxu0 0.0
    %1330 = vmatprep.subr.mxu0 0.0
    %1331 = vmatpush1.xpose.msra.mxu0 0.0
    %1332 = vmatprep.subr.mxu0 0.0
    %1333 = vmatpush1.xpose.msra.mxu0 0.0
    %1334 = vmatprep.subr.mxu0 0.0
    %1335 = vmatpush1.xpose.msra.mxu0 0.0
    %1336 = vmatprep.subr.mxu0 0.0
    %1337 = vmatpush1.xpose.msra.mxu0 0.0
    %1338 = vmatprep.subr.mxu0 0.0
    %1339 = vmatpush1.xpose.msra.mxu0 0.0
    %1340 = vmatprep.subr.mxu0 0.0
    %1341 = vmatpush1.xpose.msra.mxu0 0.0
    %1342 = vmatprep.subr.mxu0 0.0
    %1343 = vmatpush1.xpose.msra.mxu0 0.0
    %1344 = vmatprep.subr.mxu0 0.0
    %1345 = vmatpush1.xpose.msra.mxu0 0.0
    %1346 = vmatprep.subr.mxu0 0.0
    %1347 = vmatpush1.xpose.msra.mxu0 0.0
    %1348 = vmatprep.subr.mxu0 0.0
    %1349 = vmatpush1.xpose.msra.mxu0 0.0
    %1350 = vmatprep.subr.mxu0 0.0
    %1351 = vmatpush1.xpose.msra.mxu0 0.0
    %1352 = vmatprep.subr.mxu0 0.0
    %1353 = vmatpush1.xpose.msra.mxu0 0.0
    %1354 = vmatprep.subr.mxu0 0.0
    %1355 = vmatpush1.xpose.msra.mxu0 0.0
    %1356 = vmatprep.subr.mxu0 0.0
    %1357 = vmatpush1.xpose.msra.mxu0 0.0
    %1358 = vmatprep.mubr.f32.mxu0 0.0
    %1359 = vmatmul.mubr.f32.gmra.mrb[0].mxu0 %v1235
    %v1360 = vpop.f32.mrb[0].mxu0
    %v1361 = vadd.f32 %v662, %v1360
    %v1362 = vpop.f32.mrb[0].mxu0
    %1363 = vmatprep.mubr.f32.mxu0 0.0
    %1364 = vmatmul.mubr.f32.gmra.mrb[0].mxu0 %v1238
    %v1365 = vpop.f32.mrb[0].mxu0
    %v1366 = vadd.f32 %v663, %v1365
    %v1367 = vpop.f32.mrb[0].mxu0
    %1368 = vmatprep.mubr.f32.mxu0 0.0
    %1369 = vmatmul.mubr.f32.gmra.mrb[0].mxu0 %v1241
    %v1370 = vpop.f32.mrb[0].mxu0
    %v1371 = vadd.f32 %v664, %v1370
    %v1372 = vpop.f32.mrb[0].mxu0
    %1373 = vmatprep.mubr.f32.mxu0 0.0
    %1374 = vmatmul.mubr.f32.gmra.mrb[0].mxu0 %v1244
    %v1375 = vpop.f32.mrb[0].mxu0
    %v1376 = vadd.f32 %v665, %v1375
    %v1377 = vpop.f32.mrb[0].mxu0
    %1378 = vmatprep.mubr.f32.mxu0 0.0
    %1379 = vmatmul.mubr.f32.gmra.mrb[0].mxu0 %v1247
    %v1380 = vpop.f32.mrb[0].mxu0
    %v1381 = vadd.f32 %v666, %v1380
    %v1382 = vpop.f32.mrb[0].mxu0
    %1383 = vmatprep.mubr.f32.mxu0 0.0
    %1384 = vmatmul.mubr.f32.gmra.mrb[0].mxu0 %v1250
    %v1385 = vpop.f32.mrb[0].mxu0
    %v1386 = vadd.f32 %v667, %v1385
    %v1387 = vpop.f32.mrb[0].mxu0
    %1388 = vmatprep.mubr.f32.mxu0 0.0
    %1389 = vmatmul.mubr.f32.gmra.mrb[0].mxu0 %v1253
    %v1390 = vpop.f32.mrb[0].mxu0
    %v1391 = vadd.f32 %v668, %v1390
    %v1392 = vpop.f32.mrb[0].mxu0
    %1393 = vmatprep.mubr.f32.mxu0 0.0
    %1394 = vmatmul.mubr.f32.gmra.mrb[0].mxu0 %v1256
    %v1395 = vpop.f32.mrb[0].mxu0
    %v1396 = vadd.f32 %v669, %v1395
    %v1397 = vpop.f32.mrb[0].mxu0
    %1398 = vmatprep.mubr.f32.mxu0 0.0
    %1399 = vmatmul.mubr.f32.gmra.mrb[0].mxu0 %v1259
    %v1400 = vpop.f32.mrb[0].mxu0
    %v1401 = vadd.f32 %v670, %v1400
    %v1402 = vpop.f32.mrb[0].mxu0
    %1403 = vmatprep.mubr.f32.mxu0 0.0
    %1404 = vmatmul.mubr.f32.gmra.mrb[0].mxu0 %v1262
    %v1405 = vpop.f32.mrb[0].mxu0
    %v1406 = vadd.f32 %v671, %v1405
    %v1407 = vpop.f32.mrb[0].mxu0
    %1408 = vdwg.mxu0
    %vm1409 = vcmask 654336
    %v1410 = vsel %vm1409, %v1361, -inf
    %1411 = vmax.xlane.f32.xlu0 %v1410
    %v1412 = vpop.xlane.xlu0 %1411
    %v1413 = vsel %vm1409, %v1366, -inf
    %1414 = vmax.xlane.f32.xlu0 %v1413
    %v1415 = vpop.xlane.xlu0 %1414
    %v1416 = vsel %vm1409, %v1371, -inf
    %1417 = vmax.xlane.f32.xlu0 %v1416
    %v1418 = vpop.xlane.xlu0 %1417
    %v1419 = vsel %vm1409, %v1376, -inf
    %1420 = vmax.xlane.f32.xlu0 %v1419
    %v1421 = vpop.xlane.xlu0 %1420
    %v1422 = vsel %vm1409, %v1381, -inf
    %1423 = vmax.xlane.f32.xlu0 %v1422
    %v1424 = vpop.xlane.xlu0 %1423
    %v1425 = vsel %vm1409, %v1386, -inf
    %1426 = vmax.xlane.f32.xlu0 %v1425
    %v1427 = vpop.xlane.xlu0 %1426
    %v1428 = vsel %vm1409, %v1391, -inf
    %1429 = vmax.xlane.f32.xlu0 %v1428
    %v1430 = vpop.xlane.xlu0 %1429
    %v1431 = vsel %vm1409, %v1396, -inf
    %1432 = vmax.xlane.f32.xlu0 %v1431
    %v1433 = vpop.xlane.xlu0 %1432
    %v1434 = vsel %vm1409, %v1401, -inf
    %1435 = vmax.xlane.f32.xlu0 %v1434
    %v1436 = vpop.xlane.xlu0 %1435
    %v1437 = vsel %vm1409, %v1406, -inf
    %1438 = vmax.xlane.f32.xlu0 %v1437
    %v1439 = vpop.xlane.xlu0 %1438
    %v1440 = vsub.f32 %v1361, %v1412
    %v1441 = vsub.f32 %v1366, %v1415
    %v1442 = vsub.f32 %v1371, %v1418
    %v1443 = vsub.f32 %v1376, %v1421
    %v1444 = vsub.f32 %v1381, %v1424
    %v1445 = vsub.f32 %v1386, %v1427
    %v1446 = vsub.f32 %v1391, %v1430
    %v1447 = vsub.f32 %v1396, %v1433
    %v1448 = vsub.f32 %v1401, %v1436
    %v1449 = vsub.f32 %v1406, %v1439
    %v1450 = vmul.f32 %v1440, 1.442695
    %v1451 = vpow.pop %v1450
    %v1452 = vmul.f32 %v1441, 1.442695
    %v1453 = vpow.pop %v1452
    %v1454 = vmul.f32 %v1442, 1.442695
    %v1455 = vpow.pop %v1454
    %v1456 = vmul.f32 %v1443, 1.442695
    %v1457 = vpow.pop %v1456
    %v1458 = vmul.f32 %v1444, 1.442695
    %v1459 = vpow.pop %v1458
    %v1460 = vmul.f32 %v1445, 1.442695
    %v1461 = vpow.pop %v1460
    %v1462 = vmul.f32 %v1446, 1.442695
    %v1463 = vpow.pop %v1462
    %v1464 = vmul.f32 %v1447, 1.442695
    %v1465 = vpow.pop %v1464
    %v1466 = vmul.f32 %v1448, 1.442695
    %v1467 = vpow.pop %v1466
    %v1468 = vmul.f32 %v1449, 1.442695
    %v1469 = vpow.pop %v1468
    %v1470 = vsel %vm1409, %v1451, 0.0
    %1471 = vadd.xlane.f32.xlu0 %v1470
    %v1472 = vpop.xlane.xlu0 %1471
    %v1473 = vsel %vm1409, %v1453, 0.0
    %1474 = vadd.xlane.f32.xlu0 %v1473
    %v1475 = vpop.xlane.xlu0 %1474
    %v1476 = vsel %vm1409, %v1455, 0.0
    %1477 = vadd.xlane.f32.xlu0 %v1476
    %v1478 = vpop.xlane.xlu0 %1477
    %v1479 = vsel %vm1409, %v1457, 0.0
    %1480 = vadd.xlane.f32.xlu0 %v1479
    %v1481 = vpop.xlane.xlu0 %1480
    %v1482 = vsel %vm1409, %v1459, 0.0
    %1483 = vadd.xlane.f32.xlu0 %v1482
    %v1484 = vpop.xlane.xlu0 %1483
    %v1485 = vsel %vm1409, %v1461, 0.0
    %1486 = vadd.xlane.f32.xlu0 %v1485
    %v1487 = vpop.xlane.xlu0 %1486
    %v1488 = vsel %vm1409, %v1463, 0.0
    %1489 = vadd.xlane.f32.xlu0 %v1488
    %v1490 = vpop.xlane.xlu0 %1489
    %v1491 = vsel %vm1409, %v1465, 0.0
    %1492 = vadd.xlane.f32.xlu0 %v1491
    %v1493 = vpop.xlane.xlu0 %1492
    %v1494 = vsel %vm1409, %v1467, 0.0
    %1495 = vadd.xlane.f32.xlu0 %v1494
    %v1496 = vpop.xlane.xlu0 %1495
    %v1497 = vsel %vm1409, %v1469, 0.0
    %1498 = vadd.xlane.f32.xlu0 %v1497
    %v1499 = vpop.xlane.xlu0 %1498
    %v1500 = vrcp.pop %v1472
    %v1501 = vrcp.pop %v1475
    %v1502 = vrcp.pop %v1478
    %v1503 = vrcp.pop %v1481
    %v1504 = vrcp.pop %v1484
    %v1505 = vrcp.pop %v1487
    %v1506 = vrcp.pop %v1490
    %v1507 = vrcp.pop %v1493
    %v1508 = vrcp.pop %v1496
    %v1509 = vrcp.pop %v1499
    %v1510 = vmul.f32 %v1451, %v1500
    %v1511 = vmul.f32 %v1453, %v1501
    %v1512 = vmul.f32 %v1455, %v1502
    %v1513 = vmul.f32 %v1457, %v1503
    %v1514 = vmul.f32 %v1459, %v1504
    %v1515 = vmul.f32 %v1461, %v1505
    %v1516 = vmul.f32 %v1463, %v1506
    %v1517 = vmul.f32 %v1465, %v1507
    %v1518 = vmul.f32 %v1467, %v1508
    %v1519 = vmul.f32 %v1469, %v1509
    %v1521 = vsel %vm1409, %v1510, 0
    %v1524 = vsel %vm1409, %v1511, 0
    %v1527 = vsel %vm1409, %v1512, 0
    %v1530 = vsel %vm1409, %v1513, 0
    %v1533 = vsel %vm1409, %v1514, 0
    %v1536 = vsel %vm1409, %v1515, 0
    %v1539 = vsel %vm1409, %v1516, 0
    %v1542 = vsel %vm1409, %v1517, 0
    %v1545 = vsel %vm1409, %v1518, 0
    %v1548 = vsel %vm1409, %v1519, 0
    %1550 = vmatprep.subr.mxu0 0.0
    %1551 = vmatpush1.msra.mxu0 %v1185
    %1552 = vmatprep.subr.mxu0 0.0
    %1553 = vmatpush1.msra.mxu0 %v1190
    %1554 = vmatprep.subr.mxu0 0.0
    %1555 = vmatpush1.msra.mxu0 %v1195
    %1556 = vmatprep.subr.mxu0 0.0
    %1557 = vmatpush1.msra.mxu0 %v1200
    %1558 = vmatprep.subr.mxu0 0.0
    %1559 = vmatpush1.msra.mxu0 %v1205
    %1560 = vmatprep.subr.mxu0 0.0
    %1561 = vmatpush1.msra.mxu0 %v1210
    %1562 = vmatprep.subr.mxu0 0.0
    %1563 = vmatpush1.msra.mxu0 %v1215
    %1564 = vmatprep.subr.mxu0 0.0
    %1565 = vmatpush1.msra.mxu0 %v1220
    %1566 = vmatprep.subr.mxu0 0.0
    %1567 = vmatpush1.msra.mxu0 %v1225
    %1568 = vmatprep.subr.mxu0 0.0
    %1569 = vmatpush1.msra.mxu0 %v1230
    %1570 = vmatprep.subr.mxu0 0.0
    %1571 = vmatpush1.msra.mxu0 0.0
    %1572 = vmatprep.subr.mxu0 0.0
    %1573 = vmatpush1.msra.mxu0 0.0
    %1574 = vmatprep.subr.mxu0 0.0
    %1575 = vmatpush1.msra.mxu0 0.0
    %1576 = vmatprep.subr.mxu0 0.0
    %1577 = vmatpush1.msra.mxu0 0.0
    %1578 = vmatprep.subr.mxu0 0.0
    %1579 = vmatpush1.msra.mxu0 0.0
    %1580 = vmatprep.subr.mxu0 0.0
    %1581 = vmatpush1.msra.mxu0 0.0
    %1582 = vmatprep.subr.mxu0 0.0
    %1583 = vmatpush1.msra.mxu0 0.0
    %1584 = vmatprep.subr.mxu0 0.0
    %1585 = vmatpush1.msra.mxu0 0.0
    %1586 = vmatprep.subr.mxu0 0.0
    %1587 = vmatpush1.msra.mxu0 0.0
    %1588 = vmatprep.subr.mxu0 0.0
    %1589 = vmatpush1.msra.mxu0 0.0
    %1590 = vmatprep.subr.mxu0 0.0
    %1591 = vmatpush1.msra.mxu0 0.0
    %1592 = vmatprep.subr.mxu0 0.0
    %1593 = vmatpush1.msra.mxu0 0.0
    %1594 = vmatprep.subr.mxu0 0.0
    %1595 = vmatpush1.msra.mxu0 0.0
    %1596 = vmatprep.subr.mxu0 0.0
    %1597 = vmatpush1.msra.mxu0 0.0
    %1598 = vmatprep.subr.mxu0 0.0
    %1599 = vmatpush1.msra.mxu0 0.0
    %1600 = vmatprep.subr.mxu0 0.0
    %1601 = vmatpush1.msra.mxu0 0.0
    %1602 = vmatprep.subr.mxu0 0.0
    %1603 = vmatpush1.msra.mxu0 0.0
    %1604 = vmatprep.subr.mxu0 0.0
    %1605 = vmatpush1.msra.mxu0 0.0
    %1606 = vmatprep.subr.mxu0 0.0
    %1607 = vmatpush1.msra.mxu0 0.0
    %1608 = vmatprep.subr.mxu0 0.0
    %1609 = vmatpush1.msra.mxu0 0.0
    %1610 = vmatprep.subr.mxu0 0.0
    %1611 = vmatpush1.msra.mxu0 0.0
    %1612 = vmatprep.subr.mxu0 0.0
    %1613 = vmatpush1.msra.mxu0 0.0
    %1614 = vmatprep.mubr.f32.mxu0 0.0
    %1615 = vmatmul.mubr.f32.gmra.mrb[0].mxu0 %v1521
    %v1616 = vpop.f32.mrb[0].mxu0
    %v1617 = vadd.f32 0.0, %v1616
    %v1618 = vpop.f32.mrb[0].mxu0
    %1619 = vmatprep.mubr.f32.mxu0 0.0
    %1620 = vmatmul.mubr.f32.gmra.mrb[0].mxu0 %v1524
    %v1621 = vpop.f32.mrb[0].mxu0
    %v1622 = vadd.f32 0.0, %v1621
    %v1623 = vpop.f32.mrb[0].mxu0
    %1624 = vmatprep.mubr.f32.mxu0 0.0
    %1625 = vmatmul.mubr.f32.gmra.mrb[0].mxu0 %v1527
    %v1626 = vpop.f32.mrb[0].mxu0
    %v1627 = vadd.f32 0.0, %v1626
    %v1628 = vpop.f32.mrb[0].mxu0
    %1629 = vmatprep.mubr.f32.mxu0 0.0
    %1630 = vmatmul.mubr.f32.gmra.mrb[0].mxu0 %v1530
    %v1631 = vpop.f32.mrb[0].mxu0
    %v1632 = vadd.f32 0.0, %v1631
    %v1633 = vpop.f32.mrb[0].mxu0
    %1634 = vmatprep.mubr.f32.mxu0 0.0
    %1635 = vmatmul.mubr.f32.gmra.mrb[0].mxu0 %v1533
    %v1636 = vpop.f32.mrb[0].mxu0
    %v1637 = vadd.f32 0.0, %v1636
    %v1638 = vpop.f32.mrb[0].mxu0
    %1639 = vmatprep.mubr.f32.mxu0 0.0
    %1640 = vmatmul.mubr.f32.gmra.mrb[0].mxu0 %v1536
    %v1641 = vpop.f32.mrb[0].mxu0
    %v1642 = vadd.f32 0.0, %v1641
    %v1643 = vpop.f32.mrb[0].mxu0
    %1644 = vmatprep.mubr.f32.mxu0 0.0
    %1645 = vmatmul.mubr.f32.gmra.mrb[0].mxu0 %v1539
    %v1646 = vpop.f32.mrb[0].mxu0
    %v1647 = vadd.f32 0.0, %v1646
    %v1648 = vpop.f32.mrb[0].mxu0
    %1649 = vmatprep.mubr.f32.mxu0 0.0
    %1650 = vmatmul.mubr.f32.gmra.mrb[0].mxu0 %v1542
    %v1651 = vpop.f32.mrb[0].mxu0
    %v1652 = vadd.f32 0.0, %v1651
    %v1653 = vpop.f32.mrb[0].mxu0
    %1654 = vmatprep.mubr.f32.mxu0 0.0
    %1655 = vmatmul.mubr.f32.gmra.mrb[0].mxu0 %v1545
    %v1656 = vpop.f32.mrb[0].mxu0
    %v1657 = vadd.f32 0.0, %v1656
    %v1658 = vpop.f32.mrb[0].mxu0
    %1659 = vmatprep.mubr.f32.mxu0 0.0
    %1660 = vmatmul.mubr.f32.gmra.mrb[0].mxu0 %v1548
    %v1661 = vpop.f32.mrb[0].mxu0
    %v1662 = vadd.f32 0.0, %v1661
    %v1663 = vpop.f32.mrb[0].mxu0
    %1664 = vdwg.mxu0
    %v1665 = vld [vmem:[%s10] sm:$0xff]
    %s1666 = scalar_lea.vmem %s7, 32
    %v1667 = vld [vmem:[%s1666] sm:$0xff]
    %v1668 = vld [vmem:[%s1666 + $0x8] sm:$0xff]
    %v1669 = vld [vmem:[%s1666 + $0x10] sm:$0xff]
    %v1670 = vld [vmem:[%s1666 + $0x18] sm:$0xff]
    %1672 = vrot.lane.b32.xlu0 %v841, 120
    %v1673 = vpop.permute.xlu0 %1672
    %1675 = vmatprep.subr.mxu0 0.0
    %1676 = vmatpush1.msra.mxu0 %v1667
    %1677 = vmatprep.subr.mxu0 0.0
    %1678 = vmatpush1.msra.mxu0 %v1668
    %1679 = vmatprep.subr.mxu0 0.0
    %1680 = vmatpush1.msra.mxu0 %v1669
    %1681 = vmatprep.subr.mxu0 0.0
    %1682 = vmatpush1.msra.mxu0 %v1670
    %1683 = vmatprep.subr.mxu0 0.0
    %1684 = vmatpush1.msra.mxu0 0.0
    %1685 = vmatprep.subr.mxu0 0.0
    %1686 = vmatpush1.msra.mxu0 0.0
    %1687 = vmatprep.subr.mxu0 0.0
    %1688 = vmatpush1.msra.mxu0 0.0
    %1689 = vmatprep.subr.mxu0 0.0
    %1690 = vmatpush1.msra.mxu0 0.0
    %1691 = vmatprep.subr.mxu0 0.0
    %1692 = vmatpush1.msra.mxu0 0.0
    %1693 = vmatprep.subr.mxu0 0.0
    %1694 = vmatpush1.msra.mxu0 0.0
    %1695 = vmatprep.subr.mxu0 0.0
    %1696 = vmatpush1.msra.mxu0 0.0
    %1697 = vmatprep.subr.mxu0 0.0
    %1698 = vmatpush1.msra.mxu0 0.0
    %1699 = vmatprep.subr.mxu0 0.0
    %1700 = vmatpush1.msra.mxu0 0.0
    %1701 = vmatprep.subr.mxu0 0.0
    %1702 = vmatpush1.msra.mxu0 0.0
    %1703 = vmatprep.subr.mxu0 0.0
    %1704 = vmatpush1.msra.mxu0 0.0
    %1705 = vmatprep.subr.mxu0 0.0
    %1706 = vmatpush1.msra.mxu0 0.0
    %1707 = vmatprep.subr.mxu0 0.0
    %1708 = vmatpush1.msra.mxu0 0.0
    %1709 = vmatprep.subr.mxu0 0.0
    %1710 = vmatpush1.msra.mxu0 0.0
    %1711 = vmatprep.subr.mxu0 0.0
    %1712 = vmatpush1.msra.mxu0 0.0
    %1713 = vmatprep.subr.mxu0 0.0
    %1714 = vmatpush1.msra.mxu0 0.0
    %1715 = vmatprep.subr.mxu0 0.0
    %1716 = vmatpush1.msra.mxu0 0.0
    %1717 = vmatprep.subr.mxu0 0.0
    %1718 = vmatpush1.msra.mxu0 0.0
    %1719 = vmatprep.subr.mxu0 0.0
    %1720 = vmatpush1.msra.mxu0 0.0
    %1721 = vmatprep.subr.mxu0 0.0
    %1722 = vmatpush1.msra.mxu0 0.0
    %1723 = vmatprep.subr.mxu0 0.0
    %1724 = vmatpush1.msra.mxu0 0.0
    %1725 = vmatprep.subr.mxu0 0.0
    %1726 = vmatpush1.msra.mxu0 0.0
    %1727 = vmatprep.subr.mxu0 0.0
    %1728 = vmatpush1.msra.mxu0 0.0
    %1729 = vmatprep.subr.mxu0 0.0
    %1730 = vmatpush1.msra.mxu0 0.0
    %1731 = vmatprep.subr.mxu0 0.0
    %1732 = vmatpush1.msra.mxu0 0.0
    %1733 = vmatprep.subr.mxu0 0.0
    %1734 = vmatpush1.msra.mxu0 0.0
    %1735 = vmatprep.subr.mxu0 0.0
    %1736 = vmatpush1.msra.mxu0 0.0
    %1737 = vmatprep.subr.mxu0 0.0
    %1738 = vmatpush1.msra.mxu0 0.0
    %1739 = vmatprep.mubr.f32.mxu0 0.0
    %1740 = vmatmul.mubr.f32.gmra.mrb[0].mxu0 %v843
    %v1741 = vpop.f32.mrb[0].mxu0
    %v1742 = vadd.f32 %v1673, %v1741
    %v1743 = vpop.f32.mrb[0].mxu0
    %1744 = vmatprep.mubr.f32.mxu0 0.0
    %1745 = vmatmul.mubr.f32.gmra.mrb[0].mxu0 %v846
    %v1746 = vpop.f32.mrb[0].mxu0
    %v1747 = vadd.f32 %v1673, %v1746
    %v1748 = vpop.f32.mrb[0].mxu0
    %1749 = vmatprep.mubr.f32.mxu0 0.0
    %1750 = vmatmul.mubr.f32.gmra.mrb[0].mxu0 %v849
    %v1751 = vpop.f32.mrb[0].mxu0
    %v1752 = vadd.f32 %v1673, %v1751
    %v1753 = vpop.f32.mrb[0].mxu0
    %1754 = vmatprep.mubr.f32.mxu0 0.0
    %1755 = vmatmul.mubr.f32.gmra.mrb[0].mxu0 %v852
    %v1756 = vpop.f32.mrb[0].mxu0
    %v1757 = vadd.f32 %v1673, %v1756
    %v1758 = vpop.f32.mrb[0].mxu0
    %1759 = vmatprep.mubr.f32.mxu0 0.0
    %1760 = vmatmul.mubr.f32.gmra.mrb[0].mxu0 %v855
    %v1761 = vpop.f32.mrb[0].mxu0
    %v1762 = vadd.f32 %v1673, %v1761
    %v1763 = vpop.f32.mrb[0].mxu0
    %1764 = vmatprep.mubr.f32.mxu0 0.0
    %1765 = vmatmul.mubr.f32.gmra.mrb[0].mxu0 %v858
    %v1766 = vpop.f32.mrb[0].mxu0
    %v1767 = vadd.f32 %v1673, %v1766
    %v1768 = vpop.f32.mrb[0].mxu0
    %1769 = vmatprep.mubr.f32.mxu0 0.0
    %1770 = vmatmul.mubr.f32.gmra.mrb[0].mxu0 %v861
    %v1771 = vpop.f32.mrb[0].mxu0
    %v1772 = vadd.f32 %v1673, %v1771
    %v1773 = vpop.f32.mrb[0].mxu0
    %1774 = vmatprep.mubr.f32.mxu0 0.0
    %1775 = vmatmul.mubr.f32.gmra.mrb[0].mxu0 %v864
    %v1776 = vpop.f32.mrb[0].mxu0
    %v1777 = vadd.f32 %v1673, %v1776
    %v1778 = vpop.f32.mrb[0].mxu0
    %1779 = vmatprep.mubr.f32.mxu0 0.0
    %1780 = vmatmul.mubr.f32.gmra.mrb[0].mxu0 %v867
    %v1781 = vpop.f32.mrb[0].mxu0
    %v1782 = vadd.f32 %v1673, %v1781
    %v1783 = vpop.f32.mrb[0].mxu0
    %1784 = vmatprep.mubr.f32.mxu0 0.0
    %1785 = vmatmul.mubr.f32.gmra.mrb[0].mxu0 %v870
    %v1786 = vpop.f32.mrb[0].mxu0
    %v1787 = vadd.f32 %v1673, %v1786
    %v1788 = vpop.f32.mrb[0].mxu0
    %1789 = vdwg.mxu0
    %s1790 = scalar_lea.vmem %s8, 32
    %v1791 = vld [vmem:[%s1790] sm:$0xff]
    %v1792 = vld [vmem:[%s1790 + $0x8] sm:$0xff]
    %v1793 = vld [vmem:[%s1790 + $0x10] sm:$0xff]
    %v1794 = vld [vmem:[%s1790 + $0x18] sm:$0xff]
    %1796 = vrot.lane.b32.xlu0 %v994, 120
    %v1797 = vpop.permute.xlu0 %1796
    %1799 = vmatprep.subr.mxu0 0.0
    %1800 = vmatpush1.msra.mxu0 %v1791
    %1801 = vmatprep.subr.mxu0 0.0
    %1802 = vmatpush1.msra.mxu0 %v1792
    %1803 = vmatprep.subr.mxu0 0.0
    %1804 = vmatpush1.msra.mxu0 %v1793
    %1805 = vmatprep.subr.mxu0 0.0
    %1806 = vmatpush1.msra.mxu0 %v1794
    %1807 = vmatprep.subr.mxu0 0.0
    %1808 = vmatpush1.msra.mxu0 0.0
    %1809 = vmatprep.subr.mxu0 0.0
    %1810 = vmatpush1.msra.mxu0 0.0
    %1811 = vmatprep.subr.mxu0 0.0
    %1812 = vmatpush1.msra.mxu0 0.0
    %1813 = vmatprep.subr.mxu0 0.0
    %1814 = vmatpush1.msra.mxu0 0.0
    %1815 = vmatprep.subr.mxu0 0.0
    %1816 = vmatpush1.msra.mxu0 0.0
    %1817 = vmatprep.subr.mxu0 0.0
    %1818 = vmatpush1.msra.mxu0 0.0
    %1819 = vmatprep.subr.mxu0 0.0
    %1820 = vmatpush1.msra.mxu0 0.0
    %1821 = vmatprep.subr.mxu0 0.0
    %1822 = vmatpush1.msra.mxu0 0.0
    %1823 = vmatprep.subr.mxu0 0.0
    %1824 = vmatpush1.msra.mxu0 0.0
    %1825 = vmatprep.subr.mxu0 0.0
    %1826 = vmatpush1.msra.mxu0 0.0
    %1827 = vmatprep.subr.mxu0 0.0
    %1828 = vmatpush1.msra.mxu0 0.0
    %1829 = vmatprep.subr.mxu0 0.0
    %1830 = vmatpush1.msra.mxu0 0.0
    %1831 = vmatprep.subr.mxu0 0.0
    %1832 = vmatpush1.msra.mxu0 0.0
    %1833 = vmatprep.subr.mxu0 0.0
    %1834 = vmatpush1.msra.mxu0 0.0
    %1835 = vmatprep.subr.mxu0 0.0
    %1836 = vmatpush1.msra.mxu0 0.0
    %1837 = vmatprep.subr.mxu0 0.0
    %1838 = vmatpush1.msra.mxu0 0.0
    %1839 = vmatprep.subr.mxu0 0.0
    %1840 = vmatpush1.msra.mxu0 0.0
    %1841 = vmatprep.subr.mxu0 0.0
    %1842 = vmatpush1.msra.mxu0 0.0
    %1843 = vmatprep.subr.mxu0 0.0
    %1844 = vmatpush1.msra.mxu0 0.0
    %1845 = vmatprep.subr.mxu0 0.0
    %1846 = vmatpush1.msra.mxu0 0.0
    %1847 = vmatprep.subr.mxu0 0.0
    %1848 = vmatpush1.msra.mxu0 0.0
    %1849 = vmatprep.subr.mxu0 0.0
    %1850 = vmatpush1.msra.mxu0 0.0
    %1851 = vmatprep.subr.mxu0 0.0
    %1852 = vmatpush1.msra.mxu0 0.0
    %1853 = vmatprep.subr.mxu0 0.0
    %1854 = vmatpush1.msra.mxu0 0.0
    %1855 = vmatprep.subr.mxu0 0.0
    %1856 = vmatpush1.msra.mxu0 0.0
    %1857 = vmatprep.subr.mxu0 0.0
    %1858 = vmatpush1.msra.mxu0 0.0
    %1859 = vmatprep.subr.mxu0 0.0
    %1860 = vmatpush1.msra.mxu0 0.0
    %1861 = vmatprep.subr.mxu0 0.0
    %1862 = vmatpush1.msra.mxu0 0.0
    %1863 = vmatprep.mubr.f32.mxu0 0.0
    %1864 = vmatmul.mubr.f32.gmra.mrb[0].mxu0 %v843
    %v1865 = vpop.f32.mrb[0].mxu0
    %v1866 = vadd.f32 %v1797, %v1865
    %v1867 = vpop.f32.mrb[0].mxu0
    %1868 = vmatprep.mubr.f32.mxu0 0.0
    %1869 = vmatmul.mubr.f32.gmra.mrb[0].mxu0 %v846
    %v1870 = vpop.f32.mrb[0].mxu0
    %v1871 = vadd.f32 %v1797, %v1870
    %v1872 = vpop.f32.mrb[0].mxu0
    %1873 = vmatprep.mubr.f32.mxu0 0.0
    %1874 = vmatmul.mubr.f32.gmra.mrb[0].mxu0 %v849
    %v1875 = vpop.f32.mrb[0].mxu0
    %v1876 = vadd.f32 %v1797, %v1875
    %v1877 = vpop.f32.mrb[0].mxu0
    %1878 = vmatprep.mubr.f32.mxu0 0.0
    %1879 = vmatmul.mubr.f32.gmra.mrb[0].mxu0 %v852
    %v1880 = vpop.f32.mrb[0].mxu0
    %v1881 = vadd.f32 %v1797, %v1880
    %v1882 = vpop.f32.mrb[0].mxu0
    %1883 = vmatprep.mubr.f32.mxu0 0.0
    %1884 = vmatmul.mubr.f32.gmra.mrb[0].mxu0 %v855
    %v1885 = vpop.f32.mrb[0].mxu0
    %v1886 = vadd.f32 %v1797, %v1885
    %v1887 = vpop.f32.mrb[0].mxu0
    %1888 = vmatprep.mubr.f32.mxu0 0.0
    %1889 = vmatmul.mubr.f32.gmra.mrb[0].mxu0 %v858
    %v1890 = vpop.f32.mrb[0].mxu0
    %v1891 = vadd.f32 %v1797, %v1890
    %v1892 = vpop.f32.mrb[0].mxu0
    %1893 = vmatprep.mubr.f32.mxu0 0.0
    %1894 = vmatmul.mubr.f32.gmra.mrb[0].mxu0 %v861
    %v1895 = vpop.f32.mrb[0].mxu0
    %v1896 = vadd.f32 %v1797, %v1895
    %v1897 = vpop.f32.mrb[0].mxu0
    %1898 = vmatprep.mubr.f32.mxu0 0.0
    %1899 = vmatmul.mubr.f32.gmra.mrb[0].mxu0 %v864
    %v1900 = vpop.f32.mrb[0].mxu0
    %v1901 = vadd.f32 %v1797, %v1900
    %v1902 = vpop.f32.mrb[0].mxu0
    %1903 = vmatprep.mubr.f32.mxu0 0.0
    %1904 = vmatmul.mubr.f32.gmra.mrb[0].mxu0 %v867
    %v1905 = vpop.f32.mrb[0].mxu0
    %v1906 = vadd.f32 %v1797, %v1905
    %v1907 = vpop.f32.mrb[0].mxu0
    %1908 = vmatprep.mubr.f32.mxu0 0.0
    %1909 = vmatmul.mubr.f32.gmra.mrb[0].mxu0 %v870
    %v1910 = vpop.f32.mrb[0].mxu0
    %v1911 = vadd.f32 %v1797, %v1910
    %v1912 = vpop.f32.mrb[0].mxu0
    %1913 = vdwg.mxu0
    %s1914 = scalar_lea.vmem %s9, 32
    %v1915 = vld [vmem:[%s1914] sm:$0xff]
    %v1916 = vld [vmem:[%s1914 + $0x8] sm:$0xff]
    %v1917 = vld [vmem:[%s1914 + $0x10] sm:$0xff]
    %v1918 = vld [vmem:[%s1914 + $0x18] sm:$0xff]
    %1920 = vrot.lane.b32.xlu0 %v1117, 120
    %v1921 = vpop.permute.xlu0 %1920
    %1923 = vmatprep.subr.mxu0 0.0
    %1924 = vmatpush1.msra.mxu0 %v1915
    %1925 = vmatprep.subr.mxu0 0.0
    %1926 = vmatpush1.msra.mxu0 %v1916
    %1927 = vmatprep.subr.mxu0 0.0
    %1928 = vmatpush1.msra.mxu0 %v1917
    %1929 = vmatprep.subr.mxu0 0.0
    %1930 = vmatpush1.msra.mxu0 %v1918
    %1931 = vmatprep.subr.mxu0 0.0
    %1932 = vmatpush1.msra.mxu0 0.0
    %1933 = vmatprep.subr.mxu0 0.0
    %1934 = vmatpush1.msra.mxu0 0.0
    %1935 = vmatprep.subr.mxu0 0.0
    %1936 = vmatpush1.msra.mxu0 0.0
    %1937 = vmatprep.subr.mxu0 0.0
    %1938 = vmatpush1.msra.mxu0 0.0
    %1939 = vmatprep.subr.mxu0 0.0
    %1940 = vmatpush1.msra.mxu0 0.0
    %1941 = vmatprep.subr.mxu0 0.0
    %1942 = vmatpush1.msra.mxu0 0.0
    %1943 = vmatprep.subr.mxu0 0.0
    %1944 = vmatpush1.msra.mxu0 0.0
    %1945 = vmatprep.subr.mxu0 0.0
    %1946 = vmatpush1.msra.mxu0 0.0
    %1947 = vmatprep.subr.mxu0 0.0
    %1948 = vmatpush1.msra.mxu0 0.0
    %1949 = vmatprep.subr.mxu0 0.0
    %1950 = vmatpush1.msra.mxu0 0.0
    %1951 = vmatprep.subr.mxu0 0.0
    %1952 = vmatpush1.msra.mxu0 0.0
    %1953 = vmatprep.subr.mxu0 0.0
    %1954 = vmatpush1.msra.mxu0 0.0
    %1955 = vmatprep.subr.mxu0 0.0
    %1956 = vmatpush1.msra.mxu0 0.0
    %1957 = vmatprep.subr.mxu0 0.0
    %1958 = vmatpush1.msra.mxu0 0.0
    %1959 = vmatprep.subr.mxu0 0.0
    %1960 = vmatpush1.msra.mxu0 0.0
    %1961 = vmatprep.subr.mxu0 0.0
    %1962 = vmatpush1.msra.mxu0 0.0
    %1963 = vmatprep.subr.mxu0 0.0
    %1964 = vmatpush1.msra.mxu0 0.0
    %1965 = vmatprep.subr.mxu0 0.0
    %1966 = vmatpush1.msra.mxu0 0.0
    %1967 = vmatprep.subr.mxu0 0.0
    %1968 = vmatpush1.msra.mxu0 0.0
    %1969 = vmatprep.subr.mxu0 0.0
    %1970 = vmatpush1.msra.mxu0 0.0
    %1971 = vmatprep.subr.mxu0 0.0
    %1972 = vmatpush1.msra.mxu0 0.0
    %1973 = vmatprep.subr.mxu0 0.0
    %1974 = vmatpush1.msra.mxu0 0.0
    %1975 = vmatprep.subr.mxu0 0.0
    %1976 = vmatpush1.msra.mxu0 0.0
    %1977 = vmatprep.subr.mxu0 0.0
    %1978 = vmatpush1.msra.mxu0 0.0
    %1979 = vmatprep.subr.mxu0 0.0
    %1980 = vmatpush1.msra.mxu0 0.0
    %1981 = vmatprep.subr.mxu0 0.0
    %1982 = vmatpush1.msra.mxu0 0.0
    %1983 = vmatprep.subr.mxu0 0.0
    %1984 = vmatpush1.msra.mxu0 0.0
    %1985 = vmatprep.subr.mxu0 0.0
    %1986 = vmatpush1.msra.mxu0 0.0
    %1987 = vmatprep.mubr.f32.mxu0 0.0
    %1988 = vmatmul.mubr.f32.gmra.mrb[0].mxu0 %v843
    %v1989 = vpop.f32.mrb[0].mxu0
    %v1990 = vadd.f32 %v1921, %v1989
    %v1991 = vpop.f32.mrb[0].mxu0
    %1992 = vmatprep.mubr.f32.mxu0 0.0
    %1993 = vmatmul.mubr.f32.gmra.mrb[0].mxu0 %v846
    %v1994 = vpop.f32.mrb[0].mxu0
    %v1995 = vadd.f32 %v1921, %v1994
    %v1996 = vpop.f32.mrb[0].mxu0
    %1997 = vmatprep.mubr.f32.mxu0 0.0
    %1998 = vmatmul.mubr.f32.gmra.mrb[0].mxu0 %v849
    %v1999 = vpop.f32.mrb[0].mxu0
    %v2000 = vadd.f32 %v1921, %v1999
    %v2001 = vpop.f32.mrb[0].mxu0
    %2002 = vmatprep.mubr.f32.mxu0 0.0
    %2003 = vmatmul.mubr.f32.gmra.mrb[0].mxu0 %v852
    %v2004 = vpop.f32.mrb[0].mxu0
    %v2005 = vadd.f32 %v1921, %v2004
    %v2006 = vpop.f32.mrb[0].mxu0
    %2007 = vmatprep.mubr.f32.mxu0 0.0
    %2008 = vmatmul.mubr.f32.gmra.mrb[0].mxu0 %v855
    %v2009 = vpop.f32.mrb[0].mxu0
    %v2010 = vadd.f32 %v1921, %v2009
    %v2011 = vpop.f32.mrb[0].mxu0
    %2012 = vmatprep.mubr.f32.mxu0 0.0
    %2013 = vmatmul.mubr.f32.gmra.mrb[0].mxu0 %v858
    %v2014 = vpop.f32.mrb[0].mxu0
    %v2015 = vadd.f32 %v1921, %v2014
    %v2016 = vpop.f32.mrb[0].mxu0
    %2017 = vmatprep.mubr.f32.mxu0 0.0
    %2018 = vmatmul.mubr.f32.gmra.mrb[0].mxu0 %v861
    %v2019 = vpop.f32.mrb[0].mxu0
    %v2020 = vadd.f32 %v1921, %v2019
    %v2021 = vpop.f32.mrb[0].mxu0
    %2022 = vmatprep.mubr.f32.mxu0 0.0
    %2023 = vmatmul.mubr.f32.gmra.mrb[0].mxu0 %v864
    %v2024 = vpop.f32.mrb[0].mxu0
    %v2025 = vadd.f32 %v1921, %v2024
    %v2026 = vpop.f32.mrb[0].mxu0
    %2027 = vmatprep.mubr.f32.mxu0 0.0
    %2028 = vmatmul.mubr.f32.gmra.mrb[0].mxu0 %v867
    %v2029 = vpop.f32.mrb[0].mxu0
    %v2030 = vadd.f32 %v1921, %v2029
    %v2031 = vpop.f32.mrb[0].mxu0
    %2032 = vmatprep.mubr.f32.mxu0 0.0
    %2033 = vmatmul.mubr.f32.gmra.mrb[0].mxu0 %v870
    %v2034 = vpop.f32.mrb[0].mxu0
    %v2035 = vadd.f32 %v1921, %v2034
    %v2036 = vpop.f32.mrb[0].mxu0
    %2037 = vdwg.mxu0
    %v2039 = vsel %vm1233, %v1742, 0
    %v2042 = vsel %vm1233, %v1747, 0
    %v2045 = vsel %vm1233, %v1752, 0
    %v2048 = vsel %vm1233, %v1757, 0
    %v2051 = vsel %vm1233, %v1762, 0
    %v2054 = vsel %vm1233, %v1767, 0
    %v2057 = vsel %vm1233, %v1772, 0
    %v2060 = vsel %vm1233, %v1777, 0
    %v2063 = vsel %vm1233, %v1782, 0
    %v2066 = vsel %vm1233, %v1787, 0
    %v2069 = vsel %vm1233, %v1866, 0
    %v2072 = vsel %vm1233, %v1871, 0
    %v2075 = vsel %vm1233, %v1876, 0
    %v2078 = vsel %vm1233, %v1881, 0
    %v2081 = vsel %vm1233, %v1886, 0
    %v2084 = vsel %vm1233, %v1891, 0
    %v2087 = vsel %vm1233, %v1896, 0
    %v2090 = vsel %vm1233, %v1901, 0
    %v2093 = vsel %vm1233, %v1906, 0
    %v2096 = vsel %vm1233, %v1911, 0
    %2098 = vmatprep.subr.mxu0 0.0
    %2099 = vmatpush1.xpose.msra.mxu0 %v2069
    %2100 = vmatprep.subr.mxu0 0.0
    %2101 = vmatpush1.xpose.msra.mxu0 %v2072
    %2102 = vmatprep.subr.mxu0 0.0
    %2103 = vmatpush1.xpose.msra.mxu0 %v2075
    %2104 = vmatprep.subr.mxu0 0.0
    %2105 = vmatpush1.xpose.msra.mxu0 %v2078
    %2106 = vmatprep.subr.mxu0 0.0
    %2107 = vmatpush1.xpose.msra.mxu0 %v2081
    %2108 = vmatprep.subr.mxu0 0.0
    %2109 = vmatpush1.xpose.msra.mxu0 %v2084
    %2110 = vmatprep.subr.mxu0 0.0
    %2111 = vmatpush1.xpose.msra.mxu0 %v2087
    %2112 = vmatprep.subr.mxu0 0.0
    %2113 = vmatpush1.xpose.msra.mxu0 %v2090
    %2114 = vmatprep.subr.mxu0 0.0
    %2115 = vmatpush1.xpose.msra.mxu0 %v2093
    %2116 = vmatprep.subr.mxu0 0.0
    %2117 = vmatpush1.xpose.msra.mxu0 %v2096
    %2118 = vmatprep.subr.mxu0 0.0
    %2119 = vmatpush1.xpose.msra.mxu0 0.0
    %2120 = vmatprep.subr.mxu0 0.0
    %2121 = vmatpush1.xpose.msra.mxu0 0.0
    %2122 = vmatprep.subr.mxu0 0.0
    %2123 = vmatpush1.xpose.msra.mxu0 0.0
    %2124 = vmatprep.subr.mxu0 0.0
    %2125 = vmatpush1.xpose.msra.mxu0 0.0
    %2126 = vmatprep.subr.mxu0 0.0
    %2127 = vmatpush1.xpose.msra.mxu0 0.0
    %2128 = vmatprep.subr.mxu0 0.0
    %2129 = vmatpush1.xpose.msra.mxu0 0.0
    %2130 = vmatprep.subr.mxu0 0.0
    %2131 = vmatpush1.xpose.msra.mxu0 0.0
    %2132 = vmatprep.subr.mxu0 0.0
    %2133 = vmatpush1.xpose.msra.mxu0 0.0
    %2134 = vmatprep.subr.mxu0 0.0
    %2135 = vmatpush1.xpose.msra.mxu0 0.0
    %2136 = vmatprep.subr.mxu0 0.0
    %2137 = vmatpush1.xpose.msra.mxu0 0.0
    %2138 = vmatprep.subr.mxu0 0.0
    %2139 = vmatpush1.xpose.msra.mxu0 0.0
    %2140 = vmatprep.subr.mxu0 0.0
    %2141 = vmatpush1.xpose.msra.mxu0 0.0
    %2142 = vmatprep.subr.mxu0 0.0
    %2143 = vmatpush1.xpose.msra.mxu0 0.0
    %2144 = vmatprep.subr.mxu0 0.0
    %2145 = vmatpush1.xpose.msra.mxu0 0.0
    %2146 = vmatprep.subr.mxu0 0.0
    %2147 = vmatpush1.xpose.msra.mxu0 0.0
    %2148 = vmatprep.subr.mxu0 0.0
    %2149 = vmatpush1.xpose.msra.mxu0 0.0
    %2150 = vmatprep.subr.mxu0 0.0
    %2151 = vmatpush1.xpose.msra.mxu0 0.0
    %2152 = vmatprep.subr.mxu0 0.0
    %2153 = vmatpush1.xpose.msra.mxu0 0.0
    %2154 = vmatprep.subr.mxu0 0.0
    %2155 = vmatpush1.xpose.msra.mxu0 0.0
    %2156 = vmatprep.subr.mxu0 0.0
    %2157 = vmatpush1.xpose.msra.mxu0 0.0
    %2158 = vmatprep.subr.mxu0 0.0
    %2159 = vmatpush1.xpose.msra.mxu0 0.0
    %2160 = vmatprep.subr.mxu0 0.0
    %2161 = vmatpush1.xpose.msra.mxu0 0.0
    %2162 = vmatprep.mubr.f32.mxu0 0.0
    %2163 = vmatmul.mubr.f32.gmra.mrb[0].mxu0 %v2039
    %v2164 = vpop.f32.mrb[0].mxu0
    %v2165 = vadd.f32 %v662, %v2164
    %v2166 = vpop.f32.mrb[0].mxu0
    %2167 = vmatprep.mubr.f32.mxu0 0.0
    %2168 = vmatmul.mubr.f32.gmra.mrb[0].mxu0 %v2042
    %v2169 = vpop.f32.mrb[0].mxu0
    %v2170 = vadd.f32 %v663, %v2169
    %v2171 = vpop.f32.mrb[0].mxu0
    %2172 = vmatprep.mubr.f32.mxu0 0.0
    %2173 = vmatmul.mubr.f32.gmra.mrb[0].mxu0 %v2045
    %v2174 = vpop.f32.mrb[0].mxu0
    %v2175 = vadd.f32 %v664, %v2174
    %v2176 = vpop.f32.mrb[0].mxu0
    %2177 = vmatprep.mubr.f32.mxu0 0.0
    %2178 = vmatmul.mubr.f32.gmra.mrb[0].mxu0 %v2048
    %v2179 = vpop.f32.mrb[0].mxu0
    %v2180 = vadd.f32 %v665, %v2179
    %v2181 = vpop.f32.mrb[0].mxu0
    %2182 = vmatprep.mubr.f32.mxu0 0.0
    %2183 = vmatmul.mubr.f32.gmra.mrb[0].mxu0 %v2051
    %v2184 = vpop.f32.mrb[0].mxu0
    %v2185 = vadd.f32 %v666, %v2184
    %v2186 = vpop.f32.mrb[0].mxu0
    %2187 = vmatprep.mubr.f32.mxu0 0.0
    %2188 = vmatmul.mubr.f32.gmra.mrb[0].mxu0 %v2054
    %v2189 = vpop.f32.mrb[0].mxu0
    %v2190 = vadd.f32 %v667, %v2189
    %v2191 = vpop.f32.mrb[0].mxu0
    %2192 = vmatprep.mubr.f32.mxu0 0.0
    %2193 = vmatmul.mubr.f32.gmra.mrb[0].mxu0 %v2057
    %v2194 = vpop.f32.mrb[0].mxu0
    %v2195 = vadd.f32 %v668, %v2194
    %v2196 = vpop.f32.mrb[0].mxu0
    %2197 = vmatprep.mubr.f32.mxu0 0.0
    %2198 = vmatmul.mubr.f32.gmra.mrb[0].mxu0 %v2060
    %v2199 = vpop.f32.mrb[0].mxu0
    %v2200 = vadd.f32 %v669, %v2199
    %v2201 = vpop.f32.mrb[0].mxu0
    %2202 = vmatprep.mubr.f32.mxu0 0.0
    %2203 = vmatmul.mubr.f32.gmra.mrb[0].mxu0 %v2063
    %v2204 = vpop.f32.mrb[0].mxu0
    %v2205 = vadd.f32 %v670, %v2204
    %v2206 = vpop.f32.mrb[0].mxu0
    %2207 = vmatprep.mubr.f32.mxu0 0.0
    %2208 = vmatmul.mubr.f32.gmra.mrb[0].mxu0 %v2066
    %v2209 = vpop.f32.mrb[0].mxu0
    %v2210 = vadd.f32 %v671, %v2209
    %v2211 = vpop.f32.mrb[0].mxu0
    %2212 = vdwg.mxu0
    %v2213 = vsel %vm1409, %v2165, -inf
    %2214 = vmax.xlane.f32.xlu0 %v2213
    %v2215 = vpop.xlane.xlu0 %2214
    %v2216 = vsel %vm1409, %v2170, -inf
    %2217 = vmax.xlane.f32.xlu0 %v2216
    %v2218 = vpop.xlane.xlu0 %2217
    %v2219 = vsel %vm1409, %v2175, -inf
    %2220 = vmax.xlane.f32.xlu0 %v2219
    %v2221 = vpop.xlane.xlu0 %2220
    %v2222 = vsel %vm1409, %v2180, -inf
    %2223 = vmax.xlane.f32.xlu0 %v2222
    %v2224 = vpop.xlane.xlu0 %2223
    %v2225 = vsel %vm1409, %v2185, -inf
    %2226 = vmax.xlane.f32.xlu0 %v2225
    %v2227 = vpop.xlane.xlu0 %2226
    %v2228 = vsel %vm1409, %v2190, -inf
    %2229 = vmax.xlane.f32.xlu0 %v2228
    %v2230 = vpop.xlane.xlu0 %2229
    %v2231 = vsel %vm1409, %v2195, -inf
    %2232 = vmax.xlane.f32.xlu0 %v2231
    %v2233 = vpop.xlane.xlu0 %2232
    %v2234 = vsel %vm1409, %v2200, -inf
    %2235 = vmax.xlane.f32.xlu0 %v2234
    %v2236 = vpop.xlane.xlu0 %2235
    %v2237 = vsel %vm1409, %v2205, -inf
    %2238 = vmax.xlane.f32.xlu0 %v2237
    %v2239 = vpop.xlane.xlu0 %2238
    %v2240 = vsel %vm1409, %v2210, -inf
    %2241 = vmax.xlane.f32.xlu0 %v2240
    %v2242 = vpop.xlane.xlu0 %2241
    %v2243 = vsub.f32 %v2165, %v2215
    %v2244 = vsub.f32 %v2170, %v2218
    %v2245 = vsub.f32 %v2175, %v2221
    %v2246 = vsub.f32 %v2180, %v2224
    %v2247 = vsub.f32 %v2185, %v2227
    %v2248 = vsub.f32 %v2190, %v2230
    %v2249 = vsub.f32 %v2195, %v2233
    %v2250 = vsub.f32 %v2200, %v2236
    %v2251 = vsub.f32 %v2205, %v2239
    %v2252 = vsub.f32 %v2210, %v2242
    %v2253 = vmul.f32 %v2243, 1.442695
    %v2254 = vpow.pop %v2253
    %v2255 = vmul.f32 %v2244, 1.442695
    %v2256 = vpow.pop %v2255
    %v2257 = vmul.f32 %v2245, 1.442695
    %v2258 = vpow.pop %v2257
    %v2259 = vmul.f32 %v2246, 1.442695
    %v2260 = vpow.pop %v2259
    %v2261 = vmul.f32 %v2247, 1.442695
    %v2262 = vpow.pop %v2261
    %v2263 = vmul.f32 %v2248, 1.442695
    %v2264 = vpow.pop %v2263
    %v2265 = vmul.f32 %v2249, 1.442695
    %v2266 = vpow.pop %v2265
    %v2267 = vmul.f32 %v2250, 1.442695
    %v2268 = vpow.pop %v2267
    %v2269 = vmul.f32 %v2251, 1.442695
    %v2270 = vpow.pop %v2269
    %v2271 = vmul.f32 %v2252, 1.442695
    %v2272 = vpow.pop %v2271
    %v2273 = vsel %vm1409, %v2254, 0.0
    %2274 = vadd.xlane.f32.xlu0 %v2273
    %v2275 = vpop.xlane.xlu0 %2274
    %v2276 = vsel %vm1409, %v2256, 0.0
    %2277 = vadd.xlane.f32.xlu0 %v2276
    %v2278 = vpop.xlane.xlu0 %2277
    %v2279 = vsel %vm1409, %v2258, 0.0
    %2280 = vadd.xlane.f32.xlu0 %v2279
    %v2281 = vpop.xlane.xlu0 %2280
    %v2282 = vsel %vm1409, %v2260, 0.0
    %2283 = vadd.xlane.f32.xlu0 %v2282
    %v2284 = vpop.xlane.xlu0 %2283
    %v2285 = vsel %vm1409, %v2262, 0.0
    %2286 = vadd.xlane.f32.xlu0 %v2285
    %v2287 = vpop.xlane.xlu0 %2286
    %v2288 = vsel %vm1409, %v2264, 0.0
    %2289 = vadd.xlane.f32.xlu0 %v2288
    %v2290 = vpop.xlane.xlu0 %2289
    %v2291 = vsel %vm1409, %v2266, 0.0
    %2292 = vadd.xlane.f32.xlu0 %v2291
    %v2293 = vpop.xlane.xlu0 %2292
    %v2294 = vsel %vm1409, %v2268, 0.0
    %2295 = vadd.xlane.f32.xlu0 %v2294
    %v2296 = vpop.xlane.xlu0 %2295
    %v2297 = vsel %vm1409, %v2270, 0.0
    %2298 = vadd.xlane.f32.xlu0 %v2297
    %v2299 = vpop.xlane.xlu0 %2298
    %v2300 = vsel %vm1409, %v2272, 0.0
    %2301 = vadd.xlane.f32.xlu0 %v2300
    %v2302 = vpop.xlane.xlu0 %2301
    %v2303 = vrcp.pop %v2275
    %v2304 = vrcp.pop %v2278
    %v2305 = vrcp.pop %v2281
    %v2306 = vrcp.pop %v2284
    %v2307 = vrcp.pop %v2287
    %v2308 = vrcp.pop %v2290
    %v2309 = vrcp.pop %v2293
    %v2310 = vrcp.pop %v2296
    %v2311 = vrcp.pop %v2299
    %v2312 = vrcp.pop %v2302
    %v2313 = vmul.f32 %v2254, %v2303
    %v2314 = vmul.f32 %v2256, %v2304
    %v2315 = vmul.f32 %v2258, %v2305
    %v2316 = vmul.f32 %v2260, %v2306
    %v2317 = vmul.f32 %v2262, %v2307
    %v2318 = vmul.f32 %v2264, %v2308
    %v2319 = vmul.f32 %v2266, %v2309
    %v2320 = vmul.f32 %v2268, %v2310
    %v2321 = vmul.f32 %v2270, %v2311
    %v2322 = vmul.f32 %v2272, %v2312
    %v2324 = vsel %vm1409, %v2313, 0
    %v2327 = vsel %vm1409, %v2314, 0
    %v2330 = vsel %vm1409, %v2315, 0
    %v2333 = vsel %vm1409, %v2316, 0
    %v2336 = vsel %vm1409, %v2317, 0
    %v2339 = vsel %vm1409, %v2318, 0
    %v2342 = vsel %vm1409, %v2319, 0
    %v2345 = vsel %vm1409, %v2320, 0
    %v2348 = vsel %vm1409, %v2321, 0
    %v2351 = vsel %vm1409, %v2322, 0
    %2353 = vmatprep.subr.mxu0 0.0
    %2354 = vmatpush1.msra.mxu0 %v1990
    %2355 = vmatprep.subr.mxu0 0.0
    %2356 = vmatpush1.msra.mxu0 %v1995
    %2357 = vmatprep.subr.mxu0 0.0
    %2358 = vmatpush1.msra.mxu0 %v2000
    %2359 = vmatprep.subr.mxu0 0.0
    %2360 = vmatpush1.msra.mxu0 %v2005
    %2361 = vmatprep.subr.mxu0 0.0
    %2362 = vmatpush1.msra.mxu0 %v2010
    %2363 = vmatprep.subr.mxu0 0.0
    %2364 = vmatpush1.msra.mxu0 %v2015
    %2365 = vmatprep.subr.mxu0 0.0
    %2366 = vmatpush1.msra.mxu0 %v2020
    %2367 = vmatprep.subr.mxu0 0.0
    %2368 = vmatpush1.msra.mxu0 %v2025
    %2369 = vmatprep.subr.mxu0 0.0
    %2370 = vmatpush1.msra.mxu0 %v2030
    %2371 = vmatprep.subr.mxu0 0.0
    %2372 = vmatpush1.msra.mxu0 %v2035
    %2373 = vmatprep.subr.mxu0 0.0
    %2374 = vmatpush1.msra.mxu0 0.0
    %2375 = vmatprep.subr.mxu0 0.0
    %2376 = vmatpush1.msra.mxu0 0.0
    %2377 = vmatprep.subr.mxu0 0.0
    %2378 = vmatpush1.msra.mxu0 0.0
    %2379 = vmatprep.subr.mxu0 0.0
    %2380 = vmatpush1.msra.mxu0 0.0
    %2381 = vmatprep.subr.mxu0 0.0
    %2382 = vmatpush1.msra.mxu0 0.0
    %2383 = vmatprep.subr.mxu0 0.0
    %2384 = vmatpush1.msra.mxu0 0.0
    %2385 = vmatprep.subr.mxu0 0.0
    %2386 = vmatpush1.msra.mxu0 0.0
    %2387 = vmatprep.subr.mxu0 0.0
    %2388 = vmatpush1.msra.mxu0 0.0
    %2389 = vmatprep.subr.mxu0 0.0
    %2390 = vmatpush1.msra.mxu0 0.0
    %2391 = vmatprep.subr.mxu0 0.0
    %2392 = vmatpush1.msra.mxu0 0.0
    %2393 = vmatprep.subr.mxu0 0.0
    %2394 = vmatpush1.msra.mxu0 0.0
    %2395 = vmatprep.subr.mxu0 0.0
    %2396 = vmatpush1.msra.mxu0 0.0
    %2397 = vmatprep.subr.mxu0 0.0
    %2398 = vmatpush1.msra.mxu0 0.0
    %2399 = vmatprep.subr.mxu0 0.0
    %2400 = vmatpush1.msra.mxu0 0.0
    %2401 = vmatprep.subr.mxu0 0.0
    %2402 = vmatpush1.msra.mxu0 0.0
    %2403 = vmatprep.subr.mxu0 0.0
    %2404 = vmatpush1.msra.mxu0 0.0
    %2405 = vmatprep.subr.mxu0 0.0
    %2406 = vmatpush1.msra.mxu0 0.0
    %2407 = vmatprep.subr.mxu0 0.0
    %2408 = vmatpush1.msra.mxu0 0.0
    %2409 = vmatprep.subr.mxu0 0.0
    %2410 = vmatpush1.msra.mxu0 0.0
    %2411 = vmatprep.subr.mxu0 0.0
    %2412 = vmatpush1.msra.mxu0 0.0
    %2413 = vmatprep.subr.mxu0 0.0
    %2414 = vmatpush1.msra.mxu0 0.0
    %2415 = vmatprep.subr.mxu0 0.0
    %2416 = vmatpush1.msra.mxu0 0.0
    %2417 = vmatprep.mubr.f32.mxu0 0.0
    %2418 = vmatmul.mubr.f32.gmra.mrb[0].mxu0 %v2324
    %v2419 = vpop.f32.mrb[0].mxu0
    %v2420 = vadd.f32 0.0, %v2419
    %v2421 = vpop.f32.mrb[0].mxu0
    %2422 = vmatprep.mubr.f32.mxu0 0.0
    %2423 = vmatmul.mubr.f32.gmra.mrb[0].mxu0 %v2327
    %v2424 = vpop.f32.mrb[0].mxu0
    %v2425 = vadd.f32 0.0, %v2424
    %v2426 = vpop.f32.mrb[0].mxu0
    %2427 = vmatprep.mubr.f32.mxu0 0.0
    %2428 = vmatmul.mubr.f32.gmra.mrb[0].mxu0 %v2330
    %v2429 = vpop.f32.mrb[0].mxu0
    %v2430 = vadd.f32 0.0, %v2429
    %v2431 = vpop.f32.mrb[0].mxu0
    %2432 = vmatprep.mubr.f32.mxu0 0.0
    %2433 = vmatmul.mubr.f32.gmra.mrb[0].mxu0 %v2333
    %v2434 = vpop.f32.mrb[0].mxu0
    %v2435 = vadd.f32 0.0, %v2434
    %v2436 = vpop.f32.mrb[0].mxu0
    %2437 = vmatprep.mubr.f32.mxu0 0.0
    %2438 = vmatmul.mubr.f32.gmra.mrb[0].mxu0 %v2336
    %v2439 = vpop.f32.mrb[0].mxu0
    %v2440 = vadd.f32 0.0, %v2439
    %v2441 = vpop.f32.mrb[0].mxu0
    %2442 = vmatprep.mubr.f32.mxu0 0.0
    %2443 = vmatmul.mubr.f32.gmra.mrb[0].mxu0 %v2339
    %v2444 = vpop.f32.mrb[0].mxu0
    %v2445 = vadd.f32 0.0, %v2444
    %v2446 = vpop.f32.mrb[0].mxu0
    %2447 = vmatprep.mubr.f32.mxu0 0.0
    %2448 = vmatmul.mubr.f32.gmra.mrb[0].mxu0 %v2342
    %v2449 = vpop.f32.mrb[0].mxu0
    %v2450 = vadd.f32 0.0, %v2449
    %v2451 = vpop.f32.mrb[0].mxu0
    %2452 = vmatprep.mubr.f32.mxu0 0.0
    %2453 = vmatmul.mubr.f32.gmra.mrb[0].mxu0 %v2345
    %v2454 = vpop.f32.mrb[0].mxu0
    %v2455 = vadd.f32 0.0, %v2454
    %v2456 = vpop.f32.mrb[0].mxu0
    %2457 = vmatprep.mubr.f32.mxu0 0.0
    %2458 = vmatmul.mubr.f32.gmra.mrb[0].mxu0 %v2348
    %v2459 = vpop.f32.mrb[0].mxu0
    %v2460 = vadd.f32 0.0, %v2459
    %v2461 = vpop.f32.mrb[0].mxu0
    %2462 = vmatprep.mubr.f32.mxu0 0.0
    %2463 = vmatmul.mubr.f32.gmra.mrb[0].mxu0 %v2351
    %v2464 = vpop.f32.mrb[0].mxu0
    %v2465 = vadd.f32 0.0, %v2464
    %v2466 = vpop.f32.mrb[0].mxu0
    %2467 = vdwg.mxu0
    %s2468 = scalar_lea.vmem %s10, 8
    %v2469 = vld [vmem:[%s2468] sm:$0xff]
    %v2471 = vsel %vm1233, %v2420, 0
    %v2474 = vsel %vm1233, %v2425, 0
    %v2477 = vsel %vm1233, %v2430, 0
    %v2480 = vsel %vm1233, %v2435, 0
    %v2483 = vsel %vm1233, %v2440, 0
    %v2486 = vsel %vm1233, %v2445, 0
    %v2489 = vsel %vm1233, %v2450, 0
    %v2492 = vsel %vm1233, %v2455, 0
    %v2495 = vsel %vm1233, %v2460, 0
    %v2498 = vsel %vm1233, %v2465, 0
    %2500 = vmatprep.subr.mxu0 0.0
    %2501 = vmatpush1.msra.mxu0 %v2469
    %2502 = vmatprep.subr.mxu0 0.0
    %2503 = vmatpush1.msra.mxu0 0.0
    %2504 = vmatprep.subr.mxu0 0.0
    %2505 = vmatpush1.msra.mxu0 0.0
    %2506 = vmatprep.subr.mxu0 0.0
    %2507 = vmatpush1.msra.mxu0 0.0
    %2508 = vmatprep.subr.mxu0 0.0
    %2509 = vmatpush1.msra.mxu0 0.0
    %2510 = vmatprep.subr.mxu0 0.0
    %2511 = vmatpush1.msra.mxu0 0.0
    %2512 = vmatprep.subr.mxu0 0.0
    %2513 = vmatpush1.msra.mxu0 0.0
    %2514 = vmatprep.subr.mxu0 0.0
    %2515 = vmatpush1.msra.mxu0 0.0
    %2516 = vmatprep.subr.mxu0 0.0
    %2517 = vmatpush1.msra.mxu0 0.0
    %2518 = vmatprep.subr.mxu0 0.0
    %2519 = vmatpush1.msra.mxu0 0.0
    %2520 = vmatprep.subr.mxu0 0.0
    %2521 = vmatpush1.msra.mxu0 0.0
    %2522 = vmatprep.subr.mxu0 0.0
    %2523 = vmatpush1.msra.mxu0 0.0
    %2524 = vmatprep.subr.mxu0 0.0
    %2525 = vmatpush1.msra.mxu0 0.0
    %2526 = vmatprep.subr.mxu0 0.0
    %2527 = vmatpush1.msra.mxu0 0.0
    %2528 = vmatprep.subr.mxu0 0.0
    %2529 = vmatpush1.msra.mxu0 0.0
    %2530 = vmatprep.subr.mxu0 0.0
    %2531 = vmatpush1.msra.mxu0 0.0
    %2532 = vmatprep.subr.mxu0 0.0
    %2533 = vmatpush1.msra.mxu0 0.0
    %2534 = vmatprep.subr.mxu0 0.0
    %2535 = vmatpush1.msra.mxu0 0.0
    %2536 = vmatprep.subr.mxu0 0.0
    %2537 = vmatpush1.msra.mxu0 0.0
    %2538 = vmatprep.subr.mxu0 0.0
    %2539 = vmatpush1.msra.mxu0 0.0
    %2540 = vmatprep.subr.mxu0 0.0
    %2541 = vmatpush1.msra.mxu0 0.0
    %2542 = vmatprep.subr.mxu0 0.0
    %2543 = vmatpush1.msra.mxu0 0.0
    %2544 = vmatprep.subr.mxu0 0.0
    %2545 = vmatpush1.msra.mxu0 0.0
    %2546 = vmatprep.subr.mxu0 0.0
    %2547 = vmatpush1.msra.mxu0 0.0
    %2548 = vmatprep.subr.mxu0 0.0
    %2549 = vmatpush1.msra.mxu0 0.0
    %2550 = vmatprep.subr.mxu0 0.0
    %2551 = vmatpush1.msra.mxu0 0.0
    %2552 = vmatprep.subr.mxu0 0.0
    %2553 = vmatpush1.msra.mxu0 0.0
    %2554 = vmatprep.subr.mxu0 0.0
    %2555 = vmatpush1.msra.mxu0 0.0
    %2556 = vmatprep.subr.mxu0 0.0
    %2557 = vmatpush1.msra.mxu0 0.0
    %2558 = vmatprep.subr.mxu0 0.0
    %2559 = vmatpush1.msra.mxu0 0.0
    %2560 = vmatprep.subr.mxu0 0.0
    %2561 = vmatpush1.msra.mxu0 0.0
    %2562 = vmatprep.subr.mxu0 0.0
    %2563 = vmatpush1.msra.mxu0 0.0
    %2564 = vmatprep.mubr.f32.mxu0 0.0
    %2565 = vmatmul.mubr.f32.gmra.mrb[0].mxu0 %v2471
    %v2566 = vpop.f32.mrb[0].mxu0
    %v2567 = vadd.f32 0.0, %v2566
    %v2568 = vpop.f32.mrb[0].mxu0
    %2569 = vmatprep.mubr.f32.mxu0 0.0
    %2570 = vmatmul.mubr.f32.gmra.mrb[0].mxu0 %v2474
    %v2571 = vpop.f32.mrb[0].mxu0
    %v2572 = vadd.f32 0.0, %v2571
    %v2573 = vpop.f32.mrb[0].mxu0
    %2574 = vmatprep.mubr.f32.mxu0 0.0
    %2575 = vmatmul.mubr.f32.gmra.mrb[0].mxu0 %v2477
    %v2576 = vpop.f32.mrb[0].mxu0
    %v2577 = vadd.f32 0.0, %v2576
    %v2578 = vpop.f32.mrb[0].mxu0
    %2579 = vmatprep.mubr.f32.mxu0 0.0
    %2580 = vmatmul.mubr.f32.gmra.mrb[0].mxu0 %v2480
    %v2581 = vpop.f32.mrb[0].mxu0
    %v2582 = vadd.f32 0.0, %v2581
    %v2583 = vpop.f32.mrb[0].mxu0
    %2584 = vmatprep.mubr.f32.mxu0 0.0
    %2585 = vmatmul.mubr.f32.gmra.mrb[0].mxu0 %v2483
    %v2586 = vpop.f32.mrb[0].mxu0
    %v2587 = vadd.f32 0.0, %v2586
    %v2588 = vpop.f32.mrb[0].mxu0
    %2589 = vmatprep.mubr.f32.mxu0 0.0
    %2590 = vmatmul.mubr.f32.gmra.mrb[0].mxu0 %v2486
    %v2591 = vpop.f32.mrb[0].mxu0
    %v2592 = vadd.f32 0.0, %v2591
    %v2593 = vpop.f32.mrb[0].mxu0
    %2594 = vmatprep.mubr.f32.mxu0 0.0
    %2595 = vmatmul.mubr.f32.gmra.mrb[0].mxu0 %v2489
    %v2596 = vpop.f32.mrb[0].mxu0
    %v2597 = vadd.f32 0.0, %v2596
    %v2598 = vpop.f32.mrb[0].mxu0
    %2599 = vmatprep.mubr.f32.mxu0 0.0
    %2600 = vmatmul.mubr.f32.gmra.mrb[0].mxu0 %v2492
    %v2601 = vpop.f32.mrb[0].mxu0
    %v2602 = vadd.f32 0.0, %v2601
    %v2603 = vpop.f32.mrb[0].mxu0
    %2604 = vmatprep.mubr.f32.mxu0 0.0
    %2605 = vmatmul.mubr.f32.gmra.mrb[0].mxu0 %v2495
    %v2606 = vpop.f32.mrb[0].mxu0
    %v2607 = vadd.f32 0.0, %v2606
    %v2608 = vpop.f32.mrb[0].mxu0
    %2609 = vmatprep.mubr.f32.mxu0 0.0
    %2610 = vmatmul.mubr.f32.gmra.mrb[0].mxu0 %v2498
    %v2611 = vpop.f32.mrb[0].mxu0
    %v2612 = vadd.f32 0.0, %v2611
    %v2613 = vpop.f32.mrb[0].mxu0
    %2614 = vdwg.mxu0
    %v2616 = vsel %vm1233, %v1617, 0
    %v2619 = vsel %vm1233, %v1622, 0
    %v2622 = vsel %vm1233, %v1627, 0
    %v2625 = vsel %vm1233, %v1632, 0
    %v2628 = vsel %vm1233, %v1637, 0
    %v2631 = vsel %vm1233, %v1642, 0
    %v2634 = vsel %vm1233, %v1647, 0
    %v2637 = vsel %vm1233, %v1652, 0
    %v2640 = vsel %vm1233, %v1657, 0
    %v2643 = vsel %vm1233, %v1662, 0
    %2645 = vmatprep.subr.mxu0 0.0
    %2646 = vmatpush1.msra.mxu0 %v1665
    %2647 = vmatprep.subr.mxu0 0.0
    %2648 = vmatpush1.msra.mxu0 0.0
    %2649 = vmatprep.subr.mxu0 0.0
    %2650 = vmatpush1.msra.mxu0 0.0
    %2651 = vmatprep.subr.mxu0 0.0
    %2652 = vmatpush1.msra.mxu0 0.0
    %2653 = vmatprep.subr.mxu0 0.0
    %2654 = vmatpush1.msra.mxu0 0.0
    %2655 = vmatprep.subr.mxu0 0.0
    %2656 = vmatpush1.msra.mxu0 0.0
    %2657 = vmatprep.subr.mxu0 0.0
    %2658 = vmatpush1.msra.mxu0 0.0
    %2659 = vmatprep.subr.mxu0 0.0
    %2660 = vmatpush1.msra.mxu0 0.0
    %2661 = vmatprep.subr.mxu0 0.0
    %2662 = vmatpush1.msra.mxu0 0.0
    %2663 = vmatprep.subr.mxu0 0.0
    %2664 = vmatpush1.msra.mxu0 0.0
    %2665 = vmatprep.subr.mxu0 0.0
    %2666 = vmatpush1.msra.mxu0 0.0
    %2667 = vmatprep.subr.mxu0 0.0
    %2668 = vmatpush1.msra.mxu0 0.0
    %2669 = vmatprep.subr.mxu0 0.0
    %2670 = vmatpush1.msra.mxu0 0.0
    %2671 = vmatprep.subr.mxu0 0.0
    %2672 = vmatpush1.msra.mxu0 0.0
    %2673 = vmatprep.subr.mxu0 0.0
    %2674 = vmatpush1.msra.mxu0 0.0
    %2675 = vmatprep.subr.mxu0 0.0
    %2676 = vmatpush1.msra.mxu0 0.0
    %2677 = vmatprep.subr.mxu0 0.0
    %2678 = vmatpush1.msra.mxu0 0.0
    %2679 = vmatprep.subr.mxu0 0.0
    %2680 = vmatpush1.msra.mxu0 0.0
    %2681 = vmatprep.subr.mxu0 0.0
    %2682 = vmatpush1.msra.mxu0 0.0
    %2683 = vmatprep.subr.mxu0 0.0
    %2684 = vmatpush1.msra.mxu0 0.0
    %2685 = vmatprep.subr.mxu0 0.0
    %2686 = vmatpush1.msra.mxu0 0.0
    %2687 = vmatprep.subr.mxu0 0.0
    %2688 = vmatpush1.msra.mxu0 0.0
    %2689 = vmatprep.subr.mxu0 0.0
    %2690 = vmatpush1.msra.mxu0 0.0
    %2691 = vmatprep.subr.mxu0 0.0
    %2692 = vmatpush1.msra.mxu0 0.0
    %2693 = vmatprep.subr.mxu0 0.0
    %2694 = vmatpush1.msra.mxu0 0.0
    %2695 = vmatprep.subr.mxu0 0.0
    %2696 = vmatpush1.msra.mxu0 0.0
    %2697 = vmatprep.subr.mxu0 0.0
    %2698 = vmatpush1.msra.mxu0 0.0
    %2699 = vmatprep.subr.mxu0 0.0
    %2700 = vmatpush1.msra.mxu0 0.0
    %2701 = vmatprep.subr.mxu0 0.0
    %2702 = vmatpush1.msra.mxu0 0.0
    %2703 = vmatprep.subr.mxu0 0.0
    %2704 = vmatpush1.msra.mxu0 0.0
    %2705 = vmatprep.subr.mxu0 0.0
    %2706 = vmatpush1.msra.mxu0 0.0
    %2707 = vmatprep.subr.mxu0 0.0
    %2708 = vmatpush1.msra.mxu0 0.0
    %2709 = vmatprep.mubr.f32.mxu0 0.0
    %2710 = vmatmul.mubr.f32.gmra.mrb[0].mxu0 %v2616
    %v2711 = vpop.f32.mrb[0].mxu0
    %v2712 = vadd.f32 %v2567, %v2711
    %v2713 = vpop.f32.mrb[0].mxu0
    %2714 = vmatprep.mubr.f32.mxu0 0.0
    %2715 = vmatmul.mubr.f32.gmra.mrb[0].mxu0 %v2619
    %v2716 = vpop.f32.mrb[0].mxu0
    %v2717 = vadd.f32 %v2572, %v2716
    %v2718 = vpop.f32.mrb[0].mxu0
    %2719 = vmatprep.mubr.f32.mxu0 0.0
    %2720 = vmatmul.mubr.f32.gmra.mrb[0].mxu0 %v2622
    %v2721 = vpop.f32.mrb[0].mxu0
    %v2722 = vadd.f32 %v2577, %v2721
    %v2723 = vpop.f32.mrb[0].mxu0
    %2724 = vmatprep.mubr.f32.mxu0 0.0
    %2725 = vmatmul.mubr.f32.gmra.mrb[0].mxu0 %v2625
    %v2726 = vpop.f32.mrb[0].mxu0
    %v2727 = vadd.f32 %v2582, %v2726
    %v2728 = vpop.f32.mrb[0].mxu0
    %2729 = vmatprep.mubr.f32.mxu0 0.0
    %2730 = vmatmul.mubr.f32.gmra.mrb[0].mxu0 %v2628
    %v2731 = vpop.f32.mrb[0].mxu0
    %v2732 = vadd.f32 %v2587, %v2731
    %v2733 = vpop.f32.mrb[0].mxu0
    %2734 = vmatprep.mubr.f32.mxu0 0.0
    %2735 = vmatmul.mubr.f32.gmra.mrb[0].mxu0 %v2631
    %v2736 = vpop.f32.mrb[0].mxu0
    %v2737 = vadd.f32 %v2592, %v2736
    %v2738 = vpop.f32.mrb[0].mxu0
    %2739 = vmatprep.mubr.f32.mxu0 0.0
    %2740 = vmatmul.mubr.f32.gmra.mrb[0].mxu0 %v2634
    %v2741 = vpop.f32.mrb[0].mxu0
    %v2742 = vadd.f32 %v2597, %v2741
    %v2743 = vpop.f32.mrb[0].mxu0
    %2744 = vmatprep.mubr.f32.mxu0 0.0
    %2745 = vmatmul.mubr.f32.gmra.mrb[0].mxu0 %v2637
    %v2746 = vpop.f32.mrb[0].mxu0
    %v2747 = vadd.f32 %v2602, %v2746
    %v2748 = vpop.f32.mrb[0].mxu0
    %2749 = vmatprep.mubr.f32.mxu0 0.0
    %2750 = vmatmul.mubr.f32.gmra.mrb[0].mxu0 %v2640
    %v2751 = vpop.f32.mrb[0].mxu0
    %v2752 = vadd.f32 %v2607, %v2751
    %v2753 = vpop.f32.mrb[0].mxu0
    %2754 = vmatprep.mubr.f32.mxu0 0.0
    %2755 = vmatmul.mubr.f32.gmra.mrb[0].mxu0 %v2643
    %v2756 = vpop.f32.mrb[0].mxu0
    %v2757 = vadd.f32 %v2612, %v2756
    %v2758 = vpop.f32.mrb[0].mxu0
    %2759 = vdwg.mxu0
    %s2760 = scalar_lea.vmem %s7, 64
    %v2761 = vld [vmem:[%s2760] sm:$0xff]
    %v2762 = vld [vmem:[%s2760 + $0x8] sm:$0xff]
    %v2763 = vld [vmem:[%s2760 + $0x10] sm:$0xff]
    %v2764 = vld [vmem:[%s2760 + $0x18] sm:$0xff]
    %2765 = vrot.lane.b32.xlu0 %v841, 112
    %v2766 = vpop.permute.xlu0 %2765
    %2768 = vmatprep.subr.mxu0 0.0
    %2769 = vmatpush1.msra.mxu0 %v2761
    %2770 = vmatprep.subr.mxu0 0.0
    %2771 = vmatpush1.msra.mxu0 %v2762
    %2772 = vmatprep.subr.mxu0 0.0
    %2773 = vmatpush1.msra.mxu0 %v2763
    %2774 = vmatprep.subr.mxu0 0.0
    %2775 = vmatpush1.msra.mxu0 %v2764
    %2776 = vmatprep.subr.mxu0 0.0
    %2777 = vmatpush1.msra.mxu0 0.0
    %2778 = vmatprep.subr.mxu0 0.0
    %2779 = vmatpush1.msra.mxu0 0.0
    %2780 = vmatprep.subr.mxu0 0.0
    %2781 = vmatpush1.msra.mxu0 0.0
    %2782 = vmatprep.subr.mxu0 0.0
    %2783 = vmatpush1.msra.mxu0 0.0
    %2784 = vmatprep.subr.mxu0 0.0
    %2785 = vmatpush1.msra.mxu0 0.0
    %2786 = vmatprep.subr.mxu0 0.0
    %2787 = vmatpush1.msra.mxu0 0.0
    %2788 = vmatprep.subr.mxu0 0.0
    %2789 = vmatpush1.msra.mxu0 0.0
    %2790 = vmatprep.subr.mxu0 0.0
    %2791 = vmatpush1.msra.mxu0 0.0
    %2792 = vmatprep.subr.mxu0 0.0
    %2793 = vmatpush1.msra.mxu0 0.0
    %2794 = vmatprep.subr.mxu0 0.0
    %2795 = vmatpush1.msra.mxu0 0.0
    %2796 = vmatprep.subr.mxu0 0.0
    %2797 = vmatpush1.msra.mxu0 0.0
    %2798 = vmatprep.subr.mxu0 0.0
    %2799 = vmatpush1.msra.mxu0 0.0
    %2800 = vmatprep.subr.mxu0 0.0
    %2801 = vmatpush1.msra.mxu0 0.0
    %2802 = vmatprep.subr.mxu0 0.0
    %2803 = vmatpush1.msra.mxu0 0.0
    %2804 = vmatprep.subr.mxu0 0.0
    %2805 = vmatpush1.msra.mxu0 0.0
    %2806 = vmatprep.subr.mxu0 0.0
    %2807 = vmatpush1.msra.mxu0 0.0
    %2808 = vmatprep.subr.mxu0 0.0
    %2809 = vmatpush1.msra.mxu0 0.0
    %2810 = vmatprep.subr.mxu0 0.0
    %2811 = vmatpush1.msra.mxu0 0.0
    %2812 = vmatprep.subr.mxu0 0.0
    %2813 = vmatpush1.msra.mxu0 0.0
    %2814 = vmatprep.subr.mxu0 0.0
    %2815 = vmatpush1.msra.mxu0 0.0
    %2816 = vmatprep.subr.mxu0 0.0
    %2817 = vmatpush1.msra.mxu0 0.0
    %2818 = vmatprep.subr.mxu0 0.0
    %2819 = vmatpush1.msra.mxu0 0.0
    %2820 = vmatprep.subr.mxu0 0.0
    %2821 = vmatpush1.msra.mxu0 0.0
    %2822 = vmatprep.subr.mxu0 0.0
    %2823 = vmatpush1.msra.mxu0 0.0
    %2824 = vmatprep.subr.mxu0 0.0
    %2825 = vmatpush1.msra.mxu0 0.0
    %2826 = vmatprep.subr.mxu0 0.0
    %2827 = vmatpush1.msra.mxu0 0.0
    %2828 = vmatprep.subr.mxu0 0.0
    %2829 = vmatpush1.msra.mxu0 0.0
    %2830 = vmatprep.subr.mxu0 0.0
    %2831 = vmatpush1.msra.mxu0 0.0
    %2832 = vmatprep.mubr.f32.mxu0 0.0
    %2833 = vmatmul.mubr.f32.gmra.mrb[0].mxu0 %v843
    %v2834 = vpop.f32.mrb[0].mxu0
    %v2835 = vadd.f32 %v2766, %v2834
    %v2836 = vpop.f32.mrb[0].mxu0
    %2837 = vmatprep.mubr.f32.mxu0 0.0
    %2838 = vmatmul.mubr.f32.gmra.mrb[0].mxu0 %v846
    %v2839 = vpop.f32.mrb[0].mxu0
    %v2840 = vadd.f32 %v2766, %v2839
    %v2841 = vpop.f32.mrb[0].mxu0
    %2842 = vmatprep.mubr.f32.mxu0 0.0
    %2843 = vmatmul.mubr.f32.gmra.mrb[0].mxu0 %v849
    %v2844 = vpop.f32.mrb[0].mxu0
    %v2845 = vadd.f32 %v2766, %v2844
    %v2846 = vpop.f32.mrb[0].mxu0
    %2847 = vmatprep.mubr.f32.mxu0 0.0
    %2848 = vmatmul.mubr.f32.gmra.mrb[0].mxu0 %v852
    %v2849 = vpop.f32.mrb[0].mxu0
    %v2850 = vadd.f32 %v2766, %v2849
    %v2851 = vpop.f32.mrb[0].mxu0
    %2852 = vmatprep.mubr.f32.mxu0 0.0
    %2853 = vmatmul.mubr.f32.gmra.mrb[0].mxu0 %v855
    %v2854 = vpop.f32.mrb[0].mxu0
    %v2855 = vadd.f32 %v2766, %v2854
    %v2856 = vpop.f32.mrb[0].mxu0
    %2857 = vmatprep.mubr.f32.mxu0 0.0
    %2858 = vmatmul.mubr.f32.gmra.mrb[0].mxu0 %v858
    %v2859 = vpop.f32.mrb[0].mxu0
    %v2860 = vadd.f32 %v2766, %v2859
    %v2861 = vpop.f32.mrb[0].mxu0
    %2862 = vmatprep.mubr.f32.mxu0 0.0
    %2863 = vmatmul.mubr.f32.gmra.mrb[0].mxu0 %v861
    %v2864 = vpop.f32.mrb[0].mxu0
    %v2865 = vadd.f32 %v2766, %v2864
    %v2866 = vpop.f32.mrb[0].mxu0
    %2867 = vmatprep.mubr.f32.mxu0 0.0
    %2868 = vmatmul.mubr.f32.gmra.mrb[0].mxu0 %v864
    %v2869 = vpop.f32.mrb[0].mxu0
    %v2870 = vadd.f32 %v2766, %v2869
    %v2871 = vpop.f32.mrb[0].mxu0
    %2872 = vmatprep.mubr.f32.mxu0 0.0
    %2873 = vmatmul.mubr.f32.gmra.mrb[0].mxu0 %v867
    %v2874 = vpop.f32.mrb[0].mxu0
    %v2875 = vadd.f32 %v2766, %v2874
    %v2876 = vpop.f32.mrb[0].mxu0
    %2877 = vmatprep.mubr.f32.mxu0 0.0
    %2878 = vmatmul.mubr.f32.gmra.mrb[0].mxu0 %v870
    %v2879 = vpop.f32.mrb[0].mxu0
    %v2880 = vadd.f32 %v2766, %v2879
    %v2881 = vpop.f32.mrb[0].mxu0
    %2882 = vdwg.mxu0
    %s2883 = scalar_lea.vmem %s8, 64
    %v2884 = vld [vmem:[%s2883] sm:$0xff]
    %v2885 = vld [vmem:[%s2883 + $0x8] sm:$0xff]
    %v2886 = vld [vmem:[%s2883 + $0x10] sm:$0xff]
    %v2887 = vld [vmem:[%s2883 + $0x18] sm:$0xff]
    %2888 = vrot.lane.b32.xlu0 %v994, 112
    %v2889 = vpop.permute.xlu0 %2888
    %2891 = vmatprep.subr.mxu0 0.0
    %2892 = vmatpush1.msra.mxu0 %v2884
    %2893 = vmatprep.subr.mxu0 0.0
    %2894 = vmatpush1.msra.mxu0 %v2885
    %2895 = vmatprep.subr.mxu0 0.0
    %2896 = vmatpush1.msra.mxu0 %v2886
    %2897 = vmatprep.subr.mxu0 0.0
    %2898 = vmatpush1.msra.mxu0 %v2887
    %2899 = vmatprep.subr.mxu0 0.0
    %2900 = vmatpush1.msra.mxu0 0.0
    %2901 = vmatprep.subr.mxu0 0.0
    %2902 = vmatpush1.msra.mxu0 0.0
    %2903 = vmatprep.subr.mxu0 0.0
    %2904 = vmatpush1.msra.mxu0 0.0
    %2905 = vmatprep.subr.mxu0 0.0
    %2906 = vmatpush1.msra.mxu0 0.0
    %2907 = vmatprep.subr.mxu0 0.0
    %2908 = vmatpush1.msra.mxu0 0.0
    %2909 = vmatprep.subr.mxu0 0.0
    %2910 = vmatpush1.msra.mxu0 0.0
    %2911 = vmatprep.subr.mxu0 0.0
    %2912 = vmatpush1.msra.mxu0 0.0
    %2913 = vmatprep.subr.mxu0 0.0
    %2914 = vmatpush1.msra.mxu0 0.0
    %2915 = vmatprep.subr.mxu0 0.0
    %2916 = vmatpush1.msra.mxu0 0.0
    %2917 = vmatprep.subr.mxu0 0.0
    %2918 = vmatpush1.msra.mxu0 0.0
    %2919 = vmatprep.subr.mxu0 0.0
    %2920 = vmatpush1.msra.mxu0 0.0
    %2921 = vmatprep.subr.mxu0 0.0
    %2922 = vmatpush1.msra.mxu0 0.0
    %2923 = vmatprep.subr.mxu0 0.0
    %2924 = vmatpush1.msra.mxu0 0.0
    %2925 = vmatprep.subr.mxu0 0.0
    %2926 = vmatpush1.msra.mxu0 0.0
    %2927 = vmatprep.subr.mxu0 0.0
    %2928 = vmatpush1.msra.mxu0 0.0
    %2929 = vmatprep.subr.mxu0 0.0
    %2930 = vmatpush1.msra.mxu0 0.0
    %2931 = vmatprep.subr.mxu0 0.0
    %2932 = vmatpush1.msra.mxu0 0.0
    %2933 = vmatprep.subr.mxu0 0.0
    %2934 = vmatpush1.msra.mxu0 0.0
    %2935 = vmatprep.subr.mxu0 0.0
    %2936 = vmatpush1.msra.mxu0 0.0
    %2937 = vmatprep.subr.mxu0 0.0
    %2938 = vmatpush1.msra.mxu0 0.0
    %2939 = vmatprep.subr.mxu0 0.0
    %2940 = vmatpush1.msra.mxu0 0.0
    %2941 = vmatprep.subr.mxu0 0.0
    %2942 = vmatpush1.msra.mxu0 0.0
    %2943 = vmatprep.subr.mxu0 0.0
    %2944 = vmatpush1.msra.mxu0 0.0
    %2945 = vmatprep.subr.mxu0 0.0
    %2946 = vmatpush1.msra.mxu0 0.0
    %2947 = vmatprep.subr.mxu0 0.0
    %2948 = vmatpush1.msra.mxu0 0.0
    %2949 = vmatprep.subr.mxu0 0.0
    %2950 = vmatpush1.msra.mxu0 0.0
    %2951 = vmatprep.subr.mxu0 0.0
    %2952 = vmatpush1.msra.mxu0 0.0
    %2953 = vmatprep.subr.mxu0 0.0
    %2954 = vmatpush1.msra.mxu0 0.0
    %2955 = vmatprep.mubr.f32.mxu0 0.0
    %2956 = vmatmul.mubr.f32.gmra.mrb[0].mxu0 %v843
    %v2957 = vpop.f32.mrb[0].mxu0
    %v2958 = vadd.f32 %v2889, %v2957
    %v2959 = vpop.f32.mrb[0].mxu0
    %2960 = vmatprep.mubr.f32.mxu0 0.0
    %2961 = vmatmul.mubr.f32.gmra.mrb[0].mxu0 %v846
    %v2962 = vpop.f32.mrb[0].mxu0
    %v2963 = vadd.f32 %v2889, %v2962
    %v2964 = vpop.f32.mrb[0].mxu0
    %2965 = vmatprep.mubr.f32.mxu0 0.0
    %2966 = vmatmul.mubr.f32.gmra.mrb[0].mxu0 %v849
    %v2967 = vpop.f32.mrb[0].mxu0
    %v2968 = vadd.f32 %v2889, %v2967
    %v2969 = vpop.f32.mrb[0].mxu0
    %2970 = vmatprep.mubr.f32.mxu0 0.0
    %2971 = vmatmul.mubr.f32.gmra.mrb[0].mxu0 %v852
    %v2972 = vpop.f32.mrb[0].mxu0
    %v2973 = vadd.f32 %v2889, %v2972
    %v2974 = vpop.f32.mrb[0].mxu0
    %2975 = vmatprep.mubr.f32.mxu0 0.0
    %2976 = vmatmul.mubr.f32.gmra.mrb[0].mxu0 %v855
    %v2977 = vpop.f32.mrb[0].mxu0
    %v2978 = vadd.f32 %v2889, %v2977
    %v2979 = vpop.f32.mrb[0].mxu0
    %2980 = vmatprep.mubr.f32.mxu0 0.0
    %2981 = vmatmul.mubr.f32.gmra.mrb[0].mxu0 %v858
    %v2982 = vpop.f32.mrb[0].mxu0
    %v2983 = vadd.f32 %v2889, %v2982
    %v2984 = vpop.f32.mrb[0].mxu0
    %2985 = vmatprep.mubr.f32.mxu0 0.0
    %2986 = vmatmul.mubr.f32.gmra.mrb[0].mxu0 %v861
    %v2987 = vpop.f32.mrb[0].mxu0
    %v2988 = vadd.f32 %v2889, %v2987
    %v2989 = vpop.f32.mrb[0].mxu0
    %2990 = vmatprep.mubr.f32.mxu0 0.0
    %2991 = vmatmul.mubr.f32.gmra.mrb[0].mxu0 %v864
    %v2992 = vpop.f32.mrb[0].mxu0
    %v2993 = vadd.f32 %v2889, %v2992
    %v2994 = vpop.f32.mrb[0].mxu0
    %2995 = vmatprep.mubr.f32.mxu0 0.0
    %2996 = vmatmul.mubr.f32.gmra.mrb[0].mxu0 %v867
    %v2997 = vpop.f32.mrb[0].mxu0
    %v2998 = vadd.f32 %v2889, %v2997
    %v2999 = vpop.f32.mrb[0].mxu0
    %3000 = vmatprep.mubr.f32.mxu0 0.0
    %3001 = vmatmul.mubr.f32.gmra.mrb[0].mxu0 %v870
    %v3002 = vpop.f32.mrb[0].mxu0
    %v3003 = vadd.f32 %v2889, %v3002
    %v3004 = vpop.f32.mrb[0].mxu0
    %3005 = vdwg.mxu0
    %s3006 = scalar_lea.vmem %s9, 64
    %v3007 = vld [vmem:[%s3006] sm:$0xff]
    %v3008 = vld [vmem:[%s3006 + $0x8] sm:$0xff]
    %v3009 = vld [vmem:[%s3006 + $0x10] sm:$0xff]
    %v3010 = vld [vmem:[%s3006 + $0x18] sm:$0xff]
    %3011 = vrot.lane.b32.xlu0 %v1117, 112
    %v3012 = vpop.permute.xlu0 %3011
    %3014 = vmatprep.subr.mxu0 0.0
    %3015 = vmatpush1.msra.mxu0 %v3007
    %3016 = vmatprep.subr.mxu0 0.0
    %3017 = vmatpush1.msra.mxu0 %v3008
    %3018 = vmatprep.subr.mxu0 0.0
    %3019 = vmatpush1.msra.mxu0 %v3009
    %3020 = vmatprep.subr.mxu0 0.0
    %3021 = vmatpush1.msra.mxu0 %v3010
    %3022 = vmatprep.subr.mxu0 0.0
    %3023 = vmatpush1.msra.mxu0 0.0
    %3024 = vmatprep.subr.mxu0 0.0
    %3025 = vmatpush1.msra.mxu0 0.0
    %3026 = vmatprep.subr.mxu0 0.0
    %3027 = vmatpush1.msra.mxu0 0.0
    %3028 = vmatprep.subr.mxu0 0.0
    %3029 = vmatpush1.msra.mxu0 0.0
    %3030 = vmatprep.subr.mxu0 0.0
    %3031 = vmatpush1.msra.mxu0 0.0
    %3032 = vmatprep.subr.mxu0 0.0
    %3033 = vmatpush1.msra.mxu0 0.0
    %3034 = vmatprep.subr.mxu0 0.0
    %3035 = vmatpush1.msra.mxu0 0.0
    %3036 = vmatprep.subr.mxu0 0.0
    %3037 = vmatpush1.msra.mxu0 0.0
    %3038 = vmatprep.subr.mxu0 0.0
    %3039 = vmatpush1.msra.mxu0 0.0
    %3040 = vmatprep.subr.mxu0 0.0
    %3041 = vmatpush1.msra.mxu0 0.0
    %3042 = vmatprep.subr.mxu0 0.0
    %3043 = vmatpush1.msra.mxu0 0.0
    %3044 = vmatprep.subr.mxu0 0.0
    %3045 = vmatpush1.msra.mxu0 0.0
    %3046 = vmatprep.subr.mxu0 0.0
    %3047 = vmatpush1.msra.mxu0 0.0
    %3048 = vmatprep.subr.mxu0 0.0
    %3049 = vmatpush1.msra.mxu0 0.0
    %3050 = vmatprep.subr.mxu0 0.0
    %3051 = vmatpush1.msra.mxu0 0.0
    %3052 = vmatprep.subr.mxu0 0.0
    %3053 = vmatpush1.msra.mxu0 0.0
    %3054 = vmatprep.subr.mxu0 0.0
    %3055 = vmatpush1.msra.mxu0 0.0
    %3056 = vmatprep.subr.mxu0 0.0
    %3057 = vmatpush1.msra.mxu0 0.0
    %3058 = vmatprep.subr.mxu0 0.0
    %3059 = vmatpush1.msra.mxu0 0.0
    %3060 = vmatprep.subr.mxu0 0.0
    %3061 = vmatpush1.msra.mxu0 0.0
    %3062 = vmatprep.subr.mxu0 0.0
    %3063 = vmatpush1.msra.mxu0 0.0
    %3064 = vmatprep.subr.mxu0 0.0
    %3065 = vmatpush1.msra.mxu0 0.0
    %3066 = vmatprep.subr.mxu0 0.0
    %3067 = vmatpush1.msra.mxu0 0.0
    %3068 = vmatprep.subr.mxu0 0.0
    %3069 = vmatpush1.msra.mxu0 0.0
    %3070 = vmatprep.subr.mxu0 0.0
    %3071 = vmatpush1.msra.mxu0 0.0
    %3072 = vmatprep.subr.mxu0 0.0
    %3073 = vmatpush1.msra.mxu0 0.0
    %3074 = vmatprep.subr.mxu0 0.0
    %3075 = vmatpush1.msra.mxu0 0.0
    %3076 = vmatprep.subr.mxu0 0.0
    %3077 = vmatpush1.msra.mxu0 0.0
    %3078 = vmatprep.mubr.f32.mxu0 0.0
    %3079 = vmatmul.mubr.f32.gmra.mrb[0].mxu0 %v843
    %v3080 = vpop.f32.mrb[0].mxu0
    %v3081 = vadd.f32 %v3012, %v3080
    %v3082 = vpop.f32.mrb[0].mxu0
    %3083 = vmatprep.mubr.f32.mxu0 0.0
    %3084 = vmatmul.mubr.f32.gmra.mrb[0].mxu0 %v846
    %v3085 = vpop.f32.mrb[0].mxu0
    %v3086 = vadd.f32 %v3012, %v3085
    %v3087 = vpop.f32.mrb[0].mxu0
    %3088 = vmatprep.mubr.f32.mxu0 0.0
    %3089 = vmatmul.mubr.f32.gmra.mrb[0].mxu0 %v849
    %v3090 = vpop.f32.mrb[0].mxu0
    %v3091 = vadd.f32 %v3012, %v3090
    %v3092 = vpop.f32.mrb[0].mxu0
    %3093 = vmatprep.mubr.f32.mxu0 0.0
    %3094 = vmatmul.mubr.f32.gmra.mrb[0].mxu0 %v852
    %v3095 = vpop.f32.mrb[0].mxu0
    %v3096 = vadd.f32 %v3012, %v3095
    %v3097 = vpop.f32.mrb[0].mxu0
    %3098 = vmatprep.mubr.f32.mxu0 0.0
    %3099 = vmatmul.mubr.f32.gmra.mrb[0].mxu0 %v855
    %v3100 = vpop.f32.mrb[0].mxu0
    %v3101 = vadd.f32 %v3012, %v3100
    %v3102 = vpop.f32.mrb[0].mxu0
    %3103 = vmatprep.mubr.f32.mxu0 0.0
    %3104 = vmatmul.mubr.f32.gmra.mrb[0].mxu0 %v858
    %v3105 = vpop.f32.mrb[0].mxu0
    %v3106 = vadd.f32 %v3012, %v3105
    %v3107 = vpop.f32.mrb[0].mxu0
    %3108 = vmatprep.mubr.f32.mxu0 0.0
    %3109 = vmatmul.mubr.f32.gmra.mrb[0].mxu0 %v861
    %v3110 = vpop.f32.mrb[0].mxu0
    %v3111 = vadd.f32 %v3012, %v3110
    %v3112 = vpop.f32.mrb[0].mxu0
    %3113 = vmatprep.mubr.f32.mxu0 0.0
    %3114 = vmatmul.mubr.f32.gmra.mrb[0].mxu0 %v864
    %v3115 = vpop.f32.mrb[0].mxu0
    %v3116 = vadd.f32 %v3012, %v3115
    %v3117 = vpop.f32.mrb[0].mxu0
    %3118 = vmatprep.mubr.f32.mxu0 0.0
    %3119 = vmatmul.mubr.f32.gmra.mrb[0].mxu0 %v867
    %v3120 = vpop.f32.mrb[0].mxu0
    %v3121 = vadd.f32 %v3012, %v3120
    %v3122 = vpop.f32.mrb[0].mxu0
    %3123 = vmatprep.mubr.f32.mxu0 0.0
    %3124 = vmatmul.mubr.f32.gmra.mrb[0].mxu0 %v870
    %v3125 = vpop.f32.mrb[0].mxu0
    %v3126 = vadd.f32 %v3012, %v3125
    %v3127 = vpop.f32.mrb[0].mxu0
    %3128 = vdwg.mxu0
    %v3130 = vsel %vm1233, %v2835, 0
    %v3133 = vsel %vm1233, %v2840, 0
    %v3136 = vsel %vm1233, %v2845, 0
    %v3139 = vsel %vm1233, %v2850, 0
    %v3142 = vsel %vm1233, %v2855, 0
    %v3145 = vsel %vm1233, %v2860, 0
    %v3148 = vsel %vm1233, %v2865, 0
    %v3151 = vsel %vm1233, %v2870, 0
    %v3154 = vsel %vm1233, %v2875, 0
    %v3157 = vsel %vm1233, %v2880, 0
    %v3160 = vsel %vm1233, %v2958, 0
    %v3163 = vsel %vm1233, %v2963, 0
    %v3166 = vsel %vm1233, %v2968, 0
    %v3169 = vsel %vm1233, %v2973, 0
    %v3172 = vsel %vm1233, %v2978, 0
    %v3175 = vsel %vm1233, %v2983, 0
    %v3178 = vsel %vm1233, %v2988, 0
    %v3181 = vsel %vm1233, %v2993, 0
    %v3184 = vsel %vm1233, %v2998, 0
    %v3187 = vsel %vm1233, %v3003, 0
    %3189 = vmatprep.subr.mxu0 0.0
    %3190 = vmatpush1.xpose.msra.mxu0 %v3160
    %3191 = vmatprep.subr.mxu0 0.0
    %3192 = vmatpush1.xpose.msra.mxu0 %v3163
    %3193 = vmatprep.subr.mxu0 0.0
    %3194 = vmatpush1.xpose.msra.mxu0 %v3166
    %3195 = vmatprep.subr.mxu0 0.0
    %3196 = vmatpush1.xpose.msra.mxu0 %v3169
    %3197 = vmatprep.subr.mxu0 0.0
    %3198 = vmatpush1.xpose.msra.mxu0 %v3172
    %3199 = vmatprep.subr.mxu0 0.0
    %3200 = vmatpush1.xpose.msra.mxu0 %v3175
    %3201 = vmatprep.subr.mxu0 0.0
    %3202 = vmatpush1.xpose.msra.mxu0 %v3178
    %3203 = vmatprep.subr.mxu0 0.0
    %3204 = vmatpush1.xpose.msra.mxu0 %v3181
    %3205 = vmatprep.subr.mxu0 0.0
    %3206 = vmatpush1.xpose.msra.mxu0 %v3184
    %3207 = vmatprep.subr.mxu0 0.0
    %3208 = vmatpush1.xpose.msra.mxu0 %v3187
    %3209 = vmatprep.subr.mxu0 0.0
    %3210 = vmatpush1.xpose.msra.mxu0 0.0
    %3211 = vmatprep.subr.mxu0 0.0
    %3212 = vmatpush1.xpose.msra.mxu0 0.0
    %3213 = vmatprep.subr.mxu0 0.0
    %3214 = vmatpush1.xpose.msra.mxu0 0.0
    %3215 = vmatprep.subr.mxu0 0.0
    %3216 = vmatpush1.xpose.msra.mxu0 0.0
    %3217 = vmatprep.subr.mxu0 0.0
    %3218 = vmatpush1.xpose.msra.mxu0 0.0
    %3219 = vmatprep.subr.mxu0 0.0
    %3220 = vmatpush1.xpose.msra.mxu0 0.0
    %3221 = vmatprep.subr.mxu0 0.0
    %3222 = vmatpush1.xpose.msra.mxu0 0.0
    %3223 = vmatprep.subr.mxu0 0.0
    %3224 = vmatpush1.xpose.msra.mxu0 0.0
    %3225 = vmatprep.subr.mxu0 0.0
    %3226 = vmatpush1.xpose.msra.mxu0 0.0
    %3227 = vmatprep.subr.mxu0 0.0
    %3228 = vmatpush1.xpose.msra.mxu0 0.0
    %3229 = vmatprep.subr.mxu0 0.0
    %3230 = vmatpush1.xpose.msra.mxu0 0.0
    %3231 = vmatprep.subr.mxu0 0.0
    %3232 = vmatpush1.xpose.msra.mxu0 0.0
    %3233 = vmatprep.subr.mxu0 0.0
    %3234 = vmatpush1.xpose.msra.mxu0 0.0
    %3235 = vmatprep.subr.mxu0 0.0
    %3236 = vmatpush1.xpose.msra.mxu0 0.0
    %3237 = vmatprep.subr.mxu0 0.0
    %3238 = vmatpush1.xpose.msra.mxu0 0.0
    %3239 = vmatprep.subr.mxu0 0.0
    %3240 = vmatpush1.xpose.msra.mxu0 0.0
    %3241 = vmatprep.subr.mxu0 0.0
    %3242 = vmatpush1.xpose.msra.mxu0 0.0
    %3243 = vmatprep.subr.mxu0 0.0
    %3244 = vmatpush1.xpose.msra.mxu0 0.0
    %3245 = vmatprep.subr.mxu0 0.0
    %3246 = vmatpush1.xpose.msra.mxu0 0.0
    %3247 = vmatprep.subr.mxu0 0.0
    %3248 = vmatpush1.xpose.msra.mxu0 0.0
    %3249 = vmatprep.subr.mxu0 0.0
    %3250 = vmatpush1.xpose.msra.mxu0 0.0
    %3251 = vmatprep.subr.mxu0 0.0
    %3252 = vmatpush1.xpose.msra.mxu0 0.0
    %3253 = vmatprep.mubr.f32.mxu0 0.0
    %3254 = vmatmul.mubr.f32.gmra.mrb[0].mxu0 %v3130
    %v3255 = vpop.f32.mrb[0].mxu0
    %v3256 = vadd.f32 %v662, %v3255
    %v3257 = vpop.f32.mrb[0].mxu0
    %3258 = vmatprep.mubr.f32.mxu0 0.0
    %3259 = vmatmul.mubr.f32.gmra.mrb[0].mxu0 %v3133
    %v3260 = vpop.f32.mrb[0].mxu0
    %v3261 = vadd.f32 %v663, %v3260
    %v3262 = vpop.f32.mrb[0].mxu0
    %3263 = vmatprep.mubr.f32.mxu0 0.0
    %3264 = vmatmul.mubr.f32.gmra.mrb[0].mxu0 %v3136
    %v3265 = vpop.f32.mrb[0].mxu0
    %v3266 = vadd.f32 %v664, %v3265
    %v3267 = vpop.f32.mrb[0].mxu0
    %3268 = vmatprep.mubr.f32.mxu0 0.0
    %3269 = vmatmul.mubr.f32.gmra.mrb[0].mxu0 %v3139
    %v3270 = vpop.f32.mrb[0].mxu0
    %v3271 = vadd.f32 %v665, %v3270
    %v3272 = vpop.f32.mrb[0].mxu0
    %3273 = vmatprep.mubr.f32.mxu0 0.0
    %3274 = vmatmul.mubr.f32.gmra.mrb[0].mxu0 %v3142
    %v3275 = vpop.f32.mrb[0].mxu0
    %v3276 = vadd.f32 %v666, %v3275
    %v3277 = vpop.f32.mrb[0].mxu0
    %3278 = vmatprep.mubr.f32.mxu0 0.0
    %3279 = vmatmul.mubr.f32.gmra.mrb[0].mxu0 %v3145
    %v3280 = vpop.f32.mrb[0].mxu0
    %v3281 = vadd.f32 %v667, %v3280
    %v3282 = vpop.f32.mrb[0].mxu0
    %3283 = vmatprep.mubr.f32.mxu0 0.0
    %3284 = vmatmul.mubr.f32.gmra.mrb[0].mxu0 %v3148
    %v3285 = vpop.f32.mrb[0].mxu0
    %v3286 = vadd.f32 %v668, %v3285
    %v3287 = vpop.f32.mrb[0].mxu0
    %3288 = vmatprep.mubr.f32.mxu0 0.0
    %3289 = vmatmul.mubr.f32.gmra.mrb[0].mxu0 %v3151
    %v3290 = vpop.f32.mrb[0].mxu0
    %v3291 = vadd.f32 %v669, %v3290
    %v3292 = vpop.f32.mrb[0].mxu0
    %3293 = vmatprep.mubr.f32.mxu0 0.0
    %3294 = vmatmul.mubr.f32.gmra.mrb[0].mxu0 %v3154
    %v3295 = vpop.f32.mrb[0].mxu0
    %v3296 = vadd.f32 %v670, %v3295
    %v3297 = vpop.f32.mrb[0].mxu0
    %3298 = vmatprep.mubr.f32.mxu0 0.0
    %3299 = vmatmul.mubr.f32.gmra.mrb[0].mxu0 %v3157
    %v3300 = vpop.f32.mrb[0].mxu0
    %v3301 = vadd.f32 %v671, %v3300
    %v3302 = vpop.f32.mrb[0].mxu0
    %3303 = vdwg.mxu0
    %v3304 = vsel %vm1409, %v3256, -inf
    %3305 = vmax.xlane.f32.xlu0 %v3304
    %v3306 = vpop.xlane.xlu0 %3305
    %v3307 = vsel %vm1409, %v3261, -inf
    %3308 = vmax.xlane.f32.xlu0 %v3307
    %v3309 = vpop.xlane.xlu0 %3308
    %v3310 = vsel %vm1409, %v3266, -inf
    %3311 = vmax.xlane.f32.xlu0 %v3310
    %v3312 = vpop.xlane.xlu0 %3311
    %v3313 = vsel %vm1409, %v3271, -inf
    %3314 = vmax.xlane.f32.xlu0 %v3313
    %v3315 = vpop.xlane.xlu0 %3314
    %v3316 = vsel %vm1409, %v3276, -inf
    %3317 = vmax.xlane.f32.xlu0 %v3316
    %v3318 = vpop.xlane.xlu0 %3317
    %v3319 = vsel %vm1409, %v3281, -inf
    %3320 = vmax.xlane.f32.xlu0 %v3319
    %v3321 = vpop.xlane.xlu0 %3320
    %v3322 = vsel %vm1409, %v3286, -inf
    %3323 = vmax.xlane.f32.xlu0 %v3322
    %v3324 = vpop.xlane.xlu0 %3323
    %v3325 = vsel %vm1409, %v3291, -inf
    %3326 = vmax.xlane.f32.xlu0 %v3325
    %v3327 = vpop.xlane.xlu0 %3326
    %v3328 = vsel %vm1409, %v3296, -inf
    %3329 = vmax.xlane.f32.xlu0 %v3328
    %v3330 = vpop.xlane.xlu0 %3329
    %v3331 = vsel %vm1409, %v3301, -inf
    %3332 = vmax.xlane.f32.xlu0 %v3331
    %v3333 = vpop.xlane.xlu0 %3332
    %v3334 = vsub.f32 %v3256, %v3306
    %v3335 = vsub.f32 %v3261, %v3309
    %v3336 = vsub.f32 %v3266, %v3312
    %v3337 = vsub.f32 %v3271, %v3315
    %v3338 = vsub.f32 %v3276, %v3318
    %v3339 = vsub.f32 %v3281, %v3321
    %v3340 = vsub.f32 %v3286, %v3324
    %v3341 = vsub.f32 %v3291, %v3327
    %v3342 = vsub.f32 %v3296, %v3330
    %v3343 = vsub.f32 %v3301, %v3333
    %v3344 = vmul.f32 %v3334, 1.442695
    %v3345 = vpow.pop %v3344
    %v3346 = vmul.f32 %v3335, 1.442695
    %v3347 = vpow.pop %v3346
    %v3348 = vmul.f32 %v3336, 1.442695
    %v3349 = vpow.pop %v3348
    %v3350 = vmul.f32 %v3337, 1.442695
    %v3351 = vpow.pop %v3350
    %v3352 = vmul.f32 %v3338, 1.442695
    %v3353 = vpow.pop %v3352
    %v3354 = vmul.f32 %v3339, 1.442695
    %v3355 = vpow.pop %v3354
    %v3356 = vmul.f32 %v3340, 1.442695
    %v3357 = vpow.pop %v3356
    %v3358 = vmul.f32 %v3341, 1.442695
    %v3359 = vpow.pop %v3358
    %v3360 = vmul.f32 %v3342, 1.442695
    %v3361 = vpow.pop %v3360
    %v3362 = vmul.f32 %v3343, 1.442695
    %v3363 = vpow.pop %v3362
    %v3364 = vsel %vm1409, %v3345, 0.0
    %3365 = vadd.xlane.f32.xlu0 %v3364
    %v3366 = vpop.xlane.xlu0 %3365
    %v3367 = vsel %vm1409, %v3347, 0.0
    %3368 = vadd.xlane.f32.xlu0 %v3367
    %v3369 = vpop.xlane.xlu0 %3368
    %v3370 = vsel %vm1409, %v3349, 0.0
    %3371 = vadd.xlane.f32.xlu0 %v3370
    %v3372 = vpop.xlane.xlu0 %3371
    %v3373 = vsel %vm1409, %v3351, 0.0
    %3374 = vadd.xlane.f32.xlu0 %v3373
    %v3375 = vpop.xlane.xlu0 %3374
    %v3376 = vsel %vm1409, %v3353, 0.0
    %3377 = vadd.xlane.f32.xlu0 %v3376
    %v3378 = vpop.xlane.xlu0 %3377
    %v3379 = vsel %vm1409, %v3355, 0.0
    %3380 = vadd.xlane.f32.xlu0 %v3379
    %v3381 = vpop.xlane.xlu0 %3380
    %v3382 = vsel %vm1409, %v3357, 0.0
    %3383 = vadd.xlane.f32.xlu0 %v3382
    %v3384 = vpop.xlane.xlu0 %3383
    %v3385 = vsel %vm1409, %v3359, 0.0
    %3386 = vadd.xlane.f32.xlu0 %v3385
    %v3387 = vpop.xlane.xlu0 %3386
    %v3388 = vsel %vm1409, %v3361, 0.0
    %3389 = vadd.xlane.f32.xlu0 %v3388
    %v3390 = vpop.xlane.xlu0 %3389
    %v3391 = vsel %vm1409, %v3363, 0.0
    %3392 = vadd.xlane.f32.xlu0 %v3391
    %v3393 = vpop.xlane.xlu0 %3392
    %v3394 = vrcp.pop %v3366
    %v3395 = vrcp.pop %v3369
    %v3396 = vrcp.pop %v3372
    %v3397 = vrcp.pop %v3375
    %v3398 = vrcp.pop %v3378
    %v3399 = vrcp.pop %v3381
    %v3400 = vrcp.pop %v3384
    %v3401 = vrcp.pop %v3387
    %v3402 = vrcp.pop %v3390
    %v3403 = vrcp.pop %v3393
    %v3404 = vmul.f32 %v3345, %v3394
    %v3405 = vmul.f32 %v3347, %v3395
    %v3406 = vmul.f32 %v3349, %v3396
    %v3407 = vmul.f32 %v3351, %v3397
    %v3408 = vmul.f32 %v3353, %v3398
    %v3409 = vmul.f32 %v3355, %v3399
    %v3410 = vmul.f32 %v3357, %v3400
    %v3411 = vmul.f32 %v3359, %v3401
    %v3412 = vmul.f32 %v3361, %v3402
    %v3413 = vmul.f32 %v3363, %v3403
    %v3415 = vsel %vm1409, %v3404, 0
    %v3418 = vsel %vm1409, %v3405, 0
    %v3421 = vsel %vm1409, %v3406, 0
    %v3424 = vsel %vm1409, %v3407, 0
    %v3427 = vsel %vm1409, %v3408, 0
    %v3430 = vsel %vm1409, %v3409, 0
    %v3433 = vsel %vm1409, %v3410, 0
    %v3436 = vsel %vm1409, %v3411, 0
    %v3439 = vsel %vm1409, %v3412, 0
    %v3442 = vsel %vm1409, %v3413, 0
    %3444 = vmatprep.subr.mxu0 0.0
    %3445 = vmatpush1.msra.mxu0 %v3081
    %3446 = vmatprep.subr.mxu0 0.0
    %3447 = vmatpush1.msra.mxu0 %v3086
    %3448 = vmatprep.subr.mxu0 0.0
    %3449 = vmatpush1.msra.mxu0 %v3091
    %3450 = vmatprep.subr.mxu0 0.0
    %3451 = vmatpush1.msra.mxu0 %v3096
    %3452 = vmatprep.subr.mxu0 0.0
    %3453 = vmatpush1.msra.mxu0 %v3101
    %3454 = vmatprep.subr.mxu0 0.0
    %3455 = vmatpush1.msra.mxu0 %v3106
    %3456 = vmatprep.subr.mxu0 0.0
    %3457 = vmatpush1.msra.mxu0 %v3111
    %3458 = vmatprep.subr.mxu0 0.0
    %3459 = vmatpush1.msra.mxu0 %v3116
    %3460 = vmatprep.subr.mxu0 0.0
    %3461 = vmatpush1.msra.mxu0 %v3121
    %3462 = vmatprep.subr.mxu0 0.0
    %3463 = vmatpush1.msra.mxu0 %v3126
    %3464 = vmatprep.subr.mxu0 0.0
    %3465 = vmatpush1.msra.mxu0 0.0
    %3466 = vmatprep.subr.mxu0 0.0
    %3467 = vmatpush1.msra.mxu0 0.0
    %3468 = vmatprep.subr.mxu0 0.0
    %3469 = vmatpush1.msra.mxu0 0.0
    %3470 = vmatprep.subr.mxu0 0.0
    %3471 = vmatpush1.msra.mxu0 0.0
    %3472 = vmatprep.subr.mxu0 0.0
    %3473 = vmatpush1.msra.mxu0 0.0
    %3474 = vmatprep.subr.mxu0 0.0
    %3475 = vmatpush1.msra.mxu0 0.0
    %3476 = vmatprep.subr.mxu0 0.0
    %3477 = vmatpush1.msra.mxu0 0.0
    %3478 = vmatprep.subr.mxu0 0.0
    %3479 = vmatpush1.msra.mxu0 0.0
    %3480 = vmatprep.subr.mxu0 0.0
    %3481 = vmatpush1.msra.mxu0 0.0
    %3482 = vmatprep.subr.mxu0 0.0
    %3483 = vmatpush1.msra.mxu0 0.0
    %3484 = vmatprep.subr.mxu0 0.0
    %3485 = vmatpush1.msra.mxu0 0.0
    %3486 = vmatprep.subr.mxu0 0.0
    %3487 = vmatpush1.msra.mxu0 0.0
    %3488 = vmatprep.subr.mxu0 0.0
    %3489 = vmatpush1.msra.mxu0 0.0
    %3490 = vmatprep.subr.mxu0 0.0
    %3491 = vmatpush1.msra.mxu0 0.0
    %3492 = vmatprep.subr.mxu0 0.0
    %3493 = vmatpush1.msra.mxu0 0.0
    %3494 = vmatprep.subr.mxu0 0.0
    %3495 = vmatpush1.msra.mxu0 0.0
    %3496 = vmatprep.subr.mxu0 0.0
    %3497 = vmatpush1.msra.mxu0 0.0
    %3498 = vmatprep.subr.mxu0 0.0
    %3499 = vmatpush1.msra.mxu0 0.0
    %3500 = vmatprep.subr.mxu0 0.0
    %3501 = vmatpush1.msra.mxu0 0.0
    %3502 = vmatprep.subr.mxu0 0.0
    %3503 = vmatpush1.msra.mxu0 0.0
    %3504 = vmatprep.subr.mxu0 0.0
    %3505 = vmatpush1.msra.mxu0 0.0
    %3506 = vmatprep.subr.mxu0 0.0
    %3507 = vmatpush1.msra.mxu0 0.0
    %3508 = vmatprep.mubr.f32.mxu0 0.0
    %3509 = vmatmul.mubr.f32.gmra.mrb[0].mxu0 %v3415
    %v3510 = vpop.f32.mrb[0].mxu0
    %v3511 = vadd.f32 0.0, %v3510
    %v3512 = vpop.f32.mrb[0].mxu0
    %3513 = vmatprep.mubr.f32.mxu0 0.0
    %3514 = vmatmul.mubr.f32.gmra.mrb[0].mxu0 %v3418
    %v3515 = vpop.f32.mrb[0].mxu0
    %v3516 = vadd.f32 0.0, %v3515
    %v3517 = vpop.f32.mrb[0].mxu0
    %3518 = vmatprep.mubr.f32.mxu0 0.0
    %3519 = vmatmul.mubr.f32.gmra.mrb[0].mxu0 %v3421
    %v3520 = vpop.f32.mrb[0].mxu0
    %v3521 = vadd.f32 0.0, %v3520
    %v3522 = vpop.f32.mrb[0].mxu0
    %3523 = vmatprep.mubr.f32.mxu0 0.0
    %3524 = vmatmul.mubr.f32.gmra.mrb[0].mxu0 %v3424
    %v3525 = vpop.f32.mrb[0].mxu0
    %v3526 = vadd.f32 0.0, %v3525
    %v3527 = vpop.f32.mrb[0].mxu0
    %3528 = vmatprep.mubr.f32.mxu0 0.0
    %3529 = vmatmul.mubr.f32.gmra.mrb[0].mxu0 %v3427
    %v3530 = vpop.f32.mrb[0].mxu0
    %v3531 = vadd.f32 0.0, %v3530
    %v3532 = vpop.f32.mrb[0].mxu0
    %3533 = vmatprep.mubr.f32.mxu0 0.0
    %3534 = vmatmul.mubr.f32.gmra.mrb[0].mxu0 %v3430
    %v3535 = vpop.f32.mrb[0].mxu0
    %v3536 = vadd.f32 0.0, %v3535
    %v3537 = vpop.f32.mrb[0].mxu0
    %3538 = vmatprep.mubr.f32.mxu0 0.0
    %3539 = vmatmul.mubr.f32.gmra.mrb[0].mxu0 %v3433
    %v3540 = vpop.f32.mrb[0].mxu0
    %v3541 = vadd.f32 0.0, %v3540
    %v3542 = vpop.f32.mrb[0].mxu0
    %3543 = vmatprep.mubr.f32.mxu0 0.0
    %3544 = vmatmul.mubr.f32.gmra.mrb[0].mxu0 %v3436
    %v3545 = vpop.f32.mrb[0].mxu0
    %v3546 = vadd.f32 0.0, %v3545
    %v3547 = vpop.f32.mrb[0].mxu0
    %3548 = vmatprep.mubr.f32.mxu0 0.0
    %3549 = vmatmul.mubr.f32.gmra.mrb[0].mxu0 %v3439
    %v3550 = vpop.f32.mrb[0].mxu0
    %v3551 = vadd.f32 0.0, %v3550
    %v3552 = vpop.f32.mrb[0].mxu0
    %3553 = vmatprep.mubr.f32.mxu0 0.0
    %3554 = vmatmul.mubr.f32.gmra.mrb[0].mxu0 %v3442
    %v3555 = vpop.f32.mrb[0].mxu0
    %v3556 = vadd.f32 0.0, %v3555
    %v3557 = vpop.f32.mrb[0].mxu0
    %3558 = vdwg.mxu0
    %s3559 = scalar_lea.vmem %s10, 16
    %v3560 = vld [vmem:[%s3559] sm:$0xff]
    %v3562 = vsel %vm1233, %v3511, 0
    %v3565 = vsel %vm1233, %v3516, 0
    %v3568 = vsel %vm1233, %v3521, 0
    %v3571 = vsel %vm1233, %v3526, 0
    %v3574 = vsel %vm1233, %v3531, 0
    %v3577 = vsel %vm1233, %v3536, 0
    %v3580 = vsel %vm1233, %v3541, 0
    %v3583 = vsel %vm1233, %v3546, 0
    %v3586 = vsel %vm1233, %v3551, 0
    %v3589 = vsel %vm1233, %v3556, 0
    %3591 = vmatprep.subr.mxu0 0.0
    %3592 = vmatpush1.msra.mxu0 %v3560
    %3593 = vmatprep.subr.mxu0 0.0
    %3594 = vmatpush1.msra.mxu0 0.0
    %3595 = vmatprep.subr.mxu0 0.0
    %3596 = vmatpush1.msra.mxu0 0.0
    %3597 = vmatprep.subr.mxu0 0.0
    %3598 = vmatpush1.msra.mxu0 0.0
    %3599 = vmatprep.subr.mxu0 0.0
    %3600 = vmatpush1.msra.mxu0 0.0
    %3601 = vmatprep.subr.mxu0 0.0
    %3602 = vmatpush1.msra.mxu0 0.0
    %3603 = vmatprep.subr.mxu0 0.0
    %3604 = vmatpush1.msra.mxu0 0.0
    %3605 = vmatprep.subr.mxu0 0.0
    %3606 = vmatpush1.msra.mxu0 0.0
    %3607 = vmatprep.subr.mxu0 0.0
    %3608 = vmatpush1.msra.mxu0 0.0
    %3609 = vmatprep.subr.mxu0 0.0
    %3610 = vmatpush1.msra.mxu0 0.0
    %3611 = vmatprep.subr.mxu0 0.0
    %3612 = vmatpush1.msra.mxu0 0.0
    %3613 = vmatprep.subr.mxu0 0.0
    %3614 = vmatpush1.msra.mxu0 0.0
    %3615 = vmatprep.subr.mxu0 0.0
    %3616 = vmatpush1.msra.mxu0 0.0
    %3617 = vmatprep.subr.mxu0 0.0
    %3618 = vmatpush1.msra.mxu0 0.0
    %3619 = vmatprep.subr.mxu0 0.0
    %3620 = vmatpush1.msra.mxu0 0.0
    %3621 = vmatprep.subr.mxu0 0.0
    %3622 = vmatpush1.msra.mxu0 0.0
    %3623 = vmatprep.subr.mxu0 0.0
    %3624 = vmatpush1.msra.mxu0 0.0
    %3625 = vmatprep.subr.mxu0 0.0
    %3626 = vmatpush1.msra.mxu0 0.0
    %3627 = vmatprep.subr.mxu0 0.0
    %3628 = vmatpush1.msra.mxu0 0.0
    %3629 = vmatprep.subr.mxu0 0.0
    %3630 = vmatpush1.msra.mxu0 0.0
    %3631 = vmatprep.subr.mxu0 0.0
    %3632 = vmatpush1.msra.mxu0 0.0
    %3633 = vmatprep.subr.mxu0 0.0
    %3634 = vmatpush1.msra.mxu0 0.0
    %3635 = vmatprep.subr.mxu0 0.0
    %3636 = vmatpush1.msra.mxu0 0.0
    %3637 = vmatprep.subr.mxu0 0.0
    %3638 = vmatpush1.msra.mxu0 0.0
    %3639 = vmatprep.subr.mxu0 0.0
    %3640 = vmatpush1.msra.mxu0 0.0
    %3641 = vmatprep.subr.mxu0 0.0
    %3642 = vmatpush1.msra.mxu0 0.0
    %3643 = vmatprep.subr.mxu0 0.0
    %3644 = vmatpush1.msra.mxu0 0.0
    %3645 = vmatprep.subr.mxu0 0.0
    %3646 = vmatpush1.msra.mxu0 0.0
    %3647 = vmatprep.subr.mxu0 0.0
    %3648 = vmatpush1.msra.mxu0 0.0
    %3649 = vmatprep.subr.mxu0 0.0
    %3650 = vmatpush1.msra.mxu0 0.0
    %3651 = vmatprep.subr.mxu0 0.0
    %3652 = vmatpush1.msra.mxu0 0.0
    %3653 = vmatprep.subr.mxu0 0.0
    %3654 = vmatpush1.msra.mxu0 0.0
    %3655 = vmatprep.mubr.f32.mxu0 0.0
    %3656 = vmatmul.mubr.f32.gmra.mrb[0].mxu0 %v3562
    %v3657 = vpop.f32.mrb[0].mxu0
    %v3658 = vadd.f32 0.0, %v3657
    %v3659 = vpop.f32.mrb[0].mxu0
    %3660 = vmatprep.mubr.f32.mxu0 0.0
    %3661 = vmatmul.mubr.f32.gmra.mrb[0].mxu0 %v3565
    %v3662 = vpop.f32.mrb[0].mxu0
    %v3663 = vadd.f32 0.0, %v3662
    %v3664 = vpop.f32.mrb[0].mxu0
    %3665 = vmatprep.mubr.f32.mxu0 0.0
    %3666 = vmatmul.mubr.f32.gmra.mrb[0].mxu0 %v3568
    %v3667 = vpop.f32.mrb[0].mxu0
    %v3668 = vadd.f32 0.0, %v3667
    %v3669 = vpop.f32.mrb[0].mxu0
    %3670 = vmatprep.mubr.f32.mxu0 0.0
    %3671 = vmatmul.mubr.f32.gmra.mrb[0].mxu0 %v3571
    %v3672 = vpop.f32.mrb[0].mxu0
    %v3673 = vadd.f32 0.0, %v3672
    %v3674 = vpop.f32.mrb[0].mxu0
    %3675 = vmatprep.mubr.f32.mxu0 0.0
    %3676 = vmatmul.mubr.f32.gmra.mrb[0].mxu0 %v3574
    %v3677 = vpop.f32.mrb[0].mxu0
    %v3678 = vadd.f32 0.0, %v3677
    %v3679 = vpop.f32.mrb[0].mxu0
    %3680 = vmatprep.mubr.f32.mxu0 0.0
    %3681 = vmatmul.mubr.f32.gmra.mrb[0].mxu0 %v3577
    %v3682 = vpop.f32.mrb[0].mxu0
    %v3683 = vadd.f32 0.0, %v3682
    %v3684 = vpop.f32.mrb[0].mxu0
    %3685 = vmatprep.mubr.f32.mxu0 0.0
    %3686 = vmatmul.mubr.f32.gmra.mrb[0].mxu0 %v3580
    %v3687 = vpop.f32.mrb[0].mxu0
    %v3688 = vadd.f32 0.0, %v3687
    %v3689 = vpop.f32.mrb[0].mxu0
    %3690 = vmatprep.mubr.f32.mxu0 0.0
    %3691 = vmatmul.mubr.f32.gmra.mrb[0].mxu0 %v3583
    %v3692 = vpop.f32.mrb[0].mxu0
    %v3693 = vadd.f32 0.0, %v3692
    %v3694 = vpop.f32.mrb[0].mxu0
    %3695 = vmatprep.mubr.f32.mxu0 0.0
    %3696 = vmatmul.mubr.f32.gmra.mrb[0].mxu0 %v3586
    %v3697 = vpop.f32.mrb[0].mxu0
    %v3698 = vadd.f32 0.0, %v3697
    %v3699 = vpop.f32.mrb[0].mxu0
    %3700 = vmatprep.mubr.f32.mxu0 0.0
    %3701 = vmatmul.mubr.f32.gmra.mrb[0].mxu0 %v3589
    %v3702 = vpop.f32.mrb[0].mxu0
    %v3703 = vadd.f32 0.0, %v3702
    %v3704 = vpop.f32.mrb[0].mxu0
    %3705 = vdwg.mxu0
    %v3706 = vadd.f32 %v2712, %v3658
    %v3707 = vadd.f32 %v2717, %v3663
    %v3708 = vadd.f32 %v2722, %v3668
    %v3709 = vadd.f32 %v2727, %v3673
    %v3710 = vadd.f32 %v2732, %v3678
    %v3711 = vadd.f32 %v2737, %v3683
    %v3712 = vadd.f32 %v2742, %v3688
    %v3713 = vadd.f32 %v2747, %v3693
    %v3714 = vadd.f32 %v2752, %v3698
    %v3715 = vadd.f32 %v2757, %v3703
    %s3716 = scalar_lea.vmem %s7, 96
    %v3717 = vld [vmem:[%s3716] sm:$0xff]
    %v3718 = vld [vmem:[%s3716 + $0x8] sm:$0xff]
    %v3719 = vld [vmem:[%s3716 + $0x10] sm:$0xff]
    %v3720 = vld [vmem:[%s3716 + $0x18] sm:$0xff]
    %3721 = vrot.lane.b32.xlu0 %v841, 104
    %v3722 = vpop.permute.xlu0 %3721
    %3724 = vmatprep.subr.mxu0 0.0
    %3725 = vmatpush1.msra.mxu0 %v3717
    %3726 = vmatprep.subr.mxu0 0.0
    %3727 = vmatpush1.msra.mxu0 %v3718
    %3728 = vmatprep.subr.mxu0 0.0
    %3729 = vmatpush1.msra.mxu0 %v3719
    %3730 = vmatprep.subr.mxu0 0.0
    %3731 = vmatpush1.msra.mxu0 %v3720
    %3732 = vmatprep.subr.mxu0 0.0
    %3733 = vmatpush1.msra.mxu0 0.0
    %3734 = vmatprep.subr.mxu0 0.0
    %3735 = vmatpush1.msra.mxu0 0.0
    %3736 = vmatprep.subr.mxu0 0.0
    %3737 = vmatpush1.msra.mxu0 0.0
    %3738 = vmatprep.subr.mxu0 0.0
    %3739 = vmatpush1.msra.mxu0 0.0
    %3740 = vmatprep.subr.mxu0 0.0
    %3741 = vmatpush1.msra.mxu0 0.0
    %3742 = vmatprep.subr.mxu0 0.0
    %3743 = vmatpush1.msra.mxu0 0.0
    %3744 = vmatprep.subr.mxu0 0.0
    %3745 = vmatpush1.msra.mxu0 0.0
    %3746 = vmatprep.subr.mxu0 0.0
    %3747 = vmatpush1.msra.mxu0 0.0
    %3748 = vmatprep.subr.mxu0 0.0
    %3749 = vmatpush1.msra.mxu0 0.0
    %3750 = vmatprep.subr.mxu0 0.0
    %3751 = vmatpush1.msra.mxu0 0.0
    %3752 = vmatprep.subr.mxu0 0.0
    %3753 = vmatpush1.msra.mxu0 0.0
    %3754 = vmatprep.subr.mxu0 0.0
    %3755 = vmatpush1.msra.mxu0 0.0
    %3756 = vmatprep.subr.mxu0 0.0
    %3757 = vmatpush1.msra.mxu0 0.0
    %3758 = vmatprep.subr.mxu0 0.0
    %3759 = vmatpush1.msra.mxu0 0.0
    %3760 = vmatprep.subr.mxu0 0.0
    %3761 = vmatpush1.msra.mxu0 0.0
    %3762 = vmatprep.subr.mxu0 0.0
    %3763 = vmatpush1.msra.mxu0 0.0
    %3764 = vmatprep.subr.mxu0 0.0
    %3765 = vmatpush1.msra.mxu0 0.0
    %3766 = vmatprep.subr.mxu0 0.0
    %3767 = vmatpush1.msra.mxu0 0.0
    %3768 = vmatprep.subr.mxu0 0.0
    %3769 = vmatpush1.msra.mxu0 0.0
    %3770 = vmatprep.subr.mxu0 0.0
    %3771 = vmatpush1.msra.mxu0 0.0
    %3772 = vmatprep.subr.mxu0 0.0
    %3773 = vmatpush1.msra.mxu0 0.0
    %3774 = vmatprep.subr.mxu0 0.0
    %3775 = vmatpush1.msra.mxu0 0.0
    %3776 = vmatprep.subr.mxu0 0.0
    %3777 = vmatpush1.msra.mxu0 0.0
    %3778 = vmatprep.subr.mxu0 0.0
    %3779 = vmatpush1.msra.mxu0 0.0
    %3780 = vmatprep.subr.mxu0 0.0
    %3781 = vmatpush1.msra.mxu0 0.0
    %3782 = vmatprep.subr.mxu0 0.0
    %3783 = vmatpush1.msra.mxu0 0.0
    %3784 = vmatprep.subr.mxu0 0.0
    %3785 = vmatpush1.msra.mxu0 0.0
    %3786 = vmatprep.subr.mxu0 0.0
    %3787 = vmatpush1.msra.mxu0 0.0
    %3788 = vmatprep.mubr.f32.mxu0 0.0
    %3789 = vmatmul.mubr.f32.gmra.mrb[0].mxu0 %v843
    %v3790 = vpop.f32.mrb[0].mxu0
    %v3791 = vadd.f32 %v3722, %v3790
    %v3792 = vpop.f32.mrb[0].mxu0
    %3793 = vmatprep.mubr.f32.mxu0 0.0
    %3794 = vmatmul.mubr.f32.gmra.mrb[0].mxu0 %v846
    %v3795 = vpop.f32.mrb[0].mxu0
    %v3796 = vadd.f32 %v3722, %v3795
    %v3797 = vpop.f32.mrb[0].mxu0
    %3798 = vmatprep.mubr.f32.mxu0 0.0
    %3799 = vmatmul.mubr.f32.gmra.mrb[0].mxu0 %v849
    %v3800 = vpop.f32.mrb[0].mxu0
    %v3801 = vadd.f32 %v3722, %v3800
    %v3802 = vpop.f32.mrb[0].mxu0
    %3803 = vmatprep.mubr.f32.mxu0 0.0
    %3804 = vmatmul.mubr.f32.gmra.mrb[0].mxu0 %v852
    %v3805 = vpop.f32.mrb[0].mxu0
    %v3806 = vadd.f32 %v3722, %v3805
    %v3807 = vpop.f32.mrb[0].mxu0
    %3808 = vmatprep.mubr.f32.mxu0 0.0
    %3809 = vmatmul.mubr.f32.gmra.mrb[0].mxu0 %v855
    %v3810 = vpop.f32.mrb[0].mxu0
    %v3811 = vadd.f32 %v3722, %v3810
    %v3812 = vpop.f32.mrb[0].mxu0
    %3813 = vmatprep.mubr.f32.mxu0 0.0
    %3814 = vmatmul.mubr.f32.gmra.mrb[0].mxu0 %v858
    %v3815 = vpop.f32.mrb[0].mxu0
    %v3816 = vadd.f32 %v3722, %v3815
    %v3817 = vpop.f32.mrb[0].mxu0
    %3818 = vmatprep.mubr.f32.mxu0 0.0
    %3819 = vmatmul.mubr.f32.gmra.mrb[0].mxu0 %v861
    %v3820 = vpop.f32.mrb[0].mxu0
    %v3821 = vadd.f32 %v3722, %v3820
    %v3822 = vpop.f32.mrb[0].mxu0
    %3823 = vmatprep.mubr.f32.mxu0 0.0
    %3824 = vmatmul.mubr.f32.gmra.mrb[0].mxu0 %v864
    %v3825 = vpop.f32.mrb[0].mxu0
    %v3826 = vadd.f32 %v3722, %v3825
    %v3827 = vpop.f32.mrb[0].mxu0
    %3828 = vmatprep.mubr.f32.mxu0 0.0
    %3829 = vmatmul.mubr.f32.gmra.mrb[0].mxu0 %v867
    %v3830 = vpop.f32.mrb[0].mxu0
    %v3831 = vadd.f32 %v3722, %v3830
    %v3832 = vpop.f32.mrb[0].mxu0
    %3833 = vmatprep.mubr.f32.mxu0 0.0
    %3834 = vmatmul.mubr.f32.gmra.mrb[0].mxu0 %v870
    %v3835 = vpop.f32.mrb[0].mxu0
    %v3836 = vadd.f32 %v3722, %v3835
    %v3837 = vpop.f32.mrb[0].mxu0
    %3838 = vdwg.mxu0
    %s3839 = scalar_lea.vmem %s8, 96
    %v3840 = vld [vmem:[%s3839] sm:$0xff]
    %v3841 = vld [vmem:[%s3839 + $0x8] sm:$0xff]
    %v3842 = vld [vmem:[%s3839 + $0x10] sm:$0xff]
    %v3843 = vld [vmem:[%s3839 + $0x18] sm:$0xff]
    %3844 = vrot.lane.b32.xlu0 %v994, 104
    %v3845 = vpop.permute.xlu0 %3844
    %3847 = vmatprep.subr.mxu0 0.0
    %3848 = vmatpush1.msra.mxu0 %v3840
    %3849 = vmatprep.subr.mxu0 0.0
    %3850 = vmatpush1.msra.mxu0 %v3841
    %3851 = vmatprep.subr.mxu0 0.0
    %3852 = vmatpush1.msra.mxu0 %v3842
    %3853 = vmatprep.subr.mxu0 0.0
    %3854 = vmatpush1.msra.mxu0 %v3843
    %3855 = vmatprep.subr.mxu0 0.0
    %3856 = vmatpush1.msra.mxu0 0.0
    %3857 = vmatprep.subr.mxu0 0.0
    %3858 = vmatpush1.msra.mxu0 0.0
    %3859 = vmatprep.subr.mxu0 0.0
    %3860 = vmatpush1.msra.mxu0 0.0
    %3861 = vmatprep.subr.mxu0 0.0
    %3862 = vmatpush1.msra.mxu0 0.0
    %3863 = vmatprep.subr.mxu0 0.0
    %3864 = vmatpush1.msra.mxu0 0.0
    %3865 = vmatprep.subr.mxu0 0.0
    %3866 = vmatpush1.msra.mxu0 0.0
    %3867 = vmatprep.subr.mxu0 0.0
    %3868 = vmatpush1.msra.mxu0 0.0
    %3869 = vmatprep.subr.mxu0 0.0
    %3870 = vmatpush1.msra.mxu0 0.0
    %3871 = vmatprep.subr.mxu0 0.0
    %3872 = vmatpush1.msra.mxu0 0.0
    %3873 = vmatprep.subr.mxu0 0.0
    %3874 = vmatpush1.msra.mxu0 0.0
    %3875 = vmatprep.subr.mxu0 0.0
    %3876 = vmatpush1.msra.mxu0 0.0
    %3877 = vmatprep.subr.mxu0 0.0
    %3878 = vmatpush1.msra.mxu0 0.0
    %3879 = vmatprep.subr.mxu0 0.0
    %3880 = vmatpush1.msra.mxu0 0.0
    %3881 = vmatprep.subr.mxu0 0.0
    %3882 = vmatpush1.msra.mxu0 0.0
    %3883 = vmatprep.subr.mxu0 0.0
    %3884 = vmatpush1.msra.mxu0 0.0
    %3885 = vmatprep.subr.mxu0 0.0
    %3886 = vmatpush1.msra.mxu0 0.0
    %3887 = vmatprep.subr.mxu0 0.0
    %3888 = vmatpush1.msra.mxu0 0.0
    %3889 = vmatprep.subr.mxu0 0.0
    %3890 = vmatpush1.msra.mxu0 0.0
    %3891 = vmatprep.subr.mxu0 0.0
    %3892 = vmatpush1.msra.mxu0 0.0
    %3893 = vmatprep.subr.mxu0 0.0
    %3894 = vmatpush1.msra.mxu0 0.0
    %3895 = vmatprep.subr.mxu0 0.0
    %3896 = vmatpush1.msra.mxu0 0.0
    %3897 = vmatprep.subr.mxu0 0.0
    %3898 = vmatpush1.msra.mxu0 0.0
    %3899 = vmatprep.subr.mxu0 0.0
    %3900 = vmatpush1.msra.mxu0 0.0
    %3901 = vmatprep.subr.mxu0 0.0
    %3902 = vmatpush1.msra.mxu0 0.0
    %3903 = vmatprep.subr.mxu0 0.0
    %3904 = vmatpush1.msra.mxu0 0.0
    %3905 = vmatprep.subr.mxu0 0.0
    %3906 = vmatpush1.msra.mxu0 0.0
    %3907 = vmatprep.subr.mxu0 0.0
    %3908 = vmatpush1.msra.mxu0 0.0
    %3909 = vmatprep.subr.mxu0 0.0
    %3910 = vmatpush1.msra.mxu0 0.0
    %3911 = vmatprep.mubr.f32.mxu0 0.0
    %3912 = vmatmul.mubr.f32.gmra.mrb[0].mxu0 %v843
    %v3913 = vpop.f32.mrb[0].mxu0
    %v3914 = vadd.f32 %v3845, %v3913
    %v3915 = vpop.f32.mrb[0].mxu0
    %3916 = vmatprep.mubr.f32.mxu0 0.0
    %3917 = vmatmul.mubr.f32.gmra.mrb[0].mxu0 %v846
    %v3918 = vpop.f32.mrb[0].mxu0
    %v3919 = vadd.f32 %v3845, %v3918
    %v3920 = vpop.f32.mrb[0].mxu0
    %3921 = vmatprep.mubr.f32.mxu0 0.0
    %3922 = vmatmul.mubr.f32.gmra.mrb[0].mxu0 %v849
    %v3923 = vpop.f32.mrb[0].mxu0
    %v3924 = vadd.f32 %v3845, %v3923
    %v3925 = vpop.f32.mrb[0].mxu0
    %3926 = vmatprep.mubr.f32.mxu0 0.0
    %3927 = vmatmul.mubr.f32.gmra.mrb[0].mxu0 %v852
    %v3928 = vpop.f32.mrb[0].mxu0
    %v3929 = vadd.f32 %v3845, %v3928
    %v3930 = vpop.f32.mrb[0].mxu0
    %3931 = vmatprep.mubr.f32.mxu0 0.0
    %3932 = vmatmul.mubr.f32.gmra.mrb[0].mxu0 %v855
    %v3933 = vpop.f32.mrb[0].mxu0
    %v3934 = vadd.f32 %v3845, %v3933
    %v3935 = vpop.f32.mrb[0].mxu0
    %3936 = vmatprep.mubr.f32.mxu0 0.0
    %3937 = vmatmul.mubr.f32.gmra.mrb[0].mxu0 %v858
    %v3938 = vpop.f32.mrb[0].mxu0
    %v3939 = vadd.f32 %v3845, %v3938
    %v3940 = vpop.f32.mrb[0].mxu0
    %3941 = vmatprep.mubr.f32.mxu0 0.0
    %3942 = vmatmul.mubr.f32.gmra.mrb[0].mxu0 %v861
    %v3943 = vpop.f32.mrb[0].mxu0
    %v3944 = vadd.f32 %v3845, %v3943
    %v3945 = vpop.f32.mrb[0].mxu0
    %3946 = vmatprep.mubr.f32.mxu0 0.0
    %3947 = vmatmul.mubr.f32.gmra.mrb[0].mxu0 %v864
    %v3948 = vpop.f32.mrb[0].mxu0
    %v3949 = vadd.f32 %v3845, %v3948
    %v3950 = vpop.f32.mrb[0].mxu0
    %3951 = vmatprep.mubr.f32.mxu0 0.0
    %3952 = vmatmul.mubr.f32.gmra.mrb[0].mxu0 %v867
    %v3953 = vpop.f32.mrb[0].mxu0
    %v3954 = vadd.f32 %v3845, %v3953
    %v3955 = vpop.f32.mrb[0].mxu0
    %3956 = vmatprep.mubr.f32.mxu0 0.0
    %3957 = vmatmul.mubr.f32.gmra.mrb[0].mxu0 %v870
    %v3958 = vpop.f32.mrb[0].mxu0
    %v3959 = vadd.f32 %v3845, %v3958
    %v3960 = vpop.f32.mrb[0].mxu0
    %3961 = vdwg.mxu0
    %s3962 = scalar_lea.vmem %s9, 96
    %v3963 = vld [vmem:[%s3962] sm:$0xff]
    %v3964 = vld [vmem:[%s3962 + $0x8] sm:$0xff]
    %v3965 = vld [vmem:[%s3962 + $0x10] sm:$0xff]
    %v3966 = vld [vmem:[%s3962 + $0x18] sm:$0xff]
    %3967 = vrot.lane.b32.xlu0 %v1117, 104
    %v3968 = vpop.permute.xlu0 %3967
    %3970 = vmatprep.subr.mxu0 0.0
    %3971 = vmatpush1.msra.mxu0 %v3963
    %3972 = vmatprep.subr.mxu0 0.0
    %3973 = vmatpush1.msra.mxu0 %v3964
    %3974 = vmatprep.subr.mxu0 0.0
    %3975 = vmatpush1.msra.mxu0 %v3965
    %3976 = vmatprep.subr.mxu0 0.0
    %3977 = vmatpush1.msra.mxu0 %v3966
    %3978 = vmatprep.subr.mxu0 0.0
    %3979 = vmatpush1.msra.mxu0 0.0
    %3980 = vmatprep.subr.mxu0 0.0
    %3981 = vmatpush1.msra.mxu0 0.0
    %3982 = vmatprep.subr.mxu0 0.0
    %3983 = vmatpush1.msra.mxu0 0.0
    %3984 = vmatprep.subr.mxu0 0.0
    %3985 = vmatpush1.msra.mxu0 0.0
    %3986 = vmatprep.subr.mxu0 0.0
    %3987 = vmatpush1.msra.mxu0 0.0
    %3988 = vmatprep.subr.mxu0 0.0
    %3989 = vmatpush1.msra.mxu0 0.0
    %3990 = vmatprep.subr.mxu0 0.0
    %3991 = vmatpush1.msra.mxu0 0.0
    %3992 = vmatprep.subr.mxu0 0.0
    %3993 = vmatpush1.msra.mxu0 0.0
    %3994 = vmatprep.subr.mxu0 0.0
    %3995 = vmatpush1.msra.mxu0 0.0
    %3996 = vmatprep.subr.mxu0 0.0
    %3997 = vmatpush1.msra.mxu0 0.0
    %3998 = vmatprep.subr.mxu0 0.0
    %3999 = vmatpush1.msra.mxu0 0.0
    %4000 = vmatprep.subr.mxu0 0.0
    %4001 = vmatpush1.msra.mxu0 0.0
    %4002 = vmatprep.subr.mxu0 0.0
    %4003 = vmatpush1.msra.mxu0 0.0
    %4004 = vmatprep.subr.mxu0 0.0
    %4005 = vmatpush1.msra.mxu0 0.0
    %4006 = vmatprep.subr.mxu0 0.0
    %4007 = vmatpush1.msra.mxu0 0.0
    %4008 = vmatprep.subr.mxu0 0.0
    %4009 = vmatpush1.msra.mxu0 0.0
    %4010 = vmatprep.subr.mxu0 0.0
    %4011 = vmatpush1.msra.mxu0 0.0
    %4012 = vmatprep.subr.mxu0 0.0
    %4013 = vmatpush1.msra.mxu0 0.0
    %4014 = vmatprep.subr.mxu0 0.0
    %4015 = vmatpush1.msra.mxu0 0.0
    %4016 = vmatprep.subr.mxu0 0.0
    %4017 = vmatpush1.msra.mxu0 0.0
    %4018 = vmatprep.subr.mxu0 0.0
    %4019 = vmatpush1.msra.mxu0 0.0
    %4020 = vmatprep.subr.mxu0 0.0
    %4021 = vmatpush1.msra.mxu0 0.0
    %4022 = vmatprep.subr.mxu0 0.0
    %4023 = vmatpush1.msra.mxu0 0.0
    %4024 = vmatprep.subr.mxu0 0.0
    %4025 = vmatpush1.msra.mxu0 0.0
    %4026 = vmatprep.subr.mxu0 0.0
    %4027 = vmatpush1.msra.mxu0 0.0
    %4028 = vmatprep.subr.mxu0 0.0
    %4029 = vmatpush1.msra.mxu0 0.0
    %4030 = vmatprep.subr.mxu0 0.0
    %4031 = vmatpush1.msra.mxu0 0.0
    %4032 = vmatprep.subr.mxu0 0.0
    %4033 = vmatpush1.msra.mxu0 0.0
    %4034 = vmatprep.mubr.f32.mxu0 0.0
    %4035 = vmatmul.mubr.f32.gmra.mrb[0].mxu0 %v843
    %v4036 = vpop.f32.mrb[0].mxu0
    %v4037 = vadd.f32 %v3968, %v4036
    %v4038 = vpop.f32.mrb[0].mxu0
    %4039 = vmatprep.mubr.f32.mxu0 0.0
    %4040 = vmatmul.mubr.f32.gmra.mrb[0].mxu0 %v846
    %v4041 = vpop.f32.mrb[0].mxu0
    %v4042 = vadd.f32 %v3968, %v4041
    %v4043 = vpop.f32.mrb[0].mxu0
    %4044 = vmatprep.mubr.f32.mxu0 0.0
    %4045 = vmatmul.mubr.f32.gmra.mrb[0].mxu0 %v849
    %v4046 = vpop.f32.mrb[0].mxu0
    %v4047 = vadd.f32 %v3968, %v4046
    %v4048 = vpop.f32.mrb[0].mxu0
    %4049 = vmatprep.mubr.f32.mxu0 0.0
    %4050 = vmatmul.mubr.f32.gmra.mrb[0].mxu0 %v852
    %v4051 = vpop.f32.mrb[0].mxu0
    %v4052 = vadd.f32 %v3968, %v4051
    %v4053 = vpop.f32.mrb[0].mxu0
    %4054 = vmatprep.mubr.f32.mxu0 0.0
    %4055 = vmatmul.mubr.f32.gmra.mrb[0].mxu0 %v855
    %v4056 = vpop.f32.mrb[0].mxu0
    %v4057 = vadd.f32 %v3968, %v4056
    %v4058 = vpop.f32.mrb[0].mxu0
    %4059 = vmatprep.mubr.f32.mxu0 0.0
    %4060 = vmatmul.mubr.f32.gmra.mrb[0].mxu0 %v858
    %v4061 = vpop.f32.mrb[0].mxu0
    %v4062 = vadd.f32 %v3968, %v4061
    %v4063 = vpop.f32.mrb[0].mxu0
    %4064 = vmatprep.mubr.f32.mxu0 0.0
    %4065 = vmatmul.mubr.f32.gmra.mrb[0].mxu0 %v861
    %v4066 = vpop.f32.mrb[0].mxu0
    %v4067 = vadd.f32 %v3968, %v4066
    %v4068 = vpop.f32.mrb[0].mxu0
    %4069 = vmatprep.mubr.f32.mxu0 0.0
    %4070 = vmatmul.mubr.f32.gmra.mrb[0].mxu0 %v864
    %v4071 = vpop.f32.mrb[0].mxu0
    %v4072 = vadd.f32 %v3968, %v4071
    %v4073 = vpop.f32.mrb[0].mxu0
    %4074 = vmatprep.mubr.f32.mxu0 0.0
    %4075 = vmatmul.mubr.f32.gmra.mrb[0].mxu0 %v867
    %v4076 = vpop.f32.mrb[0].mxu0
    %v4077 = vadd.f32 %v3968, %v4076
    %v4078 = vpop.f32.mrb[0].mxu0
    %4079 = vmatprep.mubr.f32.mxu0 0.0
    %4080 = vmatmul.mubr.f32.gmra.mrb[0].mxu0 %v870
    %v4081 = vpop.f32.mrb[0].mxu0
    %v4082 = vadd.f32 %v3968, %v4081
    %v4083 = vpop.f32.mrb[0].mxu0
    %4084 = vdwg.mxu0
    %v4086 = vsel %vm1233, %v3791, 0
    %v4089 = vsel %vm1233, %v3796, 0
    %v4092 = vsel %vm1233, %v3801, 0
    %v4095 = vsel %vm1233, %v3806, 0
    %v4098 = vsel %vm1233, %v3811, 0
    %v4101 = vsel %vm1233, %v3816, 0
    %v4104 = vsel %vm1233, %v3821, 0
    %v4107 = vsel %vm1233, %v3826, 0
    %v4110 = vsel %vm1233, %v3831, 0
    %v4113 = vsel %vm1233, %v3836, 0
    %v4116 = vsel %vm1233, %v3914, 0
    %v4119 = vsel %vm1233, %v3919, 0
    %v4122 = vsel %vm1233, %v3924, 0
    %v4125 = vsel %vm1233, %v3929, 0
    %v4128 = vsel %vm1233, %v3934, 0
    %v4131 = vsel %vm1233, %v3939, 0
    %v4134 = vsel %vm1233, %v3944, 0
    %v4137 = vsel %vm1233, %v3949, 0
    %v4140 = vsel %vm1233, %v3954, 0
    %v4143 = vsel %vm1233, %v3959, 0
    %4145 = vmatprep.subr.mxu0 0.0
    %4146 = vmatpush1.xpose.msra.mxu0 %v4116
    %4147 = vmatprep.subr.mxu0 0.0
    %4148 = vmatpush1.xpose.msra.mxu0 %v4119
    %4149 = vmatprep.subr.mxu0 0.0
    %4150 = vmatpush1.xpose.msra.mxu0 %v4122
    %4151 = vmatprep.subr.mxu0 0.0
    %4152 = vmatpush1.xpose.msra.mxu0 %v4125
    %4153 = vmatprep.subr.mxu0 0.0
    %4154 = vmatpush1.xpose.msra.mxu0 %v4128
    %4155 = vmatprep.subr.mxu0 0.0
    %4156 = vmatpush1.xpose.msra.mxu0 %v4131
    %4157 = vmatprep.subr.mxu0 0.0
    %4158 = vmatpush1.xpose.msra.mxu0 %v4134
    %4159 = vmatprep.subr.mxu0 0.0
    %4160 = vmatpush1.xpose.msra.mxu0 %v4137
    %4161 = vmatprep.subr.mxu0 0.0
    %4162 = vmatpush1.xpose.msra.mxu0 %v4140
    %4163 = vmatprep.subr.mxu0 0.0
    %4164 = vmatpush1.xpose.msra.mxu0 %v4143
    %4165 = vmatprep.subr.mxu0 0.0
    %4166 = vmatpush1.xpose.msra.mxu0 0.0
    %4167 = vmatprep.subr.mxu0 0.0
    %4168 = vmatpush1.xpose.msra.mxu0 0.0
    %4169 = vmatprep.subr.mxu0 0.0
    %4170 = vmatpush1.xpose.msra.mxu0 0.0
    %4171 = vmatprep.subr.mxu0 0.0
    %4172 = vmatpush1.xpose.msra.mxu0 0.0
    %4173 = vmatprep.subr.mxu0 0.0
    %4174 = vmatpush1.xpose.msra.mxu0 0.0
    %4175 = vmatprep.subr.mxu0 0.0
    %4176 = vmatpush1.xpose.msra.mxu0 0.0
    %4177 = vmatprep.subr.mxu0 0.0
    %4178 = vmatpush1.xpose.msra.mxu0 0.0
    %4179 = vmatprep.subr.mxu0 0.0
    %4180 = vmatpush1.xpose.msra.mxu0 0.0
    %4181 = vmatprep.subr.mxu0 0.0
    %4182 = vmatpush1.xpose.msra.mxu0 0.0
    %4183 = vmatprep.subr.mxu0 0.0
    %4184 = vmatpush1.xpose.msra.mxu0 0.0
    %4185 = vmatprep.subr.mxu0 0.0
    %4186 = vmatpush1.xpose.msra.mxu0 0.0
    %4187 = vmatprep.subr.mxu0 0.0
    %4188 = vmatpush1.xpose.msra.mxu0 0.0
    %4189 = vmatprep.subr.mxu0 0.0
    %4190 = vmatpush1.xpose.msra.mxu0 0.0
    %4191 = vmatprep.subr.mxu0 0.0
    %4192 = vmatpush1.xpose.msra.mxu0 0.0
    %4193 = vmatprep.subr.mxu0 0.0
    %4194 = vmatpush1.xpose.msra.mxu0 0.0
    %4195 = vmatprep.subr.mxu0 0.0
    %4196 = vmatpush1.xpose.msra.mxu0 0.0
    %4197 = vmatprep.subr.mxu0 0.0
    %4198 = vmatpush1.xpose.msra.mxu0 0.0
    %4199 = vmatprep.subr.mxu0 0.0
    %4200 = vmatpush1.xpose.msra.mxu0 0.0
    %4201 = vmatprep.subr.mxu0 0.0
    %4202 = vmatpush1.xpose.msra.mxu0 0.0
    %4203 = vmatprep.subr.mxu0 0.0
    %4204 = vmatpush1.xpose.msra.mxu0 0.0
    %4205 = vmatprep.subr.mxu0 0.0
    %4206 = vmatpush1.xpose.msra.mxu0 0.0
    %4207 = vmatprep.subr.mxu0 0.0
    %4208 = vmatpush1.xpose.msra.mxu0 0.0
    %4209 = vmatprep.mubr.f32.mxu0 0.0
    %4210 = vmatmul.mubr.f32.gmra.mrb[0].mxu0 %v4086
    %v4211 = vpop.f32.mrb[0].mxu0
    %v4212 = vadd.f32 %v662, %v4211
    %v4213 = vpop.f32.mrb[0].mxu0
    %4214 = vmatprep.mubr.f32.mxu0 0.0
    %4215 = vmatmul.mubr.f32.gmra.mrb[0].mxu0 %v4089
    %v4216 = vpop.f32.mrb[0].mxu0
    %v4217 = vadd.f32 %v663, %v4216
    %v4218 = vpop.f32.mrb[0].mxu0
    %4219 = vmatprep.mubr.f32.mxu0 0.0
    %4220 = vmatmul.mubr.f32.gmra.mrb[0].mxu0 %v4092
    %v4221 = vpop.f32.mrb[0].mxu0
    %v4222 = vadd.f32 %v664, %v4221
    %v4223 = vpop.f32.mrb[0].mxu0
    %4224 = vmatprep.mubr.f32.mxu0 0.0
    %4225 = vmatmul.mubr.f32.gmra.mrb[0].mxu0 %v4095
    %v4226 = vpop.f32.mrb[0].mxu0
    %v4227 = vadd.f32 %v665, %v4226
    %v4228 = vpop.f32.mrb[0].mxu0
    %4229 = vmatprep.mubr.f32.mxu0 0.0
    %4230 = vmatmul.mubr.f32.gmra.mrb[0].mxu0 %v4098
    %v4231 = vpop.f32.mrb[0].mxu0
    %v4232 = vadd.f32 %v666, %v4231
    %v4233 = vpop.f32.mrb[0].mxu0
    %4234 = vmatprep.mubr.f32.mxu0 0.0
    %4235 = vmatmul.mubr.f32.gmra.mrb[0].mxu0 %v4101
    %v4236 = vpop.f32.mrb[0].mxu0
    %v4237 = vadd.f32 %v667, %v4236
    %v4238 = vpop.f32.mrb[0].mxu0
    %4239 = vmatprep.mubr.f32.mxu0 0.0
    %4240 = vmatmul.mubr.f32.gmra.mrb[0].mxu0 %v4104
    %v4241 = vpop.f32.mrb[0].mxu0
    %v4242 = vadd.f32 %v668, %v4241
    %v4243 = vpop.f32.mrb[0].mxu0
    %4244 = vmatprep.mubr.f32.mxu0 0.0
    %4245 = vmatmul.mubr.f32.gmra.mrb[0].mxu0 %v4107
    %v4246 = vpop.f32.mrb[0].mxu0
    %v4247 = vadd.f32 %v669, %v4246
    %v4248 = vpop.f32.mrb[0].mxu0
    %4249 = vmatprep.mubr.f32.mxu0 0.0
    %4250 = vmatmul.mubr.f32.gmra.mrb[0].mxu0 %v4110
    %v4251 = vpop.f32.mrb[0].mxu0
    %v4252 = vadd.f32 %v670, %v4251
    %v4253 = vpop.f32.mrb[0].mxu0
    %4254 = vmatprep.mubr.f32.mxu0 0.0
    %4255 = vmatmul.mubr.f32.gmra.mrb[0].mxu0 %v4113
    %v4256 = vpop.f32.mrb[0].mxu0
    %v4257 = vadd.f32 %v671, %v4256
    %v4258 = vpop.f32.mrb[0].mxu0
    %4259 = vdwg.mxu0
    %v4260 = vsel %vm1409, %v4212, -inf
    %4261 = vmax.xlane.f32.xlu0 %v4260
    %v4262 = vpop.xlane.xlu0 %4261
    %v4263 = vsel %vm1409, %v4217, -inf
    %4264 = vmax.xlane.f32.xlu0 %v4263
    %v4265 = vpop.xlane.xlu0 %4264
    %v4266 = vsel %vm1409, %v4222, -inf
    %4267 = vmax.xlane.f32.xlu0 %v4266
    %v4268 = vpop.xlane.xlu0 %4267
    %v4269 = vsel %vm1409, %v4227, -inf
    %4270 = vmax.xlane.f32.xlu0 %v4269
    %v4271 = vpop.xlane.xlu0 %4270
    %v4272 = vsel %vm1409, %v4232, -inf
    %4273 = vmax.xlane.f32.xlu0 %v4272
    %v4274 = vpop.xlane.xlu0 %4273
    %v4275 = vsel %vm1409, %v4237, -inf
    %4276 = vmax.xlane.f32.xlu0 %v4275
    %v4277 = vpop.xlane.xlu0 %4276
    %v4278 = vsel %vm1409, %v4242, -inf
    %4279 = vmax.xlane.f32.xlu0 %v4278
    %v4280 = vpop.xlane.xlu0 %4279
    %v4281 = vsel %vm1409, %v4247, -inf
    %4282 = vmax.xlane.f32.xlu0 %v4281
    %v4283 = vpop.xlane.xlu0 %4282
    %v4284 = vsel %vm1409, %v4252, -inf
    %4285 = vmax.xlane.f32.xlu0 %v4284
    %v4286 = vpop.xlane.xlu0 %4285
    %v4287 = vsel %vm1409, %v4257, -inf
    %4288 = vmax.xlane.f32.xlu0 %v4287
    %v4289 = vpop.xlane.xlu0 %4288
    %v4290 = vsub.f32 %v4212, %v4262
    %v4291 = vsub.f32 %v4217, %v4265
    %v4292 = vsub.f32 %v4222, %v4268
    %v4293 = vsub.f32 %v4227, %v4271
    %v4294 = vsub.f32 %v4232, %v4274
    %v4295 = vsub.f32 %v4237, %v4277
    %v4296 = vsub.f32 %v4242, %v4280
    %v4297 = vsub.f32 %v4247, %v4283
    %v4298 = vsub.f32 %v4252, %v4286
    %v4299 = vsub.f32 %v4257, %v4289
    %v4300 = vmul.f32 %v4290, 1.442695
    %v4301 = vpow.pop %v4300
    %v4302 = vmul.f32 %v4291, 1.442695
    %v4303 = vpow.pop %v4302
    %v4304 = vmul.f32 %v4292, 1.442695
    %v4305 = vpow.pop %v4304
    %v4306 = vmul.f32 %v4293, 1.442695
    %v4307 = vpow.pop %v4306
    %v4308 = vmul.f32 %v4294, 1.442695
    %v4309 = vpow.pop %v4308
    %v4310 = vmul.f32 %v4295, 1.442695
    %v4311 = vpow.pop %v4310
    %v4312 = vmul.f32 %v4296, 1.442695
    %v4313 = vpow.pop %v4312
    %v4314 = vmul.f32 %v4297, 1.442695
    %v4315 = vpow.pop %v4314
    %v4316 = vmul.f32 %v4298, 1.442695
    %v4317 = vpow.pop %v4316
    %v4318 = vmul.f32 %v4299, 1.442695
    %v4319 = vpow.pop %v4318
    %v4320 = vsel %vm1409, %v4301, 0.0
    %4321 = vadd.xlane.f32.xlu0 %v4320
    %v4322 = vpop.xlane.xlu0 %4321
    %v4323 = vsel %vm1409, %v4303, 0.0
    %4324 = vadd.xlane.f32.xlu0 %v4323
    %v4325 = vpop.xlane.xlu0 %4324
    %v4326 = vsel %vm1409, %v4305, 0.0
    %4327 = vadd.xlane.f32.xlu0 %v4326
    %v4328 = vpop.xlane.xlu0 %4327
    %v4329 = vsel %vm1409, %v4307, 0.0
    %4330 = vadd.xlane.f32.xlu0 %v4329
    %v4331 = vpop.xlane.xlu0 %4330
    %v4332 = vsel %vm1409, %v4309, 0.0
    %4333 = vadd.xlane.f32.xlu0 %v4332
    %v4334 = vpop.xlane.xlu0 %4333
    %v4335 = vsel %vm1409, %v4311, 0.0
    %4336 = vadd.xlane.f32.xlu0 %v4335
    %v4337 = vpop.xlane.xlu0 %4336
    %v4338 = vsel %vm1409, %v4313, 0.0
    %4339 = vadd.xlane.f32.xlu0 %v4338
    %v4340 = vpop.xlane.xlu0 %4339
    %v4341 = vsel %vm1409, %v4315, 0.0
    %4342 = vadd.xlane.f32.xlu0 %v4341
    %v4343 = vpop.xlane.xlu0 %4342
    %v4344 = vsel %vm1409, %v4317, 0.0
    %4345 = vadd.xlane.f32.xlu0 %v4344
    %v4346 = vpop.xlane.xlu0 %4345
    %v4347 = vsel %vm1409, %v4319, 0.0
    %4348 = vadd.xlane.f32.xlu0 %v4347
    %v4349 = vpop.xlane.xlu0 %4348
    %v4350 = vrcp.pop %v4322
    %v4351 = vrcp.pop %v4325
    %v4352 = vrcp.pop %v4328
    %v4353 = vrcp.pop %v4331
    %v4354 = vrcp.pop %v4334
    %v4355 = vrcp.pop %v4337
    %v4356 = vrcp.pop %v4340
    %v4357 = vrcp.pop %v4343
    %v4358 = vrcp.pop %v4346
    %v4359 = vrcp.pop %v4349
    %v4360 = vmul.f32 %v4301, %v4350
    %v4361 = vmul.f32 %v4303, %v4351
    %v4362 = vmul.f32 %v4305, %v4352
    %v4363 = vmul.f32 %v4307, %v4353
    %v4364 = vmul.f32 %v4309, %v4354
    %v4365 = vmul.f32 %v4311, %v4355
    %v4366 = vmul.f32 %v4313, %v4356
    %v4367 = vmul.f32 %v4315, %v4357
    %v4368 = vmul.f32 %v4317, %v4358
    %v4369 = vmul.f32 %v4319, %v4359
    %v4371 = vsel %vm1409, %v4360, 0
    %v4374 = vsel %vm1409, %v4361, 0
    %v4377 = vsel %vm1409, %v4362, 0
    %v4380 = vsel %vm1409, %v4363, 0
    %v4383 = vsel %vm1409, %v4364, 0
    %v4386 = vsel %vm1409, %v4365, 0
    %v4389 = vsel %vm1409, %v4366, 0
    %v4392 = vsel %vm1409, %v4367, 0
    %v4395 = vsel %vm1409, %v4368, 0
    %v4398 = vsel %vm1409, %v4369, 0
    %4400 = vmatprep.subr.mxu0 0.0
    %4401 = vmatpush1.msra.mxu0 %v4037
    %4402 = vmatprep.subr.mxu0 0.0
    %4403 = vmatpush1.msra.mxu0 %v4042
    %4404 = vmatprep.subr.mxu0 0.0
    %4405 = vmatpush1.msra.mxu0 %v4047
    %4406 = vmatprep.subr.mxu0 0.0
    %4407 = vmatpush1.msra.mxu0 %v4052
    %4408 = vmatprep.subr.mxu0 0.0
    %4409 = vmatpush1.msra.mxu0 %v4057
    %4410 = vmatprep.subr.mxu0 0.0
    %4411 = vmatpush1.msra.mxu0 %v4062
    %4412 = vmatprep.subr.mxu0 0.0
    %4413 = vmatpush1.msra.mxu0 %v4067
    %4414 = vmatprep.subr.mxu0 0.0
    %4415 = vmatpush1.msra.mxu0 %v4072
    %4416 = vmatprep.subr.mxu0 0.0
    %4417 = vmatpush1.msra.mxu0 %v4077
    %4418 = vmatprep.subr.mxu0 0.0
    %4419 = vmatpush1.msra.mxu0 %v4082
    %4420 = vmatprep.subr.mxu0 0.0
    %4421 = vmatpush1.msra.mxu0 0.0
    %4422 = vmatprep.subr.mxu0 0.0
    %4423 = vmatpush1.msra.mxu0 0.0
    %4424 = vmatprep.subr.mxu0 0.0
    %4425 = vmatpush1.msra.mxu0 0.0
    %4426 = vmatprep.subr.mxu0 0.0
    %4427 = vmatpush1.msra.mxu0 0.0
    %4428 = vmatprep.subr.mxu0 0.0
    %4429 = vmatpush1.msra.mxu0 0.0
    %4430 = vmatprep.subr.mxu0 0.0
    %4431 = vmatpush1.msra.mxu0 0.0
    %4432 = vmatprep.subr.mxu0 0.0
    %4433 = vmatpush1.msra.mxu0 0.0
    %4434 = vmatprep.subr.mxu0 0.0
    %4435 = vmatpush1.msra.mxu0 0.0
    %4436 = vmatprep.subr.mxu0 0.0
    %4437 = vmatpush1.msra.mxu0 0.0
    %4438 = vmatprep.subr.mxu0 0.0
    %4439 = vmatpush1.msra.mxu0 0.0
    %4440 = vmatprep.subr.mxu0 0.0
    %4441 = vmatpush1.msra.mxu0 0.0
    %4442 = vmatprep.subr.mxu0 0.0
    %4443 = vmatpush1.msra.mxu0 0.0
    %4444 = vmatprep.subr.mxu0 0.0
    %4445 = vmatpush1.msra.mxu0 0.0
    %4446 = vmatprep.subr.mxu0 0.0
    %4447 = vmatpush1.msra.mxu0 0.0
    %4448 = vmatprep.subr.mxu0 0.0
    %4449 = vmatpush1.msra.mxu0 0.0
    %4450 = vmatprep.subr.mxu0 0.0
    %4451 = vmatpush1.msra.mxu0 0.0
    %4452 = vmatprep.subr.mxu0 0.0
    %4453 = vmatpush1.msra.mxu0 0.0
    %4454 = vmatprep.subr.mxu0 0.0
    %4455 = vmatpush1.msra.mxu0 0.0
    %4456 = vmatprep.subr.mxu0 0.0
    %4457 = vmatpush1.msra.mxu0 0.0
    %4458 = vmatprep.subr.mxu0 0.0
    %4459 = vmatpush1.msra.mxu0 0.0
    %4460 = vmatprep.subr.mxu0 0.0
    %4461 = vmatpush1.msra.mxu0 0.0
    %4462 = vmatprep.subr.mxu0 0.0
    %4463 = vmatpush1.msra.mxu0 0.0
    %4464 = vmatprep.mubr.f32.mxu0 0.0
    %4465 = vmatmul.mubr.f32.gmra.mrb[0].mxu0 %v4371
    %v4466 = vpop.f32.mrb[0].mxu0
    %v4467 = vadd.f32 0.0, %v4466
    %v4468 = vpop.f32.mrb[0].mxu0
    %4469 = vmatprep.mubr.f32.mxu0 0.0
    %4470 = vmatmul.mubr.f32.gmra.mrb[0].mxu0 %v4374
    %v4471 = vpop.f32.mrb[0].mxu0
    %v4472 = vadd.f32 0.0, %v4471
    %v4473 = vpop.f32.mrb[0].mxu0
    %4474 = vmatprep.mubr.f32.mxu0 0.0
    %4475 = vmatmul.mubr.f32.gmra.mrb[0].mxu0 %v4377
    %v4476 = vpop.f32.mrb[0].mxu0
    %v4477 = vadd.f32 0.0, %v4476
    %v4478 = vpop.f32.mrb[0].mxu0
    %4479 = vmatprep.mubr.f32.mxu0 0.0
    %4480 = vmatmul.mubr.f32.gmra.mrb[0].mxu0 %v4380
    %v4481 = vpop.f32.mrb[0].mxu0
    %v4482 = vadd.f32 0.0, %v4481
    %v4483 = vpop.f32.mrb[0].mxu0
    %4484 = vmatprep.mubr.f32.mxu0 0.0
    %4485 = vmatmul.mubr.f32.gmra.mrb[0].mxu0 %v4383
    %v4486 = vpop.f32.mrb[0].mxu0
    %v4487 = vadd.f32 0.0, %v4486
    %v4488 = vpop.f32.mrb[0].mxu0
    %4489 = vmatprep.mubr.f32.mxu0 0.0
    %4490 = vmatmul.mubr.f32.gmra.mrb[0].mxu0 %v4386
    %v4491 = vpop.f32.mrb[0].mxu0
    %v4492 = vadd.f32 0.0, %v4491
    %v4493 = vpop.f32.mrb[0].mxu0
    %4494 = vmatprep.mubr.f32.mxu0 0.0
    %4495 = vmatmul.mubr.f32.gmra.mrb[0].mxu0 %v4389
    %v4496 = vpop.f32.mrb[0].mxu0
    %v4497 = vadd.f32 0.0, %v4496
    %v4498 = vpop.f32.mrb[0].mxu0
    %4499 = vmatprep.mubr.f32.mxu0 0.0
    %4500 = vmatmul.mubr.f32.gmra.mrb[0].mxu0 %v4392
    %v4501 = vpop.f32.mrb[0].mxu0
    %v4502 = vadd.f32 0.0, %v4501
    %v4503 = vpop.f32.mrb[0].mxu0
    %4504 = vmatprep.mubr.f32.mxu0 0.0
    %4505 = vmatmul.mubr.f32.gmra.mrb[0].mxu0 %v4395
    %v4506 = vpop.f32.mrb[0].mxu0
    %v4507 = vadd.f32 0.0, %v4506
    %v4508 = vpop.f32.mrb[0].mxu0
    %4509 = vmatprep.mubr.f32.mxu0 0.0
    %4510 = vmatmul.mubr.f32.gmra.mrb[0].mxu0 %v4398
    %v4511 = vpop.f32.mrb[0].mxu0
    %v4512 = vadd.f32 0.0, %v4511
    %v4513 = vpop.f32.mrb[0].mxu0
    %4514 = vdwg.mxu0
    %s4515 = scalar_lea.vmem %s10, 24
    %v4516 = vld [vmem:[%s4515] sm:$0xff]
    %v4518 = vsel %vm1233, %v4467, 0
    %v4521 = vsel %vm1233, %v4472, 0
    %v4524 = vsel %vm1233, %v4477, 0
    %v4527 = vsel %vm1233, %v4482, 0
    %v4530 = vsel %vm1233, %v4487, 0
    %v4533 = vsel %vm1233, %v4492, 0
    %v4536 = vsel %vm1233, %v4497, 0
    %v4539 = vsel %vm1233, %v4502, 0
    %v4542 = vsel %vm1233, %v4507, 0
    %v4545 = vsel %vm1233, %v4512, 0
    %4547 = vmatprep.subr.mxu0 0.0
    %4548 = vmatpush1.msra.mxu0 %v4516
    %4549 = vmatprep.subr.mxu0 0.0
    %4550 = vmatpush1.msra.mxu0 0.0
    %4551 = vmatprep.subr.mxu0 0.0
    %4552 = vmatpush1.msra.mxu0 0.0
    %4553 = vmatprep.subr.mxu0 0.0
    %4554 = vmatpush1.msra.mxu0 0.0
    %4555 = vmatprep.subr.mxu0 0.0
    %4556 = vmatpush1.msra.mxu0 0.0
    %4557 = vmatprep.subr.mxu0 0.0
    %4558 = vmatpush1.msra.mxu0 0.0
    %4559 = vmatprep.subr.mxu0 0.0
    %4560 = vmatpush1.msra.mxu0 0.0
    %4561 = vmatprep.subr.mxu0 0.0
    %4562 = vmatpush1.msra.mxu0 0.0
    %4563 = vmatprep.subr.mxu0 0.0
    %4564 = vmatpush1.msra.mxu0 0.0
    %4565 = vmatprep.subr.mxu0 0.0
    %4566 = vmatpush1.msra.mxu0 0.0
    %4567 = vmatprep.subr.mxu0 0.0
    %4568 = vmatpush1.msra.mxu0 0.0
    %4569 = vmatprep.subr.mxu0 0.0
    %4570 = vmatpush1.msra.mxu0 0.0
    %4571 = vmatprep.subr.mxu0 0.0
    %4572 = vmatpush1.msra.mxu0 0.0
    %4573 = vmatprep.subr.mxu0 0.0
    %4574 = vmatpush1.msra.mxu0 0.0
    %4575 = vmatprep.subr.mxu0 0.0
    %4576 = vmatpush1.msra.mxu0 0.0
    %4577 = vmatprep.subr.mxu0 0.0
    %4578 = vmatpush1.msra.mxu0 0.0
    %4579 = vmatprep.subr.mxu0 0.0
    %4580 = vmatpush1.msra.mxu0 0.0
    %4581 = vmatprep.subr.mxu0 0.0
    %4582 = vmatpush1.msra.mxu0 0.0
    %4583 = vmatprep.subr.mxu0 0.0
    %4584 = vmatpush1.msra.mxu0 0.0
    %4585 = vmatprep.subr.mxu0 0.0
    %4586 = vmatpush1.msra.mxu0 0.0
    %4587 = vmatprep.subr.mxu0 0.0
    %4588 = vmatpush1.msra.mxu0 0.0
    %4589 = vmatprep.subr.mxu0 0.0
    %4590 = vmatpush1.msra.mxu0 0.0
    %4591 = vmatprep.subr.mxu0 0.0
    %4592 = vmatpush1.msra.mxu0 0.0
    %4593 = vmatprep.subr.mxu0 0.0
    %4594 = vmatpush1.msra.mxu0 0.0
    %4595 = vmatprep.subr.mxu0 0.0
    %4596 = vmatpush1.msra.mxu0 0.0
    %4597 = vmatprep.subr.mxu0 0.0
    %4598 = vmatpush1.msra.mxu0 0.0
    %4599 = vmatprep.subr.mxu0 0.0
    %4600 = vmatpush1.msra.mxu0 0.0
    %4601 = vmatprep.subr.mxu0 0.0
    %4602 = vmatpush1.msra.mxu0 0.0
    %4603 = vmatprep.subr.mxu0 0.0
    %4604 = vmatpush1.msra.mxu0 0.0
    %4605 = vmatprep.subr.mxu0 0.0
    %4606 = vmatpush1.msra.mxu0 0.0
    %4607 = vmatprep.subr.mxu0 0.0
    %4608 = vmatpush1.msra.mxu0 0.0
    %4609 = vmatprep.subr.mxu0 0.0
    %4610 = vmatpush1.msra.mxu0 0.0
    %4611 = vmatprep.mubr.f32.mxu0 0.0
    %4612 = vmatmul.mubr.f32.gmra.mrb[0].mxu0 %v4518
    %v4613 = vpop.f32.mrb[0].mxu0
    %v4614 = vadd.f32 0.0, %v4613
    %v4615 = vpop.f32.mrb[0].mxu0
    %4616 = vmatprep.mubr.f32.mxu0 0.0
    %4617 = vmatmul.mubr.f32.gmra.mrb[0].mxu0 %v4521
    %v4618 = vpop.f32.mrb[0].mxu0
    %v4619 = vadd.f32 0.0, %v4618
    %v4620 = vpop.f32.mrb[0].mxu0
    %4621 = vmatprep.mubr.f32.mxu0 0.0
    %4622 = vmatmul.mubr.f32.gmra.mrb[0].mxu0 %v4524
    %v4623 = vpop.f32.mrb[0].mxu0
    %v4624 = vadd.f32 0.0, %v4623
    %v4625 = vpop.f32.mrb[0].mxu0
    %4626 = vmatprep.mubr.f32.mxu0 0.0
    %4627 = vmatmul.mubr.f32.gmra.mrb[0].mxu0 %v4527
    %v4628 = vpop.f32.mrb[0].mxu0
    %v4629 = vadd.f32 0.0, %v4628
    %v4630 = vpop.f32.mrb[0].mxu0
    %4631 = vmatprep.mubr.f32.mxu0 0.0
    %4632 = vmatmul.mubr.f32.gmra.mrb[0].mxu0 %v4530
    %v4633 = vpop.f32.mrb[0].mxu0
    %v4634 = vadd.f32 0.0, %v4633
    %v4635 = vpop.f32.mrb[0].mxu0
    %4636 = vmatprep.mubr.f32.mxu0 0.0
    %4637 = vmatmul.mubr.f32.gmra.mrb[0].mxu0 %v4533
    %v4638 = vpop.f32.mrb[0].mxu0
    %v4639 = vadd.f32 0.0, %v4638
    %v4640 = vpop.f32.mrb[0].mxu0
    %4641 = vmatprep.mubr.f32.mxu0 0.0
    %4642 = vmatmul.mubr.f32.gmra.mrb[0].mxu0 %v4536
    %v4643 = vpop.f32.mrb[0].mxu0
    %v4644 = vadd.f32 0.0, %v4643
    %v4645 = vpop.f32.mrb[0].mxu0
    %4646 = vmatprep.mubr.f32.mxu0 0.0
    %4647 = vmatmul.mubr.f32.gmra.mrb[0].mxu0 %v4539
    %v4648 = vpop.f32.mrb[0].mxu0
    %v4649 = vadd.f32 0.0, %v4648
    %v4650 = vpop.f32.mrb[0].mxu0
    %4651 = vmatprep.mubr.f32.mxu0 0.0
    %4652 = vmatmul.mubr.f32.gmra.mrb[0].mxu0 %v4542
    %v4653 = vpop.f32.mrb[0].mxu0
    %v4654 = vadd.f32 0.0, %v4653
    %v4655 = vpop.f32.mrb[0].mxu0
    %4656 = vmatprep.mubr.f32.mxu0 0.0
    %4657 = vmatmul.mubr.f32.gmra.mrb[0].mxu0 %v4545
    %v4658 = vpop.f32.mrb[0].mxu0
    %v4659 = vadd.f32 0.0, %v4658
    %v4660 = vpop.f32.mrb[0].mxu0
    %4661 = vdwg.mxu0
    %v4662 = vadd.f32 %v3706, %v4614
    %v4663 = vadd.f32 %v3707, %v4619
    %v4664 = vadd.f32 %v3708, %v4624
    %v4665 = vadd.f32 %v3709, %v4629
    %v4666 = vadd.f32 %v3710, %v4634
    %v4667 = vadd.f32 %v3711, %v4639
    %v4668 = vadd.f32 %v3712, %v4644
    %v4669 = vadd.f32 %v3713, %v4649
    %v4670 = vadd.f32 %v3714, %v4654
    %v4671 = vadd.f32 %v3715, %v4659
    %v4672 = vadd.f32 %v519, %v4662
    %v4673 = vadd.f32 %v520, %v4663
    %v4674 = vadd.f32 %v521, %v4664
    %v4675 = vadd.f32 %v522, %v4665
    %v4676 = vadd.f32 %v523, %v4666
    %v4677 = vadd.f32 %v657, %v4667
    %v4678 = vadd.f32 %v658, %v4668
    %v4679 = vadd.f32 %v659, %v4669
    %v4680 = vadd.f32 %v660, %v4670
    %v4681 = vadd.f32 %v661, %v4671
    %v4682 = vlaneseq
    %v4683 = vshrl.u32 %v4682, 7
    %v4684 = vsub.s32 5, %v4683
    %v4685 = vrot.slane %v672, %v4684
    %v4686 = vadd.f32 %v4672, %v4685
    %v4687 = vadd.f32 %v4673, %v4685
    %v4688 = vadd.f32 %v4674, %v4685
    %v4689 = vadd.f32 %v4675, %v4685
    %v4690 = vadd.f32 %v4676, %v4685
    %v4691 = vadd.f32 %v4677, %v4685
    %v4692 = vadd.f32 %v4678, %v4685
    %v4693 = vadd.f32 %v4679, %v4685
    %v4694 = vadd.f32 %v4680, %v4685
    %v4695 = vadd.f32 %v4681, %v4685
    %v4696 = vsel %vm674, %v4686, 0.0
    %4697 = vadd.xlane.f32.xlu0 %v4696
    %v4698 = vpop.xlane.xlu0 %4697
    %v4699 = vsel %vm674, %v4687, 0.0
    %4700 = vadd.xlane.f32.xlu0 %v4699
    %v4701 = vpop.xlane.xlu0 %4700
    %v4702 = vsel %vm674, %v4688, 0.0
    %4703 = vadd.xlane.f32.xlu0 %v4702
    %v4704 = vpop.xlane.xlu0 %4703
    %v4705 = vsel %vm674, %v4689, 0.0
    %4706 = vadd.xlane.f32.xlu0 %v4705
    %v4707 = vpop.xlane.xlu0 %4706
    %v4708 = vsel %vm674, %v4690, 0.0
    %4709 = vadd.xlane.f32.xlu0 %v4708
    %v4710 = vpop.xlane.xlu0 %4709
    %v4711 = vsel %vm674, %v4691, 0.0
    %4712 = vadd.xlane.f32.xlu0 %v4711
    %v4713 = vpop.xlane.xlu0 %4712
    %v4714 = vsel %vm674, %v4692, 0.0
    %4715 = vadd.xlane.f32.xlu0 %v4714
    %v4716 = vpop.xlane.xlu0 %4715
    %v4717 = vsel %vm674, %v4693, 0.0
    %4718 = vadd.xlane.f32.xlu0 %v4717
    %v4719 = vpop.xlane.xlu0 %4718
    %v4720 = vsel %vm674, %v4694, 0.0
    %4721 = vadd.xlane.f32.xlu0 %v4720
    %v4722 = vpop.xlane.xlu0 %4721
    %v4723 = vsel %vm674, %v4695, 0.0
    %4724 = vadd.xlane.f32.xlu0 %v4723
    %v4725 = vpop.xlane.xlu0 %4724
    %v4726 = vmul.f32 %v4698, %v705
    %v4727 = vmul.f32 %v4701, %v705
    %v4728 = vmul.f32 %v4704, %v705
    %v4729 = vmul.f32 %v4707, %v705
    %v4730 = vmul.f32 %v4710, %v705
    %v4731 = vmul.f32 %v4713, %v705
    %v4732 = vmul.f32 %v4716, %v705
    %v4733 = vmul.f32 %v4719, %v705
    %v4734 = vmul.f32 %v4722, %v705
    %v4735 = vmul.f32 %v4725, %v705
    %v4736 = vsub.f32 %v4686, %v4726
    %v4737 = vsub.f32 %v4687, %v4727
    %v4738 = vsub.f32 %v4688, %v4728
    %v4739 = vsub.f32 %v4689, %v4729
    %v4740 = vsub.f32 %v4690, %v4730
    %v4741 = vsub.f32 %v4691, %v4731
    %v4742 = vsub.f32 %v4692, %v4732
    %v4743 = vsub.f32 %v4693, %v4733
    %v4744 = vsub.f32 %v4694, %v4734
    %v4745 = vsub.f32 %v4695, %v4735
    %v4746 = vmul.f32 %v4736, %v4736
    %v4747 = vmul.f32 %v4737, %v4737
    %v4748 = vmul.f32 %v4738, %v4738
    %v4749 = vmul.f32 %v4739, %v4739
    %v4750 = vmul.f32 %v4740, %v4740
    %v4751 = vmul.f32 %v4741, %v4741
    %v4752 = vmul.f32 %v4742, %v4742
    %v4753 = vmul.f32 %v4743, %v4743
    %v4754 = vmul.f32 %v4744, %v4744
    %v4755 = vmul.f32 %v4745, %v4745
    %v4756 = vsel %vm674, %v4746, 0.0
    %4757 = vadd.xlane.f32.xlu0 %v4756
    %v4758 = vpop.xlane.xlu0 %4757
    %v4759 = vsel %vm674, %v4747, 0.0
    %4760 = vadd.xlane.f32.xlu0 %v4759
    %v4761 = vpop.xlane.xlu0 %4760
    %v4762 = vsel %vm674, %v4748, 0.0
    %4763 = vadd.xlane.f32.xlu0 %v4762
    %v4764 = vpop.xlane.xlu0 %4763
    %v4765 = vsel %vm674, %v4749, 0.0
    %4766 = vadd.xlane.f32.xlu0 %v4765
    %v4767 = vpop.xlane.xlu0 %4766
    %v4768 = vsel %vm674, %v4750, 0.0
    %4769 = vadd.xlane.f32.xlu0 %v4768
    %v4770 = vpop.xlane.xlu0 %4769
    %v4771 = vsel %vm674, %v4751, 0.0
    %4772 = vadd.xlane.f32.xlu0 %v4771
    %v4773 = vpop.xlane.xlu0 %4772
    %v4774 = vsel %vm674, %v4752, 0.0
    %4775 = vadd.xlane.f32.xlu0 %v4774
    %v4776 = vpop.xlane.xlu0 %4775
    %v4777 = vsel %vm674, %v4753, 0.0
    %4778 = vadd.xlane.f32.xlu0 %v4777
    %v4779 = vpop.xlane.xlu0 %4778
    %v4780 = vsel %vm674, %v4754, 0.0
    %4781 = vadd.xlane.f32.xlu0 %v4780
    %v4782 = vpop.xlane.xlu0 %4781
    %v4783 = vsel %vm674, %v4755, 0.0
    %4784 = vadd.xlane.f32.xlu0 %v4783
    %v4785 = vpop.xlane.xlu0 %4784
    %v4786 = vmul.f32 %v4758, %v705
    %v4787 = vmul.f32 %v4761, %v705
    %v4788 = vmul.f32 %v4764, %v705
    %v4789 = vmul.f32 %v4767, %v705
    %v4790 = vmul.f32 %v4770, %v705
    %v4791 = vmul.f32 %v4773, %v705
    %v4792 = vmul.f32 %v4776, %v705
    %v4793 = vmul.f32 %v4779, %v705
    %v4794 = vmul.f32 %v4782, %v705
    %v4795 = vmul.f32 %v4785, %v705
    %v4796 = vadd.f32 %v4786, 1e-05
    %v4797 = vadd.f32 %v4787, 1e-05
    %v4798 = vadd.f32 %v4788, 1e-05
    %v4799 = vadd.f32 %v4789, 1e-05
    %v4800 = vadd.f32 %v4790, 1e-05
    %v4801 = vadd.f32 %v4791, 1e-05
    %v4802 = vadd.f32 %v4792, 1e-05
    %v4803 = vadd.f32 %v4793, 1e-05
    %v4804 = vadd.f32 %v4794, 1e-05
    %v4805 = vadd.f32 %v4795, 1e-05
    %v4806 = vrsqrt.pop %v4796
    %v4807 = vrsqrt.pop %v4797
    %v4808 = vrsqrt.pop %v4798
    %v4809 = vrsqrt.pop %v4799
    %v4810 = vrsqrt.pop %v4800
    %v4811 = vrsqrt.pop %v4801
    %v4812 = vrsqrt.pop %v4802
    %v4813 = vrsqrt.pop %v4803
    %v4814 = vrsqrt.pop %v4804
    %v4815 = vrsqrt.pop %v4805
    %v4816 = vmul.f32 %v4736, %v4806
    %v4817 = vmul.f32 %v4737, %v4807
    %v4818 = vmul.f32 %v4738, %v4808
    %v4819 = vmul.f32 %v4739, %v4809
    %v4820 = vmul.f32 %v4740, %v4810
    %v4821 = vmul.f32 %v4741, %v4811
    %v4822 = vmul.f32 %v4742, %v4812
    %v4823 = vmul.f32 %v4743, %v4813
    %v4824 = vmul.f32 %v4744, %v4814
    %v4825 = vmul.f32 %v4745, %v4815
    %v4826 = vlaneseq
    %v4827 = vshrl.u32 %v4826, 7
    %v4828 = vsub.s32 6, %v4827
    %v4829 = vrot.slane %v672, %v4828
    %v4830 = vmul.f32 %v4816, %v4829
    %v4831 = vmul.f32 %v4817, %v4829
    %v4832 = vmul.f32 %v4818, %v4829
    %v4833 = vmul.f32 %v4819, %v4829
    %v4834 = vmul.f32 %v4820, %v4829
    %v4835 = vmul.f32 %v4821, %v4829
    %v4836 = vmul.f32 %v4822, %v4829
    %v4837 = vmul.f32 %v4823, %v4829
    %v4838 = vmul.f32 %v4824, %v4829
    %v4839 = vmul.f32 %v4825, %v4829
    %v4840 = vlaneseq
    %v4841 = vshrl.u32 %v4840, 7
    %v4842 = vsub.s32 7, %v4841
    %v4843 = vrot.slane %v672, %v4842
    %v4844 = vadd.f32 %v4830, %v4843
    %v4845 = vadd.f32 %v4831, %v4843
    %v4846 = vadd.f32 %v4832, %v4843
    %v4847 = vadd.f32 %v4833, %v4843
    %v4848 = vadd.f32 %v4834, %v4843
    %v4849 = vadd.f32 %v4835, %v4843
    %v4850 = vadd.f32 %v4836, %v4843
    %v4851 = vadd.f32 %v4837, %v4843
    %v4852 = vadd.f32 %v4838, %v4843
    %v4853 = vadd.f32 %v4839, %v4843
    %v4854 = vld [vmem:[%s11] sm:$0xff]
    %v4855 = vld [vmem:[%s11 + $0x8] sm:$0xff]
    %v4856 = vld [vmem:[%s11 + $0x10] sm:$0xff]
    %v4857 = vld [vmem:[%s11 + $0x18] sm:$0xff]
    %v4858 = vlaneseq
    %v4859 = vshrl.u32 %v4858, 7
    %v4860 = vsub.s32 0, %v4859
    %v4861 = vrot.slane %v673, %v4860
    %v4863 = vsel %vm674, %v4844, 0
    %v4866 = vsel %vm674, %v4845, 0
    %v4869 = vsel %vm674, %v4846, 0
    %v4872 = vsel %vm674, %v4847, 0
    %v4875 = vsel %vm674, %v4848, 0
    %v4878 = vsel %vm674, %v4849, 0
    %v4881 = vsel %vm674, %v4850, 0
    %v4884 = vsel %vm674, %v4851, 0
    %v4887 = vsel %vm674, %v4852, 0
    %v4890 = vsel %vm674, %v4853, 0
    %4892 = vmatprep.subr.mxu0 0.0
    %4893 = vmatpush1.msra.mxu0 %v4854
    %4894 = vmatprep.subr.mxu0 0.0
    %4895 = vmatpush1.msra.mxu0 %v4855
    %4896 = vmatprep.subr.mxu0 0.0
    %4897 = vmatpush1.msra.mxu0 %v4856
    %4898 = vmatprep.subr.mxu0 0.0
    %4899 = vmatpush1.msra.mxu0 %v4857
    %4900 = vmatprep.subr.mxu0 0.0
    %4901 = vmatpush1.msra.mxu0 0.0
    %4902 = vmatprep.subr.mxu0 0.0
    %4903 = vmatpush1.msra.mxu0 0.0
    %4904 = vmatprep.subr.mxu0 0.0
    %4905 = vmatpush1.msra.mxu0 0.0
    %4906 = vmatprep.subr.mxu0 0.0
    %4907 = vmatpush1.msra.mxu0 0.0
    %4908 = vmatprep.subr.mxu0 0.0
    %4909 = vmatpush1.msra.mxu0 0.0
    %4910 = vmatprep.subr.mxu0 0.0
    %4911 = vmatpush1.msra.mxu0 0.0
    %4912 = vmatprep.subr.mxu0 0.0
    %4913 = vmatpush1.msra.mxu0 0.0
    %4914 = vmatprep.subr.mxu0 0.0
    %4915 = vmatpush1.msra.mxu0 0.0
    %4916 = vmatprep.subr.mxu0 0.0
    %4917 = vmatpush1.msra.mxu0 0.0
    %4918 = vmatprep.subr.mxu0 0.0
    %4919 = vmatpush1.msra.mxu0 0.0
    %4920 = vmatprep.subr.mxu0 0.0
    %4921 = vmatpush1.msra.mxu0 0.0
    %4922 = vmatprep.subr.mxu0 0.0
    %4923 = vmatpush1.msra.mxu0 0.0
    %4924 = vmatprep.subr.mxu0 0.0
    %4925 = vmatpush1.msra.mxu0 0.0
    %4926 = vmatprep.subr.mxu0 0.0
    %4927 = vmatpush1.msra.mxu0 0.0
    %4928 = vmatprep.subr.mxu0 0.0
    %4929 = vmatpush1.msra.mxu0 0.0
    %4930 = vmatprep.subr.mxu0 0.0
    %4931 = vmatpush1.msra.mxu0 0.0
    %4932 = vmatprep.subr.mxu0 0.0
    %4933 = vmatpush1.msra.mxu0 0.0
    %4934 = vmatprep.subr.mxu0 0.0
    %4935 = vmatpush1.msra.mxu0 0.0
    %4936 = vmatprep.subr.mxu0 0.0
    %4937 = vmatpush1.msra.mxu0 0.0
    %4938 = vmatprep.subr.mxu0 0.0
    %4939 = vmatpush1.msra.mxu0 0.0
    %4940 = vmatprep.subr.mxu0 0.0
    %4941 = vmatpush1.msra.mxu0 0.0
    %4942 = vmatprep.subr.mxu0 0.0
    %4943 = vmatpush1.msra.mxu0 0.0
    %4944 = vmatprep.subr.mxu0 0.0
    %4945 = vmatpush1.msra.mxu0 0.0
    %4946 = vmatprep.subr.mxu0 0.0
    %4947 = vmatpush1.msra.mxu0 0.0
    %4948 = vmatprep.subr.mxu0 0.0
    %4949 = vmatpush1.msra.mxu0 0.0
    %4950 = vmatprep.subr.mxu0 0.0
    %4951 = vmatpush1.msra.mxu0 0.0
    %4952 = vmatprep.subr.mxu0 0.0
    %4953 = vmatpush1.msra.mxu0 0.0
    %4954 = vmatprep.subr.mxu0 0.0
    %4955 = vmatpush1.msra.mxu0 0.0
    %4956 = vmatprep.mubr.f32.mxu0 0.0
    %4957 = vmatmul.mubr.f32.gmra.mrb[0].mxu0 %v4863
    %v4958 = vpop.f32.mrb[0].mxu0
    %v4959 = vadd.f32 %v4861, %v4958
    %v4960 = vpop.f32.mrb[0].mxu0
    %4961 = vmatprep.mubr.f32.mxu0 0.0
    %4962 = vmatmul.mubr.f32.gmra.mrb[0].mxu0 %v4866
    %v4963 = vpop.f32.mrb[0].mxu0
    %v4964 = vadd.f32 %v4861, %v4963
    %v4965 = vpop.f32.mrb[0].mxu0
    %4966 = vmatprep.mubr.f32.mxu0 0.0
    %4967 = vmatmul.mubr.f32.gmra.mrb[0].mxu0 %v4869
    %v4968 = vpop.f32.mrb[0].mxu0
    %v4969 = vadd.f32 %v4861, %v4968
    %v4970 = vpop.f32.mrb[0].mxu0
    %4971 = vmatprep.mubr.f32.mxu0 0.0
    %4972 = vmatmul.mubr.f32.gmra.mrb[0].mxu0 %v4872
    %v4973 = vpop.f32.mrb[0].mxu0
    %v4974 = vadd.f32 %v4861, %v4973
    %v4975 = vpop.f32.mrb[0].mxu0
    %4976 = vmatprep.mubr.f32.mxu0 0.0
    %4977 = vmatmul.mubr.f32.gmra.mrb[0].mxu0 %v4875
    %v4978 = vpop.f32.mrb[0].mxu0
    %v4979 = vadd.f32 %v4861, %v4978
    %v4980 = vpop.f32.mrb[0].mxu0
    %4981 = vmatprep.mubr.f32.mxu0 0.0
    %4982 = vmatmul.mubr.f32.gmra.mrb[0].mxu0 %v4878
    %v4983 = vpop.f32.mrb[0].mxu0
    %v4984 = vadd.f32 %v4861, %v4983
    %v4985 = vpop.f32.mrb[0].mxu0
    %4986 = vmatprep.mubr.f32.mxu0 0.0
    %4987 = vmatmul.mubr.f32.gmra.mrb[0].mxu0 %v4881
    %v4988 = vpop.f32.mrb[0].mxu0
    %v4989 = vadd.f32 %v4861, %v4988
    %v4990 = vpop.f32.mrb[0].mxu0
    %4991 = vmatprep.mubr.f32.mxu0 0.0
    %4992 = vmatmul.mubr.f32.gmra.mrb[0].mxu0 %v4884
    %v4993 = vpop.f32.mrb[0].mxu0
    %v4994 = vadd.f32 %v4861, %v4993
    %v4995 = vpop.f32.mrb[0].mxu0
    %4996 = vmatprep.mubr.f32.mxu0 0.0
    %4997 = vmatmul.mubr.f32.gmra.mrb[0].mxu0 %v4887
    %v4998 = vpop.f32.mrb[0].mxu0
    %v4999 = vadd.f32 %v4861, %v4998
    %v5000 = vpop.f32.mrb[0].mxu0
    %5001 = vmatprep.mubr.f32.mxu0 0.0
    %5002 = vmatmul.mubr.f32.gmra.mrb[0].mxu0 %v4890
    %v5003 = vpop.f32.mrb[0].mxu0
    %v5004 = vadd.f32 %v4861, %v5003
    %v5005 = vpop.f32.mrb[0].mxu0
    %5006 = vdwg.mxu0
    %v5007 = vmul.f32 %v4959, 0.5
    %v5008 = vmul.f32 %v4964, 0.5
    %v5009 = vmul.f32 %v4969, 0.5
    %v5010 = vmul.f32 %v4974, 0.5
    %v5011 = vmul.f32 %v4979, 0.5
    %v5012 = vmul.f32 %v4984, 0.5
    %v5013 = vmul.f32 %v4989, 0.5
    %v5014 = vmul.f32 %v4994, 0.5
    %v5015 = vmul.f32 %v4999, 0.5
    %v5016 = vmul.f32 %v5004, 0.5
    %v5017 = vmul.f32 %v4959, 0.044715
    %v5018 = vmul.f32 %v4964, 0.044715
    %v5019 = vmul.f32 %v4969, 0.044715
    %v5020 = vmul.f32 %v4974, 0.044715
    %v5021 = vmul.f32 %v4979, 0.044715
    %v5022 = vmul.f32 %v4984, 0.044715
    %v5023 = vmul.f32 %v4989, 0.044715
    %v5024 = vmul.f32 %v4994, 0.044715
    %v5025 = vmul.f32 %v4999, 0.044715
    %v5026 = vmul.f32 %v5004, 0.044715
    %v5027 = vmul.f32 %v5017, %v4959
    %v5028 = vmul.f32 %v5018, %v4964
    %v5029 = vmul.f32 %v5019, %v4969
    %v5030 = vmul.f32 %v5020, %v4974
    %v5031 = vmul.f32 %v5021, %v4979
    %v5032 = vmul.f32 %v5022, %v4984
    %v5033 = vmul.f32 %v5023, %v4989
    %v5034 = vmul.f32 %v5024, %v4994
    %v5035 = vmul.f32 %v5025, %v4999
    %v5036 = vmul.f32 %v5026, %v5004
    %v5037 = vmul.f32 %v5027, %v4959
    %v5038 = vmul.f32 %v5028, %v4964
    %v5039 = vmul.f32 %v5029, %v4969
    %v5040 = vmul.f32 %v5030, %v4974
    %v5041 = vmul.f32 %v5031, %v4979
    %v5042 = vmul.f32 %v5032, %v4984
    %v5043 = vmul.f32 %v5033, %v4989
    %v5044 = vmul.f32 %v5034, %v4994
    %v5045 = vmul.f32 %v5035, %v4999
    %v5046 = vmul.f32 %v5036, %v5004
    %v5047 = vadd.f32 %v4959, %v5037
    %v5048 = vadd.f32 %v4964, %v5038
    %v5049 = vadd.f32 %v4969, %v5039
    %v5050 = vadd.f32 %v4974, %v5040
    %v5051 = vadd.f32 %v4979, %v5041
    %v5052 = vadd.f32 %v4984, %v5042
    %v5053 = vadd.f32 %v4989, %v5043
    %v5054 = vadd.f32 %v4994, %v5044
    %v5055 = vadd.f32 %v4999, %v5045
    %v5056 = vadd.f32 %v5004, %v5046
    %v5057 = vmul.f32 %v5047, 0.7978846
    %v5058 = vmul.f32 %v5048, 0.7978846
    %v5059 = vmul.f32 %v5049, 0.7978846
    %v5060 = vmul.f32 %v5050, 0.7978846
    %v5061 = vmul.f32 %v5051, 0.7978846
    %v5062 = vmul.f32 %v5052, 0.7978846
    %v5063 = vmul.f32 %v5053, 0.7978846
    %v5064 = vmul.f32 %v5054, 0.7978846
    %v5065 = vmul.f32 %v5055, 0.7978846
    %v5066 = vmul.f32 %v5056, 0.7978846
    %v5067 = vtanh.pop %v5057
    %v5068 = vtanh.pop %v5058
    %v5069 = vtanh.pop %v5059
    %v5070 = vtanh.pop %v5060
    %v5071 = vtanh.pop %v5061
    %v5072 = vtanh.pop %v5062
    %v5073 = vtanh.pop %v5063
    %v5074 = vtanh.pop %v5064
    %v5075 = vtanh.pop %v5065
    %v5076 = vtanh.pop %v5066
    %v5077 = vadd.f32 %v5067, 1.0
    %v5078 = vadd.f32 %v5068, 1.0
    %v5079 = vadd.f32 %v5069, 1.0
    %v5080 = vadd.f32 %v5070, 1.0
    %v5081 = vadd.f32 %v5071, 1.0
    %v5082 = vadd.f32 %v5072, 1.0
    %v5083 = vadd.f32 %v5073, 1.0
    %v5084 = vadd.f32 %v5074, 1.0
    %v5085 = vadd.f32 %v5075, 1.0
    %v5086 = vadd.f32 %v5076, 1.0
    %v5087 = vmul.f32 %v5007, %v5077
    %v5088 = vmul.f32 %v5008, %v5078
    %v5089 = vmul.f32 %v5009, %v5079
    %v5090 = vmul.f32 %v5010, %v5080
    %v5091 = vmul.f32 %v5011, %v5081
    %v5092 = vmul.f32 %v5012, %v5082
    %v5093 = vmul.f32 %v5013, %v5083
    %v5094 = vmul.f32 %v5014, %v5084
    %v5095 = vmul.f32 %v5015, %v5085
    %v5096 = vmul.f32 %v5016, %v5086
    %v5097 = vld [vmem:[%s12] sm:$0xff]
    %v5098 = vld [vmem:[%s12 + $0x8] sm:$0xff]
    %v5099 = vld [vmem:[%s12 + $0x10] sm:$0xff]
    %v5100 = vld [vmem:[%s12 + $0x18] sm:$0xff]
    %v5101 = vld [vmem:[%s12 + $0x20] sm:$0xff]
    %v5102 = vld [vmem:[%s12 + $0x28] sm:$0xff]
    %v5103 = vld [vmem:[%s12 + $0x30] sm:$0xff]
    %v5104 = vld [vmem:[%s12 + $0x38] sm:$0xff]
    %v5105 = vlaneseq
    %v5106 = vshrl.u32 %v5105, 7
    %v5107 = vsub.s32 1, %v5106
    %v5108 = vrot.slane %v673, %v5107
    %v5110 = vsel %vm277, %v5087, 0
    %v5113 = vsel %vm277, %v5088, 0
    %v5116 = vsel %vm277, %v5089, 0
    %v5119 = vsel %vm277, %v5090, 0
    %v5122 = vsel %vm277, %v5091, 0
    %v5125 = vsel %vm277, %v5092, 0
    %v5128 = vsel %vm277, %v5093, 0
    %v5131 = vsel %vm277, %v5094, 0
    %v5134 = vsel %vm277, %v5095, 0
    %v5137 = vsel %vm277, %v5096, 0
    %5139 = vmatprep.subr.mxu0 0.0
    %5140 = vmatpush1.msra.mxu0 %v5097
    %5141 = vmatprep.subr.mxu0 0.0
    %5142 = vmatpush1.msra.mxu0 %v5098
    %5143 = vmatprep.subr.mxu0 0.0
    %5144 = vmatpush1.msra.mxu0 %v5099
    %5145 = vmatprep.subr.mxu0 0.0
    %5146 = vmatpush1.msra.mxu0 %v5100
    %5147 = vmatprep.subr.mxu0 0.0
    %5148 = vmatpush1.msra.mxu0 %v5101
    %5149 = vmatprep.subr.mxu0 0.0
    %5150 = vmatpush1.msra.mxu0 %v5102
    %5151 = vmatprep.subr.mxu0 0.0
    %5152 = vmatpush1.msra.mxu0 %v5103
    %5153 = vmatprep.subr.mxu0 0.0
    %5154 = vmatpush1.msra.mxu0 %v5104
    %5155 = vmatprep.subr.mxu0 0.0
    %5156 = vmatpush1.msra.mxu0 0.0
    %5157 = vmatprep.subr.mxu0 0.0
    %5158 = vmatpush1.msra.mxu0 0.0
    %5159 = vmatprep.subr.mxu0 0.0
    %5160 = vmatpush1.msra.mxu0 0.0
    %5161 = vmatprep.subr.mxu0 0.0
    %5162 = vmatpush1.msra.mxu0 0.0
    %5163 = vmatprep.subr.mxu0 0.0
    %5164 = vmatpush1.msra.mxu0 0.0
    %5165 = vmatprep.subr.mxu0 0.0
    %5166 = vmatpush1.msra.mxu0 0.0
    %5167 = vmatprep.subr.mxu0 0.0
    %5168 = vmatpush1.msra.mxu0 0.0
    %5169 = vmatprep.subr.mxu0 0.0
    %5170 = vmatpush1.msra.mxu0 0.0
    %5171 = vmatprep.subr.mxu0 0.0
    %5172 = vmatpush1.msra.mxu0 0.0
    %5173 = vmatprep.subr.mxu0 0.0
    %5174 = vmatpush1.msra.mxu0 0.0
    %5175 = vmatprep.subr.mxu0 0.0
    %5176 = vmatpush1.msra.mxu0 0.0
    %5177 = vmatprep.subr.mxu0 0.0
    %5178 = vmatpush1.msra.mxu0 0.0
    %5179 = vmatprep.subr.mxu0 0.0
    %5180 = vmatpush1.msra.mxu0 0.0
    %5181 = vmatprep.subr.mxu0 0.0
    %5182 = vmatpush1.msra.mxu0 0.0
    %5183 = vmatprep.subr.mxu0 0.0
    %5184 = vmatpush1.msra.mxu0 0.0
    %5185 = vmatprep.subr.mxu0 0.0
    %5186 = vmatpush1.msra.mxu0 0.0
    %5187 = vmatprep.subr.mxu0 0.0
    %5188 = vmatpush1.msra.mxu0 0.0
    %5189 = vmatprep.subr.mxu0 0.0
    %5190 = vmatpush1.msra.mxu0 0.0
    %5191 = vmatprep.subr.mxu0 0.0
    %5192 = vmatpush1.msra.mxu0 0.0
    %5193 = vmatprep.subr.mxu0 0.0
    %5194 = vmatpush1.msra.mxu0 0.0
    %5195 = vmatprep.subr.mxu0 0.0
    %5196 = vmatpush1.msra.mxu0 0.0
    %5197 = vmatprep.subr.mxu0 0.0
    %5198 = vmatpush1.msra.mxu0 0.0
    %5199 = vmatprep.subr.mxu0 0.0
    %5200 = vmatpush1.msra.mxu0 0.0
    %5201 = vmatprep.subr.mxu0 0.0
    %5202 = vmatpush1.msra.mxu0 0.0
    %5203 = vmatprep.mubr.f32.mxu0 0.0
    %5204 = vmatmul.mubr.f32.gmra.mrb[0].mxu0 %v5110
    %v5205 = vpop.f32.mrb[0].mxu0
    %v5206 = vadd.f32 %v5108, %v5205
    %v5207 = vpop.f32.mrb[0].mxu0
    %5208 = vmatprep.mubr.f32.mxu0 0.0
    %5209 = vmatmul.mubr.f32.gmra.mrb[0].mxu0 %v5113
    %v5210 = vpop.f32.mrb[0].mxu0
    %v5211 = vadd.f32 %v5108, %v5210
    %v5212 = vpop.f32.mrb[0].mxu0
    %5213 = vmatprep.mubr.f32.mxu0 0.0
    %5214 = vmatmul.mubr.f32.gmra.mrb[0].mxu0 %v5116
    %v5215 = vpop.f32.mrb[0].mxu0
    %v5216 = vadd.f32 %v5108, %v5215
    %v5217 = vpop.f32.mrb[0].mxu0
    %5218 = vmatprep.mubr.f32.mxu0 0.0
    %5219 = vmatmul.mubr.f32.gmra.mrb[0].mxu0 %v5119
    %v5220 = vpop.f32.mrb[0].mxu0
    %v5221 = vadd.f32 %v5108, %v5220
    %v5222 = vpop.f32.mrb[0].mxu0
    %5223 = vmatprep.mubr.f32.mxu0 0.0
    %5224 = vmatmul.mubr.f32.gmra.mrb[0].mxu0 %v5122
    %v5225 = vpop.f32.mrb[0].mxu0
    %v5226 = vadd.f32 %v5108, %v5225
    %v5227 = vpop.f32.mrb[0].mxu0
    %5228 = vmatprep.mubr.f32.mxu0 0.0
    %5229 = vmatmul.mubr.f32.gmra.mrb[0].mxu0 %v5125
    %v5230 = vpop.f32.mrb[0].mxu0
    %v5231 = vadd.f32 %v5108, %v5230
    %v5232 = vpop.f32.mrb[0].mxu0
    %5233 = vmatprep.mubr.f32.mxu0 0.0
    %5234 = vmatmul.mubr.f32.gmra.mrb[0].mxu0 %v5128
    %v5235 = vpop.f32.mrb[0].mxu0
    %v5236 = vadd.f32 %v5108, %v5235
    %v5237 = vpop.f32.mrb[0].mxu0
    %5238 = vmatprep.mubr.f32.mxu0 0.0
    %5239 = vmatmul.mubr.f32.gmra.mrb[0].mxu0 %v5131
    %v5240 = vpop.f32.mrb[0].mxu0
    %v5241 = vadd.f32 %v5108, %v5240
    %v5242 = vpop.f32.mrb[0].mxu0
    %5243 = vmatprep.mubr.f32.mxu0 0.0
    %5244 = vmatmul.mubr.f32.gmra.mrb[0].mxu0 %v5134
    %v5245 = vpop.f32.mrb[0].mxu0
    %v5246 = vadd.f32 %v5108, %v5245
    %v5247 = vpop.f32.mrb[0].mxu0
    %5248 = vmatprep.mubr.f32.mxu0 0.0
    %5249 = vmatmul.mubr.f32.gmra.mrb[0].mxu0 %v5137
    %v5250 = vpop.f32.mrb[0].mxu0
    %v5251 = vadd.f32 %v5108, %v5250
    %v5252 = vpop.f32.mrb[0].mxu0
    %5253 = vdwg.mxu0
    %v5254 = vadd.f32 %v4686, %v5206
    %v5255 = vadd.f32 %v4687, %v5211
    %v5256 = vadd.f32 %v4688, %v5216
    %v5257 = vadd.f32 %v4689, %v5221
    %v5258 = vadd.f32 %v4690, %v5226
    %v5259 = vadd.f32 %v4691, %v5231
    %v5260 = vadd.f32 %v4692, %v5236
    %v5261 = vadd.f32 %v4693, %v5241
    %v5262 = vadd.f32 %v4694, %v5246
    %v5263 = vadd.f32 %v4695, %v5251
    %s5264 = scalar_lea.vmem %s13, 16
    %v5265 = vld [vmem:[%s5264] sm:$0xff]
    %v5266 = vld [vmem:[%s5264 + $0x8] sm:$0xff]
    %v5267 = vsel %vm674, %v5254, 0.0
    %5268 = vadd.xlane.f32.xlu0 %v5267
    %v5269 = vpop.xlane.xlu0 %5268
    %v5270 = vsel %vm674, %v5255, 0.0
    %5271 = vadd.xlane.f32.xlu0 %v5270
    %v5272 = vpop.xlane.xlu0 %5271
    %v5273 = vsel %vm674, %v5256, 0.0
    %5274 = vadd.xlane.f32.xlu0 %v5273
    %v5275 = vpop.xlane.xlu0 %5274
    %v5276 = vsel %vm674, %v5257, 0.0
    %5277 = vadd.xlane.f32.xlu0 %v5276
    %v5278 = vpop.xlane.xlu0 %5277
    %v5279 = vsel %vm674, %v5258, 0.0
    %5280 = vadd.xlane.f32.xlu0 %v5279
    %v5281 = vpop.xlane.xlu0 %5280
    %v5282 = vsel %vm674, %v5259, 0.0
    %5283 = vadd.xlane.f32.xlu0 %v5282
    %v5284 = vpop.xlane.xlu0 %5283
    %v5285 = vsel %vm674, %v5260, 0.0
    %5286 = vadd.xlane.f32.xlu0 %v5285
    %v5287 = vpop.xlane.xlu0 %5286
    %v5288 = vsel %vm674, %v5261, 0.0
    %5289 = vadd.xlane.f32.xlu0 %v5288
    %v5290 = vpop.xlane.xlu0 %5289
    %v5291 = vsel %vm674, %v5262, 0.0
    %5292 = vadd.xlane.f32.xlu0 %v5291
    %v5293 = vpop.xlane.xlu0 %5292
    %v5294 = vsel %vm674, %v5263, 0.0
    %5295 = vadd.xlane.f32.xlu0 %v5294
    %v5296 = vpop.xlane.xlu0 %5295
    %v5297 = vmul.f32 %v5269, %v705
    %v5298 = vmul.f32 %v5272, %v705
    %v5299 = vmul.f32 %v5275, %v705
    %v5300 = vmul.f32 %v5278, %v705
    %v5301 = vmul.f32 %v5281, %v705
    %v5302 = vmul.f32 %v5284, %v705
    %v5303 = vmul.f32 %v5287, %v705
    %v5304 = vmul.f32 %v5290, %v705
    %v5305 = vmul.f32 %v5293, %v705
    %v5306 = vmul.f32 %v5296, %v705
    %v5307 = vsub.f32 %v5254, %v5297
    %v5308 = vsub.f32 %v5255, %v5298
    %v5309 = vsub.f32 %v5256, %v5299
    %v5310 = vsub.f32 %v5257, %v5300
    %v5311 = vsub.f32 %v5258, %v5301
    %v5312 = vsub.f32 %v5259, %v5302
    %v5313 = vsub.f32 %v5260, %v5303
    %v5314 = vsub.f32 %v5261, %v5304
    %v5315 = vsub.f32 %v5262, %v5305
    %v5316 = vsub.f32 %v5263, %v5306
    %v5317 = vmul.f32 %v5307, %v5307
    %v5318 = vmul.f32 %v5308, %v5308
    %v5319 = vmul.f32 %v5309, %v5309
    %v5320 = vmul.f32 %v5310, %v5310
    %v5321 = vmul.f32 %v5311, %v5311
    %v5322 = vmul.f32 %v5312, %v5312
    %v5323 = vmul.f32 %v5313, %v5313
    %v5324 = vmul.f32 %v5314, %v5314
    %v5325 = vmul.f32 %v5315, %v5315
    %v5326 = vmul.f32 %v5316, %v5316
    %v5327 = vsel %vm674, %v5317, 0.0
    %5328 = vadd.xlane.f32.xlu0 %v5327
    %v5329 = vpop.xlane.xlu0 %5328
    %v5330 = vsel %vm674, %v5318, 0.0
    %5331 = vadd.xlane.f32.xlu0 %v5330
    %v5332 = vpop.xlane.xlu0 %5331
    %v5333 = vsel %vm674, %v5319, 0.0
    %5334 = vadd.xlane.f32.xlu0 %v5333
    %v5335 = vpop.xlane.xlu0 %5334
    %v5336 = vsel %vm674, %v5320, 0.0
    %5337 = vadd.xlane.f32.xlu0 %v5336
    %v5338 = vpop.xlane.xlu0 %5337
    %v5339 = vsel %vm674, %v5321, 0.0
    %5340 = vadd.xlane.f32.xlu0 %v5339
    %v5341 = vpop.xlane.xlu0 %5340
    %v5342 = vsel %vm674, %v5322, 0.0
    %5343 = vadd.xlane.f32.xlu0 %v5342
    %v5344 = vpop.xlane.xlu0 %5343
    %v5345 = vsel %vm674, %v5323, 0.0
    %5346 = vadd.xlane.f32.xlu0 %v5345
    %v5347 = vpop.xlane.xlu0 %5346
    %v5348 = vsel %vm674, %v5324, 0.0
    %5349 = vadd.xlane.f32.xlu0 %v5348
    %v5350 = vpop.xlane.xlu0 %5349
    %v5351 = vsel %vm674, %v5325, 0.0
    %5352 = vadd.xlane.f32.xlu0 %v5351
    %v5353 = vpop.xlane.xlu0 %5352
    %v5354 = vsel %vm674, %v5326, 0.0
    %5355 = vadd.xlane.f32.xlu0 %v5354
    %v5356 = vpop.xlane.xlu0 %5355
    %v5357 = vmul.f32 %v5329, %v705
    %v5358 = vmul.f32 %v5332, %v705
    %v5359 = vmul.f32 %v5335, %v705
    %v5360 = vmul.f32 %v5338, %v705
    %v5361 = vmul.f32 %v5341, %v705
    %v5362 = vmul.f32 %v5344, %v705
    %v5363 = vmul.f32 %v5347, %v705
    %v5364 = vmul.f32 %v5350, %v705
    %v5365 = vmul.f32 %v5353, %v705
    %v5366 = vmul.f32 %v5356, %v705
    %v5367 = vadd.f32 %v5357, 1e-05
    %v5368 = vadd.f32 %v5358, 1e-05
    %v5369 = vadd.f32 %v5359, 1e-05
    %v5370 = vadd.f32 %v5360, 1e-05
    %v5371 = vadd.f32 %v5361, 1e-05
    %v5372 = vadd.f32 %v5362, 1e-05
    %v5373 = vadd.f32 %v5363, 1e-05
    %v5374 = vadd.f32 %v5364, 1e-05
    %v5375 = vadd.f32 %v5365, 1e-05
    %v5376 = vadd.f32 %v5366, 1e-05
    %v5377 = vrsqrt.pop %v5367
    %v5378 = vrsqrt.pop %v5368
    %v5379 = vrsqrt.pop %v5369
    %v5380 = vrsqrt.pop %v5370
    %v5381 = vrsqrt.pop %v5371
    %v5382 = vrsqrt.pop %v5372
    %v5383 = vrsqrt.pop %v5373
    %v5384 = vrsqrt.pop %v5374
    %v5385 = vrsqrt.pop %v5375
    %v5386 = vrsqrt.pop %v5376
    %v5387 = vmul.f32 %v5307, %v5377
    %v5388 = vmul.f32 %v5308, %v5378
    %v5389 = vmul.f32 %v5309, %v5379
    %v5390 = vmul.f32 %v5310, %v5380
    %v5391 = vmul.f32 %v5311, %v5381
    %v5392 = vmul.f32 %v5312, %v5382
    %v5393 = vmul.f32 %v5313, %v5383
    %v5394 = vmul.f32 %v5314, %v5384
    %v5395 = vmul.f32 %v5315, %v5385
    %v5396 = vmul.f32 %v5316, %v5386
    %v5397 = vlaneseq
    %v5398 = vshrl.u32 %v5397, 7
    %v5399 = vsub.s32 0, %v5398
    %v5400 = vrot.slane %v5265, %v5399
    %v5401 = vmul.f32 %v5387, %v5400
    %v5402 = vmul.f32 %v5388, %v5400
    %v5403 = vmul.f32 %v5389, %v5400
    %v5404 = vmul.f32 %v5390, %v5400
    %v5405 = vmul.f32 %v5391, %v5400
    %v5406 = vmul.f32 %v5392, %v5400
    %v5407 = vmul.f32 %v5393, %v5400
    %v5408 = vmul.f32 %v5394, %v5400
    %v5409 = vmul.f32 %v5395, %v5400
    %v5410 = vmul.f32 %v5396, %v5400
    %v5411 = vlaneseq
    %v5412 = vshrl.u32 %v5411, 7
    %v5413 = vsub.s32 1, %v5412
    %v5414 = vrot.slane %v5265, %v5413
    %v5415 = vadd.f32 %v5401, %v5414
    %v5416 = vadd.f32 %v5402, %v5414
    %v5417 = vadd.f32 %v5403, %v5414
    %v5418 = vadd.f32 %v5404, %v5414
    %v5419 = vadd.f32 %v5405, %v5414
    %v5420 = vadd.f32 %v5406, %v5414
    %v5421 = vadd.f32 %v5407, %v5414
    %v5422 = vadd.f32 %v5408, %v5414
    %v5423 = vadd.f32 %v5409, %v5414
    %v5424 = vadd.f32 %v5410, %v5414
    %s5425 = scalar_lea.vmem %s7, 128
    %v5426 = vld [vmem:[%s5425] sm:$0xff]
    %v5427 = vld [vmem:[%s5425 + $0x8] sm:$0xff]
    %v5428 = vld [vmem:[%s5425 + $0x10] sm:$0xff]
    %v5429 = vld [vmem:[%s5425 + $0x18] sm:$0xff]
    %v5430 = vlaneseq
    %v5431 = vshrl.u32 %v5430, 7
    %v5432 = vsub.s32 2, %v5431
    %v5433 = vrot.slane %v5265, %v5432
    %v5435 = vsel %vm674, %v5415, 0
    %v5438 = vsel %vm674, %v5416, 0
    %v5441 = vsel %vm674, %v5417, 0
    %v5444 = vsel %vm674, %v5418, 0
    %v5447 = vsel %vm674, %v5419, 0
    %v5450 = vsel %vm674, %v5420, 0
    %v5453 = vsel %vm674, %v5421, 0
    %v5456 = vsel %vm674, %v5422, 0
    %v5459 = vsel %vm674, %v5423, 0
    %v5462 = vsel %vm674, %v5424, 0
    %5464 = vmatprep.subr.mxu0 0.0
    %5465 = vmatpush1.msra.mxu0 %v5426
    %5466 = vmatprep.subr.mxu0 0.0
    %5467 = vmatpush1.msra.mxu0 %v5427
    %5468 = vmatprep.subr.mxu0 0.0
    %5469 = vmatpush1.msra.mxu0 %v5428
    %5470 = vmatprep.subr.mxu0 0.0
    %5471 = vmatpush1.msra.mxu0 %v5429
    %5472 = vmatprep.subr.mxu0 0.0
    %5473 = vmatpush1.msra.mxu0 0.0
    %5474 = vmatprep.subr.mxu0 0.0
    %5475 = vmatpush1.msra.mxu0 0.0
    %5476 = vmatprep.subr.mxu0 0.0
    %5477 = vmatpush1.msra.mxu0 0.0
    %5478 = vmatprep.subr.mxu0 0.0
    %5479 = vmatpush1.msra.mxu0 0.0
    %5480 = vmatprep.subr.mxu0 0.0
    %5481 = vmatpush1.msra.mxu0 0.0
    %5482 = vmatprep.subr.mxu0 0.0
    %5483 = vmatpush1.msra.mxu0 0.0
    %5484 = vmatprep.subr.mxu0 0.0
    %5485 = vmatpush1.msra.mxu0 0.0
    %5486 = vmatprep.subr.mxu0 0.0
    %5487 = vmatpush1.msra.mxu0 0.0
    %5488 = vmatprep.subr.mxu0 0.0
    %5489 = vmatpush1.msra.mxu0 0.0
    %5490 = vmatprep.subr.mxu0 0.0
    %5491 = vmatpush1.msra.mxu0 0.0
    %5492 = vmatprep.subr.mxu0 0.0
    %5493 = vmatpush1.msra.mxu0 0.0
    %5494 = vmatprep.subr.mxu0 0.0
    %5495 = vmatpush1.msra.mxu0 0.0
    %5496 = vmatprep.subr.mxu0 0.0
    %5497 = vmatpush1.msra.mxu0 0.0
    %5498 = vmatprep.subr.mxu0 0.0
    %5499 = vmatpush1.msra.mxu0 0.0
    %5500 = vmatprep.subr.mxu0 0.0
    %5501 = vmatpush1.msra.mxu0 0.0
    %5502 = vmatprep.subr.mxu0 0.0
    %5503 = vmatpush1.msra.mxu0 0.0
    %5504 = vmatprep.subr.mxu0 0.0
    %5505 = vmatpush1.msra.mxu0 0.0
    %5506 = vmatprep.subr.mxu0 0.0
    %5507 = vmatpush1.msra.mxu0 0.0
    %5508 = vmatprep.subr.mxu0 0.0
    %5509 = vmatpush1.msra.mxu0 0.0
    %5510 = vmatprep.subr.mxu0 0.0
    %5511 = vmatpush1.msra.mxu0 0.0
    %5512 = vmatprep.subr.mxu0 0.0
    %5513 = vmatpush1.msra.mxu0 0.0
    %5514 = vmatprep.subr.mxu0 0.0
    %5515 = vmatpush1.msra.mxu0 0.0
    %5516 = vmatprep.subr.mxu0 0.0
    %5517 = vmatpush1.msra.mxu0 0.0
    %5518 = vmatprep.subr.mxu0 0.0
    %5519 = vmatpush1.msra.mxu0 0.0
    %5520 = vmatprep.subr.mxu0 0.0
    %5521 = vmatpush1.msra.mxu0 0.0
    %5522 = vmatprep.subr.mxu0 0.0
    %5523 = vmatpush1.msra.mxu0 0.0
    %5524 = vmatprep.subr.mxu0 0.0
    %5525 = vmatpush1.msra.mxu0 0.0
    %5526 = vmatprep.subr.mxu0 0.0
    %5527 = vmatpush1.msra.mxu0 0.0
    %5528 = vmatprep.mubr.f32.mxu0 0.0
    %5529 = vmatmul.mubr.f32.gmra.mrb[0].mxu0 %v5435
    %v5530 = vpop.f32.mrb[0].mxu0
    %v5531 = vadd.f32 %v5433, %v5530
    %v5532 = vpop.f32.mrb[0].mxu0
    %5533 = vmatprep.mubr.f32.mxu0 0.0
    %5534 = vmatmul.mubr.f32.gmra.mrb[0].mxu0 %v5438
    %v5535 = vpop.f32.mrb[0].mxu0
    %v5536 = vadd.f32 %v5433, %v5535
    %v5537 = vpop.f32.mrb[0].mxu0
    %5538 = vmatprep.mubr.f32.mxu0 0.0
    %5539 = vmatmul.mubr.f32.gmra.mrb[0].mxu0 %v5441
    %v5540 = vpop.f32.mrb[0].mxu0
    %v5541 = vadd.f32 %v5433, %v5540
    %v5542 = vpop.f32.mrb[0].mxu0
    %5543 = vmatprep.mubr.f32.mxu0 0.0
    %5544 = vmatmul.mubr.f32.gmra.mrb[0].mxu0 %v5444
    %v5545 = vpop.f32.mrb[0].mxu0
    %v5546 = vadd.f32 %v5433, %v5545
    %v5547 = vpop.f32.mrb[0].mxu0
    %5548 = vmatprep.mubr.f32.mxu0 0.0
    %5549 = vmatmul.mubr.f32.gmra.mrb[0].mxu0 %v5447
    %v5550 = vpop.f32.mrb[0].mxu0
    %v5551 = vadd.f32 %v5433, %v5550
    %v5552 = vpop.f32.mrb[0].mxu0
    %5553 = vmatprep.mubr.f32.mxu0 0.0
    %5554 = vmatmul.mubr.f32.gmra.mrb[0].mxu0 %v5450
    %v5555 = vpop.f32.mrb[0].mxu0
    %v5556 = vadd.f32 %v5433, %v5555
    %v5557 = vpop.f32.mrb[0].mxu0
    %5558 = vmatprep.mubr.f32.mxu0 0.0
    %5559 = vmatmul.mubr.f32.gmra.mrb[0].mxu0 %v5453
    %v5560 = vpop.f32.mrb[0].mxu0
    %v5561 = vadd.f32 %v5433, %v5560
    %v5562 = vpop.f32.mrb[0].mxu0
    %5563 = vmatprep.mubr.f32.mxu0 0.0
    %5564 = vmatmul.mubr.f32.gmra.mrb[0].mxu0 %v5456
    %v5565 = vpop.f32.mrb[0].mxu0
    %v5566 = vadd.f32 %v5433, %v5565
    %v5567 = vpop.f32.mrb[0].mxu0
    %5568 = vmatprep.mubr.f32.mxu0 0.0
    %5569 = vmatmul.mubr.f32.gmra.mrb[0].mxu0 %v5459
    %v5570 = vpop.f32.mrb[0].mxu0
    %v5571 = vadd.f32 %v5433, %v5570
    %v5572 = vpop.f32.mrb[0].mxu0
    %5573 = vmatprep.mubr.f32.mxu0 0.0
    %5574 = vmatmul.mubr.f32.gmra.mrb[0].mxu0 %v5462
    %v5575 = vpop.f32.mrb[0].mxu0
    %v5576 = vadd.f32 %v5433, %v5575
    %v5577 = vpop.f32.mrb[0].mxu0
    %5578 = vdwg.mxu0
    %s5579 = scalar_lea.vmem %s8, 128
    %v5580 = vld [vmem:[%s5579] sm:$0xff]
    %v5581 = vld [vmem:[%s5579 + $0x8] sm:$0xff]
    %v5582 = vld [vmem:[%s5579 + $0x10] sm:$0xff]
    %v5583 = vld [vmem:[%s5579 + $0x18] sm:$0xff]
    %v5584 = vlaneseq
    %v5585 = vshrl.u32 %v5584, 7
    %v5586 = vsub.s32 3, %v5585
    %v5587 = vrot.slane %v5265, %v5586
    %5588 = vmatprep.subr.mxu0 0.0
    %5589 = vmatpush1.msra.mxu0 %v5580
    %5590 = vmatprep.subr.mxu0 0.0
    %5591 = vmatpush1.msra.mxu0 %v5581
    %5592 = vmatprep.subr.mxu0 0.0
    %5593 = vmatpush1.msra.mxu0 %v5582
    %5594 = vmatprep.subr.mxu0 0.0
    %5595 = vmatpush1.msra.mxu0 %v5583
    %5596 = vmatprep.subr.mxu0 0.0
    %5597 = vmatpush1.msra.mxu0 0.0
    %5598 = vmatprep.subr.mxu0 0.0
    %5599 = vmatpush1.msra.mxu0 0.0
    %5600 = vmatprep.subr.mxu0 0.0
    %5601 = vmatpush1.msra.mxu0 0.0
    %5602 = vmatprep.subr.mxu0 0.0
    %5603 = vmatpush1.msra.mxu0 0.0
    %5604 = vmatprep.subr.mxu0 0.0
    %5605 = vmatpush1.msra.mxu0 0.0
    %5606 = vmatprep.subr.mxu0 0.0
    %5607 = vmatpush1.msra.mxu0 0.0
    %5608 = vmatprep.subr.mxu0 0.0
    %5609 = vmatpush1.msra.mxu0 0.0
    %5610 = vmatprep.subr.mxu0 0.0
    %5611 = vmatpush1.msra.mxu0 0.0
    %5612 = vmatprep.subr.mxu0 0.0
    %5613 = vmatpush1.msra.mxu0 0.0
    %5614 = vmatprep.subr.mxu0 0.0
    %5615 = vmatpush1.msra.mxu0 0.0
    %5616 = vmatprep.subr.mxu0 0.0
    %5617 = vmatpush1.msra.mxu0 0.0
    %5618 = vmatprep.subr.mxu0 0.0
    %5619 = vmatpush1.msra.mxu0 0.0
    %5620 = vmatprep.subr.mxu0 0.0
    %5621 = vmatpush1.msra.mxu0 0.0
    %5622 = vmatprep.subr.mxu0 0.0
    %5623 = vmatpush1.msra.mxu0 0.0
    %5624 = vmatprep.subr.mxu0 0.0
    %5625 = vmatpush1.msra.mxu0 0.0
    %5626 = vmatprep.subr.mxu0 0.0
    %5627 = vmatpush1.msra.mxu0 0.0
    %5628 = vmatprep.subr.mxu0 0.0
    %5629 = vmatpush1.msra.mxu0 0.0
    %5630 = vmatprep.subr.mxu0 0.0
    %5631 = vmatpush1.msra.mxu0 0.0
    %5632 = vmatprep.subr.mxu0 0.0
    %5633 = vmatpush1.msra.mxu0 0.0
    %5634 = vmatprep.subr.mxu0 0.0
    %5635 = vmatpush1.msra.mxu0 0.0
    %5636 = vmatprep.subr.mxu0 0.0
    %5637 = vmatpush1.msra.mxu0 0.0
    %5638 = vmatprep.subr.mxu0 0.0
    %5639 = vmatpush1.msra.mxu0 0.0
    %5640 = vmatprep.subr.mxu0 0.0
    %5641 = vmatpush1.msra.mxu0 0.0
    %5642 = vmatprep.subr.mxu0 0.0
    %5643 = vmatpush1.msra.mxu0 0.0
    %5644 = vmatprep.subr.mxu0 0.0
    %5645 = vmatpush1.msra.mxu0 0.0
    %5646 = vmatprep.subr.mxu0 0.0
    %5647 = vmatpush1.msra.mxu0 0.0
    %5648 = vmatprep.subr.mxu0 0.0
    %5649 = vmatpush1.msra.mxu0 0.0
    %5650 = vmatprep.subr.mxu0 0.0
    %5651 = vmatpush1.msra.mxu0 0.0
    %5652 = vmatprep.mubr.f32.mxu0 0.0
    %5653 = vmatmul.mubr.f32.gmra.mrb[0].mxu0 %v5435
    %v5654 = vpop.f32.mrb[0].mxu0
    %v5655 = vadd.f32 %v5587, %v5654
    %v5656 = vpop.f32.mrb[0].mxu0
    %5657 = vmatprep.mubr.f32.mxu0 0.0
    %5658 = vmatmul.mubr.f32.gmra.mrb[0].mxu0 %v5438
    %v5659 = vpop.f32.mrb[0].mxu0
    %v5660 = vadd.f32 %v5587, %v5659
    %v5661 = vpop.f32.mrb[0].mxu0
    %5662 = vmatprep.mubr.f32.mxu0 0.0
    %5663 = vmatmul.mubr.f32.gmra.mrb[0].mxu0 %v5441
    %v5664 = vpop.f32.mrb[0].mxu0
    %v5665 = vadd.f32 %v5587, %v5664
    %v5666 = vpop.f32.mrb[0].mxu0
    %5667 = vmatprep.mubr.f32.mxu0 0.0
    %5668 = vmatmul.mubr.f32.gmra.mrb[0].mxu0 %v5444
    %v5669 = vpop.f32.mrb[0].mxu0
    %v5670 = vadd.f32 %v5587, %v5669
    %v5671 = vpop.f32.mrb[0].mxu0
    %5672 = vmatprep.mubr.f32.mxu0 0.0
    %5673 = vmatmul.mubr.f32.gmra.mrb[0].mxu0 %v5447
    %v5674 = vpop.f32.mrb[0].mxu0
    %v5675 = vadd.f32 %v5587, %v5674
    %v5676 = vpop.f32.mrb[0].mxu0
    %5677 = vmatprep.mubr.f32.mxu0 0.0
    %5678 = vmatmul.mubr.f32.gmra.mrb[0].mxu0 %v5450
    %v5679 = vpop.f32.mrb[0].mxu0
    %v5680 = vadd.f32 %v5587, %v5679
    %v5681 = vpop.f32.mrb[0].mxu0
    %5682 = vmatprep.mubr.f32.mxu0 0.0
    %5683 = vmatmul.mubr.f32.gmra.mrb[0].mxu0 %v5453
    %v5684 = vpop.f32.mrb[0].mxu0
    %v5685 = vadd.f32 %v5587, %v5684
    %v5686 = vpop.f32.mrb[0].mxu0
    %5687 = vmatprep.mubr.f32.mxu0 0.0
    %5688 = vmatmul.mubr.f32.gmra.mrb[0].mxu0 %v5456
    %v5689 = vpop.f32.mrb[0].mxu0
    %v5690 = vadd.f32 %v5587, %v5689
    %v5691 = vpop.f32.mrb[0].mxu0
    %5692 = vmatprep.mubr.f32.mxu0 0.0
    %5693 = vmatmul.mubr.f32.gmra.mrb[0].mxu0 %v5459
    %v5694 = vpop.f32.mrb[0].mxu0
    %v5695 = vadd.f32 %v5587, %v5694
    %v5696 = vpop.f32.mrb[0].mxu0
    %5697 = vmatprep.mubr.f32.mxu0 0.0
    %5698 = vmatmul.mubr.f32.gmra.mrb[0].mxu0 %v5462
    %v5699 = vpop.f32.mrb[0].mxu0
    %v5700 = vadd.f32 %v5587, %v5699
    %v5701 = vpop.f32.mrb[0].mxu0
    %5702 = vdwg.mxu0
    %s5703 = scalar_lea.vmem %s9, 128
    %v5704 = vld [vmem:[%s5703] sm:$0xff]
    %v5705 = vld [vmem:[%s5703 + $0x8] sm:$0xff]
    %v5706 = vld [vmem:[%s5703 + $0x10] sm:$0xff]
    %v5707 = vld [vmem:[%s5703 + $0x18] sm:$0xff]
    %v5708 = vlaneseq
    %v5709 = vshrl.u32 %v5708, 7
    %v5710 = vsub.s32 4, %v5709
    %v5711 = vrot.slane %v5265, %v5710
    %5712 = vmatprep.subr.mxu0 0.0
    %5713 = vmatpush1.msra.mxu0 %v5704
    %5714 = vmatprep.subr.mxu0 0.0
    %5715 = vmatpush1.msra.mxu0 %v5705
    %5716 = vmatprep.subr.mxu0 0.0
    %5717 = vmatpush1.msra.mxu0 %v5706
    %5718 = vmatprep.subr.mxu0 0.0
    %5719 = vmatpush1.msra.mxu0 %v5707
    %5720 = vmatprep.subr.mxu0 0.0
    %5721 = vmatpush1.msra.mxu0 0.0
    %5722 = vmatprep.subr.mxu0 0.0
    %5723 = vmatpush1.msra.mxu0 0.0
    %5724 = vmatprep.subr.mxu0 0.0
    %5725 = vmatpush1.msra.mxu0 0.0
    %5726 = vmatprep.subr.mxu0 0.0
    %5727 = vmatpush1.msra.mxu0 0.0
    %5728 = vmatprep.subr.mxu0 0.0
    %5729 = vmatpush1.msra.mxu0 0.0
    %5730 = vmatprep.subr.mxu0 0.0
    %5731 = vmatpush1.msra.mxu0 0.0
    %5732 = vmatprep.subr.mxu0 0.0
    %5733 = vmatpush1.msra.mxu0 0.0
    %5734 = vmatprep.subr.mxu0 0.0
    %5735 = vmatpush1.msra.mxu0 0.0
    %5736 = vmatprep.subr.mxu0 0.0
    %5737 = vmatpush1.msra.mxu0 0.0
    %5738 = vmatprep.subr.mxu0 0.0
    %5739 = vmatpush1.msra.mxu0 0.0
    %5740 = vmatprep.subr.mxu0 0.0
    %5741 = vmatpush1.msra.mxu0 0.0
    %5742 = vmatprep.subr.mxu0 0.0
    %5743 = vmatpush1.msra.mxu0 0.0
    %5744 = vmatprep.subr.mxu0 0.0
    %5745 = vmatpush1.msra.mxu0 0.0
    %5746 = vmatprep.subr.mxu0 0.0
    %5747 = vmatpush1.msra.mxu0 0.0
    %5748 = vmatprep.subr.mxu0 0.0
    %5749 = vmatpush1.msra.mxu0 0.0
    %5750 = vmatprep.subr.mxu0 0.0
    %5751 = vmatpush1.msra.mxu0 0.0
    %5752 = vmatprep.subr.mxu0 0.0
    %5753 = vmatpush1.msra.mxu0 0.0
    %5754 = vmatprep.subr.mxu0 0.0
    %5755 = vmatpush1.msra.mxu0 0.0
    %5756 = vmatprep.subr.mxu0 0.0
    %5757 = vmatpush1.msra.mxu0 0.0
    %5758 = vmatprep.subr.mxu0 0.0
    %5759 = vmatpush1.msra.mxu0 0.0
    %5760 = vmatprep.subr.mxu0 0.0
    %5761 = vmatpush1.msra.mxu0 0.0
    %5762 = vmatprep.subr.mxu0 0.0
    %5763 = vmatpush1.msra.mxu0 0.0
    %5764 = vmatprep.subr.mxu0 0.0
    %5765 = vmatpush1.msra.mxu0 0.0
    %5766 = vmatprep.subr.mxu0 0.0
    %5767 = vmatpush1.msra.mxu0 0.0
    %5768 = vmatprep.subr.mxu0 0.0
    %5769 = vmatpush1.msra.mxu0 0.0
    %5770 = vmatprep.subr.mxu0 0.0
    %5771 = vmatpush1.msra.mxu0 0.0
    %5772 = vmatprep.subr.mxu0 0.0
    %5773 = vmatpush1.msra.mxu0 0.0
    %5774 = vmatprep.subr.mxu0 0.0
    %5775 = vmatpush1.msra.mxu0 0.0
    %5776 = vmatprep.mubr.f32.mxu0 0.0
    %5777 = vmatmul.mubr.f32.gmra.mrb[0].mxu0 %v5435
    %v5778 = vpop.f32.mrb[0].mxu0
    %v5779 = vadd.f32 %v5711, %v5778
    %v5780 = vpop.f32.mrb[0].mxu0
    %5781 = vmatprep.mubr.f32.mxu0 0.0
    %5782 = vmatmul.mubr.f32.gmra.mrb[0].mxu0 %v5438
    %v5783 = vpop.f32.mrb[0].mxu0
    %v5784 = vadd.f32 %v5711, %v5783
    %v5785 = vpop.f32.mrb[0].mxu0
    %5786 = vmatprep.mubr.f32.mxu0 0.0
    %5787 = vmatmul.mubr.f32.gmra.mrb[0].mxu0 %v5441
    %v5788 = vpop.f32.mrb[0].mxu0
    %v5789 = vadd.f32 %v5711, %v5788
    %v5790 = vpop.f32.mrb[0].mxu0
    %5791 = vmatprep.mubr.f32.mxu0 0.0
    %5792 = vmatmul.mubr.f32.gmra.mrb[0].mxu0 %v5444
    %v5793 = vpop.f32.mrb[0].mxu0
    %v5794 = vadd.f32 %v5711, %v5793
    %v5795 = vpop.f32.mrb[0].mxu0
    %5796 = vmatprep.mubr.f32.mxu0 0.0
    %5797 = vmatmul.mubr.f32.gmra.mrb[0].mxu0 %v5447
    %v5798 = vpop.f32.mrb[0].mxu0
    %v5799 = vadd.f32 %v5711, %v5798
    %v5800 = vpop.f32.mrb[0].mxu0
    %5801 = vmatprep.mubr.f32.mxu0 0.0
    %5802 = vmatmul.mubr.f32.gmra.mrb[0].mxu0 %v5450
    %v5803 = vpop.f32.mrb[0].mxu0
    %v5804 = vadd.f32 %v5711, %v5803
    %v5805 = vpop.f32.mrb[0].mxu0
    %5806 = vmatprep.mubr.f32.mxu0 0.0
    %5807 = vmatmul.mubr.f32.gmra.mrb[0].mxu0 %v5453
    %v5808 = vpop.f32.mrb[0].mxu0
    %v5809 = vadd.f32 %v5711, %v5808
    %v5810 = vpop.f32.mrb[0].mxu0
    %5811 = vmatprep.mubr.f32.mxu0 0.0
    %5812 = vmatmul.mubr.f32.gmra.mrb[0].mxu0 %v5456
    %v5813 = vpop.f32.mrb[0].mxu0
    %v5814 = vadd.f32 %v5711, %v5813
    %v5815 = vpop.f32.mrb[0].mxu0
    %5816 = vmatprep.mubr.f32.mxu0 0.0
    %5817 = vmatmul.mubr.f32.gmra.mrb[0].mxu0 %v5459
    %v5818 = vpop.f32.mrb[0].mxu0
    %v5819 = vadd.f32 %v5711, %v5818
    %v5820 = vpop.f32.mrb[0].mxu0
    %5821 = vmatprep.mubr.f32.mxu0 0.0
    %5822 = vmatmul.mubr.f32.gmra.mrb[0].mxu0 %v5462
    %v5823 = vpop.f32.mrb[0].mxu0
    %v5824 = vadd.f32 %v5711, %v5823
    %v5825 = vpop.f32.mrb[0].mxu0
    %5826 = vdwg.mxu0
    %v5828 = vsel %vm1233, %v5531, 0
    %v5831 = vsel %vm1233, %v5536, 0
    %v5834 = vsel %vm1233, %v5541, 0
    %v5837 = vsel %vm1233, %v5546, 0
    %v5840 = vsel %vm1233, %v5551, 0
    %v5843 = vsel %vm1233, %v5556, 0
    %v5846 = vsel %vm1233, %v5561, 0
    %v5849 = vsel %vm1233, %v5566, 0
    %v5852 = vsel %vm1233, %v5571, 0
    %v5855 = vsel %vm1233, %v5576, 0
    %v5858 = vsel %vm1233, %v5655, 0
    %v5861 = vsel %vm1233, %v5660, 0
    %v5864 = vsel %vm1233, %v5665, 0
    %v5867 = vsel %vm1233, %v5670, 0
    %v5870 = vsel %vm1233, %v5675, 0
    %v5873 = vsel %vm1233, %v5680, 0
    %v5876 = vsel %vm1233, %v5685, 0
    %v5879 = vsel %vm1233, %v5690, 0
    %v5882 = vsel %vm1233, %v5695, 0
    %v5885 = vsel %vm1233, %v5700, 0
    %5887 = vmatprep.subr.mxu0 0.0
    %5888 = vmatpush1.xpose.msra.mxu0 %v5858
    %5889 = vmatprep.subr.mxu0 0.0
    %5890 = vmatpush1.xpose.msra.mxu0 %v5861
    %5891 = vmatprep.subr.mxu0 0.0
    %5892 = vmatpush1.xpose.msra.mxu0 %v5864
    %5893 = vmatprep.subr.mxu0 0.0
    %5894 = vmatpush1.xpose.msra.mxu0 %v5867
    %5895 = vmatprep.subr.mxu0 0.0
    %5896 = vmatpush1.xpose.msra.mxu0 %v5870
    %5897 = vmatprep.subr.mxu0 0.0
    %5898 = vmatpush1.xpose.msra.mxu0 %v5873
    %5899 = vmatprep.subr.mxu0 0.0
    %5900 = vmatpush1.xpose.msra.mxu0 %v5876
    %5901 = vmatprep.subr.mxu0 0.0
    %5902 = vmatpush1.xpose.msra.mxu0 %v5879
    %5903 = vmatprep.subr.mxu0 0.0
    %5904 = vmatpush1.xpose.msra.mxu0 %v5882
    %5905 = vmatprep.subr.mxu0 0.0
    %5906 = vmatpush1.xpose.msra.mxu0 %v5885
    %5907 = vmatprep.subr.mxu0 0.0
    %5908 = vmatpush1.xpose.msra.mxu0 0.0
    %5909 = vmatprep.subr.mxu0 0.0
    %5910 = vmatpush1.xpose.msra.mxu0 0.0
    %5911 = vmatprep.subr.mxu0 0.0
    %5912 = vmatpush1.xpose.msra.mxu0 0.0
    %5913 = vmatprep.subr.mxu0 0.0
    %5914 = vmatpush1.xpose.msra.mxu0 0.0
    %5915 = vmatprep.subr.mxu0 0.0
    %5916 = vmatpush1.xpose.msra.mxu0 0.0
    %5917 = vmatprep.subr.mxu0 0.0
    %5918 = vmatpush1.xpose.msra.mxu0 0.0
    %5919 = vmatprep.subr.mxu0 0.0
    %5920 = vmatpush1.xpose.msra.mxu0 0.0
    %5921 = vmatprep.subr.mxu0 0.0
    %5922 = vmatpush1.xpose.msra.mxu0 0.0
    %5923 = vmatprep.subr.mxu0 0.0
    %5924 = vmatpush1.xpose.msra.mxu0 0.0
    %5925 = vmatprep.subr.mxu0 0.0
    %5926 = vmatpush1.xpose.msra.mxu0 0.0
    %5927 = vmatprep.subr.mxu0 0.0
    %5928 = vmatpush1.xpose.msra.mxu0 0.0
    %5929 = vmatprep.subr.mxu0 0.0
    %5930 = vmatpush1.xpose.msra.mxu0 0.0
    %5931 = vmatprep.subr.mxu0 0.0
    %5932 = vmatpush1.xpose.msra.mxu0 0.0
    %5933 = vmatprep.subr.mxu0 0.0
    %5934 = vmatpush1.xpose.msra.mxu0 0.0
    %5935 = vmatprep.subr.mxu0 0.0
    %5936 = vmatpush1.xpose.msra.mxu0 0.0
    %5937 = vmatprep.subr.mxu0 0.0
    %5938 = vmatpush1.xpose.msra.mxu0 0.0
    %5939 = vmatprep.subr.mxu0 0.0
    %5940 = vmatpush1.xpose.msra.mxu0 0.0
    %5941 = vmatprep.subr.mxu0 0.0
    %5942 = vmatpush1.xpose.msra.mxu0 0.0
    %5943 = vmatprep.subr.mxu0 0.0
    %5944 = vmatpush1.xpose.msra.mxu0 0.0
    %5945 = vmatprep.subr.mxu0 0.0
    %5946 = vmatpush1.xpose.msra.mxu0 0.0
    %5947 = vmatprep.subr.mxu0 0.0
    %5948 = vmatpush1.xpose.msra.mxu0 0.0
    %5949 = vmatprep.subr.mxu0 0.0
    %5950 = vmatpush1.xpose.msra.mxu0 0.0
    %5951 = vmatprep.mubr.f32.mxu0 0.0
    %5952 = vmatmul.mubr.f32.gmra.mrb[0].mxu0 %v5828
    %v5953 = vpop.f32.mrb[0].mxu0
    %v5954 = vadd.f32 %v662, %v5953
    %v5955 = vpop.f32.mrb[0].mxu0
    %5956 = vmatprep.mubr.f32.mxu0 0.0
    %5957 = vmatmul.mubr.f32.gmra.mrb[0].mxu0 %v5831
    %v5958 = vpop.f32.mrb[0].mxu0
    %v5959 = vadd.f32 %v663, %v5958
    %v5960 = vpop.f32.mrb[0].mxu0
    %5961 = vmatprep.mubr.f32.mxu0 0.0
    %5962 = vmatmul.mubr.f32.gmra.mrb[0].mxu0 %v5834
    %v5963 = vpop.f32.mrb[0].mxu0
    %v5964 = vadd.f32 %v664, %v5963
    %v5965 = vpop.f32.mrb[0].mxu0
    %5966 = vmatprep.mubr.f32.mxu0 0.0
    %5967 = vmatmul.mubr.f32.gmra.mrb[0].mxu0 %v5837
    %v5968 = vpop.f32.mrb[0].mxu0
    %v5969 = vadd.f32 %v665, %v5968
    %v5970 = vpop.f32.mrb[0].mxu0
    %5971 = vmatprep.mubr.f32.mxu0 0.0
    %5972 = vmatmul.mubr.f32.gmra.mrb[0].mxu0 %v5840
    %v5973 = vpop.f32.mrb[0].mxu0
    %v5974 = vadd.f32 %v666, %v5973
    %v5975 = vpop.f32.mrb[0].mxu0
    %5976 = vmatprep.mubr.f32.mxu0 0.0
    %5977 = vmatmul.mubr.f32.gmra.mrb[0].mxu0 %v5843
    %v5978 = vpop.f32.mrb[0].mxu0
    %v5979 = vadd.f32 %v667, %v5978
    %v5980 = vpop.f32.mrb[0].mxu0
    %5981 = vmatprep.mubr.f32.mxu0 0.0
    %5982 = vmatmul.mubr.f32.gmra.mrb[0].mxu0 %v5846
    %v5983 = vpop.f32.mrb[0].mxu0
    %v5984 = vadd.f32 %v668, %v5983
    %v5985 = vpop.f32.mrb[0].mxu0
    %5986 = vmatprep.mubr.f32.mxu0 0.0
    %5987 = vmatmul.mubr.f32.gmra.mrb[0].mxu0 %v5849
    %v5988 = vpop.f32.mrb[0].mxu0
    %v5989 = vadd.f32 %v669, %v5988
    %v5990 = vpop.f32.mrb[0].mxu0
    %5991 = vmatprep.mubr.f32.mxu0 0.0
    %5992 = vmatmul.mubr.f32.gmra.mrb[0].mxu0 %v5852
    %v5993 = vpop.f32.mrb[0].mxu0
    %v5994 = vadd.f32 %v670, %v5993
    %v5995 = vpop.f32.mrb[0].mxu0
    %5996 = vmatprep.mubr.f32.mxu0 0.0
    %5997 = vmatmul.mubr.f32.gmra.mrb[0].mxu0 %v5855
    %v5998 = vpop.f32.mrb[0].mxu0
    %v5999 = vadd.f32 %v671, %v5998
    %v6000 = vpop.f32.mrb[0].mxu0
    %6001 = vdwg.mxu0
    %v6002 = vsel %vm1409, %v5954, -inf
    %6003 = vmax.xlane.f32.xlu0 %v6002
    %v6004 = vpop.xlane.xlu0 %6003
    %v6005 = vsel %vm1409, %v5959, -inf
    %6006 = vmax.xlane.f32.xlu0 %v6005
    %v6007 = vpop.xlane.xlu0 %6006
    %v6008 = vsel %vm1409, %v5964, -inf
    %6009 = vmax.xlane.f32.xlu0 %v6008
    %v6010 = vpop.xlane.xlu0 %6009
    %v6011 = vsel %vm1409, %v5969, -inf
    %6012 = vmax.xlane.f32.xlu0 %v6011
    %v6013 = vpop.xlane.xlu0 %6012
    %v6014 = vsel %vm1409, %v5974, -inf
    %6015 = vmax.xlane.f32.xlu0 %v6014
    %v6016 = vpop.xlane.xlu0 %6015
    %v6017 = vsel %vm1409, %v5979, -inf
    %6018 = vmax.xlane.f32.xlu0 %v6017
    %v6019 = vpop.xlane.xlu0 %6018
    %v6020 = vsel %vm1409, %v5984, -inf
    %6021 = vmax.xlane.f32.xlu0 %v6020
    %v6022 = vpop.xlane.xlu0 %6021
    %v6023 = vsel %vm1409, %v5989, -inf
    %6024 = vmax.xlane.f32.xlu0 %v6023
    %v6025 = vpop.xlane.xlu0 %6024
    %v6026 = vsel %vm1409, %v5994, -inf
    %6027 = vmax.xlane.f32.xlu0 %v6026
    %v6028 = vpop.xlane.xlu0 %6027
    %v6029 = vsel %vm1409, %v5999, -inf
    %6030 = vmax.xlane.f32.xlu0 %v6029
    %v6031 = vpop.xlane.xlu0 %6030
    %v6032 = vsub.f32 %v5954, %v6004
    %v6033 = vsub.f32 %v5959, %v6007
    %v6034 = vsub.f32 %v5964, %v6010
    %v6035 = vsub.f32 %v5969, %v6013
    %v6036 = vsub.f32 %v5974, %v6016
    %v6037 = vsub.f32 %v5979, %v6019
    %v6038 = vsub.f32 %v5984, %v6022
    %v6039 = vsub.f32 %v5989, %v6025
    %v6040 = vsub.f32 %v5994, %v6028
    %v6041 = vsub.f32 %v5999, %v6031
    %v6042 = vmul.f32 %v6032, 1.442695
    %v6043 = vpow.pop %v6042
    %v6044 = vmul.f32 %v6033, 1.442695
    %v6045 = vpow.pop %v6044
    %v6046 = vmul.f32 %v6034, 1.442695
    %v6047 = vpow.pop %v6046
    %v6048 = vmul.f32 %v6035, 1.442695
    %v6049 = vpow.pop %v6048
    %v6050 = vmul.f32 %v6036, 1.442695
    %v6051 = vpow.pop %v6050
    %v6052 = vmul.f32 %v6037, 1.442695
    %v6053 = vpow.pop %v6052
    %v6054 = vmul.f32 %v6038, 1.442695
    %v6055 = vpow.pop %v6054
    %v6056 = vmul.f32 %v6039, 1.442695
    %v6057 = vpow.pop %v6056
    %v6058 = vmul.f32 %v6040, 1.442695
    %v6059 = vpow.pop %v6058
    %v6060 = vmul.f32 %v6041, 1.442695
    %v6061 = vpow.pop %v6060
    %v6062 = vsel %vm1409, %v6043, 0.0
    %6063 = vadd.xlane.f32.xlu0 %v6062
    %v6064 = vpop.xlane.xlu0 %6063
    %v6065 = vsel %vm1409, %v6045, 0.0
    %6066 = vadd.xlane.f32.xlu0 %v6065
    %v6067 = vpop.xlane.xlu0 %6066
    %v6068 = vsel %vm1409, %v6047, 0.0
    %6069 = vadd.xlane.f32.xlu0 %v6068
    %v6070 = vpop.xlane.xlu0 %6069
    %v6071 = vsel %vm1409, %v6049, 0.0
    %6072 = vadd.xlane.f32.xlu0 %v6071
    %v6073 = vpop.xlane.xlu0 %6072
    %v6074 = vsel %vm1409, %v6051, 0.0
    %6075 = vadd.xlane.f32.xlu0 %v6074
    %v6076 = vpop.xlane.xlu0 %6075
    %v6077 = vsel %vm1409, %v6053, 0.0
    %6078 = vadd.xlane.f32.xlu0 %v6077
    %v6079 = vpop.xlane.xlu0 %6078
    %v6080 = vsel %vm1409, %v6055, 0.0
    %6081 = vadd.xlane.f32.xlu0 %v6080
    %v6082 = vpop.xlane.xlu0 %6081
    %v6083 = vsel %vm1409, %v6057, 0.0
    %6084 = vadd.xlane.f32.xlu0 %v6083
    %v6085 = vpop.xlane.xlu0 %6084
    %v6086 = vsel %vm1409, %v6059, 0.0
    %6087 = vadd.xlane.f32.xlu0 %v6086
    %v6088 = vpop.xlane.xlu0 %6087
    %v6089 = vsel %vm1409, %v6061, 0.0
    %6090 = vadd.xlane.f32.xlu0 %v6089
    %v6091 = vpop.xlane.xlu0 %6090
    %v6092 = vrcp.pop %v6064
    %v6093 = vrcp.pop %v6067
    %v6094 = vrcp.pop %v6070
    %v6095 = vrcp.pop %v6073
    %v6096 = vrcp.pop %v6076
    %v6097 = vrcp.pop %v6079
    %v6098 = vrcp.pop %v6082
    %v6099 = vrcp.pop %v6085
    %v6100 = vrcp.pop %v6088
    %v6101 = vrcp.pop %v6091
    %v6102 = vmul.f32 %v6043, %v6092
    %v6103 = vmul.f32 %v6045, %v6093
    %v6104 = vmul.f32 %v6047, %v6094
    %v6105 = vmul.f32 %v6049, %v6095
    %v6106 = vmul.f32 %v6051, %v6096
    %v6107 = vmul.f32 %v6053, %v6097
    %v6108 = vmul.f32 %v6055, %v6098
    %v6109 = vmul.f32 %v6057, %v6099
    %v6110 = vmul.f32 %v6059, %v6100
    %v6111 = vmul.f32 %v6061, %v6101
    %v6113 = vsel %vm1409, %v6102, 0
    %v6116 = vsel %vm1409, %v6103, 0
    %v6119 = vsel %vm1409, %v6104, 0
    %v6122 = vsel %vm1409, %v6105, 0
    %v6125 = vsel %vm1409, %v6106, 0
    %v6128 = vsel %vm1409, %v6107, 0
    %v6131 = vsel %vm1409, %v6108, 0
    %v6134 = vsel %vm1409, %v6109, 0
    %v6137 = vsel %vm1409, %v6110, 0
    %v6140 = vsel %vm1409, %v6111, 0
    %6142 = vmatprep.subr.mxu0 0.0
    %6143 = vmatpush1.msra.mxu0 %v5779
    %6144 = vmatprep.subr.mxu0 0.0
    %6145 = vmatpush1.msra.mxu0 %v5784
    %6146 = vmatprep.subr.mxu0 0.0
    %6147 = vmatpush1.msra.mxu0 %v5789
    %6148 = vmatprep.subr.mxu0 0.0
    %6149 = vmatpush1.msra.mxu0 %v5794
    %6150 = vmatprep.subr.mxu0 0.0
    %6151 = vmatpush1.msra.mxu0 %v5799
    %6152 = vmatprep.subr.mxu0 0.0
    %6153 = vmatpush1.msra.mxu0 %v5804
    %6154 = vmatprep.subr.mxu0 0.0
    %6155 = vmatpush1.msra.mxu0 %v5809
    %6156 = vmatprep.subr.mxu0 0.0
    %6157 = vmatpush1.msra.mxu0 %v5814
    %6158 = vmatprep.subr.mxu0 0.0
    %6159 = vmatpush1.msra.mxu0 %v5819
    %6160 = vmatprep.subr.mxu0 0.0
    %6161 = vmatpush1.msra.mxu0 %v5824
    %6162 = vmatprep.subr.mxu0 0.0
    %6163 = vmatpush1.msra.mxu0 0.0
    %6164 = vmatprep.subr.mxu0 0.0
    %6165 = vmatpush1.msra.mxu0 0.0
    %6166 = vmatprep.subr.mxu0 0.0
    %6167 = vmatpush1.msra.mxu0 0.0
    %6168 = vmatprep.subr.mxu0 0.0
    %6169 = vmatpush1.msra.mxu0 0.0
    %6170 = vmatprep.subr.mxu0 0.0
    %6171 = vmatpush1.msra.mxu0 0.0
    %6172 = vmatprep.subr.mxu0 0.0
    %6173 = vmatpush1.msra.mxu0 0.0
    %6174 = vmatprep.subr.mxu0 0.0
    %6175 = vmatpush1.msra.mxu0 0.0
    %6176 = vmatprep.subr.mxu0 0.0
    %6177 = vmatpush1.msra.mxu0 0.0
    %6178 = vmatprep.subr.mxu0 0.0
    %6179 = vmatpush1.msra.mxu0 0.0
    %6180 = vmatprep.subr.mxu0 0.0
    %6181 = vmatpush1.msra.mxu0 0.0
    %6182 = vmatprep.subr.mxu0 0.0
    %6183 = vmatpush1.msra.mxu0 0.0
    %6184 = vmatprep.subr.mxu0 0.0
    %6185 = vmatpush1.msra.mxu0 0.0
    %6186 = vmatprep.subr.mxu0 0.0
    %6187 = vmatpush1.msra.mxu0 0.0
    %6188 = vmatprep.subr.mxu0 0.0
    %6189 = vmatpush1.msra.mxu0 0.0
    %6190 = vmatprep.subr.mxu0 0.0
    %6191 = vmatpush1.msra.mxu0 0.0
    %6192 = vmatprep.subr.mxu0 0.0
    %6193 = vmatpush1.msra.mxu0 0.0
    %6194 = vmatprep.subr.mxu0 0.0
    %6195 = vmatpush1.msra.mxu0 0.0
    %6196 = vmatprep.subr.mxu0 0.0
    %6197 = vmatpush1.msra.mxu0 0.0
    %6198 = vmatprep.subr.mxu0 0.0
    %6199 = vmatpush1.msra.mxu0 0.0
    %6200 = vmatprep.subr.mxu0 0.0
    %6201 = vmatpush1.msra.mxu0 0.0
    %6202 = vmatprep.subr.mxu0 0.0
    %6203 = vmatpush1.msra.mxu0 0.0
    %6204 = vmatprep.subr.mxu0 0.0
    %6205 = vmatpush1.msra.mxu0 0.0
    %6206 = vmatprep.mubr.f32.mxu0 0.0
    %6207 = vmatmul.mubr.f32.gmra.mrb[0].mxu0 %v6113
    %v6208 = vpop.f32.mrb[0].mxu0
    %v6209 = vadd.f32 0.0, %v6208
    %v6210 = vpop.f32.mrb[0].mxu0
    %6211 = vmatprep.mubr.f32.mxu0 0.0
    %6212 = vmatmul.mubr.f32.gmra.mrb[0].mxu0 %v6116
    %v6213 = vpop.f32.mrb[0].mxu0
    %v6214 = vadd.f32 0.0, %v6213
    %v6215 = vpop.f32.mrb[0].mxu0
    %6216 = vmatprep.mubr.f32.mxu0 0.0
    %6217 = vmatmul.mubr.f32.gmra.mrb[0].mxu0 %v6119
    %v6218 = vpop.f32.mrb[0].mxu0
    %v6219 = vadd.f32 0.0, %v6218
    %v6220 = vpop.f32.mrb[0].mxu0
    %6221 = vmatprep.mubr.f32.mxu0 0.0
    %6222 = vmatmul.mubr.f32.gmra.mrb[0].mxu0 %v6122
    %v6223 = vpop.f32.mrb[0].mxu0
    %v6224 = vadd.f32 0.0, %v6223
    %v6225 = vpop.f32.mrb[0].mxu0
    %6226 = vmatprep.mubr.f32.mxu0 0.0
    %6227 = vmatmul.mubr.f32.gmra.mrb[0].mxu0 %v6125
    %v6228 = vpop.f32.mrb[0].mxu0
    %v6229 = vadd.f32 0.0, %v6228
    %v6230 = vpop.f32.mrb[0].mxu0
    %6231 = vmatprep.mubr.f32.mxu0 0.0
    %6232 = vmatmul.mubr.f32.gmra.mrb[0].mxu0 %v6128
    %v6233 = vpop.f32.mrb[0].mxu0
    %v6234 = vadd.f32 0.0, %v6233
    %v6235 = vpop.f32.mrb[0].mxu0
    %6236 = vmatprep.mubr.f32.mxu0 0.0
    %6237 = vmatmul.mubr.f32.gmra.mrb[0].mxu0 %v6131
    %v6238 = vpop.f32.mrb[0].mxu0
    %v6239 = vadd.f32 0.0, %v6238
    %v6240 = vpop.f32.mrb[0].mxu0
    %6241 = vmatprep.mubr.f32.mxu0 0.0
    %6242 = vmatmul.mubr.f32.gmra.mrb[0].mxu0 %v6134
    %v6243 = vpop.f32.mrb[0].mxu0
    %v6244 = vadd.f32 0.0, %v6243
    %v6245 = vpop.f32.mrb[0].mxu0
    %6246 = vmatprep.mubr.f32.mxu0 0.0
    %6247 = vmatmul.mubr.f32.gmra.mrb[0].mxu0 %v6137
    %v6248 = vpop.f32.mrb[0].mxu0
    %v6249 = vadd.f32 0.0, %v6248
    %v6250 = vpop.f32.mrb[0].mxu0
    %6251 = vmatprep.mubr.f32.mxu0 0.0
    %6252 = vmatmul.mubr.f32.gmra.mrb[0].mxu0 %v6140
    %v6253 = vpop.f32.mrb[0].mxu0
    %v6254 = vadd.f32 0.0, %v6253
    %v6255 = vpop.f32.mrb[0].mxu0
    %6256 = vdwg.mxu0
    %s6257 = scalar_lea.vmem %s10, 32
    %v6258 = vld [vmem:[%s6257] sm:$0xff]
    %s6259 = scalar_lea.vmem %s7, 160
    %v6260 = vld [vmem:[%s6259] sm:$0xff]
    %v6261 = vld [vmem:[%s6259 + $0x8] sm:$0xff]
    %v6262 = vld [vmem:[%s6259 + $0x10] sm:$0xff]
    %v6263 = vld [vmem:[%s6259 + $0x18] sm:$0xff]
    %6265 = vrot.lane.b32.xlu0 %v5433, 120
    %v6266 = vpop.permute.xlu0 %6265
    %6268 = vmatprep.subr.mxu0 0.0
    %6269 = vmatpush1.msra.mxu0 %v6260
    %6270 = vmatprep.subr.mxu0 0.0
    %6271 = vmatpush1.msra.mxu0 %v6261
    %6272 = vmatprep.subr.mxu0 0.0
    %6273 = vmatpush1.msra.mxu0 %v6262
    %6274 = vmatprep.subr.mxu0 0.0
    %6275 = vmatpush1.msra.mxu0 %v6263
    %6276 = vmatprep.subr.mxu0 0.0
    %6277 = vmatpush1.msra.mxu0 0.0
    %6278 = vmatprep.subr.mxu0 0.0
    %6279 = vmatpush1.msra.mxu0 0.0
    %6280 = vmatprep.subr.mxu0 0.0
    %6281 = vmatpush1.msra.mxu0 0.0
    %6282 = vmatprep.subr.mxu0 0.0
    %6283 = vmatpush1.msra.mxu0 0.0
    %6284 = vmatprep.subr.mxu0 0.0
    %6285 = vmatpush1.msra.mxu0 0.0
    %6286 = vmatprep.subr.mxu0 0.0
    %6287 = vmatpush1.msra.mxu0 0.0
    %6288 = vmatprep.subr.mxu0 0.0
    %6289 = vmatpush1.msra.mxu0 0.0
    %6290 = vmatprep.subr.mxu0 0.0
    %6291 = vmatpush1.msra.mxu0 0.0
    %6292 = vmatprep.subr.mxu0 0.0
    %6293 = vmatpush1.msra.mxu0 0.0
    %6294 = vmatprep.subr.mxu0 0.0
    %6295 = vmatpush1.msra.mxu0 0.0
    %6296 = vmatprep.subr.mxu0 0.0
    %6297 = vmatpush1.msra.mxu0 0.0
    %6298 = vmatprep.subr.mxu0 0.0
    %6299 = vmatpush1.msra.mxu0 0.0
    %6300 = vmatprep.subr.mxu0 0.0
    %6301 = vmatpush1.msra.mxu0 0.0
    %6302 = vmatprep.subr.mxu0 0.0
    %6303 = vmatpush1.msra.mxu0 0.0
    %6304 = vmatprep.subr.mxu0 0.0
    %6305 = vmatpush1.msra.mxu0 0.0
    %6306 = vmatprep.subr.mxu0 0.0
    %6307 = vmatpush1.msra.mxu0 0.0
    %6308 = vmatprep.subr.mxu0 0.0
    %6309 = vmatpush1.msra.mxu0 0.0
    %6310 = vmatprep.subr.mxu0 0.0
    %6311 = vmatpush1.msra.mxu0 0.0
    %6312 = vmatprep.subr.mxu0 0.0
    %6313 = vmatpush1.msra.mxu0 0.0
    %6314 = vmatprep.subr.mxu0 0.0
    %6315 = vmatpush1.msra.mxu0 0.0
    %6316 = vmatprep.subr.mxu0 0.0
    %6317 = vmatpush1.msra.mxu0 0.0
    %6318 = vmatprep.subr.mxu0 0.0
    %6319 = vmatpush1.msra.mxu0 0.0
    %6320 = vmatprep.subr.mxu0 0.0
    %6321 = vmatpush1.msra.mxu0 0.0
    %6322 = vmatprep.subr.mxu0 0.0
    %6323 = vmatpush1.msra.mxu0 0.0
    %6324 = vmatprep.subr.mxu0 0.0
    %6325 = vmatpush1.msra.mxu0 0.0
    %6326 = vmatprep.subr.mxu0 0.0
    %6327 = vmatpush1.msra.mxu0 0.0
    %6328 = vmatprep.subr.mxu0 0.0
    %6329 = vmatpush1.msra.mxu0 0.0
    %6330 = vmatprep.subr.mxu0 0.0
    %6331 = vmatpush1.msra.mxu0 0.0
    %6332 = vmatprep.mubr.f32.mxu0 0.0
    %6333 = vmatmul.mubr.f32.gmra.mrb[0].mxu0 %v5435
    %v6334 = vpop.f32.mrb[0].mxu0
    %v6335 = vadd.f32 %v6266, %v6334
    %v6336 = vpop.f32.mrb[0].mxu0
    %6337 = vmatprep.mubr.f32.mxu0 0.0
    %6338 = vmatmul.mubr.f32.gmra.mrb[0].mxu0 %v5438
    %v6339 = vpop.f32.mrb[0].mxu0
    %v6340 = vadd.f32 %v6266, %v6339
    %v6341 = vpop.f32.mrb[0].mxu0
    %6342 = vmatprep.mubr.f32.mxu0 0.0
    %6343 = vmatmul.mubr.f32.gmra.mrb[0].mxu0 %v5441
    %v6344 = vpop.f32.mrb[0].mxu0
    %v6345 = vadd.f32 %v6266, %v6344
    %v6346 = vpop.f32.mrb[0].mxu0
    %6347 = vmatprep.mubr.f32.mxu0 0.0
    %6348 = vmatmul.mubr.f32.gmra.mrb[0].mxu0 %v5444
    %v6349 = vpop.f32.mrb[0].mxu0
    %v6350 = vadd.f32 %v6266, %v6349
    %v6351 = vpop.f32.mrb[0].mxu0
    %6352 = vmatprep.mubr.f32.mxu0 0.0
    %6353 = vmatmul.mubr.f32.gmra.mrb[0].mxu0 %v5447
    %v6354 = vpop.f32.mrb[0].mxu0
    %v6355 = vadd.f32 %v6266, %v6354
    %v6356 = vpop.f32.mrb[0].mxu0
    %6357 = vmatprep.mubr.f32.mxu0 0.0
    %6358 = vmatmul.mubr.f32.gmra.mrb[0].mxu0 %v5450
    %v6359 = vpop.f32.mrb[0].mxu0
    %v6360 = vadd.f32 %v6266, %v6359
    %v6361 = vpop.f32.mrb[0].mxu0
    %6362 = vmatprep.mubr.f32.mxu0 0.0
    %6363 = vmatmul.mubr.f32.gmra.mrb[0].mxu0 %v5453
    %v6364 = vpop.f32.mrb[0].mxu0
    %v6365 = vadd.f32 %v6266, %v6364
    %v6366 = vpop.f32.mrb[0].mxu0
    %6367 = vmatprep.mubr.f32.mxu0 0.0
    %6368 = vmatmul.mubr.f32.gmra.mrb[0].mxu0 %v5456
    %v6369 = vpop.f32.mrb[0].mxu0
    %v6370 = vadd.f32 %v6266, %v6369
    %v6371 = vpop.f32.mrb[0].mxu0
    %6372 = vmatprep.mubr.f32.mxu0 0.0
    %6373 = vmatmul.mubr.f32.gmra.mrb[0].mxu0 %v5459
    %v6374 = vpop.f32.mrb[0].mxu0
    %v6375 = vadd.f32 %v6266, %v6374
    %v6376 = vpop.f32.mrb[0].mxu0
    %6377 = vmatprep.mubr.f32.mxu0 0.0
    %6378 = vmatmul.mubr.f32.gmra.mrb[0].mxu0 %v5462
    %v6379 = vpop.f32.mrb[0].mxu0
    %v6380 = vadd.f32 %v6266, %v6379
    %v6381 = vpop.f32.mrb[0].mxu0
    %6382 = vdwg.mxu0
    %s6383 = scalar_lea.vmem %s8, 160
    %v6384 = vld [vmem:[%s6383] sm:$0xff]
    %v6385 = vld [vmem:[%s6383 + $0x8] sm:$0xff]
    %v6386 = vld [vmem:[%s6383 + $0x10] sm:$0xff]
    %v6387 = vld [vmem:[%s6383 + $0x18] sm:$0xff]
    %6389 = vrot.lane.b32.xlu0 %v5587, 120
    %v6390 = vpop.permute.xlu0 %6389
    %6392 = vmatprep.subr.mxu0 0.0
    %6393 = vmatpush1.msra.mxu0 %v6384
    %6394 = vmatprep.subr.mxu0 0.0
    %6395 = vmatpush1.msra.mxu0 %v6385
    %6396 = vmatprep.subr.mxu0 0.0
    %6397 = vmatpush1.msra.mxu0 %v6386
    %6398 = vmatprep.subr.mxu0 0.0
    %6399 = vmatpush1.msra.mxu0 %v6387
    %6400 = vmatprep.subr.mxu0 0.0
    %6401 = vmatpush1.msra.mxu0 0.0
    %6402 = vmatprep.subr.mxu0 0.0
    %6403 = vmatpush1.msra.mxu0 0.0
    %6404 = vmatprep.subr.mxu0 0.0
    %6405 = vmatpush1.msra.mxu0 0.0
    %6406 = vmatprep.subr.mxu0 0.0
    %6407 = vmatpush1.msra.mxu0 0.0
    %6408 = vmatprep.subr.mxu0 0.0
    %6409 = vmatpush1.msra.mxu0 0.0
    %6410 = vmatprep.subr.mxu0 0.0
    %6411 = vmatpush1.msra.mxu0 0.0
    %6412 = vmatprep.subr.mxu0 0.0
    %6413 = vmatpush1.msra.mxu0 0.0
    %6414 = vmatprep.subr.mxu0 0.0
    %6415 = vmatpush1.msra.mxu0 0.0
    %6416 = vmatprep.subr.mxu0 0.0
    %6417 = vmatpush1.msra.mxu0 0.0
    %6418 = vmatprep.subr.mxu0 0.0
    %6419 = vmatpush1.msra.mxu0 0.0
    %6420 = vmatprep.subr.mxu0 0.0
    %6421 = vmatpush1.msra.mxu0 0.0
    %6422 = vmatprep.subr.mxu0 0.0
    %6423 = vmatpush1.msra.mxu0 0.0
    %6424 = vmatprep.subr.mxu0 0.0
    %6425 = vmatpush1.msra.mxu0 0.0
    %6426 = vmatprep.subr.mxu0 0.0
    %6427 = vmatpush1.msra.mxu0 0.0
    %6428 = vmatprep.subr.mxu0 0.0
    %6429 = vmatpush1.msra.mxu0 0.0
    %6430 = vmatprep.subr.mxu0 0.0
    %6431 = vmatpush1.msra.mxu0 0.0
    %6432 = vmatprep.subr.mxu0 0.0
    %6433 = vmatpush1.msra.mxu0 0.0
    %6434 = vmatprep.subr.mxu0 0.0
    %6435 = vmatpush1.msra.mxu0 0.0
    %6436 = vmatprep.subr.mxu0 0.0
    %6437 = vmatpush1.msra.mxu0 0.0
    %6438 = vmatprep.subr.mxu0 0.0
    %6439 = vmatpush1.msra.mxu0 0.0
    %6440 = vmatprep.subr.mxu0 0.0
    %6441 = vmatpush1.msra.mxu0 0.0
    %6442 = vmatprep.subr.mxu0 0.0
    %6443 = vmatpush1.msra.mxu0 0.0
    %6444 = vmatprep.subr.mxu0 0.0
    %6445 = vmatpush1.msra.mxu0 0.0
    %6446 = vmatprep.subr.mxu0 0.0
    %6447 = vmatpush1.msra.mxu0 0.0
    %6448 = vmatprep.subr.mxu0 0.0
    %6449 = vmatpush1.msra.mxu0 0.0
    %6450 = vmatprep.subr.mxu0 0.0
    %6451 = vmatpush1.msra.mxu0 0.0
    %6452 = vmatprep.subr.mxu0 0.0
    %6453 = vmatpush1.msra.mxu0 0.0
    %6454 = vmatprep.subr.mxu0 0.0
    %6455 = vmatpush1.msra.mxu0 0.0
    %6456 = vmatprep.mubr.f32.mxu0 0.0
    %6457 = vmatmul.mubr.f32.gmra.mrb[0].mxu0 %v5435
    %v6458 = vpop.f32.mrb[0].mxu0
    %v6459 = vadd.f32 %v6390, %v6458
    %v6460 = vpop.f32.mrb[0].mxu0
    %6461 = vmatprep.mubr.f32.mxu0 0.0
    %6462 = vmatmul.mubr.f32.gmra.mrb[0].mxu0 %v5438
    %v6463 = vpop.f32.mrb[0].mxu0
    %v6464 = vadd.f32 %v6390, %v6463
    %v6465 = vpop.f32.mrb[0].mxu0
    %6466 = vmatprep.mubr.f32.mxu0 0.0
    %6467 = vmatmul.mubr.f32.gmra.mrb[0].mxu0 %v5441
    %v6468 = vpop.f32.mrb[0].mxu0
    %v6469 = vadd.f32 %v6390, %v6468
    %v6470 = vpop.f32.mrb[0].mxu0
    %6471 = vmatprep.mubr.f32.mxu0 0.0
    %6472 = vmatmul.mubr.f32.gmra.mrb[0].mxu0 %v5444
    %v6473 = vpop.f32.mrb[0].mxu0
    %v6474 = vadd.f32 %v6390, %v6473
    %v6475 = vpop.f32.mrb[0].mxu0
    %6476 = vmatprep.mubr.f32.mxu0 0.0
    %6477 = vmatmul.mubr.f32.gmra.mrb[0].mxu0 %v5447
    %v6478 = vpop.f32.mrb[0].mxu0
    %v6479 = vadd.f32 %v6390, %v6478
    %v6480 = vpop.f32.mrb[0].mxu0
    %6481 = vmatprep.mubr.f32.mxu0 0.0
    %6482 = vmatmul.mubr.f32.gmra.mrb[0].mxu0 %v5450
    %v6483 = vpop.f32.mrb[0].mxu0
    %v6484 = vadd.f32 %v6390, %v6483
    %v6485 = vpop.f32.mrb[0].mxu0
    %6486 = vmatprep.mubr.f32.mxu0 0.0
    %6487 = vmatmul.mubr.f32.gmra.mrb[0].mxu0 %v5453
    %v6488 = vpop.f32.mrb[0].mxu0
    %v6489 = vadd.f32 %v6390, %v6488
    %v6490 = vpop.f32.mrb[0].mxu0
    %6491 = vmatprep.mubr.f32.mxu0 0.0
    %6492 = vmatmul.mubr.f32.gmra.mrb[0].mxu0 %v5456
    %v6493 = vpop.f32.mrb[0].mxu0
    %v6494 = vadd.f32 %v6390, %v6493
    %v6495 = vpop.f32.mrb[0].mxu0
    %6496 = vmatprep.mubr.f32.mxu0 0.0
    %6497 = vmatmul.mubr.f32.gmra.mrb[0].mxu0 %v5459
    %v6498 = vpop.f32.mrb[0].mxu0
    %v6499 = vadd.f32 %v6390, %v6498
    %v6500 = vpop.f32.mrb[0].mxu0
    %6501 = vmatprep.mubr.f32.mxu0 0.0
    %6502 = vmatmul.mubr.f32.gmra.mrb[0].mxu0 %v5462
    %v6503 = vpop.f32.mrb[0].mxu0
    %v6504 = vadd.f32 %v6390, %v6503
    %v6505 = vpop.f32.mrb[0].mxu0
    %6506 = vdwg.mxu0
    %s6507 = scalar_lea.vmem %s9, 160
    %v6508 = vld [vmem:[%s6507] sm:$0xff]
    %v6509 = vld [vmem:[%s6507 + $0x8] sm:$0xff]
    %v6510 = vld [vmem:[%s6507 + $0x10] sm:$0xff]
    %v6511 = vld [vmem:[%s6507 + $0x18] sm:$0xff]
    %6513 = vrot.lane.b32.xlu0 %v5711, 120
    %v6514 = vpop.permute.xlu0 %6513
    %6516 = vmatprep.subr.mxu0 0.0
    %6517 = vmatpush1.msra.mxu0 %v6508
    %6518 = vmatprep.subr.mxu0 0.0
    %6519 = vmatpush1.msra.mxu0 %v6509
    %6520 = vmatprep.subr.mxu0 0.0
    %6521 = vmatpush1.msra.mxu0 %v6510
    %6522 = vmatprep.subr.mxu0 0.0
    %6523 = vmatpush1.msra.mxu0 %v6511
    %6524 = vmatprep.subr.mxu0 0.0
    %6525 = vmatpush1.msra.mxu0 0.0
    %6526 = vmatprep.subr.mxu0 0.0
    %6527 = vmatpush1.msra.mxu0 0.0
    %6528 = vmatprep.subr.mxu0 0.0
    %6529 = vmatpush1.msra.mxu0 0.0
    %6530 = vmatprep.subr.mxu0 0.0
    %6531 = vmatpush1.msra.mxu0 0.0
    %6532 = vmatprep.subr.mxu0 0.0
    %6533 = vmatpush1.msra.mxu0 0.0
    %6534 = vmatprep.subr.mxu0 0.0
    %6535 = vmatpush1.msra.mxu0 0.0
    %6536 = vmatprep.subr.mxu0 0.0
    %6537 = vmatpush1.msra.mxu0 0.0
    %6538 = vmatprep.subr.mxu0 0.0
    %6539 = vmatpush1.msra.mxu0 0.0
    %6540 = vmatprep.subr.mxu0 0.0
    %6541 = vmatpush1.msra.mxu0 0.0
    %6542 = vmatprep.subr.mxu0 0.0
    %6543 = vmatpush1.msra.mxu0 0.0
    %6544 = vmatprep.subr.mxu0 0.0
    %6545 = vmatpush1.msra.mxu0 0.0
    %6546 = vmatprep.subr.mxu0 0.0
    %6547 = vmatpush1.msra.mxu0 0.0
    %6548 = vmatprep.subr.mxu0 0.0
    %6549 = vmatpush1.msra.mxu0 0.0
    %6550 = vmatprep.subr.mxu0 0.0
    %6551 = vmatpush1.msra.mxu0 0.0
    %6552 = vmatprep.subr.mxu0 0.0
    %6553 = vmatpush1.msra.mxu0 0.0
    %6554 = vmatprep.subr.mxu0 0.0
    %6555 = vmatpush1.msra.mxu0 0.0
    %6556 = vmatprep.subr.mxu0 0.0
    %6557 = vmatpush1.msra.mxu0 0.0
    %6558 = vmatprep.subr.mxu0 0.0
    %6559 = vmatpush1.msra.mxu0 0.0
    %6560 = vmatprep.subr.mxu0 0.0
    %6561 = vmatpush1.msra.mxu0 0.0
    %6562 = vmatprep.subr.mxu0 0.0
    %6563 = vmatpush1.msra.mxu0 0.0
    %6564 = vmatprep.subr.mxu0 0.0
    %6565 = vmatpush1.msra.mxu0 0.0
    %6566 = vmatprep.subr.mxu0 0.0
    %6567 = vmatpush1.msra.mxu0 0.0
    %6568 = vmatprep.subr.mxu0 0.0
    %6569 = vmatpush1.msra.mxu0 0.0
    %6570 = vmatprep.subr.mxu0 0.0
    %6571 = vmatpush1.msra.mxu0 0.0
    %6572 = vmatprep.subr.mxu0 0.0
    %6573 = vmatpush1.msra.mxu0 0.0
    %6574 = vmatprep.subr.mxu0 0.0
    %6575 = vmatpush1.msra.mxu0 0.0
    %6576 = vmatprep.subr.mxu0 0.0
    %6577 = vmatpush1.msra.mxu0 0.0
    %6578 = vmatprep.subr.mxu0 0.0
    %6579 = vmatpush1.msra.mxu0 0.0
    %6580 = vmatprep.mubr.f32.mxu0 0.0
    %6581 = vmatmul.mubr.f32.gmra.mrb[0].mxu0 %v5435
    %v6582 = vpop.f32.mrb[0].mxu0
    %v6583 = vadd.f32 %v6514, %v6582
    %v6584 = vpop.f32.mrb[0].mxu0
    %6585 = vmatprep.mubr.f32.mxu0 0.0
    %6586 = vmatmul.mubr.f32.gmra.mrb[0].mxu0 %v5438
    %v6587 = vpop.f32.mrb[0].mxu0
    %v6588 = vadd.f32 %v6514, %v6587
    %v6589 = vpop.f32.mrb[0].mxu0
    %6590 = vmatprep.mubr.f32.mxu0 0.0
    %6591 = vmatmul.mubr.f32.gmra.mrb[0].mxu0 %v5441
    %v6592 = vpop.f32.mrb[0].mxu0
    %v6593 = vadd.f32 %v6514, %v6592
    %v6594 = vpop.f32.mrb[0].mxu0
    %6595 = vmatprep.mubr.f32.mxu0 0.0
    %6596 = vmatmul.mubr.f32.gmra.mrb[0].mxu0 %v5444
    %v6597 = vpop.f32.mrb[0].mxu0
    %v6598 = vadd.f32 %v6514, %v6597
    %v6599 = vpop.f32.mrb[0].mxu0
    %6600 = vmatprep.mubr.f32.mxu0 0.0
    %6601 = vmatmul.mubr.f32.gmra.mrb[0].mxu0 %v5447
    %v6602 = vpop.f32.mrb[0].mxu0
    %v6603 = vadd.f32 %v6514, %v6602
    %v6604 = vpop.f32.mrb[0].mxu0
    %6605 = vmatprep.mubr.f32.mxu0 0.0
    %6606 = vmatmul.mubr.f32.gmra.mrb[0].mxu0 %v5450
    %v6607 = vpop.f32.mrb[0].mxu0
    %v6608 = vadd.f32 %v6514, %v6607
    %v6609 = vpop.f32.mrb[0].mxu0
    %6610 = vmatprep.mubr.f32.mxu0 0.0
    %6611 = vmatmul.mubr.f32.gmra.mrb[0].mxu0 %v5453
    %v6612 = vpop.f32.mrb[0].mxu0
    %v6613 = vadd.f32 %v6514, %v6612
    %v6614 = vpop.f32.mrb[0].mxu0
    %6615 = vmatprep.mubr.f32.mxu0 0.0
    %6616 = vmatmul.mubr.f32.gmra.mrb[0].mxu0 %v5456
    %v6617 = vpop.f32.mrb[0].mxu0
    %v6618 = vadd.f32 %v6514, %v6617
    %v6619 = vpop.f32.mrb[0].mxu0
    %6620 = vmatprep.mubr.f32.mxu0 0.0
    %6621 = vmatmul.mubr.f32.gmra.mrb[0].mxu0 %v5459
    %v6622 = vpop.f32.mrb[0].mxu0
    %v6623 = vadd.f32 %v6514, %v6622
    %v6624 = vpop.f32.mrb[0].mxu0
    %6625 = vmatprep.mubr.f32.mxu0 0.0
    %6626 = vmatmul.mubr.f32.gmra.mrb[0].mxu0 %v5462
    %v6627 = vpop.f32.mrb[0].mxu0
    %v6628 = vadd.f32 %v6514, %v6627
    %v6629 = vpop.f32.mrb[0].mxu0
    %6630 = vdwg.mxu0
    %v6632 = vsel %vm1233, %v6335, 0
    %v6635 = vsel %vm1233, %v6340, 0
    %v6638 = vsel %vm1233, %v6345, 0
    %v6641 = vsel %vm1233, %v6350, 0
    %v6644 = vsel %vm1233, %v6355, 0
    %v6647 = vsel %vm1233, %v6360, 0
    %v6650 = vsel %vm1233, %v6365, 0
    %v6653 = vsel %vm1233, %v6370, 0
    %v6656 = vsel %vm1233, %v6375, 0
    %v6659 = vsel %vm1233, %v6380, 0
    %v6662 = vsel %vm1233, %v6459, 0
    %v6665 = vsel %vm1233, %v6464, 0
    %v6668 = vsel %vm1233, %v6469, 0
    %v6671 = vsel %vm1233, %v6474, 0
    %v6674 = vsel %vm1233, %v6479, 0
    %v6677 = vsel %vm1233, %v6484, 0
    %v6680 = vsel %vm1233, %v6489, 0
    %v6683 = vsel %vm1233, %v6494, 0
    %v6686 = vsel %vm1233, %v6499, 0
    %v6689 = vsel %vm1233, %v6504, 0
    %6691 = vmatprep.subr.mxu0 0.0
    %6692 = vmatpush1.xpose.msra.mxu0 %v6662
    %6693 = vmatprep.subr.mxu0 0.0
    %6694 = vmatpush1.xpose.msra.mxu0 %v6665
    %6695 = vmatprep.subr.mxu0 0.0
    %6696 = vmatpush1.xpose.msra.mxu0 %v6668
    %6697 = vmatprep.subr.mxu0 0.0
    %6698 = vmatpush1.xpose.msra.mxu0 %v6671
    %6699 = vmatprep.subr.mxu0 0.0
    %6700 = vmatpush1.xpose.msra.mxu0 %v6674
    %6701 = vmatprep.subr.mxu0 0.0
    %6702 = vmatpush1.xpose.msra.mxu0 %v6677
    %6703 = vmatprep.subr.mxu0 0.0
    %6704 = vmatpush1.xpose.msra.mxu0 %v6680
    %6705 = vmatprep.subr.mxu0 0.0
    %6706 = vmatpush1.xpose.msra.mxu0 %v6683
    %6707 = vmatprep.subr.mxu0 0.0
    %6708 = vmatpush1.xpose.msra.mxu0 %v6686
    %6709 = vmatprep.subr.mxu0 0.0
    %6710 = vmatpush1.xpose.msra.mxu0 %v6689
    %6711 = vmatprep.subr.mxu0 0.0
    %6712 = vmatpush1.xpose.msra.mxu0 0.0
    %6713 = vmatprep.subr.mxu0 0.0
    %6714 = vmatpush1.xpose.msra.mxu0 0.0
    %6715 = vmatprep.subr.mxu0 0.0
    %6716 = vmatpush1.xpose.msra.mxu0 0.0
    %6717 = vmatprep.subr.mxu0 0.0
    %6718 = vmatpush1.xpose.msra.mxu0 0.0
    %6719 = vmatprep.subr.mxu0 0.0
    %6720 = vmatpush1.xpose.msra.mxu0 0.0
    %6721 = vmatprep.subr.mxu0 0.0
    %6722 = vmatpush1.xpose.msra.mxu0 0.0
    %6723 = vmatprep.subr.mxu0 0.0
    %6724 = vmatpush1.xpose.msra.mxu0 0.0
    %6725 = vmatprep.subr.mxu0 0.0
    %6726 = vmatpush1.xpose.msra.mxu0 0.0
    %6727 = vmatprep.subr.mxu0 0.0
    %6728 = vmatpush1.xpose.msra.mxu0 0.0
    %6729 = vmatprep.subr.mxu0 0.0
    %6730 = vmatpush1.xpose.msra.mxu0 0.0
    %6731 = vmatprep.subr.mxu0 0.0
    %6732 = vmatpush1.xpose.msra.mxu0 0.0
    %6733 = vmatprep.subr.mxu0 0.0
    %6734 = vmatpush1.xpose.msra.mxu0 0.0
    %6735 = vmatprep.subr.mxu0 0.0
    %6736 = vmatpush1.xpose.msra.mxu0 0.0
    %6737 = vmatprep.subr.mxu0 0.0
    %6738 = vmatpush1.xpose.msra.mxu0 0.0
    %6739 = vmatprep.subr.mxu0 0.0
    %6740 = vmatpush1.xpose.msra.mxu0 0.0
    %6741 = vmatprep.subr.mxu0 0.0
    %6742 = vmatpush1.xpose.msra.mxu0 0.0
    %6743 = vmatprep.subr.mxu0 0.0
    %6744 = vmatpush1.xpose.msra.mxu0 0.0
    %6745 = vmatprep.subr.mxu0 0.0
    %6746 = vmatpush1.xpose.msra.mxu0 0.0
    %6747 = vmatprep.subr.mxu0 0.0
    %6748 = vmatpush1.xpose.msra.mxu0 0.0
    %6749 = vmatprep.subr.mxu0 0.0
    %6750 = vmatpush1.xpose.msra.mxu0 0.0
    %6751 = vmatprep.subr.mxu0 0.0
    %6752 = vmatpush1.xpose.msra.mxu0 0.0
    %6753 = vmatprep.subr.mxu0 0.0
    %6754 = vmatpush1.xpose.msra.mxu0 0.0
    %6755 = vmatprep.mubr.f32.mxu0 0.0
    %6756 = vmatmul.mubr.f32.gmra.mrb[0].mxu0 %v6632
    %v6757 = vpop.f32.mrb[0].mxu0
    %v6758 = vadd.f32 %v662, %v6757
    %v6759 = vpop.f32.mrb[0].mxu0
    %6760 = vmatprep.mubr.f32.mxu0 0.0
    %6761 = vmatmul.mubr.f32.gmra.mrb[0].mxu0 %v6635
    %v6762 = vpop.f32.mrb[0].mxu0
    %v6763 = vadd.f32 %v663, %v6762
    %v6764 = vpop.f32.mrb[0].mxu0
    %6765 = vmatprep.mubr.f32.mxu0 0.0
    %6766 = vmatmul.mubr.f32.gmra.mrb[0].mxu0 %v6638
    %v6767 = vpop.f32.mrb[0].mxu0
    %v6768 = vadd.f32 %v664, %v6767
    %v6769 = vpop.f32.mrb[0].mxu0
    %6770 = vmatprep.mubr.f32.mxu0 0.0
    %6771 = vmatmul.mubr.f32.gmra.mrb[0].mxu0 %v6641
    %v6772 = vpop.f32.mrb[0].mxu0
    %v6773 = vadd.f32 %v665, %v6772
    %v6774 = vpop.f32.mrb[0].mxu0
    %6775 = vmatprep.mubr.f32.mxu0 0.0
    %6776 = vmatmul.mubr.f32.gmra.mrb[0].mxu0 %v6644
    %v6777 = vpop.f32.mrb[0].mxu0
    %v6778 = vadd.f32 %v666, %v6777
    %v6779 = vpop.f32.mrb[0].mxu0
    %6780 = vmatprep.mubr.f32.mxu0 0.0
    %6781 = vmatmul.mubr.f32.gmra.mrb[0].mxu0 %v6647
    %v6782 = vpop.f32.mrb[0].mxu0
    %v6783 = vadd.f32 %v667, %v6782
    %v6784 = vpop.f32.mrb[0].mxu0
    %6785 = vmatprep.mubr.f32.mxu0 0.0
    %6786 = vmatmul.mubr.f32.gmra.mrb[0].mxu0 %v6650
    %v6787 = vpop.f32.mrb[0].mxu0
    %v6788 = vadd.f32 %v668, %v6787
    %v6789 = vpop.f32.mrb[0].mxu0
    %6790 = vmatprep.mubr.f32.mxu0 0.0
    %6791 = vmatmul.mubr.f32.gmra.mrb[0].mxu0 %v6653
    %v6792 = vpop.f32.mrb[0].mxu0
    %v6793 = vadd.f32 %v669, %v6792
    %v6794 = vpop.f32.mrb[0].mxu0
    %6795 = vmatprep.mubr.f32.mxu0 0.0
    %6796 = vmatmul.mubr.f32.gmra.mrb[0].mxu0 %v6656
    %v6797 = vpop.f32.mrb[0].mxu0
    %v6798 = vadd.f32 %v670, %v6797
    %v6799 = vpop.f32.mrb[0].mxu0
    %6800 = vmatprep.mubr.f32.mxu0 0.0
    %6801 = vmatmul.mubr.f32.gmra.mrb[0].mxu0 %v6659
    %v6802 = vpop.f32.mrb[0].mxu0
    %v6803 = vadd.f32 %v671, %v6802
    %v6804 = vpop.f32.mrb[0].mxu0
    %6805 = vdwg.mxu0
    %v6806 = vsel %vm1409, %v6758, -inf
    %6807 = vmax.xlane.f32.xlu0 %v6806
    %v6808 = vpop.xlane.xlu0 %6807
    %v6809 = vsel %vm1409, %v6763, -inf
    %6810 = vmax.xlane.f32.xlu0 %v6809
    %v6811 = vpop.xlane.xlu0 %6810
    %v6812 = vsel %vm1409, %v6768, -inf
    %6813 = vmax.xlane.f32.xlu0 %v6812
    %v6814 = vpop.xlane.xlu0 %6813
    %v6815 = vsel %vm1409, %v6773, -inf
    %6816 = vmax.xlane.f32.xlu0 %v6815
    %v6817 = vpop.xlane.xlu0 %6816
    %v6818 = vsel %vm1409, %v6778, -inf
    %6819 = vmax.xlane.f32.xlu0 %v6818
    %v6820 = vpop.xlane.xlu0 %6819
    %v6821 = vsel %vm1409, %v6783, -inf
    %6822 = vmax.xlane.f32.xlu0 %v6821
    %v6823 = vpop.xlane.xlu0 %6822
    %v6824 = vsel %vm1409, %v6788, -inf
    %6825 = vmax.xlane.f32.xlu0 %v6824
    %v6826 = vpop.xlane.xlu0 %6825
    %v6827 = vsel %vm1409, %v6793, -inf
    %6828 = vmax.xlane.f32.xlu0 %v6827
    %v6829 = vpop.xlane.xlu0 %6828
    %v6830 = vsel %vm1409, %v6798, -inf
    %6831 = vmax.xlane.f32.xlu0 %v6830
    %v6832 = vpop.xlane.xlu0 %6831
    %v6833 = vsel %vm1409, %v6803, -inf
    %6834 = vmax.xlane.f32.xlu0 %v6833
    %v6835 = vpop.xlane.xlu0 %6834
    %v6836 = vsub.f32 %v6758, %v6808
    %v6837 = vsub.f32 %v6763, %v6811
    %v6838 = vsub.f32 %v6768, %v6814
    %v6839 = vsub.f32 %v6773, %v6817
    %v6840 = vsub.f32 %v6778, %v6820
    %v6841 = vsub.f32 %v6783, %v6823
    %v6842 = vsub.f32 %v6788, %v6826
    %v6843 = vsub.f32 %v6793, %v6829
    %v6844 = vsub.f32 %v6798, %v6832
    %v6845 = vsub.f32 %v6803, %v6835
    %v6846 = vmul.f32 %v6836, 1.442695
    %v6847 = vpow.pop %v6846
    %v6848 = vmul.f32 %v6837, 1.442695
    %v6849 = vpow.pop %v6848
    %v6850 = vmul.f32 %v6838, 1.442695
    %v6851 = vpow.pop %v6850
    %v6852 = vmul.f32 %v6839, 1.442695
    %v6853 = vpow.pop %v6852
    %v6854 = vmul.f32 %v6840, 1.442695
    %v6855 = vpow.pop %v6854
    %v6856 = vmul.f32 %v6841, 1.442695
    %v6857 = vpow.pop %v6856
    %v6858 = vmul.f32 %v6842, 1.442695
    %v6859 = vpow.pop %v6858
    %v6860 = vmul.f32 %v6843, 1.442695
    %v6861 = vpow.pop %v6860
    %v6862 = vmul.f32 %v6844, 1.442695
    %v6863 = vpow.pop %v6862
    %v6864 = vmul.f32 %v6845, 1.442695
    %v6865 = vpow.pop %v6864
    %v6866 = vsel %vm1409, %v6847, 0.0
    %6867 = vadd.xlane.f32.xlu0 %v6866
    %v6868 = vpop.xlane.xlu0 %6867
    %v6869 = vsel %vm1409, %v6849, 0.0
    %6870 = vadd.xlane.f32.xlu0 %v6869
    %v6871 = vpop.xlane.xlu0 %6870
    %v6872 = vsel %vm1409, %v6851, 0.0
    %6873 = vadd.xlane.f32.xlu0 %v6872
    %v6874 = vpop.xlane.xlu0 %6873
    %v6875 = vsel %vm1409, %v6853, 0.0
    %6876 = vadd.xlane.f32.xlu0 %v6875
    %v6877 = vpop.xlane.xlu0 %6876
    %v6878 = vsel %vm1409, %v6855, 0.0
    %6879 = vadd.xlane.f32.xlu0 %v6878
    %v6880 = vpop.xlane.xlu0 %6879
    %v6881 = vsel %vm1409, %v6857, 0.0
    %6882 = vadd.xlane.f32.xlu0 %v6881
    %v6883 = vpop.xlane.xlu0 %6882
    %v6884 = vsel %vm1409, %v6859, 0.0
    %6885 = vadd.xlane.f32.xlu0 %v6884
    %v6886 = vpop.xlane.xlu0 %6885
    %v6887 = vsel %vm1409, %v6861, 0.0
    %6888 = vadd.xlane.f32.xlu0 %v6887
    %v6889 = vpop.xlane.xlu0 %6888
    %v6890 = vsel %vm1409, %v6863, 0.0
    %6891 = vadd.xlane.f32.xlu0 %v6890
    %v6892 = vpop.xlane.xlu0 %6891
    %v6893 = vsel %vm1409, %v6865, 0.0
    %6894 = vadd.xlane.f32.xlu0 %v6893
    %v6895 = vpop.xlane.xlu0 %6894
    %v6896 = vrcp.pop %v6868
    %v6897 = vrcp.pop %v6871
    %v6898 = vrcp.pop %v6874
    %v6899 = vrcp.pop %v6877
    %v6900 = vrcp.pop %v6880
    %v6901 = vrcp.pop %v6883
    %v6902 = vrcp.pop %v6886
    %v6903 = vrcp.pop %v6889
    %v6904 = vrcp.pop %v6892
    %v6905 = vrcp.pop %v6895
    %v6906 = vmul.f32 %v6847, %v6896
    %v6907 = vmul.f32 %v6849, %v6897
    %v6908 = vmul.f32 %v6851, %v6898
    %v6909 = vmul.f32 %v6853, %v6899
    %v6910 = vmul.f32 %v6855, %v6900
    %v6911 = vmul.f32 %v6857, %v6901
    %v6912 = vmul.f32 %v6859, %v6902
    %v6913 = vmul.f32 %v6861, %v6903
    %v6914 = vmul.f32 %v6863, %v6904
    %v6915 = vmul.f32 %v6865, %v6905
    %v6917 = vsel %vm1409, %v6906, 0
    %v6920 = vsel %vm1409, %v6907, 0
    %v6923 = vsel %vm1409, %v6908, 0
    %v6926 = vsel %vm1409, %v6909, 0
    %v6929 = vsel %vm1409, %v6910, 0
    %v6932 = vsel %vm1409, %v6911, 0
    %v6935 = vsel %vm1409, %v6912, 0
    %v6938 = vsel %vm1409, %v6913, 0
    %v6941 = vsel %vm1409, %v6914, 0
    %v6944 = vsel %vm1409, %v6915, 0
    %6946 = vmatprep.subr.mxu0 0.0
    %6947 = vmatpush1.msra.mxu0 %v6583
    %6948 = vmatprep.subr.mxu0 0.0
    %6949 = vmatpush1.msra.mxu0 %v6588
    %6950 = vmatprep.subr.mxu0 0.0
    %6951 = vmatpush1.msra.mxu0 %v6593
    %6952 = vmatprep.subr.mxu0 0.0
    %6953 = vmatpush1.msra.mxu0 %v6598
    %6954 = vmatprep.subr.mxu0 0.0
    %6955 = vmatpush1.msra.mxu0 %v6603
    %6956 = vmatprep.subr.mxu0 0.0
    %6957 = vmatpush1.msra.mxu0 %v6608
    %6958 = vmatprep.subr.mxu0 0.0
    %6959 = vmatpush1.msra.mxu0 %v6613
    %6960 = vmatprep.subr.mxu0 0.0
    %6961 = vmatpush1.msra.mxu0 %v6618
    %6962 = vmatprep.subr.mxu0 0.0
    %6963 = vmatpush1.msra.mxu0 %v6623
    %6964 = vmatprep.subr.mxu0 0.0
    %6965 = vmatpush1.msra.mxu0 %v6628
    %6966 = vmatprep.subr.mxu0 0.0
    %6967 = vmatpush1.msra.mxu0 0.0
    %6968 = vmatprep.subr.mxu0 0.0
    %6969 = vmatpush1.msra.mxu0 0.0
    %6970 = vmatprep.subr.mxu0 0.0
    %6971 = vmatpush1.msra.mxu0 0.0
    %6972 = vmatprep.subr.mxu0 0.0
    %6973 = vmatpush1.msra.mxu0 0.0
    %6974 = vmatprep.subr.mxu0 0.0
    %6975 = vmatpush1.msra.mxu0 0.0
    %6976 = vmatprep.subr.mxu0 0.0
    %6977 = vmatpush1.msra.mxu0 0.0
    %6978 = vmatprep.subr.mxu0 0.0
    %6979 = vmatpush1.msra.mxu0 0.0
    %6980 = vmatprep.subr.mxu0 0.0
    %6981 = vmatpush1.msra.mxu0 0.0
    %6982 = vmatprep.subr.mxu0 0.0
    %6983 = vmatpush1.msra.mxu0 0.0
    %6984 = vmatprep.subr.mxu0 0.0
    %6985 = vmatpush1.msra.mxu0 0.0
    %6986 = vmatprep.subr.mxu0 0.0
    %6987 = vmatpush1.msra.mxu0 0.0
    %6988 = vmatprep.subr.mxu0 0.0
    %6989 = vmatpush1.msra.mxu0 0.0
    %6990 = vmatprep.subr.mxu0 0.0
    %6991 = vmatpush1.msra.mxu0 0.0
    %6992 = vmatprep.subr.mxu0 0.0
    %6993 = vmatpush1.msra.mxu0 0.0
    %6994 = vmatprep.subr.mxu0 0.0
    %6995 = vmatpush1.msra.mxu0 0.0
    %6996 = vmatprep.subr.mxu0 0.0
    %6997 = vmatpush1.msra.mxu0 0.0
    %6998 = vmatprep.subr.mxu0 0.0
    %6999 = vmatpush1.msra.mxu0 0.0
    %7000 = vmatprep.subr.mxu0 0.0
    %7001 = vmatpush1.msra.mxu0 0.0
    %7002 = vmatprep.subr.mxu0 0.0
    %7003 = vmatpush1.msra.mxu0 0.0
    %7004 = vmatprep.subr.mxu0 0.0
    %7005 = vmatpush1.msra.mxu0 0.0
    %7006 = vmatprep.subr.mxu0 0.0
    %7007 = vmatpush1.msra.mxu0 0.0
    %7008 = vmatprep.subr.mxu0 0.0
    %7009 = vmatpush1.msra.mxu0 0.0
    %7010 = vmatprep.mubr.f32.mxu0 0.0
    %7011 = vmatmul.mubr.f32.gmra.mrb[0].mxu0 %v6917
    %v7012 = vpop.f32.mrb[0].mxu0
    %v7013 = vadd.f32 0.0, %v7012
    %v7014 = vpop.f32.mrb[0].mxu0
    %7015 = vmatprep.mubr.f32.mxu0 0.0
    %7016 = vmatmul.mubr.f32.gmra.mrb[0].mxu0 %v6920
    %v7017 = vpop.f32.mrb[0].mxu0
    %v7018 = vadd.f32 0.0, %v7017
    %v7019 = vpop.f32.mrb[0].mxu0
    %7020 = vmatprep.mubr.f32.mxu0 0.0
    %7021 = vmatmul.mubr.f32.gmra.mrb[0].mxu0 %v6923
    %v7022 = vpop.f32.mrb[0].mxu0
    %v7023 = vadd.f32 0.0, %v7022
    %v7024 = vpop.f32.mrb[0].mxu0
    %7025 = vmatprep.mubr.f32.mxu0 0.0
    %7026 = vmatmul.mubr.f32.gmra.mrb[0].mxu0 %v6926
    %v7027 = vpop.f32.mrb[0].mxu0
    %v7028 = vadd.f32 0.0, %v7027
    %v7029 = vpop.f32.mrb[0].mxu0
    %7030 = vmatprep.mubr.f32.mxu0 0.0
    %7031 = vmatmul.mubr.f32.gmra.mrb[0].mxu0 %v6929
    %v7032 = vpop.f32.mrb[0].mxu0
    %v7033 = vadd.f32 0.0, %v7032
    %v7034 = vpop.f32.mrb[0].mxu0
    %7035 = vmatprep.mubr.f32.mxu0 0.0
    %7036 = vmatmul.mubr.f32.gmra.mrb[0].mxu0 %v6932
    %v7037 = vpop.f32.mrb[0].mxu0
    %v7038 = vadd.f32 0.0, %v7037
    %v7039 = vpop.f32.mrb[0].mxu0
    %7040 = vmatprep.mubr.f32.mxu0 0.0
    %7041 = vmatmul.mubr.f32.gmra.mrb[0].mxu0 %v6935
    %v7042 = vpop.f32.mrb[0].mxu0
    %v7043 = vadd.f32 0.0, %v7042
    %v7044 = vpop.f32.mrb[0].mxu0
    %7045 = vmatprep.mubr.f32.mxu0 0.0
    %7046 = vmatmul.mubr.f32.gmra.mrb[0].mxu0 %v6938
    %v7047 = vpop.f32.mrb[0].mxu0
    %v7048 = vadd.f32 0.0, %v7047
    %v7049 = vpop.f32.mrb[0].mxu0
    %7050 = vmatprep.mubr.f32.mxu0 0.0
    %7051 = vmatmul.mubr.f32.gmra.mrb[0].mxu0 %v6941
    %v7052 = vpop.f32.mrb[0].mxu0
    %v7053 = vadd.f32 0.0, %v7052
    %v7054 = vpop.f32.mrb[0].mxu0
    %7055 = vmatprep.mubr.f32.mxu0 0.0
    %7056 = vmatmul.mubr.f32.gmra.mrb[0].mxu0 %v6944
    %v7057 = vpop.f32.mrb[0].mxu0
    %v7058 = vadd.f32 0.0, %v7057
    %v7059 = vpop.f32.mrb[0].mxu0
    %7060 = vdwg.mxu0
    %s7061 = scalar_lea.vmem %s10, 40
    %v7062 = vld [vmem:[%s7061] sm:$0xff]
    %v7064 = vsel %vm1233, %v7013, 0
    %v7067 = vsel %vm1233, %v7018, 0
    %v7070 = vsel %vm1233, %v7023, 0
    %v7073 = vsel %vm1233, %v7028, 0
    %v7076 = vsel %vm1233, %v7033, 0
    %v7079 = vsel %vm1233, %v7038, 0
    %v7082 = vsel %vm1233, %v7043, 0
    %v7085 = vsel %vm1233, %v7048, 0
    %v7088 = vsel %vm1233, %v7053, 0
    %v7091 = vsel %vm1233, %v7058, 0
    %7093 = vmatprep.subr.mxu0 0.0
    %7094 = vmatpush1.msra.mxu0 %v7062
    %7095 = vmatprep.subr.mxu0 0.0
    %7096 = vmatpush1.msra.mxu0 0.0
    %7097 = vmatprep.subr.mxu0 0.0
    %7098 = vmatpush1.msra.mxu0 0.0
    %7099 = vmatprep.subr.mxu0 0.0
    %7100 = vmatpush1.msra.mxu0 0.0
    %7101 = vmatprep.subr.mxu0 0.0
    %7102 = vmatpush1.msra.mxu0 0.0
    %7103 = vmatprep.subr.mxu0 0.0
    %7104 = vmatpush1.msra.mxu0 0.0
    %7105 = vmatprep.subr.mxu0 0.0
    %7106 = vmatpush1.msra.mxu0 0.0
    %7107 = vmatprep.subr.mxu0 0.0
    %7108 = vmatpush1.msra.mxu0 0.0
    %7109 = vmatprep.subr.mxu0 0.0
    %7110 = vmatpush1.msra.mxu0 0.0
    %7111 = vmatprep.subr.mxu0 0.0
    %7112 = vmatpush1.msra.mxu0 0.0
    %7113 = vmatprep.subr.mxu0 0.0
    %7114 = vmatpush1.msra.mxu0 0.0
    %7115 = vmatprep.subr.mxu0 0.0
    %7116 = vmatpush1.msra.mxu0 0.0
    %7117 = vmatprep.subr.mxu0 0.0
    %7118 = vmatpush1.msra.mxu0 0.0
    %7119 = vmatprep.subr.mxu0 0.0
    %7120 = vmatpush1.msra.mxu0 0.0
    %7121 = vmatprep.subr.mxu0 0.0
    %7122 = vmatpush1.msra.mxu0 0.0
    %7123 = vmatprep.subr.mxu0 0.0
    %7124 = vmatpush1.msra.mxu0 0.0
    %7125 = vmatprep.subr.mxu0 0.0
    %7126 = vmatpush1.msra.mxu0 0.0
    %7127 = vmatprep.subr.mxu0 0.0
    %7128 = vmatpush1.msra.mxu0 0.0
    %7129 = vmatprep.subr.mxu0 0.0
    %7130 = vmatpush1.msra.mxu0 0.0
    %7131 = vmatprep.subr.mxu0 0.0
    %7132 = vmatpush1.msra.mxu0 0.0
    %7133 = vmatprep.subr.mxu0 0.0
    %7134 = vmatpush1.msra.mxu0 0.0
    %7135 = vmatprep.subr.mxu0 0.0
    %7136 = vmatpush1.msra.mxu0 0.0
    %7137 = vmatprep.subr.mxu0 0.0
    %7138 = vmatpush1.msra.mxu0 0.0
    %7139 = vmatprep.subr.mxu0 0.0
    %7140 = vmatpush1.msra.mxu0 0.0
    %7141 = vmatprep.subr.mxu0 0.0
    %7142 = vmatpush1.msra.mxu0 0.0
    %7143 = vmatprep.subr.mxu0 0.0
    %7144 = vmatpush1.msra.mxu0 0.0
    %7145 = vmatprep.subr.mxu0 0.0
    %7146 = vmatpush1.msra.mxu0 0.0
    %7147 = vmatprep.subr.mxu0 0.0
    %7148 = vmatpush1.msra.mxu0 0.0
    %7149 = vmatprep.subr.mxu0 0.0
    %7150 = vmatpush1.msra.mxu0 0.0
    %7151 = vmatprep.subr.mxu0 0.0
    %7152 = vmatpush1.msra.mxu0 0.0
    %7153 = vmatprep.subr.mxu0 0.0
    %7154 = vmatpush1.msra.mxu0 0.0
    %7155 = vmatprep.subr.mxu0 0.0
    %7156 = vmatpush1.msra.mxu0 0.0
    %7157 = vmatprep.mubr.f32.mxu0 0.0
    %7158 = vmatmul.mubr.f32.gmra.mrb[0].mxu0 %v7064
    %v7159 = vpop.f32.mrb[0].mxu0
    %v7160 = vadd.f32 0.0, %v7159
    %v7161 = vpop.f32.mrb[0].mxu0
    %7162 = vmatprep.mubr.f32.mxu0 0.0
    %7163 = vmatmul.mubr.f32.gmra.mrb[0].mxu0 %v7067
    %v7164 = vpop.f32.mrb[0].mxu0
    %v7165 = vadd.f32 0.0, %v7164
    %v7166 = vpop.f32.mrb[0].mxu0
    %7167 = vmatprep.mubr.f32.mxu0 0.0
    %7168 = vmatmul.mubr.f32.gmra.mrb[0].mxu0 %v7070
    %v7169 = vpop.f32.mrb[0].mxu0
    %v7170 = vadd.f32 0.0, %v7169
    %v7171 = vpop.f32.mrb[0].mxu0
    %7172 = vmatprep.mubr.f32.mxu0 0.0
    %7173 = vmatmul.mubr.f32.gmra.mrb[0].mxu0 %v7073
    %v7174 = vpop.f32.mrb[0].mxu0
    %v7175 = vadd.f32 0.0, %v7174
    %v7176 = vpop.f32.mrb[0].mxu0
    %7177 = vmatprep.mubr.f32.mxu0 0.0
    %7178 = vmatmul.mubr.f32.gmra.mrb[0].mxu0 %v7076
    %v7179 = vpop.f32.mrb[0].mxu0
    %v7180 = vadd.f32 0.0, %v7179
    %v7181 = vpop.f32.mrb[0].mxu0
    %7182 = vmatprep.mubr.f32.mxu0 0.0
    %7183 = vmatmul.mubr.f32.gmra.mrb[0].mxu0 %v7079
    %v7184 = vpop.f32.mrb[0].mxu0
    %v7185 = vadd.f32 0.0, %v7184
    %v7186 = vpop.f32.mrb[0].mxu0
    %7187 = vmatprep.mubr.f32.mxu0 0.0
    %7188 = vmatmul.mubr.f32.gmra.mrb[0].mxu0 %v7082
    %v7189 = vpop.f32.mrb[0].mxu0
    %v7190 = vadd.f32 0.0, %v7189
    %v7191 = vpop.f32.mrb[0].mxu0
    %7192 = vmatprep.mubr.f32.mxu0 0.0
    %7193 = vmatmul.mubr.f32.gmra.mrb[0].mxu0 %v7085
    %v7194 = vpop.f32.mrb[0].mxu0
    %v7195 = vadd.f32 0.0, %v7194
    %v7196 = vpop.f32.mrb[0].mxu0
    %7197 = vmatprep.mubr.f32.mxu0 0.0
    %7198 = vmatmul.mubr.f32.gmra.mrb[0].mxu0 %v7088
    %v7199 = vpop.f32.mrb[0].mxu0
    %v7200 = vadd.f32 0.0, %v7199
    %v7201 = vpop.f32.mrb[0].mxu0
    %7202 = vmatprep.mubr.f32.mxu0 0.0
    %7203 = vmatmul.mubr.f32.gmra.mrb[0].mxu0 %v7091
    %v7204 = vpop.f32.mrb[0].mxu0
    %v7205 = vadd.f32 0.0, %v7204
    %v7206 = vpop.f32.mrb[0].mxu0
    %7207 = vdwg.mxu0
    %v7209 = vsel %vm1233, %v6209, 0
    %v7212 = vsel %vm1233, %v6214, 0
    %v7215 = vsel %vm1233, %v6219, 0
    %v7218 = vsel %vm1233, %v6224, 0
    %v7221 = vsel %vm1233, %v6229, 0
    %v7224 = vsel %vm1233, %v6234, 0
    %v7227 = vsel %vm1233, %v6239, 0
    %v7230 = vsel %vm1233, %v6244, 0
    %v7233 = vsel %vm1233, %v6249, 0
    %v7236 = vsel %vm1233, %v6254, 0
    %7238 = vmatprep.subr.mxu0 0.0
    %7239 = vmatpush1.msra.mxu0 %v6258
    %7240 = vmatprep.subr.mxu0 0.0
    %7241 = vmatpush1.msra.mxu0 0.0
    %7242 = vmatprep.subr.mxu0 0.0
    %7243 = vmatpush1.msra.mxu0 0.0
    %7244 = vmatprep.subr.mxu0 0.0
    %7245 = vmatpush1.msra.mxu0 0.0
    %7246 = vmatprep.subr.mxu0 0.0
    %7247 = vmatpush1.msra.mxu0 0.0
    %7248 = vmatprep.subr.mxu0 0.0
    %7249 = vmatpush1.msra.mxu0 0.0
    %7250 = vmatprep.subr.mxu0 0.0
    %7251 = vmatpush1.msra.mxu0 0.0
    %7252 = vmatprep.subr.mxu0 0.0
    %7253 = vmatpush1.msra.mxu0 0.0
    %7254 = vmatprep.subr.mxu0 0.0
    %7255 = vmatpush1.msra.mxu0 0.0
    %7256 = vmatprep.subr.mxu0 0.0
    %7257 = vmatpush1.msra.mxu0 0.0
    %7258 = vmatprep.subr.mxu0 0.0
    %7259 = vmatpush1.msra.mxu0 0.0
    %7260 = vmatprep.subr.mxu0 0.0
    %7261 = vmatpush1.msra.mxu0 0.0
    %7262 = vmatprep.subr.mxu0 0.0
    %7263 = vmatpush1.msra.mxu0 0.0
    %7264 = vmatprep.subr.mxu0 0.0
    %7265 = vmatpush1.msra.mxu0 0.0
    %7266 = vmatprep.subr.mxu0 0.0
    %7267 = vmatpush1.msra.mxu0 0.0
    %7268 = vmatprep.subr.mxu0 0.0
    %7269 = vmatpush1.msra.mxu0 0.0
    %7270 = vmatprep.subr.mxu0 0.0
    %7271 = vmatpush1.msra.mxu0 0.0
    %7272 = vmatprep.subr.mxu0 0.0
    %7273 = vmatpush1.msra.mxu0 0.0
    %7274 = vmatprep.subr.mxu0 0.0
    %7275 = vmatpush1.msra.mxu0 0.0
    %7276 = vmatprep.subr.mxu0 0.0
    %7277 = vmatpush1.msra.mxu0 0.0
    %7278 = vmatprep.subr.mxu0 0.0
    %7279 = vmatpush1.msra.mxu0 0.0
    %7280 = vmatprep.subr.mxu0 0.0
    %7281 = vmatpush1.msra.mxu0 0.0
    %7282 = vmatprep.subr.mxu0 0.0
    %7283 = vmatpush1.msra.mxu0 0.0
    %7284 = vmatprep.subr.mxu0 0.0
    %7285 = vmatpush1.msra.mxu0 0.0
    %7286 = vmatprep.subr.mxu0 0.0
    %7287 = vmatpush1.msra.mxu0 0.0
    %7288 = vmatprep.subr.mxu0 0.0
    %7289 = vmatpush1.msra.mxu0 0.0
    %7290 = vmatprep.subr.mxu0 0.0
    %7291 = vmatpush1.msra.mxu0 0.0
    %7292 = vmatprep.subr.mxu0 0.0
    %7293 = vmatpush1.msra.mxu0 0.0
    %7294 = vmatprep.subr.mxu0 0.0
    %7295 = vmatpush1.msra.mxu0 0.0
    %7296 = vmatprep.subr.mxu0 0.0
    %7297 = vmatpush1.msra.mxu0 0.0
    %7298 = vmatprep.subr.mxu0 0.0
    %7299 = vmatpush1.msra.mxu0 0.0
    %7300 = vmatprep.subr.mxu0 0.0
    %7301 = vmatpush1.msra.mxu0 0.0
    %7302 = vmatprep.mubr.f32.mxu0 0.0
    %7303 = vmatmul.mubr.f32.gmra.mrb[0].mxu0 %v7209
    %v7304 = vpop.f32.mrb[0].mxu0
    %v7305 = vadd.f32 %v7160, %v7304
    %v7306 = vpop.f32.mrb[0].mxu0
    %7307 = vmatprep.mubr.f32.mxu0 0.0
    %7308 = vmatmul.mubr.f32.gmra.mrb[0].mxu0 %v7212
    %v7309 = vpop.f32.mrb[0].mxu0
    %v7310 = vadd.f32 %v7165, %v7309
    %v7311 = vpop.f32.mrb[0].mxu0
    %7312 = vmatprep.mubr.f32.mxu0 0.0
    %7313 = vmatmul.mubr.f32.gmra.mrb[0].mxu0 %v7215
    %v7314 = vpop.f32.mrb[0].mxu0
    %v7315 = vadd.f32 %v7170, %v7314
    %v7316 = vpop.f32.mrb[0].mxu0
    %7317 = vmatprep.mubr.f32.mxu0 0.0
    %7318 = vmatmul.mubr.f32.gmra.mrb[0].mxu0 %v7218
    %v7319 = vpop.f32.mrb[0].mxu0
    %v7320 = vadd.f32 %v7175, %v7319
    %v7321 = vpop.f32.mrb[0].mxu0
    %7322 = vmatprep.mubr.f32.mxu0 0.0
    %7323 = vmatmul.mubr.f32.gmra.mrb[0].mxu0 %v7221
    %v7324 = vpop.f32.mrb[0].mxu0
    %v7325 = vadd.f32 %v7180, %v7324
    %v7326 = vpop.f32.mrb[0].mxu0
    %7327 = vmatprep.mubr.f32.mxu0 0.0
    %7328 = vmatmul.mubr.f32.gmra.mrb[0].mxu0 %v7224
    %v7329 = vpop.f32.mrb[0].mxu0
    %v7330 = vadd.f32 %v7185, %v7329
    %v7331 = vpop.f32.mrb[0].mxu0
    %7332 = vmatprep.mubr.f32.mxu0 0.0
    %7333 = vmatmul.mubr.f32.gmra.mrb[0].mxu0 %v7227
    %v7334 = vpop.f32.mrb[0].mxu0
    %v7335 = vadd.f32 %v7190, %v7334
    %v7336 = vpop.f32.mrb[0].mxu0
    %7337 = vmatprep.mubr.f32.mxu0 0.0
    %7338 = vmatmul.mubr.f32.gmra.mrb[0].mxu0 %v7230
    %v7339 = vpop.f32.mrb[0].mxu0
    %v7340 = vadd.f32 %v7195, %v7339
    %v7341 = vpop.f32.mrb[0].mxu0
    %7342 = vmatprep.mubr.f32.mxu0 0.0
    %7343 = vmatmul.mubr.f32.gmra.mrb[0].mxu0 %v7233
    %v7344 = vpop.f32.mrb[0].mxu0
    %v7345 = vadd.f32 %v7200, %v7344
    %v7346 = vpop.f32.mrb[0].mxu0
    %7347 = vmatprep.mubr.f32.mxu0 0.0
    %7348 = vmatmul.mubr.f32.gmra.mrb[0].mxu0 %v7236
    %v7349 = vpop.f32.mrb[0].mxu0
    %v7350 = vadd.f32 %v7205, %v7349
    %v7351 = vpop.f32.mrb[0].mxu0
    %7352 = vdwg.mxu0
    %s7353 = scalar_lea.vmem %s7, 192
    %v7354 = vld [vmem:[%s7353] sm:$0xff]
    %v7355 = vld [vmem:[%s7353 + $0x8] sm:$0xff]
    %v7356 = vld [vmem:[%s7353 + $0x10] sm:$0xff]
    %v7357 = vld [vmem:[%s7353 + $0x18] sm:$0xff]
    %7358 = vrot.lane.b32.xlu0 %v5433, 112
    %v7359 = vpop.permute.xlu0 %7358
    %7361 = vmatprep.subr.mxu0 0.0
    %7362 = vmatpush1.msra.mxu0 %v7354
    %7363 = vmatprep.subr.mxu0 0.0
    %7364 = vmatpush1.msra.mxu0 %v7355
    %7365 = vmatprep.subr.mxu0 0.0
    %7366 = vmatpush1.msra.mxu0 %v7356
    %7367 = vmatprep.subr.mxu0 0.0
    %7368 = vmatpush1.msra.mxu0 %v7357
    %7369 = vmatprep.subr.mxu0 0.0
    %7370 = vmatpush1.msra.mxu0 0.0
    %7371 = vmatprep.subr.mxu0 0.0
    %7372 = vmatpush1.msra.mxu0 0.0
    %7373 = vmatprep.subr.mxu0 0.0
    %7374 = vmatpush1.msra.mxu0 0.0
    %7375 = vmatprep.subr.mxu0 0.0
    %7376 = vmatpush1.msra.mxu0 0.0
    %7377 = vmatprep.subr.mxu0 0.0
    %7378 = vmatpush1.msra.mxu0 0.0
    %7379 = vmatprep.subr.mxu0 0.0
    %7380 = vmatpush1.msra.mxu0 0.0
    %7381 = vmatprep.subr.mxu0 0.0
    %7382 = vmatpush1.msra.mxu0 0.0
    %7383 = vmatprep.subr.mxu0 0.0
    %7384 = vmatpush1.msra.mxu0 0.0
    %7385 = vmatprep.subr.mxu0 0.0
    %7386 = vmatpush1.msra.mxu0 0.0
    %7387 = vmatprep.subr.mxu0 0.0
    %7388 = vmatpush1.msra.mxu0 0.0
    %7389 = vmatprep.subr.mxu0 0.0
    %7390 = vmatpush1.msra.mxu0 0.0
    %7391 = vmatprep.subr.mxu0 0.0
    %7392 = vmatpush1.msra.mxu0 0.0
    %7393 = vmatprep.subr.mxu0 0.0
    %7394 = vmatpush1.msra.mxu0 0.0
    %7395 = vmatprep.subr.mxu0 0.0
    %7396 = vmatpush1.msra.mxu0 0.0
    %7397 = vmatprep.subr.mxu0 0.0
    %7398 = vmatpush1.msra.mxu0 0.0
    %7399 = vmatprep.subr.mxu0 0.0
    %7400 = vmatpush1.msra.mxu0 0.0
    %7401 = vmatprep.subr.mxu0 0.0
    %7402 = vmatpush1.msra.mxu0 0.0
    %7403 = vmatprep.subr.mxu0 0.0
    %7404 = vmatpush1.msra.mxu0 0.0
    %7405 = vmatprep.subr.mxu0 0.0
    %7406 = vmatpush1.msra.mxu0 0.0
    %7407 = vmatprep.subr.mxu0 0.0
    %7408 = vmatpush1.msra.mxu0 0.0
    %7409 = vmatprep.subr.mxu0 0.0
    %7410 = vmatpush1.msra.mxu0 0.0
    %7411 = vmatprep.subr.mxu0 0.0
    %7412 = vmatpush1.msra.mxu0 0.0
    %7413 = vmatprep.subr.mxu0 0.0
    %7414 = vmatpush1.msra.mxu0 0.0
    %7415 = vmatprep.subr.mxu0 0.0
    %7416 = vmatpush1.msra.mxu0 0.0
    %7417 = vmatprep.subr.mxu0 0.0
    %7418 = vmatpush1.msra.mxu0 0.0
    %7419 = vmatprep.subr.mxu0 0.0
    %7420 = vmatpush1.msra.mxu0 0.0
    %7421 = vmatprep.subr.mxu0 0.0
    %7422 = vmatpush1.msra.mxu0 0.0
    %7423 = vmatprep.subr.mxu0 0.0
    %7424 = vmatpush1.msra.mxu0 0.0
    %7425 = vmatprep.mubr.f32.mxu0 0.0
    %7426 = vmatmul.mubr.f32.gmra.mrb[0].mxu0 %v5435
    %v7427 = vpop.f32.mrb[0].mxu0
    %v7428 = vadd.f32 %v7359, %v7427
    %v7429 = vpop.f32.mrb[0].mxu0
    %7430 = vmatprep.mubr.f32.mxu0 0.0
    %7431 = vmatmul.mubr.f32.gmra.mrb[0].mxu0 %v5438
    %v7432 = vpop.f32.mrb[0].mxu0
    %v7433 = vadd.f32 %v7359, %v7432
    %v7434 = vpop.f32.mrb[0].mxu0
    %7435 = vmatprep.mubr.f32.mxu0 0.0
    %7436 = vmatmul.mubr.f32.gmra.mrb[0].mxu0 %v5441
    %v7437 = vpop.f32.mrb[0].mxu0
    %v7438 = vadd.f32 %v7359, %v7437
    %v7439 = vpop.f32.mrb[0].mxu0
    %7440 = vmatprep.mubr.f32.mxu0 0.0
    %7441 = vmatmul.mubr.f32.gmra.mrb[0].mxu0 %v5444
    %v7442 = vpop.f32.mrb[0].mxu0
    %v7443 = vadd.f32 %v7359, %v7442
    %v7444 = vpop.f32.mrb[0].mxu0
    %7445 = vmatprep.mubr.f32.mxu0 0.0
    %7446 = vmatmul.mubr.f32.gmra.mrb[0].mxu0 %v5447
    %v7447 = vpop.f32.mrb[0].mxu0
    %v7448 = vadd.f32 %v7359, %v7447
    %v7449 = vpop.f32.mrb[0].mxu0
    %7450 = vmatprep.mubr.f32.mxu0 0.0
    %7451 = vmatmul.mubr.f32.gmra.mrb[0].mxu0 %v5450
    %v7452 = vpop.f32.mrb[0].mxu0
    %v7453 = vadd.f32 %v7359, %v7452
    %v7454 = vpop.f32.mrb[0].mxu0
    %7455 = vmatprep.mubr.f32.mxu0 0.0
    %7456 = vmatmul.mubr.f32.gmra.mrb[0].mxu0 %v5453
    %v7457 = vpop.f32.mrb[0].mxu0
    %v7458 = vadd.f32 %v7359, %v7457
    %v7459 = vpop.f32.mrb[0].mxu0
    %7460 = vmatprep.mubr.f32.mxu0 0.0
    %7461 = vmatmul.mubr.f32.gmra.mrb[0].mxu0 %v5456
    %v7462 = vpop.f32.mrb[0].mxu0
    %v7463 = vadd.f32 %v7359, %v7462
    %v7464 = vpop.f32.mrb[0].mxu0
    %7465 = vmatprep.mubr.f32.mxu0 0.0
    %7466 = vmatmul.mubr.f32.gmra.mrb[0].mxu0 %v5459
    %v7467 = vpop.f32.mrb[0].mxu0
    %v7468 = vadd.f32 %v7359, %v7467
    %v7469 = vpop.f32.mrb[0].mxu0
    %7470 = vmatprep.mubr.f32.mxu0 0.0
    %7471 = vmatmul.mubr.f32.gmra.mrb[0].mxu0 %v5462
    %v7472 = vpop.f32.mrb[0].mxu0
    %v7473 = vadd.f32 %v7359, %v7472
    %v7474 = vpop.f32.mrb[0].mxu0
    %7475 = vdwg.mxu0
    %s7476 = scalar_lea.vmem %s8, 192
    %v7477 = vld [vmem:[%s7476] sm:$0xff]
    %v7478 = vld [vmem:[%s7476 + $0x8] sm:$0xff]
    %v7479 = vld [vmem:[%s7476 + $0x10] sm:$0xff]
    %v7480 = vld [vmem:[%s7476 + $0x18] sm:$0xff]
    %7481 = vrot.lane.b32.xlu0 %v5587, 112
    %v7482 = vpop.permute.xlu0 %7481
    %7484 = vmatprep.subr.mxu0 0.0
    %7485 = vmatpush1.msra.mxu0 %v7477
    %7486 = vmatprep.subr.mxu0 0.0
    %7487 = vmatpush1.msra.mxu0 %v7478
    %7488 = vmatprep.subr.mxu0 0.0
    %7489 = vmatpush1.msra.mxu0 %v7479
    %7490 = vmatprep.subr.mxu0 0.0
    %7491 = vmatpush1.msra.mxu0 %v7480
    %7492 = vmatprep.subr.mxu0 0.0
    %7493 = vmatpush1.msra.mxu0 0.0
    %7494 = vmatprep.subr.mxu0 0.0
    %7495 = vmatpush1.msra.mxu0 0.0
    %7496 = vmatprep.subr.mxu0 0.0
    %7497 = vmatpush1.msra.mxu0 0.0
    %7498 = vmatprep.subr.mxu0 0.0
    %7499 = vmatpush1.msra.mxu0 0.0
    %7500 = vmatprep.subr.mxu0 0.0
    %7501 = vmatpush1.msra.mxu0 0.0
    %7502 = vmatprep.subr.mxu0 0.0
    %7503 = vmatpush1.msra.mxu0 0.0
    %7504 = vmatprep.subr.mxu0 0.0
    %7505 = vmatpush1.msra.mxu0 0.0
    %7506 = vmatprep.subr.mxu0 0.0
    %7507 = vmatpush1.msra.mxu0 0.0
    %7508 = vmatprep.subr.mxu0 0.0
    %7509 = vmatpush1.msra.mxu0 0.0
    %7510 = vmatprep.subr.mxu0 0.0
    %7511 = vmatpush1.msra.mxu0 0.0
    %7512 = vmatprep.subr.mxu0 0.0
    %7513 = vmatpush1.msra.mxu0 0.0
    %7514 = vmatprep.subr.mxu0 0.0
    %7515 = vmatpush1.msra.mxu0 0.0
    %7516 = vmatprep.subr.mxu0 0.0
    %7517 = vmatpush1.msra.mxu0 0.0
    %7518 = vmatprep.subr.mxu0 0.0
    %7519 = vmatpush1.msra.mxu0 0.0
    %7520 = vmatprep.subr.mxu0 0.0
    %7521 = vmatpush1.msra.mxu0 0.0
    %7522 = vmatprep.subr.mxu0 0.0
    %7523 = vmatpush1.msra.mxu0 0.0
    %7524 = vmatprep.subr.mxu0 0.0
    %7525 = vmatpush1.msra.mxu0 0.0
    %7526 = vmatprep.subr.mxu0 0.0
    %7527 = vmatpush1.msra.mxu0 0.0
    %7528 = vmatprep.subr.mxu0 0.0
    %7529 = vmatpush1.msra.mxu0 0.0
    %7530 = vmatprep.subr.mxu0 0.0
    %7531 = vmatpush1.msra.mxu0 0.0
    %7532 = vmatprep.subr.mxu0 0.0
    %7533 = vmatpush1.msra.mxu0 0.0
    %7534 = vmatprep.subr.mxu0 0.0
    %7535 = vmatpush1.msra.mxu0 0.0
    %7536 = vmatprep.subr.mxu0 0.0
    %7537 = vmatpush1.msra.mxu0 0.0
    %7538 = vmatprep.subr.mxu0 0.0
    %7539 = vmatpush1.msra.mxu0 0.0
    %7540 = vmatprep.subr.mxu0 0.0
    %7541 = vmatpush1.msra.mxu0 0.0
    %7542 = vmatprep.subr.mxu0 0.0
    %7543 = vmatpush1.msra.mxu0 0.0
    %7544 = vmatprep.subr.mxu0 0.0
    %7545 = vmatpush1.msra.mxu0 0.0
    %7546 = vmatprep.subr.mxu0 0.0
    %7547 = vmatpush1.msra.mxu0 0.0
    %7548 = vmatprep.mubr.f32.mxu0 0.0
    %7549 = vmatmul.mubr.f32.gmra.mrb[0].mxu0 %v5435
    %v7550 = vpop.f32.mrb[0].mxu0
    %v7551 = vadd.f32 %v7482, %v7550
    %v7552 = vpop.f32.mrb[0].mxu0
    %7553 = vmatprep.mubr.f32.mxu0 0.0
    %7554 = vmatmul.mubr.f32.gmra.mrb[0].mxu0 %v5438
    %v7555 = vpop.f32.mrb[0].mxu0
    %v7556 = vadd.f32 %v7482, %v7555
    %v7557 = vpop.f32.mrb[0].mxu0
    %7558 = vmatprep.mubr.f32.mxu0 0.0
    %7559 = vmatmul.mubr.f32.gmra.mrb[0].mxu0 %v5441
    %v7560 = vpop.f32.mrb[0].mxu0
    %v7561 = vadd.f32 %v7482, %v7560
    %v7562 = vpop.f32.mrb[0].mxu0
    %7563 = vmatprep.mubr.f32.mxu0 0.0
    %7564 = vmatmul.mubr.f32.gmra.mrb[0].mxu0 %v5444
    %v7565 = vpop.f32.mrb[0].mxu0
    %v7566 = vadd.f32 %v7482, %v7565
    %v7567 = vpop.f32.mrb[0].mxu0
    %7568 = vmatprep.mubr.f32.mxu0 0.0
    %7569 = vmatmul.mubr.f32.gmra.mrb[0].mxu0 %v5447
    %v7570 = vpop.f32.mrb[0].mxu0
    %v7571 = vadd.f32 %v7482, %v7570
    %v7572 = vpop.f32.mrb[0].mxu0
    %7573 = vmatprep.mubr.f32.mxu0 0.0
    %7574 = vmatmul.mubr.f32.gmra.mrb[0].mxu0 %v5450
    %v7575 = vpop.f32.mrb[0].mxu0
    %v7576 = vadd.f32 %v7482, %v7575
    %v7577 = vpop.f32.mrb[0].mxu0
    %7578 = vmatprep.mubr.f32.mxu0 0.0
    %7579 = vmatmul.mubr.f32.gmra.mrb[0].mxu0 %v5453
    %v7580 = vpop.f32.mrb[0].mxu0
    %v7581 = vadd.f32 %v7482, %v7580
    %v7582 = vpop.f32.mrb[0].mxu0
    %7583 = vmatprep.mubr.f32.mxu0 0.0
    %7584 = vmatmul.mubr.f32.gmra.mrb[0].mxu0 %v5456
    %v7585 = vpop.f32.mrb[0].mxu0
    %v7586 = vadd.f32 %v7482, %v7585
    %v7587 = vpop.f32.mrb[0].mxu0
    %7588 = vmatprep.mubr.f32.mxu0 0.0
    %7589 = vmatmul.mubr.f32.gmra.mrb[0].mxu0 %v5459
    %v7590 = vpop.f32.mrb[0].mxu0
    %v7591 = vadd.f32 %v7482, %v7590
    %v7592 = vpop.f32.mrb[0].mxu0
    %7593 = vmatprep.mubr.f32.mxu0 0.0
    %7594 = vmatmul.mubr.f32.gmra.mrb[0].mxu0 %v5462
    %v7595 = vpop.f32.mrb[0].mxu0
    %v7596 = vadd.f32 %v7482, %v7595
    %v7597 = vpop.f32.mrb[0].mxu0
    %7598 = vdwg.mxu0
    %s7599 = scalar_lea.vmem %s9, 192
    %v7600 = vld [vmem:[%s7599] sm:$0xff]
    %v7601 = vld [vmem:[%s7599 + $0x8] sm:$0xff]
    %v7602 = vld [vmem:[%s7599 + $0x10] sm:$0xff]
    %v7603 = vld [vmem:[%s7599 + $0x18] sm:$0xff]
    %7604 = vrot.lane.b32.xlu0 %v5711, 112
    %v7605 = vpop.permute.xlu0 %7604
    %7607 = vmatprep.subr.mxu0 0.0
    %7608 = vmatpush1.msra.mxu0 %v7600
    %7609 = vmatprep.subr.mxu0 0.0
    %7610 = vmatpush1.msra.mxu0 %v7601
    %7611 = vmatprep.subr.mxu0 0.0
    %7612 = vmatpush1.msra.mxu0 %v7602
    %7613 = vmatprep.subr.mxu0 0.0
    %7614 = vmatpush1.msra.mxu0 %v7603
    %7615 = vmatprep.subr.mxu0 0.0
    %7616 = vmatpush1.msra.mxu0 0.0
    %7617 = vmatprep.subr.mxu0 0.0
    %7618 = vmatpush1.msra.mxu0 0.0
    %7619 = vmatprep.subr.mxu0 0.0
    %7620 = vmatpush1.msra.mxu0 0.0
    %7621 = vmatprep.subr.mxu0 0.0
    %7622 = vmatpush1.msra.mxu0 0.0
    %7623 = vmatprep.subr.mxu0 0.0
    %7624 = vmatpush1.msra.mxu0 0.0
    %7625 = vmatprep.subr.mxu0 0.0
    %7626 = vmatpush1.msra.mxu0 0.0
    %7627 = vmatprep.subr.mxu0 0.0
    %7628 = vmatpush1.msra.mxu0 0.0
    %7629 = vmatprep.subr.mxu0 0.0
    %7630 = vmatpush1.msra.mxu0 0.0
    %7631 = vmatprep.subr.mxu0 0.0
    %7632 = vmatpush1.msra.mxu0 0.0
    %7633 = vmatprep.subr.mxu0 0.0
    %7634 = vmatpush1.msra.mxu0 0.0
    %7635 = vmatprep.subr.mxu0 0.0
    %7636 = vmatpush1.msra.mxu0 0.0
    %7637 = vmatprep.subr.mxu0 0.0
    %7638 = vmatpush1.msra.mxu0 0.0
    %7639 = vmatprep.subr.mxu0 0.0
    %7640 = vmatpush1.msra.mxu0 0.0
    %7641 = vmatprep.subr.mxu0 0.0
    %7642 = vmatpush1.msra.mxu0 0.0
    %7643 = vmatprep.subr.mxu0 0.0
    %7644 = vmatpush1.msra.mxu0 0.0
    %7645 = vmatprep.subr.mxu0 0.0
    %7646 = vmatpush1.msra.mxu0 0.0
    %7647 = vmatprep.subr.mxu0 0.0
    %7648 = vmatpush1.msra.mxu0 0.0
    %7649 = vmatprep.subr.mxu0 0.0
    %7650 = vmatpush1.msra.mxu0 0.0
    %7651 = vmatprep.subr.mxu0 0.0
    %7652 = vmatpush1.msra.mxu0 0.0
    %7653 = vmatprep.subr.mxu0 0.0
    %7654 = vmatpush1.msra.mxu0 0.0
    %7655 = vmatprep.subr.mxu0 0.0
    %7656 = vmatpush1.msra.mxu0 0.0
    %7657 = vmatprep.subr.mxu0 0.0
    %7658 = vmatpush1.msra.mxu0 0.0
    %7659 = vmatprep.subr.mxu0 0.0
    %7660 = vmatpush1.msra.mxu0 0.0
    %7661 = vmatprep.subr.mxu0 0.0
    %7662 = vmatpush1.msra.mxu0 0.0
    %7663 = vmatprep.subr.mxu0 0.0
    %7664 = vmatpush1.msra.mxu0 0.0
    %7665 = vmatprep.subr.mxu0 0.0
    %7666 = vmatpush1.msra.mxu0 0.0
    %7667 = vmatprep.subr.mxu0 0.0
    %7668 = vmatpush1.msra.mxu0 0.0
    %7669 = vmatprep.subr.mxu0 0.0
    %7670 = vmatpush1.msra.mxu0 0.0
    %7671 = vmatprep.mubr.f32.mxu0 0.0
    %7672 = vmatmul.mubr.f32.gmra.mrb[0].mxu0 %v5435
    %v7673 = vpop.f32.mrb[0].mxu0
    %v7674 = vadd.f32 %v7605, %v7673
    %v7675 = vpop.f32.mrb[0].mxu0
    %7676 = vmatprep.mubr.f32.mxu0 0.0
    %7677 = vmatmul.mubr.f32.gmra.mrb[0].mxu0 %v5438
    %v7678 = vpop.f32.mrb[0].mxu0
    %v7679 = vadd.f32 %v7605, %v7678
    %v7680 = vpop.f32.mrb[0].mxu0
    %7681 = vmatprep.mubr.f32.mxu0 0.0
    %7682 = vmatmul.mubr.f32.gmra.mrb[0].mxu0 %v5441
    %v7683 = vpop.f32.mrb[0].mxu0
    %v7684 = vadd.f32 %v7605, %v7683
    %v7685 = vpop.f32.mrb[0].mxu0
    %7686 = vmatprep.mubr.f32.mxu0 0.0
    %7687 = vmatmul.mubr.f32.gmra.mrb[0].mxu0 %v5444
    %v7688 = vpop.f32.mrb[0].mxu0
    %v7689 = vadd.f32 %v7605, %v7688
    %v7690 = vpop.f32.mrb[0].mxu0
    %7691 = vmatprep.mubr.f32.mxu0 0.0
    %7692 = vmatmul.mubr.f32.gmra.mrb[0].mxu0 %v5447
    %v7693 = vpop.f32.mrb[0].mxu0
    %v7694 = vadd.f32 %v7605, %v7693
    %v7695 = vpop.f32.mrb[0].mxu0
    %7696 = vmatprep.mubr.f32.mxu0 0.0
    %7697 = vmatmul.mubr.f32.gmra.mrb[0].mxu0 %v5450
    %v7698 = vpop.f32.mrb[0].mxu0
    %v7699 = vadd.f32 %v7605, %v7698
    %v7700 = vpop.f32.mrb[0].mxu0
    %7701 = vmatprep.mubr.f32.mxu0 0.0
    %7702 = vmatmul.mubr.f32.gmra.mrb[0].mxu0 %v5453
    %v7703 = vpop.f32.mrb[0].mxu0
    %v7704 = vadd.f32 %v7605, %v7703
    %v7705 = vpop.f32.mrb[0].mxu0
    %7706 = vmatprep.mubr.f32.mxu0 0.0
    %7707 = vmatmul.mubr.f32.gmra.mrb[0].mxu0 %v5456
    %v7708 = vpop.f32.mrb[0].mxu0
    %v7709 = vadd.f32 %v7605, %v7708
    %v7710 = vpop.f32.mrb[0].mxu0
    %7711 = vmatprep.mubr.f32.mxu0 0.0
    %7712 = vmatmul.mubr.f32.gmra.mrb[0].mxu0 %v5459
    %v7713 = vpop.f32.mrb[0].mxu0
    %v7714 = vadd.f32 %v7605, %v7713
    %v7715 = vpop.f32.mrb[0].mxu0
    %7716 = vmatprep.mubr.f32.mxu0 0.0
    %7717 = vmatmul.mubr.f32.gmra.mrb[0].mxu0 %v5462
    %v7718 = vpop.f32.mrb[0].mxu0
    %v7719 = vadd.f32 %v7605, %v7718
    %v7720 = vpop.f32.mrb[0].mxu0
    %7721 = vdwg.mxu0
    %v7723 = vsel %vm1233, %v7428, 0
    %v7726 = vsel %vm1233, %v7433, 0
    %v7729 = vsel %vm1233, %v7438, 0
    %v7732 = vsel %vm1233, %v7443, 0
    %v7735 = vsel %vm1233, %v7448, 0
    %v7738 = vsel %vm1233, %v7453, 0
    %v7741 = vsel %vm1233, %v7458, 0
    %v7744 = vsel %vm1233, %v7463, 0
    %v7747 = vsel %vm1233, %v7468, 0
    %v7750 = vsel %vm1233, %v7473, 0
    %v7753 = vsel %vm1233, %v7551, 0
    %v7756 = vsel %vm1233, %v7556, 0
    %v7759 = vsel %vm1233, %v7561, 0
    %v7762 = vsel %vm1233, %v7566, 0
    %v7765 = vsel %vm1233, %v7571, 0
    %v7768 = vsel %vm1233, %v7576, 0
    %v7771 = vsel %vm1233, %v7581, 0
    %v7774 = vsel %vm1233, %v7586, 0
    %v7777 = vsel %vm1233, %v7591, 0
    %v7780 = vsel %vm1233, %v7596, 0
    %7782 = vmatprep.subr.mxu0 0.0
    %7783 = vmatpush1.xpose.msra.mxu0 %v7753
    %7784 = vmatprep.subr.mxu0 0.0
    %7785 = vmatpush1.xpose.msra.mxu0 %v7756
    %7786 = vmatprep.subr.mxu0 0.0
    %7787 = vmatpush1.xpose.msra.mxu0 %v7759
    %7788 = vmatprep.subr.mxu0 0.0
    %7789 = vmatpush1.xpose.msra.mxu0 %v7762
    %7790 = vmatprep.subr.mxu0 0.0
    %7791 = vmatpush1.xpose.msra.mxu0 %v7765
    %7792 = vmatprep.subr.mxu0 0.0
    %7793 = vmatpush1.xpose.msra.mxu0 %v7768
    %7794 = vmatprep.subr.mxu0 0.0
    %7795 = vmatpush1.xpose.msra.mxu0 %v7771
    %7796 = vmatprep.subr.mxu0 0.0
    %7797 = vmatpush1.xpose.msra.mxu0 %v7774
    %7798 = vmatprep.subr.mxu0 0.0
    %7799 = vmatpush1.xpose.msra.mxu0 %v7777
    %7800 = vmatprep.subr.mxu0 0.0
    %7801 = vmatpush1.xpose.msra.mxu0 %v7780
    %7802 = vmatprep.subr.mxu0 0.0
    %7803 = vmatpush1.xpose.msra.mxu0 0.0
    %7804 = vmatprep.subr.mxu0 0.0
    %7805 = vmatpush1.xpose.msra.mxu0 0.0
    %7806 = vmatprep.subr.mxu0 0.0
    %7807 = vmatpush1.xpose.msra.mxu0 0.0
    %7808 = vmatprep.subr.mxu0 0.0
    %7809 = vmatpush1.xpose.msra.mxu0 0.0
    %7810 = vmatprep.subr.mxu0 0.0
    %7811 = vmatpush1.xpose.msra.mxu0 0.0
    %7812 = vmatprep.subr.mxu0 0.0
    %7813 = vmatpush1.xpose.msra.mxu0 0.0
    %7814 = vmatprep.subr.mxu0 0.0
    %7815 = vmatpush1.xpose.msra.mxu0 0.0
    %7816 = vmatprep.subr.mxu0 0.0
    %7817 = vmatpush1.xpose.msra.mxu0 0.0
    %7818 = vmatprep.subr.mxu0 0.0
    %7819 = vmatpush1.xpose.msra.mxu0 0.0
    %7820 = vmatprep.subr.mxu0 0.0
    %7821 = vmatpush1.xpose.msra.mxu0 0.0
    %7822 = vmatprep.subr.mxu0 0.0
    %7823 = vmatpush1.xpose.msra.mxu0 0.0
    %7824 = vmatprep.subr.mxu0 0.0
    %7825 = vmatpush1.xpose.msra.mxu0 0.0
    %7826 = vmatprep.subr.mxu0 0.0
    %7827 = vmatpush1.xpose.msra.mxu0 0.0
    %7828 = vmatprep.subr.mxu0 0.0
    %7829 = vmatpush1.xpose.msra.mxu0 0.0
    %7830 = vmatprep.subr.mxu0 0.0
    %7831 = vmatpush1.xpose.msra.mxu0 0.0
    %7832 = vmatprep.subr.mxu0 0.0
    %7833 = vmatpush1.xpose.msra.mxu0 0.0
    %7834 = vmatprep.subr.mxu0 0.0
    %7835 = vmatpush1.xpose.msra.mxu0 0.0
    %7836 = vmatprep.subr.mxu0 0.0
    %7837 = vmatpush1.xpose.msra.mxu0 0.0
    %7838 = vmatprep.subr.mxu0 0.0
    %7839 = vmatpush1.xpose.msra.mxu0 0.0
    %7840 = vmatprep.subr.mxu0 0.0
    %7841 = vmatpush1.xpose.msra.mxu0 0.0
    %7842 = vmatprep.subr.mxu0 0.0
    %7843 = vmatpush1.xpose.msra.mxu0 0.0
    %7844 = vmatprep.subr.mxu0 0.0
    %7845 = vmatpush1.xpose.msra.mxu0 0.0
    %7846 = vmatprep.mubr.f32.mxu0 0.0
    %7847 = vmatmul.mubr.f32.gmra.mrb[0].mxu0 %v7723
    %v7848 = vpop.f32.mrb[0].mxu0
    %v7849 = vadd.f32 %v662, %v7848
    %v7850 = vpop.f32.mrb[0].mxu0
    %7851 = vmatprep.mubr.f32.mxu0 0.0
    %7852 = vmatmul.mubr.f32.gmra.mrb[0].mxu0 %v7726
    %v7853 = vpop.f32.mrb[0].mxu0
    %v7854 = vadd.f32 %v663, %v7853
    %v7855 = vpop.f32.mrb[0].mxu0
    %7856 = vmatprep.mubr.f32.mxu0 0.0
    %7857 = vmatmul.mubr.f32.gmra.mrb[0].mxu0 %v7729
    %v7858 = vpop.f32.mrb[0].mxu0
    %v7859 = vadd.f32 %v664, %v7858
    %v7860 = vpop.f32.mrb[0].mxu0
    %7861 = vmatprep.mubr.f32.mxu0 0.0
    %7862 = vmatmul.mubr.f32.gmra.mrb[0].mxu0 %v7732
    %v7863 = vpop.f32.mrb[0].mxu0
    %v7864 = vadd.f32 %v665, %v7863
    %v7865 = vpop.f32.mrb[0].mxu0
    %7866 = vmatprep.mubr.f32.mxu0 0.0
    %7867 = vmatmul.mubr.f32.gmra.mrb[0].mxu0 %v7735
    %v7868 = vpop.f32.mrb[0].mxu0
    %v7869 = vadd.f32 %v666, %v7868
    %v7870 = vpop.f32.mrb[0].mxu0
    %7871 = vmatprep.mubr.f32.mxu0 0.0
    %7872 = vmatmul.mubr.f32.gmra.mrb[0].mxu0 %v7738
    %v7873 = vpop.f32.mrb[0].mxu0
    %v7874 = vadd.f32 %v667, %v7873
    %v7875 = vpop.f32.mrb[0].mxu0
    %7876 = vmatprep.mubr.f32.mxu0 0.0
    %7877 = vmatmul.mubr.f32.gmra.mrb[0].mxu0 %v7741
    %v7878 = vpop.f32.mrb[0].mxu0
    %v7879 = vadd.f32 %v668, %v7878
    %v7880 = vpop.f32.mrb[0].mxu0
    %7881 = vmatprep.mubr.f32.mxu0 0.0
    %7882 = vmatmul.mubr.f32.gmra.mrb[0].mxu0 %v7744
    %v7883 = vpop.f32.mrb[0].mxu0
    %v7884 = vadd.f32 %v669, %v7883
    %v7885 = vpop.f32.mrb[0].mxu0
    %7886 = vmatprep.mubr.f32.mxu0 0.0
    %7887 = vmatmul.mubr.f32.gmra.mrb[0].mxu0 %v7747
    %v7888 = vpop.f32.mrb[0].mxu0
    %v7889 = vadd.f32 %v670, %v7888
    %v7890 = vpop.f32.mrb[0].mxu0
    %7891 = vmatprep.mubr.f32.mxu0 0.0
    %7892 = vmatmul.mubr.f32.gmra.mrb[0].mxu0 %v7750
    %v7893 = vpop.f32.mrb[0].mxu0
    %v7894 = vadd.f32 %v671, %v7893
    %v7895 = vpop.f32.mrb[0].mxu0
    %7896 = vdwg.mxu0
    %v7897 = vsel %vm1409, %v7849, -inf
    %7898 = vmax.xlane.f32.xlu0 %v7897
    %v7899 = vpop.xlane.xlu0 %7898
    %v7900 = vsel %vm1409, %v7854, -inf
    %7901 = vmax.xlane.f32.xlu0 %v7900
    %v7902 = vpop.xlane.xlu0 %7901
    %v7903 = vsel %vm1409, %v7859, -inf
    %7904 = vmax.xlane.f32.xlu0 %v7903
    %v7905 = vpop.xlane.xlu0 %7904
    %v7906 = vsel %vm1409, %v7864, -inf
    %7907 = vmax.xlane.f32.xlu0 %v7906
    %v7908 = vpop.xlane.xlu0 %7907
    %v7909 = vsel %vm1409, %v7869, -inf
    %7910 = vmax.xlane.f32.xlu0 %v7909
    %v7911 = vpop.xlane.xlu0 %7910
    %v7912 = vsel %vm1409, %v7874, -inf
    %7913 = vmax.xlane.f32.xlu0 %v7912
    %v7914 = vpop.xlane.xlu0 %7913
    %v7915 = vsel %vm1409, %v7879, -inf
    %7916 = vmax.xlane.f32.xlu0 %v7915
    %v7917 = vpop.xlane.xlu0 %7916
    %v7918 = vsel %vm1409, %v7884, -inf
    %7919 = vmax.xlane.f32.xlu0 %v7918
    %v7920 = vpop.xlane.xlu0 %7919
    %v7921 = vsel %vm1409, %v7889, -inf
    %7922 = vmax.xlane.f32.xlu0 %v7921
    %v7923 = vpop.xlane.xlu0 %7922
    %v7924 = vsel %vm1409, %v7894, -inf
    %7925 = vmax.xlane.f32.xlu0 %v7924
    %v7926 = vpop.xlane.xlu0 %7925
    %v7927 = vsub.f32 %v7849, %v7899
    %v7928 = vsub.f32 %v7854, %v7902
    %v7929 = vsub.f32 %v7859, %v7905
    %v7930 = vsub.f32 %v7864, %v7908
    %v7931 = vsub.f32 %v7869, %v7911
    %v7932 = vsub.f32 %v7874, %v7914
    %v7933 = vsub.f32 %v7879, %v7917
    %v7934 = vsub.f32 %v7884, %v7920
    %v7935 = vsub.f32 %v7889, %v7923
    %v7936 = vsub.f32 %v7894, %v7926
    %v7937 = vmul.f32 %v7927, 1.442695
    %v7938 = vpow.pop %v7937
    %v7939 = vmul.f32 %v7928, 1.442695
    %v7940 = vpow.pop %v7939
    %v7941 = vmul.f32 %v7929, 1.442695
    %v7942 = vpow.pop %v7941
    %v7943 = vmul.f32 %v7930, 1.442695
    %v7944 = vpow.pop %v7943
    %v7945 = vmul.f32 %v7931, 1.442695
    %v7946 = vpow.pop %v7945
    %v7947 = vmul.f32 %v7932, 1.442695
    %v7948 = vpow.pop %v7947
    %v7949 = vmul.f32 %v7933, 1.442695
    %v7950 = vpow.pop %v7949
    %v7951 = vmul.f32 %v7934, 1.442695
    %v7952 = vpow.pop %v7951
    %v7953 = vmul.f32 %v7935, 1.442695
    %v7954 = vpow.pop %v7953
    %v7955 = vmul.f32 %v7936, 1.442695
    %v7956 = vpow.pop %v7955
    %v7957 = vsel %vm1409, %v7938, 0.0
    %7958 = vadd.xlane.f32.xlu0 %v7957
    %v7959 = vpop.xlane.xlu0 %7958
    %v7960 = vsel %vm1409, %v7940, 0.0
    %7961 = vadd.xlane.f32.xlu0 %v7960
    %v7962 = vpop.xlane.xlu0 %7961
    %v7963 = vsel %vm1409, %v7942, 0.0
    %7964 = vadd.xlane.f32.xlu0 %v7963
    %v7965 = vpop.xlane.xlu0 %7964
    %v7966 = vsel %vm1409, %v7944, 0.0
    %7967 = vadd.xlane.f32.xlu0 %v7966
    %v7968 = vpop.xlane.xlu0 %7967
    %v7969 = vsel %vm1409, %v7946, 0.0
    %7970 = vadd.xlane.f32.xlu0 %v7969
    %v7971 = vpop.xlane.xlu0 %7970
    %v7972 = vsel %vm1409, %v7948, 0.0
    %7973 = vadd.xlane.f32.xlu0 %v7972
    %v7974 = vpop.xlane.xlu0 %7973
    %v7975 = vsel %vm1409, %v7950, 0.0
    %7976 = vadd.xlane.f32.xlu0 %v7975
    %v7977 = vpop.xlane.xlu0 %7976
    %v7978 = vsel %vm1409, %v7952, 0.0
    %7979 = vadd.xlane.f32.xlu0 %v7978
    %v7980 = vpop.xlane.xlu0 %7979
    %v7981 = vsel %vm1409, %v7954, 0.0
    %7982 = vadd.xlane.f32.xlu0 %v7981
    %v7983 = vpop.xlane.xlu0 %7982
    %v7984 = vsel %vm1409, %v7956, 0.0
    %7985 = vadd.xlane.f32.xlu0 %v7984
    %v7986 = vpop.xlane.xlu0 %7985
    %v7987 = vrcp.pop %v7959
    %v7988 = vrcp.pop %v7962
    %v7989 = vrcp.pop %v7965
    %v7990 = vrcp.pop %v7968
    %v7991 = vrcp.pop %v7971
    %v7992 = vrcp.pop %v7974
    %v7993 = vrcp.pop %v7977
    %v7994 = vrcp.pop %v7980
    %v7995 = vrcp.pop %v7983
    %v7996 = vrcp.pop %v7986
    %v7997 = vmul.f32 %v7938, %v7987
    %v7998 = vmul.f32 %v7940, %v7988
    %v7999 = vmul.f32 %v7942, %v7989
    %v8000 = vmul.f32 %v7944, %v7990
    %v8001 = vmul.f32 %v7946, %v7991
    %v8002 = vmul.f32 %v7948, %v7992
    %v8003 = vmul.f32 %v7950, %v7993
    %v8004 = vmul.f32 %v7952, %v7994
    %v8005 = vmul.f32 %v7954, %v7995
    %v8006 = vmul.f32 %v7956, %v7996
    %v8008 = vsel %vm1409, %v7997, 0
    %v8011 = vsel %vm1409, %v7998, 0
    %v8014 = vsel %vm1409, %v7999, 0
    %v8017 = vsel %vm1409, %v8000, 0
    %v8020 = vsel %vm1409, %v8001, 0
    %v8023 = vsel %vm1409, %v8002, 0
    %v8026 = vsel %vm1409, %v8003, 0
    %v8029 = vsel %vm1409, %v8004, 0
    %v8032 = vsel %vm1409, %v8005, 0
    %v8035 = vsel %vm1409, %v8006, 0
    %8037 = vmatprep.subr.mxu0 0.0
    %8038 = vmatpush1.msra.mxu0 %v7674
    %8039 = vmatprep.subr.mxu0 0.0
    %8040 = vmatpush1.msra.mxu0 %v7679
    %8041 = vmatprep.subr.mxu0 0.0
    %8042 = vmatpush1.msra.mxu0 %v7684
    %8043 = vmatprep.subr.mxu0 0.0
    %8044 = vmatpush1.msra.mxu0 %v7689
    %8045 = vmatprep.subr.mxu0 0.0
    %8046 = vmatpush1.msra.mxu0 %v7694
    %8047 = vmatprep.subr.mxu0 0.0
    %8048 = vmatpush1.msra.mxu0 %v7699
    %8049 = vmatprep.subr.mxu0 0.0
    %8050 = vmatpush1.msra.mxu0 %v7704
    %8051 = vmatprep.subr.mxu0 0.0
    %8052 = vmatpush1.msra.mxu0 %v7709
    %8053 = vmatprep.subr.mxu0 0.0
    %8054 = vmatpush1.msra.mxu0 %v7714
    %8055 = vmatprep.subr.mxu0 0.0
    %8056 = vmatpush1.msra.mxu0 %v7719
    %8057 = vmatprep.subr.mxu0 0.0
    %8058 = vmatpush1.msra.mxu0 0.0
    %8059 = vmatprep.subr.mxu0 0.0
    %8060 = vmatpush1.msra.mxu0 0.0
    %8061 = vmatprep.subr.mxu0 0.0
    %8062 = vmatpush1.msra.mxu0 0.0
    %8063 = vmatprep.subr.mxu0 0.0
    %8064 = vmatpush1.msra.mxu0 0.0
    %8065 = vmatprep.subr.mxu0 0.0
    %8066 = vmatpush1.msra.mxu0 0.0
    %8067 = vmatprep.subr.mxu0 0.0
    %8068 = vmatpush1.msra.mxu0 0.0
    %8069 = vmatprep.subr.mxu0 0.0
    %8070 = vmatpush1.msra.mxu0 0.0
    %8071 = vmatprep.subr.mxu0 0.0
    %8072 = vmatpush1.msra.mxu0 0.0
    %8073 = vmatprep.subr.mxu0 0.0
    %8074 = vmatpush1.msra.mxu0 0.0
    %8075 = vmatprep.subr.mxu0 0.0
    %8076 = vmatpush1.msra.mxu0 0.0
    %8077 = vmatprep.subr.mxu0 0.0
    %8078 = vmatpush1.msra.mxu0 0.0
    %8079 = vmatprep.subr.mxu0 0.0
    %8080 = vmatpush1.msra.mxu0 0.0
    %8081 = vmatprep.subr.mxu0 0.0
    %8082 = vmatpush1.msra.mxu0 0.0
    %8083 = vmatprep.subr.mxu0 0.0
    %8084 = vmatpush1.msra.mxu0 0.0
    %8085 = vmatprep.subr.mxu0 0.0
    %8086 = vmatpush1.msra.mxu0 0.0
    %8087 = vmatprep.subr.mxu0 0.0
    %8088 = vmatpush1.msra.mxu0 0.0
    %8089 = vmatprep.subr.mxu0 0.0
    %8090 = vmatpush1.msra.mxu0 0.0
    %8091 = vmatprep.subr.mxu0 0.0
    %8092 = vmatpush1.msra.mxu0 0.0
    %8093 = vmatprep.subr.mxu0 0.0
    %8094 = vmatpush1.msra.mxu0 0.0
    %8095 = vmatprep.subr.mxu0 0.0
    %8096 = vmatpush1.msra.mxu0 0.0
    %8097 = vmatprep.subr.mxu0 0.0
    %8098 = vmatpush1.msra.mxu0 0.0
    %8099 = vmatprep.subr.mxu0 0.0
    %8100 = vmatpush1.msra.mxu0 0.0
    %8101 = vmatprep.mubr.f32.mxu0 0.0
    %8102 = vmatmul.mubr.f32.gmra.mrb[0].mxu0 %v8008
    %v8103 = vpop.f32.mrb[0].mxu0
    %v8104 = vadd.f32 0.0, %v8103
    %v8105 = vpop.f32.mrb[0].mxu0
    %8106 = vmatprep.mubr.f32.mxu0 0.0
    %8107 = vmatmul.mubr.f32.gmra.mrb[0].mxu0 %v8011
    %v8108 = vpop.f32.mrb[0].mxu0
    %v8109 = vadd.f32 0.0, %v8108
    %v8110 = vpop.f32.mrb[0].mxu0
    %8111 = vmatprep.mubr.f32.mxu0 0.0
    %8112 = vmatmul.mubr.f32.gmra.mrb[0].mxu0 %v8014
    %v8113 = vpop.f32.mrb[0].mxu0
    %v8114 = vadd.f32 0.0, %v8113
    %v8115 = vpop.f32.mrb[0].mxu0
    %8116 = vmatprep.mubr.f32.mxu0 0.0
    %8117 = vmatmul.mubr.f32.gmra.mrb[0].mxu0 %v8017
    %v8118 = vpop.f32.mrb[0].mxu0
    %v8119 = vadd.f32 0.0, %v8118
    %v8120 = vpop.f32.mrb[0].mxu0
    %8121 = vmatprep.mubr.f32.mxu0 0.0
    %8122 = vmatmul.mubr.f32.gmra.mrb[0].mxu0 %v8020
    %v8123 = vpop.f32.mrb[0].mxu0
    %v8124 = vadd.f32 0.0, %v8123
    %v8125 = vpop.f32.mrb[0].mxu0
    %8126 = vmatprep.mubr.f32.mxu0 0.0
    %8127 = vmatmul.mubr.f32.gmra.mrb[0].mxu0 %v8023
    %v8128 = vpop.f32.mrb[0].mxu0
    %v8129 = vadd.f32 0.0, %v8128
    %v8130 = vpop.f32.mrb[0].mxu0
    %8131 = vmatprep.mubr.f32.mxu0 0.0
    %8132 = vmatmul.mubr.f32.gmra.mrb[0].mxu0 %v8026
    %v8133 = vpop.f32.mrb[0].mxu0
    %v8134 = vadd.f32 0.0, %v8133
    %v8135 = vpop.f32.mrb[0].mxu0
    %8136 = vmatprep.mubr.f32.mxu0 0.0
    %8137 = vmatmul.mubr.f32.gmra.mrb[0].mxu0 %v8029
    %v8138 = vpop.f32.mrb[0].mxu0
    %v8139 = vadd.f32 0.0, %v8138
    %v8140 = vpop.f32.mrb[0].mxu0
    %8141 = vmatprep.mubr.f32.mxu0 0.0
    %8142 = vmatmul.mubr.f32.gmra.mrb[0].mxu0 %v8032
    %v8143 = vpop.f32.mrb[0].mxu0
    %v8144 = vadd.f32 0.0, %v8143
    %v8145 = vpop.f32.mrb[0].mxu0
    %8146 = vmatprep.mubr.f32.mxu0 0.0
    %8147 = vmatmul.mubr.f32.gmra.mrb[0].mxu0 %v8035
    %v8148 = vpop.f32.mrb[0].mxu0
    %v8149 = vadd.f32 0.0, %v8148
    %v8150 = vpop.f32.mrb[0].mxu0
    %8151 = vdwg.mxu0
    %s8152 = scalar_lea.vmem %s10, 48
    %v8153 = vld [vmem:[%s8152] sm:$0xff]
    %v8155 = vsel %vm1233, %v8104, 0
    %v8158 = vsel %vm1233, %v8109, 0
    %v8161 = vsel %vm1233, %v8114, 0
    %v8164 = vsel %vm1233, %v8119, 0
    %v8167 = vsel %vm1233, %v8124, 0
    %v8170 = vsel %vm1233, %v8129, 0
    %v8173 = vsel %vm1233, %v8134, 0
    %v8176 = vsel %vm1233, %v8139, 0
    %v8179 = vsel %vm1233, %v8144, 0
    %v8182 = vsel %vm1233, %v8149, 0
    %8184 = vmatprep.subr.mxu0 0.0
    %8185 = vmatpush1.msra.mxu0 %v8153
    %8186 = vmatprep.subr.mxu0 0.0
    %8187 = vmatpush1.msra.mxu0 0.0
    %8188 = vmatprep.subr.mxu0 0.0
    %8189 = vmatpush1.msra.mxu0 0.0
    %8190 = vmatprep.subr.mxu0 0.0
    %8191 = vmatpush1.msra.mxu0 0.0
    %8192 = vmatprep.subr.mxu0 0.0
    %8193 = vmatpush1.msra.mxu0 0.0
    %8194 = vmatprep.subr.mxu0 0.0
    %8195 = vmatpush1.msra.mxu0 0.0
    %8196 = vmatprep.subr.mxu0 0.0
    %8197 = vmatpush1.msra.mxu0 0.0
    %8198 = vmatprep.subr.mxu0 0.0
    %8199 = vmatpush1.msra.mxu0 0.0
    %8200 = vmatprep.subr.mxu0 0.0
    %8201 = vmatpush1.msra.mxu0 0.0
    %8202 = vmatprep.subr.mxu0 0.0
    %8203 = vmatpush1.msra.mxu0 0.0
    %8204 = vmatprep.subr.mxu0 0.0
    %8205 = vmatpush1.msra.mxu0 0.0
    %8206 = vmatprep.subr.mxu0 0.0
    %8207 = vmatpush1.msra.mxu0 0.0
    %8208 = vmatprep.subr.mxu0 0.0
    %8209 = vmatpush1.msra.mxu0 0.0
    %8210 = vmatprep.subr.mxu0 0.0
    %8211 = vmatpush1.msra.mxu0 0.0
    %8212 = vmatprep.subr.mxu0 0.0
    %8213 = vmatpush1.msra.mxu0 0.0
    %8214 = vmatprep.subr.mxu0 0.0
    %8215 = vmatpush1.msra.mxu0 0.0
    %8216 = vmatprep.subr.mxu0 0.0
    %8217 = vmatpush1.msra.mxu0 0.0
    %8218 = vmatprep.subr.mxu0 0.0
    %8219 = vmatpush1.msra.mxu0 0.0
    %8220 = vmatprep.subr.mxu0 0.0
    %8221 = vmatpush1.msra.mxu0 0.0
    %8222 = vmatprep.subr.mxu0 0.0
    %8223 = vmatpush1.msra.mxu0 0.0
    %8224 = vmatprep.subr.mxu0 0.0
    %8225 = vmatpush1.msra.mxu0 0.0
    %8226 = vmatprep.subr.mxu0 0.0
    %8227 = vmatpush1.msra.mxu0 0.0
    %8228 = vmatprep.subr.mxu0 0.0
    %8229 = vmatpush1.msra.mxu0 0.0
    %8230 = vmatprep.subr.mxu0 0.0
    %8231 = vmatpush1.msra.mxu0 0.0
    %8232 = vmatprep.subr.mxu0 0.0
    %8233 = vmatpush1.msra.mxu0 0.0
    %8234 = vmatprep.subr.mxu0 0.0
    %8235 = vmatpush1.msra.mxu0 0.0
    %8236 = vmatprep.subr.mxu0 0.0
    %8237 = vmatpush1.msra.mxu0 0.0
    %8238 = vmatprep.subr.mxu0 0.0
    %8239 = vmatpush1.msra.mxu0 0.0
    %8240 = vmatprep.subr.mxu0 0.0
    %8241 = vmatpush1.msra.mxu0 0.0
    %8242 = vmatprep.subr.mxu0 0.0
    %8243 = vmatpush1.msra.mxu0 0.0
    %8244 = vmatprep.subr.mxu0 0.0
    %8245 = vmatpush1.msra.mxu0 0.0
    %8246 = vmatprep.subr.mxu0 0.0
    %8247 = vmatpush1.msra.mxu0 0.0
    %8248 = vmatprep.mubr.f32.mxu0 0.0
    %8249 = vmatmul.mubr.f32.gmra.mrb[0].mxu0 %v8155
    %v8250 = vpop.f32.mrb[0].mxu0
    %v8251 = vadd.f32 0.0, %v8250
    %v8252 = vpop.f32.mrb[0].mxu0
    %8253 = vmatprep.mubr.f32.mxu0 0.0
    %8254 = vmatmul.mubr.f32.gmra.mrb[0].mxu0 %v8158
    %v8255 = vpop.f32.mrb[0].mxu0
    %v8256 = vadd.f32 0.0, %v8255
    %v8257 = vpop.f32.mrb[0].mxu0
    %8258 = vmatprep.mubr.f32.mxu0 0.0
    %8259 = vmatmul.mubr.f32.gmra.mrb[0].mxu0 %v8161
    %v8260 = vpop.f32.mrb[0].mxu0
    %v8261 = vadd.f32 0.0, %v8260
    %v8262 = vpop.f32.mrb[0].mxu0
    %8263 = vmatprep.mubr.f32.mxu0 0.0
    %8264 = vmatmul.mubr.f32.gmra.mrb[0].mxu0 %v8164
    %v8265 = vpop.f32.mrb[0].mxu0
    %v8266 = vadd.f32 0.0, %v8265
    %v8267 = vpop.f32.mrb[0].mxu0
    %8268 = vmatprep.mubr.f32.mxu0 0.0
    %8269 = vmatmul.mubr.f32.gmra.mrb[0].mxu0 %v8167
    %v8270 = vpop.f32.mrb[0].mxu0
    %v8271 = vadd.f32 0.0, %v8270
    %v8272 = vpop.f32.mrb[0].mxu0
    %8273 = vmatprep.mubr.f32.mxu0 0.0
    %8274 = vmatmul.mubr.f32.gmra.mrb[0].mxu0 %v8170
    %v8275 = vpop.f32.mrb[0].mxu0
    %v8276 = vadd.f32 0.0, %v8275
    %v8277 = vpop.f32.mrb[0].mxu0
    %8278 = vmatprep.mubr.f32.mxu0 0.0
    %8279 = vmatmul.mubr.f32.gmra.mrb[0].mxu0 %v8173
    %v8280 = vpop.f32.mrb[0].mxu0
    %v8281 = vadd.f32 0.0, %v8280
    %v8282 = vpop.f32.mrb[0].mxu0
    %8283 = vmatprep.mubr.f32.mxu0 0.0
    %8284 = vmatmul.mubr.f32.gmra.mrb[0].mxu0 %v8176
    %v8285 = vpop.f32.mrb[0].mxu0
    %v8286 = vadd.f32 0.0, %v8285
    %v8287 = vpop.f32.mrb[0].mxu0
    %8288 = vmatprep.mubr.f32.mxu0 0.0
    %8289 = vmatmul.mubr.f32.gmra.mrb[0].mxu0 %v8179
    %v8290 = vpop.f32.mrb[0].mxu0
    %v8291 = vadd.f32 0.0, %v8290
    %v8292 = vpop.f32.mrb[0].mxu0
    %8293 = vmatprep.mubr.f32.mxu0 0.0
    %8294 = vmatmul.mubr.f32.gmra.mrb[0].mxu0 %v8182
    %v8295 = vpop.f32.mrb[0].mxu0
    %v8296 = vadd.f32 0.0, %v8295
    %v8297 = vpop.f32.mrb[0].mxu0
    %8298 = vdwg.mxu0
    %v8299 = vadd.f32 %v7305, %v8251
    %v8300 = vadd.f32 %v7310, %v8256
    %v8301 = vadd.f32 %v7315, %v8261
    %v8302 = vadd.f32 %v7320, %v8266
    %v8303 = vadd.f32 %v7325, %v8271
    %v8304 = vadd.f32 %v7330, %v8276
    %v8305 = vadd.f32 %v7335, %v8281
    %v8306 = vadd.f32 %v7340, %v8286
    %v8307 = vadd.f32 %v7345, %v8291
    %v8308 = vadd.f32 %v7350, %v8296
    %s8309 = scalar_lea.vmem %s7, 224
    %v8310 = vld [vmem:[%s8309] sm:$0xff]
    %v8311 = vld [vmem:[%s8309 + $0x8] sm:$0xff]
    %v8312 = vld [vmem:[%s8309 + $0x10] sm:$0xff]
    %v8313 = vld [vmem:[%s8309 + $0x18] sm:$0xff]
    %8314 = vrot.lane.b32.xlu0 %v5433, 104
    %v8315 = vpop.permute.xlu0 %8314
    %8317 = vmatprep.subr.mxu0 0.0
    %8318 = vmatpush1.msra.mxu0 %v8310
    %8319 = vmatprep.subr.mxu0 0.0
    %8320 = vmatpush1.msra.mxu0 %v8311
    %8321 = vmatprep.subr.mxu0 0.0
    %8322 = vmatpush1.msra.mxu0 %v8312
    %8323 = vmatprep.subr.mxu0 0.0
    %8324 = vmatpush1.msra.mxu0 %v8313
    %8325 = vmatprep.subr.mxu0 0.0
    %8326 = vmatpush1.msra.mxu0 0.0
    %8327 = vmatprep.subr.mxu0 0.0
    %8328 = vmatpush1.msra.mxu0 0.0
    %8329 = vmatprep.subr.mxu0 0.0
    %8330 = vmatpush1.msra.mxu0 0.0
    %8331 = vmatprep.subr.mxu0 0.0
    %8332 = vmatpush1.msra.mxu0 0.0
    %8333 = vmatprep.subr.mxu0 0.0
    %8334 = vmatpush1.msra.mxu0 0.0
    %8335 = vmatprep.subr.mxu0 0.0
    %8336 = vmatpush1.msra.mxu0 0.0
    %8337 = vmatprep.subr.mxu0 0.0
    %8338 = vmatpush1.msra.mxu0 0.0
    %8339 = vmatprep.subr.mxu0 0.0
    %8340 = vmatpush1.msra.mxu0 0.0
    %8341 = vmatprep.subr.mxu0 0.0
    %8342 = vmatpush1.msra.mxu0 0.0
    %8343 = vmatprep.subr.mxu0 0.0
    %8344 = vmatpush1.msra.mxu0 0.0
    %8345 = vmatprep.subr.mxu0 0.0
    %8346 = vmatpush1.msra.mxu0 0.0
    %8347 = vmatprep.subr.mxu0 0.0
    %8348 = vmatpush1.msra.mxu0 0.0
    %8349 = vmatprep.subr.mxu0 0.0
    %8350 = vmatpush1.msra.mxu0 0.0
    %8351 = vmatprep.subr.mxu0 0.0
    %8352 = vmatpush1.msra.mxu0 0.0
    %8353 = vmatprep.subr.mxu0 0.0
    %8354 = vmatpush1.msra.mxu0 0.0
    %8355 = vmatprep.subr.mxu0 0.0
    %8356 = vmatpush1.msra.mxu0 0.0
    %8357 = vmatprep.subr.mxu0 0.0
    %8358 = vmatpush1.msra.mxu0 0.0
    %8359 = vmatprep.subr.mxu0 0.0
    %8360 = vmatpush1.msra.mxu0 0.0
    %8361 = vmatprep.subr.mxu0 0.0
    %8362 = vmatpush1.msra.mxu0 0.0
    %8363 = vmatprep.subr.mxu0 0.0
    %8364 = vmatpush1.msra.mxu0 0.0
    %8365 = vmatprep.subr.mxu0 0.0
    %8366 = vmatpush1.msra.mxu0 0.0
    %8367 = vmatprep.subr.mxu0 0.0
    %8368 = vmatpush1.msra.mxu0 0.0
    %8369 = vmatprep.subr.mxu0 0.0
    %8370 = vmatpush1.msra.mxu0 0.0
    %8371 = vmatprep.subr.mxu0 0.0
    %8372 = vmatpush1.msra.mxu0 0.0
    %8373 = vmatprep.subr.mxu0 0.0
    %8374 = vmatpush1.msra.mxu0 0.0
    %8375 = vmatprep.subr.mxu0 0.0
    %8376 = vmatpush1.msra.mxu0 0.0
    %8377 = vmatprep.subr.mxu0 0.0
    %8378 = vmatpush1.msra.mxu0 0.0
    %8379 = vmatprep.subr.mxu0 0.0
    %8380 = vmatpush1.msra.mxu0 0.0
    %8381 = vmatprep.mubr.f32.mxu0 0.0
    %8382 = vmatmul.mubr.f32.gmra.mrb[0].mxu0 %v5435
    %v8383 = vpop.f32.mrb[0].mxu0
    %v8384 = vadd.f32 %v8315, %v8383
    %v8385 = vpop.f32.mrb[0].mxu0
    %8386 = vmatprep.mubr.f32.mxu0 0.0
    %8387 = vmatmul.mubr.f32.gmra.mrb[0].mxu0 %v5438
    %v8388 = vpop.f32.mrb[0].mxu0
    %v8389 = vadd.f32 %v8315, %v8388
    %v8390 = vpop.f32.mrb[0].mxu0
    %8391 = vmatprep.mubr.f32.mxu0 0.0
    %8392 = vmatmul.mubr.f32.gmra.mrb[0].mxu0 %v5441
    %v8393 = vpop.f32.mrb[0].mxu0
    %v8394 = vadd.f32 %v8315, %v8393
    %v8395 = vpop.f32.mrb[0].mxu0
    %8396 = vmatprep.mubr.f32.mxu0 0.0
    %8397 = vmatmul.mubr.f32.gmra.mrb[0].mxu0 %v5444
    %v8398 = vpop.f32.mrb[0].mxu0
    %v8399 = vadd.f32 %v8315, %v8398
    %v8400 = vpop.f32.mrb[0].mxu0
    %8401 = vmatprep.mubr.f32.mxu0 0.0
    %8402 = vmatmul.mubr.f32.gmra.mrb[0].mxu0 %v5447
    %v8403 = vpop.f32.mrb[0].mxu0
    %v8404 = vadd.f32 %v8315, %v8403
    %v8405 = vpop.f32.mrb[0].mxu0
    %8406 = vmatprep.mubr.f32.mxu0 0.0
    %8407 = vmatmul.mubr.f32.gmra.mrb[0].mxu0 %v5450
    %v8408 = vpop.f32.mrb[0].mxu0
    %v8409 = vadd.f32 %v8315, %v8408
    %v8410 = vpop.f32.mrb[0].mxu0
    %8411 = vmatprep.mubr.f32.mxu0 0.0
    %8412 = vmatmul.mubr.f32.gmra.mrb[0].mxu0 %v5453
    %v8413 = vpop.f32.mrb[0].mxu0
    %v8414 = vadd.f32 %v8315, %v8413
    %v8415 = vpop.f32.mrb[0].mxu0
    %8416 = vmatprep.mubr.f32.mxu0 0.0
    %8417 = vmatmul.mubr.f32.gmra.mrb[0].mxu0 %v5456
    %v8418 = vpop.f32.mrb[0].mxu0
    %v8419 = vadd.f32 %v8315, %v8418
    %v8420 = vpop.f32.mrb[0].mxu0
    %8421 = vmatprep.mubr.f32.mxu0 0.0
    %8422 = vmatmul.mubr.f32.gmra.mrb[0].mxu0 %v5459
    %v8423 = vpop.f32.mrb[0].mxu0
    %v8424 = vadd.f32 %v8315, %v8423
    %v8425 = vpop.f32.mrb[0].mxu0
    %8426 = vmatprep.mubr.f32.mxu0 0.0
    %8427 = vmatmul.mubr.f32.gmra.mrb[0].mxu0 %v5462
    %v8428 = vpop.f32.mrb[0].mxu0
    %v8429 = vadd.f32 %v8315, %v8428
    %v8430 = vpop.f32.mrb[0].mxu0
    %8431 = vdwg.mxu0
    %s8432 = scalar_lea.vmem %s8, 224
    %v8433 = vld [vmem:[%s8432] sm:$0xff]
    %v8434 = vld [vmem:[%s8432 + $0x8] sm:$0xff]
    %v8435 = vld [vmem:[%s8432 + $0x10] sm:$0xff]
    %v8436 = vld [vmem:[%s8432 + $0x18] sm:$0xff]
    %8437 = vrot.lane.b32.xlu0 %v5587, 104
    %v8438 = vpop.permute.xlu0 %8437
    %8440 = vmatprep.subr.mxu0 0.0
    %8441 = vmatpush1.msra.mxu0 %v8433
    %8442 = vmatprep.subr.mxu0 0.0
    %8443 = vmatpush1.msra.mxu0 %v8434
    %8444 = vmatprep.subr.mxu0 0.0
    %8445 = vmatpush1.msra.mxu0 %v8435
    %8446 = vmatprep.subr.mxu0 0.0
    %8447 = vmatpush1.msra.mxu0 %v8436
    %8448 = vmatprep.subr.mxu0 0.0
    %8449 = vmatpush1.msra.mxu0 0.0
    %8450 = vmatprep.subr.mxu0 0.0
    %8451 = vmatpush1.msra.mxu0 0.0
    %8452 = vmatprep.subr.mxu0 0.0
    %8453 = vmatpush1.msra.mxu0 0.0
    %8454 = vmatprep.subr.mxu0 0.0
    %8455 = vmatpush1.msra.mxu0 0.0
    %8456 = vmatprep.subr.mxu0 0.0
    %8457 = vmatpush1.msra.mxu0 0.0
    %8458 = vmatprep.subr.mxu0 0.0
    %8459 = vmatpush1.msra.mxu0 0.0
    %8460 = vmatprep.subr.mxu0 0.0
    %8461 = vmatpush1.msra.mxu0 0.0
    %8462 = vmatprep.subr.mxu0 0.0
    %8463 = vmatpush1.msra.mxu0 0.0
    %8464 = vmatprep.subr.mxu0 0.0
    %8465 = vmatpush1.msra.mxu0 0.0
    %8466 = vmatprep.subr.mxu0 0.0
    %8467 = vmatpush1.msra.mxu0 0.0
    %8468 = vmatprep.subr.mxu0 0.0
    %8469 = vmatpush1.msra.mxu0 0.0
    %8470 = vmatprep.subr.mxu0 0.0
    %8471 = vmatpush1.msra.mxu0 0.0
    %8472 = vmatprep.subr.mxu0 0.0
    %8473 = vmatpush1.msra.mxu0 0.0
    %8474 = vmatprep.subr.mxu0 0.0
    %8475 = vmatpush1.msra.mxu0 0.0
    %8476 = vmatprep.subr.mxu0 0.0
    %8477 = vmatpush1.msra.mxu0 0.0
    %8478 = vmatprep.subr.mxu0 0.0
    %8479 = vmatpush1.msra.mxu0 0.0
    %8480 = vmatprep.subr.mxu0 0.0
    %8481 = vmatpush1.msra.mxu0 0.0
    %8482 = vmatprep.subr.mxu0 0.0
    %8483 = vmatpush1.msra.mxu0 0.0
    %8484 = vmatprep.subr.mxu0 0.0
    %8485 = vmatpush1.msra.mxu0 0.0
    %8486 = vmatprep.subr.mxu0 0.0
    %8487 = vmatpush1.msra.mxu0 0.0
    %8488 = vmatprep.subr.mxu0 0.0
    %8489 = vmatpush1.msra.mxu0 0.0
    %8490 = vmatprep.subr.mxu0 0.0
    %8491 = vmatpush1.msra.mxu0 0.0
    %8492 = vmatprep.subr.mxu0 0.0
    %8493 = vmatpush1.msra.mxu0 0.0
    %8494 = vmatprep.subr.mxu0 0.0
    %8495 = vmatpush1.msra.mxu0 0.0
    %8496 = vmatprep.subr.mxu0 0.0
    %8497 = vmatpush1.msra.mxu0 0.0
    %8498 = vmatprep.subr.mxu0 0.0
    %8499 = vmatpush1.msra.mxu0 0.0
    %8500 = vmatprep.subr.mxu0 0.0
    %8501 = vmatpush1.msra.mxu0 0.0
    %8502 = vmatprep.subr.mxu0 0.0
    %8503 = vmatpush1.msra.mxu0 0.0
    %8504 = vmatprep.mubr.f32.mxu0 0.0
    %8505 = vmatmul.mubr.f32.gmra.mrb[0].mxu0 %v5435
    %v8506 = vpop.f32.mrb[0].mxu0
    %v8507 = vadd.f32 %v8438, %v8506
    %v8508 = vpop.f32.mrb[0].mxu0
    %8509 = vmatprep.mubr.f32.mxu0 0.0
    %8510 = vmatmul.mubr.f32.gmra.mrb[0].mxu0 %v5438
    %v8511 = vpop.f32.mrb[0].mxu0
    %v8512 = vadd.f32 %v8438, %v8511
    %v8513 = vpop.f32.mrb[0].mxu0
    %8514 = vmatprep.mubr.f32.mxu0 0.0
    %8515 = vmatmul.mubr.f32.gmra.mrb[0].mxu0 %v5441
    %v8516 = vpop.f32.mrb[0].mxu0
    %v8517 = vadd.f32 %v8438, %v8516
    %v8518 = vpop.f32.mrb[0].mxu0
    %8519 = vmatprep.mubr.f32.mxu0 0.0
    %8520 = vmatmul.mubr.f32.gmra.mrb[0].mxu0 %v5444
    %v8521 = vpop.f32.mrb[0].mxu0
    %v8522 = vadd.f32 %v8438, %v8521
    %v8523 = vpop.f32.mrb[0].mxu0
    %8524 = vmatprep.mubr.f32.mxu0 0.0
    %8525 = vmatmul.mubr.f32.gmra.mrb[0].mxu0 %v5447
    %v8526 = vpop.f32.mrb[0].mxu0
    %v8527 = vadd.f32 %v8438, %v8526
    %v8528 = vpop.f32.mrb[0].mxu0
    %8529 = vmatprep.mubr.f32.mxu0 0.0
    %8530 = vmatmul.mubr.f32.gmra.mrb[0].mxu0 %v5450
    %v8531 = vpop.f32.mrb[0].mxu0
    %v8532 = vadd.f32 %v8438, %v8531
    %v8533 = vpop.f32.mrb[0].mxu0
    %8534 = vmatprep.mubr.f32.mxu0 0.0
    %8535 = vmatmul.mubr.f32.gmra.mrb[0].mxu0 %v5453
    %v8536 = vpop.f32.mrb[0].mxu0
    %v8537 = vadd.f32 %v8438, %v8536
    %v8538 = vpop.f32.mrb[0].mxu0
    %8539 = vmatprep.mubr.f32.mxu0 0.0
    %8540 = vmatmul.mubr.f32.gmra.mrb[0].mxu0 %v5456
    %v8541 = vpop.f32.mrb[0].mxu0
    %v8542 = vadd.f32 %v8438, %v8541
    %v8543 = vpop.f32.mrb[0].mxu0
    %8544 = vmatprep.mubr.f32.mxu0 0.0
    %8545 = vmatmul.mubr.f32.gmra.mrb[0].mxu0 %v5459
    %v8546 = vpop.f32.mrb[0].mxu0
    %v8547 = vadd.f32 %v8438, %v8546
    %v8548 = vpop.f32.mrb[0].mxu0
    %8549 = vmatprep.mubr.f32.mxu0 0.0
    %8550 = vmatmul.mubr.f32.gmra.mrb[0].mxu0 %v5462
    %v8551 = vpop.f32.mrb[0].mxu0
    %v8552 = vadd.f32 %v8438, %v8551
    %v8553 = vpop.f32.mrb[0].mxu0
    %8554 = vdwg.mxu0
    %s8555 = scalar_lea.vmem %s9, 224
    %v8556 = vld [vmem:[%s8555] sm:$0xff]
    %v8557 = vld [vmem:[%s8555 + $0x8] sm:$0xff]
    %v8558 = vld [vmem:[%s8555 + $0x10] sm:$0xff]
    %v8559 = vld [vmem:[%s8555 + $0x18] sm:$0xff]
    %8560 = vrot.lane.b32.xlu0 %v5711, 104
    %v8561 = vpop.permute.xlu0 %8560
    %8563 = vmatprep.subr.mxu0 0.0
    %8564 = vmatpush1.msra.mxu0 %v8556
    %8565 = vmatprep.subr.mxu0 0.0
    %8566 = vmatpush1.msra.mxu0 %v8557
    %8567 = vmatprep.subr.mxu0 0.0
    %8568 = vmatpush1.msra.mxu0 %v8558
    %8569 = vmatprep.subr.mxu0 0.0
    %8570 = vmatpush1.msra.mxu0 %v8559
    %8571 = vmatprep.subr.mxu0 0.0
    %8572 = vmatpush1.msra.mxu0 0.0
    %8573 = vmatprep.subr.mxu0 0.0
    %8574 = vmatpush1.msra.mxu0 0.0
    %8575 = vmatprep.subr.mxu0 0.0
    %8576 = vmatpush1.msra.mxu0 0.0
    %8577 = vmatprep.subr.mxu0 0.0
    %8578 = vmatpush1.msra.mxu0 0.0
    %8579 = vmatprep.subr.mxu0 0.0
    %8580 = vmatpush1.msra.mxu0 0.0
    %8581 = vmatprep.subr.mxu0 0.0
    %8582 = vmatpush1.msra.mxu0 0.0
    %8583 = vmatprep.subr.mxu0 0.0
    %8584 = vmatpush1.msra.mxu0 0.0
    %8585 = vmatprep.subr.mxu0 0.0
    %8586 = vmatpush1.msra.mxu0 0.0
    %8587 = vmatprep.subr.mxu0 0.0
    %8588 = vmatpush1.msra.mxu0 0.0
    %8589 = vmatprep.subr.mxu0 0.0
    %8590 = vmatpush1.msra.mxu0 0.0
    %8591 = vmatprep.subr.mxu0 0.0
    %8592 = vmatpush1.msra.mxu0 0.0
    %8593 = vmatprep.subr.mxu0 0.0
    %8594 = vmatpush1.msra.mxu0 0.0
    %8595 = vmatprep.subr.mxu0 0.0
    %8596 = vmatpush1.msra.mxu0 0.0
    %8597 = vmatprep.subr.mxu0 0.0
    %8598 = vmatpush1.msra.mxu0 0.0
    %8599 = vmatprep.subr.mxu0 0.0
    %8600 = vmatpush1.msra.mxu0 0.0
    %8601 = vmatprep.subr.mxu0 0.0
    %8602 = vmatpush1.msra.mxu0 0.0
    %8603 = vmatprep.subr.mxu0 0.0
    %8604 = vmatpush1.msra.mxu0 0.0
    %8605 = vmatprep.subr.mxu0 0.0
    %8606 = vmatpush1.msra.mxu0 0.0
    %8607 = vmatprep.subr.mxu0 0.0
    %8608 = vmatpush1.msra.mxu0 0.0
    %8609 = vmatprep.subr.mxu0 0.0
    %8610 = vmatpush1.msra.mxu0 0.0
    %8611 = vmatprep.subr.mxu0 0.0
    %8612 = vmatpush1.msra.mxu0 0.0
    %8613 = vmatprep.subr.mxu0 0.0
    %8614 = vmatpush1.msra.mxu0 0.0
    %8615 = vmatprep.subr.mxu0 0.0
    %8616 = vmatpush1.msra.mxu0 0.0
    %8617 = vmatprep.subr.mxu0 0.0
    %8618 = vmatpush1.msra.mxu0 0.0
    %8619 = vmatprep.subr.mxu0 0.0
    %8620 = vmatpush1.msra.mxu0 0.0
    %8621 = vmatprep.subr.mxu0 0.0
    %8622 = vmatpush1.msra.mxu0 0.0
    %8623 = vmatprep.subr.mxu0 0.0
    %8624 = vmatpush1.msra.mxu0 0.0
    %8625 = vmatprep.subr.mxu0 0.0
    %8626 = vmatpush1.msra.mxu0 0.0
    %8627 = vmatprep.mubr.f32.mxu0 0.0
    %8628 = vmatmul.mubr.f32.gmra.mrb[0].mxu0 %v5435
    %v8629 = vpop.f32.mrb[0].mxu0
    %v8630 = vadd.f32 %v8561, %v8629
    %v8631 = vpop.f32.mrb[0].mxu0
    %8632 = vmatprep.mubr.f32.mxu0 0.0
    %8633 = vmatmul.mubr.f32.gmra.mrb[0].mxu0 %v5438
    %v8634 = vpop.f32.mrb[0].mxu0
    %v8635 = vadd.f32 %v8561, %v8634
    %v8636 = vpop.f32.mrb[0].mxu0
    %8637 = vmatprep.mubr.f32.mxu0 0.0
    %8638 = vmatmul.mubr.f32.gmra.mrb[0].mxu0 %v5441
    %v8639 = vpop.f32.mrb[0].mxu0
    %v8640 = vadd.f32 %v8561, %v8639
    %v8641 = vpop.f32.mrb[0].mxu0
    %8642 = vmatprep.mubr.f32.mxu0 0.0
    %8643 = vmatmul.mubr.f32.gmra.mrb[0].mxu0 %v5444
    %v8644 = vpop.f32.mrb[0].mxu0
    %v8645 = vadd.f32 %v8561, %v8644
    %v8646 = vpop.f32.mrb[0].mxu0
    %8647 = vmatprep.mubr.f32.mxu0 0.0
    %8648 = vmatmul.mubr.f32.gmra.mrb[0].mxu0 %v5447
    %v8649 = vpop.f32.mrb[0].mxu0
    %v8650 = vadd.f32 %v8561, %v8649
    %v8651 = vpop.f32.mrb[0].mxu0
    %8652 = vmatprep.mubr.f32.mxu0 0.0
    %8653 = vmatmul.mubr.f32.gmra.mrb[0].mxu0 %v5450
    %v8654 = vpop.f32.mrb[0].mxu0
    %v8655 = vadd.f32 %v8561, %v8654
    %v8656 = vpop.f32.mrb[0].mxu0
    %8657 = vmatprep.mubr.f32.mxu0 0.0
    %8658 = vmatmul.mubr.f32.gmra.mrb[0].mxu0 %v5453
    %v8659 = vpop.f32.mrb[0].mxu0
    %v8660 = vadd.f32 %v8561, %v8659
    %v8661 = vpop.f32.mrb[0].mxu0
    %8662 = vmatprep.mubr.f32.mxu0 0.0
    %8663 = vmatmul.mubr.f32.gmra.mrb[0].mxu0 %v5456
    %v8664 = vpop.f32.mrb[0].mxu0
    %v8665 = vadd.f32 %v8561, %v8664
    %v8666 = vpop.f32.mrb[0].mxu0
    %8667 = vmatprep.mubr.f32.mxu0 0.0
    %8668 = vmatmul.mubr.f32.gmra.mrb[0].mxu0 %v5459
    %v8669 = vpop.f32.mrb[0].mxu0
    %v8670 = vadd.f32 %v8561, %v8669
    %v8671 = vpop.f32.mrb[0].mxu0
    %8672 = vmatprep.mubr.f32.mxu0 0.0
    %8673 = vmatmul.mubr.f32.gmra.mrb[0].mxu0 %v5462
    %v8674 = vpop.f32.mrb[0].mxu0
    %v8675 = vadd.f32 %v8561, %v8674
    %v8676 = vpop.f32.mrb[0].mxu0
    %8677 = vdwg.mxu0
    %v8679 = vsel %vm1233, %v8384, 0
    %v8682 = vsel %vm1233, %v8389, 0
    %v8685 = vsel %vm1233, %v8394, 0
    %v8688 = vsel %vm1233, %v8399, 0
    %v8691 = vsel %vm1233, %v8404, 0
    %v8694 = vsel %vm1233, %v8409, 0
    %v8697 = vsel %vm1233, %v8414, 0
    %v8700 = vsel %vm1233, %v8419, 0
    %v8703 = vsel %vm1233, %v8424, 0
    %v8706 = vsel %vm1233, %v8429, 0
    %v8709 = vsel %vm1233, %v8507, 0
    %v8712 = vsel %vm1233, %v8512, 0
    %v8715 = vsel %vm1233, %v8517, 0
    %v8718 = vsel %vm1233, %v8522, 0
    %v8721 = vsel %vm1233, %v8527, 0
    %v8724 = vsel %vm1233, %v8532, 0
    %v8727 = vsel %vm1233, %v8537, 0
    %v8730 = vsel %vm1233, %v8542, 0
    %v8733 = vsel %vm1233, %v8547, 0
    %v8736 = vsel %vm1233, %v8552, 0
    %8738 = vmatprep.subr.mxu0 0.0
    %8739 = vmatpush1.xpose.msra.mxu0 %v8709
    %8740 = vmatprep.subr.mxu0 0.0
    %8741 = vmatpush1.xpose.msra.mxu0 %v8712
    %8742 = vmatprep.subr.mxu0 0.0
    %8743 = vmatpush1.xpose.msra.mxu0 %v8715
    %8744 = vmatprep.subr.mxu0 0.0
    %8745 = vmatpush1.xpose.msra.mxu0 %v8718
    %8746 = vmatprep.subr.mxu0 0.0
    %8747 = vmatpush1.xpose.msra.mxu0 %v8721
    %8748 = vmatprep.subr.mxu0 0.0
    %8749 = vmatpush1.xpose.msra.mxu0 %v8724
    %8750 = vmatprep.subr.mxu0 0.0
    %8751 = vmatpush1.xpose.msra.mxu0 %v8727
    %8752 = vmatprep.subr.mxu0 0.0
    %8753 = vmatpush1.xpose.msra.mxu0 %v8730
    %8754 = vmatprep.subr.mxu0 0.0
    %8755 = vmatpush1.xpose.msra.mxu0 %v8733
    %8756 = vmatprep.subr.mxu0 0.0
    %8757 = vmatpush1.xpose.msra.mxu0 %v8736
    %8758 = vmatprep.subr.mxu0 0.0
    %8759 = vmatpush1.xpose.msra.mxu0 0.0
    %8760 = vmatprep.subr.mxu0 0.0
    %8761 = vmatpush1.xpose.msra.mxu0 0.0
    %8762 = vmatprep.subr.mxu0 0.0
    %8763 = vmatpush1.xpose.msra.mxu0 0.0
    %8764 = vmatprep.subr.mxu0 0.0
    %8765 = vmatpush1.xpose.msra.mxu0 0.0
    %8766 = vmatprep.subr.mxu0 0.0
    %8767 = vmatpush1.xpose.msra.mxu0 0.0
    %8768 = vmatprep.subr.mxu0 0.0
    %8769 = vmatpush1.xpose.msra.mxu0 0.0
    %8770 = vmatprep.subr.mxu0 0.0
    %8771 = vmatpush1.xpose.msra.mxu0 0.0
    %8772 = vmatprep.subr.mxu0 0.0
    %8773 = vmatpush1.xpose.msra.mxu0 0.0
    %8774 = vmatprep.subr.mxu0 0.0
    %8775 = vmatpush1.xpose.msra.mxu0 0.0
    %8776 = vmatprep.subr.mxu0 0.0
    %8777 = vmatpush1.xpose.msra.mxu0 0.0
    %8778 = vmatprep.subr.mxu0 0.0
    %8779 = vmatpush1.xpose.msra.mxu0 0.0
    %8780 = vmatprep.subr.mxu0 0.0
    %8781 = vmatpush1.xpose.msra.mxu0 0.0
    %8782 = vmatprep.subr.mxu0 0.0
    %8783 = vmatpush1.xpose.msra.mxu0 0.0
    %8784 = vmatprep.subr.mxu0 0.0
    %8785 = vmatpush1.xpose.msra.mxu0 0.0
    %8786 = vmatprep.subr.mxu0 0.0
    %8787 = vmatpush1.xpose.msra.mxu0 0.0
    %8788 = vmatprep.subr.mxu0 0.0
    %8789 = vmatpush1.xpose.msra.mxu0 0.0
    %8790 = vmatprep.subr.mxu0 0.0
    %8791 = vmatpush1.xpose.msra.mxu0 0.0
    %8792 = vmatprep.subr.mxu0 0.0
    %8793 = vmatpush1.xpose.msra.mxu0 0.0
    %8794 = vmatprep.subr.mxu0 0.0
    %8795 = vmatpush1.xpose.msra.mxu0 0.0
    %8796 = vmatprep.subr.mxu0 0.0
    %8797 = vmatpush1.xpose.msra.mxu0 0.0
    %8798 = vmatprep.subr.mxu0 0.0
    %8799 = vmatpush1.xpose.msra.mxu0 0.0
    %8800 = vmatprep.subr.mxu0 0.0
    %8801 = vmatpush1.xpose.msra.mxu0 0.0
    %8802 = vmatprep.mubr.f32.mxu0 0.0
    %8803 = vmatmul.mubr.f32.gmra.mrb[0].mxu0 %v8679
    %v8804 = vpop.f32.mrb[0].mxu0
    %v8805 = vadd.f32 %v662, %v8804
    %v8806 = vpop.f32.mrb[0].mxu0
    %8807 = vmatprep.mubr.f32.mxu0 0.0
    %8808 = vmatmul.mubr.f32.gmra.mrb[0].mxu0 %v8682
    %v8809 = vpop.f32.mrb[0].mxu0
    %v8810 = vadd.f32 %v663, %v8809
    %v8811 = vpop.f32.mrb[0].mxu0
    %8812 = vmatprep.mubr.f32.mxu0 0.0
    %8813 = vmatmul.mubr.f32.gmra.mrb[0].mxu0 %v8685
    %v8814 = vpop.f32.mrb[0].mxu0
    %v8815 = vadd.f32 %v664, %v8814
    %v8816 = vpop.f32.mrb[0].mxu0
    %8817 = vmatprep.mubr.f32.mxu0 0.0
    %8818 = vmatmul.mubr.f32.gmra.mrb[0].mxu0 %v8688
    %v8819 = vpop.f32.mrb[0].mxu0
    %v8820 = vadd.f32 %v665, %v8819
    %v8821 = vpop.f32.mrb[0].mxu0
    %8822 = vmatprep.mubr.f32.mxu0 0.0
    %8823 = vmatmul.mubr.f32.gmra.mrb[0].mxu0 %v8691
    %v8824 = vpop.f32.mrb[0].mxu0
    %v8825 = vadd.f32 %v666, %v8824
    %v8826 = vpop.f32.mrb[0].mxu0
    %8827 = vmatprep.mubr.f32.mxu0 0.0
    %8828 = vmatmul.mubr.f32.gmra.mrb[0].mxu0 %v8694
    %v8829 = vpop.f32.mrb[0].mxu0
    %v8830 = vadd.f32 %v667, %v8829
    %v8831 = vpop.f32.mrb[0].mxu0
    %8832 = vmatprep.mubr.f32.mxu0 0.0
    %8833 = vmatmul.mubr.f32.gmra.mrb[0].mxu0 %v8697
    %v8834 = vpop.f32.mrb[0].mxu0
    %v8835 = vadd.f32 %v668, %v8834
    %v8836 = vpop.f32.mrb[0].mxu0
    %8837 = vmatprep.mubr.f32.mxu0 0.0
    %8838 = vmatmul.mubr.f32.gmra.mrb[0].mxu0 %v8700
    %v8839 = vpop.f32.mrb[0].mxu0
    %v8840 = vadd.f32 %v669, %v8839
    %v8841 = vpop.f32.mrb[0].mxu0
    %8842 = vmatprep.mubr.f32.mxu0 0.0
    %8843 = vmatmul.mubr.f32.gmra.mrb[0].mxu0 %v8703
    %v8844 = vpop.f32.mrb[0].mxu0
    %v8845 = vadd.f32 %v670, %v8844
    %v8846 = vpop.f32.mrb[0].mxu0
    %8847 = vmatprep.mubr.f32.mxu0 0.0
    %8848 = vmatmul.mubr.f32.gmra.mrb[0].mxu0 %v8706
    %v8849 = vpop.f32.mrb[0].mxu0
    %v8850 = vadd.f32 %v671, %v8849
    %v8851 = vpop.f32.mrb[0].mxu0
    %8852 = vdwg.mxu0
    %v8853 = vsel %vm1409, %v8805, -inf
    %8854 = vmax.xlane.f32.xlu0 %v8853
    %v8855 = vpop.xlane.xlu0 %8854
    %v8856 = vsel %vm1409, %v8810, -inf
    %8857 = vmax.xlane.f32.xlu0 %v8856
    %v8858 = vpop.xlane.xlu0 %8857
    %v8859 = vsel %vm1409, %v8815, -inf
    %8860 = vmax.xlane.f32.xlu0 %v8859
    %v8861 = vpop.xlane.xlu0 %8860
    %v8862 = vsel %vm1409, %v8820, -inf
    %8863 = vmax.xlane.f32.xlu0 %v8862
    %v8864 = vpop.xlane.xlu0 %8863
    %v8865 = vsel %vm1409, %v8825, -inf
    %8866 = vmax.xlane.f32.xlu0 %v8865
    %v8867 = vpop.xlane.xlu0 %8866
    %v8868 = vsel %vm1409, %v8830, -inf
    %8869 = vmax.xlane.f32.xlu0 %v8868
    %v8870 = vpop.xlane.xlu0 %8869
    %v8871 = vsel %vm1409, %v8835, -inf
    %8872 = vmax.xlane.f32.xlu0 %v8871
    %v8873 = vpop.xlane.xlu0 %8872
    %v8874 = vsel %vm1409, %v8840, -inf
    %8875 = vmax.xlane.f32.xlu0 %v8874
    %v8876 = vpop.xlane.xlu0 %8875
    %v8877 = vsel %vm1409, %v8845, -inf
    %8878 = vmax.xlane.f32.xlu0 %v8877
    %v8879 = vpop.xlane.xlu0 %8878
    %v8880 = vsel %vm1409, %v8850, -inf
    %8881 = vmax.xlane.f32.xlu0 %v8880
    %v8882 = vpop.xlane.xlu0 %8881
    %v8883 = vsub.f32 %v8805, %v8855
    %v8884 = vsub.f32 %v8810, %v8858
    %v8885 = vsub.f32 %v8815, %v8861
    %v8886 = vsub.f32 %v8820, %v8864
    %v8887 = vsub.f32 %v8825, %v8867
    %v8888 = vsub.f32 %v8830, %v8870
    %v8889 = vsub.f32 %v8835, %v8873
    %v8890 = vsub.f32 %v8840, %v8876
    %v8891 = vsub.f32 %v8845, %v8879
    %v8892 = vsub.f32 %v8850, %v8882
    %v8893 = vmul.f32 %v8883, 1.442695
    %v8894 = vpow.pop %v8893
    %v8895 = vmul.f32 %v8884, 1.442695
    %v8896 = vpow.pop %v8895
    %v8897 = vmul.f32 %v8885, 1.442695
    %v8898 = vpow.pop %v8897
    %v8899 = vmul.f32 %v8886, 1.442695
    %v8900 = vpow.pop %v8899
    %v8901 = vmul.f32 %v8887, 1.442695
    %v8902 = vpow.pop %v8901
    %v8903 = vmul.f32 %v8888, 1.442695
    %v8904 = vpow.pop %v8903
    %v8905 = vmul.f32 %v8889, 1.442695
    %v8906 = vpow.pop %v8905
    %v8907 = vmul.f32 %v8890, 1.442695
    %v8908 = vpow.pop %v8907
    %v8909 = vmul.f32 %v8891, 1.442695
    %v8910 = vpow.pop %v8909
    %v8911 = vmul.f32 %v8892, 1.442695
    %v8912 = vpow.pop %v8911
    %v8913 = vsel %vm1409, %v8894, 0.0
    %8914 = vadd.xlane.f32.xlu0 %v8913
    %v8915 = vpop.xlane.xlu0 %8914
    %v8916 = vsel %vm1409, %v8896, 0.0
    %8917 = vadd.xlane.f32.xlu0 %v8916
    %v8918 = vpop.xlane.xlu0 %8917
    %v8919 = vsel %vm1409, %v8898, 0.0
    %8920 = vadd.xlane.f32.xlu0 %v8919
    %v8921 = vpop.xlane.xlu0 %8920
    %v8922 = vsel %vm1409, %v8900, 0.0
    %8923 = vadd.xlane.f32.xlu0 %v8922
    %v8924 = vpop.xlane.xlu0 %8923
    %v8925 = vsel %vm1409, %v8902, 0.0
    %8926 = vadd.xlane.f32.xlu0 %v8925
    %v8927 = vpop.xlane.xlu0 %8926
    %v8928 = vsel %vm1409, %v8904, 0.0
    %8929 = vadd.xlane.f32.xlu0 %v8928
    %v8930 = vpop.xlane.xlu0 %8929
    %v8931 = vsel %vm1409, %v8906, 0.0
    %8932 = vadd.xlane.f32.xlu0 %v8931
    %v8933 = vpop.xlane.xlu0 %8932
    %v8934 = vsel %vm1409, %v8908, 0.0
    %8935 = vadd.xlane.f32.xlu0 %v8934
    %v8936 = vpop.xlane.xlu0 %8935
    %v8937 = vsel %vm1409, %v8910, 0.0
    %8938 = vadd.xlane.f32.xlu0 %v8937
    %v8939 = vpop.xlane.xlu0 %8938
    %v8940 = vsel %vm1409, %v8912, 0.0
    %8941 = vadd.xlane.f32.xlu0 %v8940
    %v8942 = vpop.xlane.xlu0 %8941
    %v8943 = vrcp.pop %v8915
    %v8944 = vrcp.pop %v8918
    %v8945 = vrcp.pop %v8921
    %v8946 = vrcp.pop %v8924
    %v8947 = vrcp.pop %v8927
    %v8948 = vrcp.pop %v8930
    %v8949 = vrcp.pop %v8933
    %v8950 = vrcp.pop %v8936
    %v8951 = vrcp.pop %v8939
    %v8952 = vrcp.pop %v8942
    %v8953 = vmul.f32 %v8894, %v8943
    %v8954 = vmul.f32 %v8896, %v8944
    %v8955 = vmul.f32 %v8898, %v8945
    %v8956 = vmul.f32 %v8900, %v8946
    %v8957 = vmul.f32 %v8902, %v8947
    %v8958 = vmul.f32 %v8904, %v8948
    %v8959 = vmul.f32 %v8906, %v8949
    %v8960 = vmul.f32 %v8908, %v8950
    %v8961 = vmul.f32 %v8910, %v8951
    %v8962 = vmul.f32 %v8912, %v8952
    %v8964 = vsel %vm1409, %v8953, 0
    %v8967 = vsel %vm1409, %v8954, 0
    %v8970 = vsel %vm1409, %v8955, 0
    %v8973 = vsel %vm1409, %v8956, 0
    %v8976 = vsel %vm1409, %v8957, 0
    %v8979 = vsel %vm1409, %v8958, 0
    %v8982 = vsel %vm1409, %v8959, 0
    %v8985 = vsel %vm1409, %v8960, 0
    %v8988 = vsel %vm1409, %v8961, 0
    %v8991 = vsel %vm1409, %v8962, 0
    %8993 = vmatprep.subr.mxu0 0.0
    %8994 = vmatpush1.msra.mxu0 %v8630
    %8995 = vmatprep.subr.mxu0 0.0
    %8996 = vmatpush1.msra.mxu0 %v8635
    %8997 = vmatprep.subr.mxu0 0.0
    %8998 = vmatpush1.msra.mxu0 %v8640
    %8999 = vmatprep.subr.mxu0 0.0
    %9000 = vmatpush1.msra.mxu0 %v8645
    %9001 = vmatprep.subr.mxu0 0.0
    %9002 = vmatpush1.msra.mxu0 %v8650
    %9003 = vmatprep.subr.mxu0 0.0
    %9004 = vmatpush1.msra.mxu0 %v8655
    %9005 = vmatprep.subr.mxu0 0.0
    %9006 = vmatpush1.msra.mxu0 %v8660
    %9007 = vmatprep.subr.mxu0 0.0
    %9008 = vmatpush1.msra.mxu0 %v8665
    %9009 = vmatprep.subr.mxu0 0.0
    %9010 = vmatpush1.msra.mxu0 %v8670
    %9011 = vmatprep.subr.mxu0 0.0
    %9012 = vmatpush1.msra.mxu0 %v8675
    %9013 = vmatprep.subr.mxu0 0.0
    %9014 = vmatpush1.msra.mxu0 0.0
    %9015 = vmatprep.subr.mxu0 0.0
    %9016 = vmatpush1.msra.mxu0 0.0
    %9017 = vmatprep.subr.mxu0 0.0
    %9018 = vmatpush1.msra.mxu0 0.0
    %9019 = vmatprep.subr.mxu0 0.0
    %9020 = vmatpush1.msra.mxu0 0.0
    %9021 = vmatprep.subr.mxu0 0.0
    %9022 = vmatpush1.msra.mxu0 0.0
    %9023 = vmatprep.subr.mxu0 0.0
    %9024 = vmatpush1.msra.mxu0 0.0
    %9025 = vmatprep.subr.mxu0 0.0
    %9026 = vmatpush1.msra.mxu0 0.0
    %9027 = vmatprep.subr.mxu0 0.0
    %9028 = vmatpush1.msra.mxu0 0.0
    %9029 = vmatprep.subr.mxu0 0.0
    %9030 = vmatpush1.msra.mxu0 0.0
    %9031 = vmatprep.subr.mxu0 0.0
    %9032 = vmatpush1.msra.mxu0 0.0
    %9033 = vmatprep.subr.mxu0 0.0
    %9034 = vmatpush1.msra.mxu0 0.0
    %9035 = vmatprep.subr.mxu0 0.0
    %9036 = vmatpush1.msra.mxu0 0.0
    %9037 = vmatprep.subr.mxu0 0.0
    %9038 = vmatpush1.msra.mxu0 0.0
    %9039 = vmatprep.subr.mxu0 0.0
    %9040 = vmatpush1.msra.mxu0 0.0
    %9041 = vmatprep.subr.mxu0 0.0
    %9042 = vmatpush1.msra.mxu0 0.0
    %9043 = vmatprep.subr.mxu0 0.0
    %9044 = vmatpush1.msra.mxu0 0.0
    %9045 = vmatprep.subr.mxu0 0.0
    %9046 = vmatpush1.msra.mxu0 0.0
    %9047 = vmatprep.subr.mxu0 0.0
    %9048 = vmatpush1.msra.mxu0 0.0
    %9049 = vmatprep.subr.mxu0 0.0
    %9050 = vmatpush1.msra.mxu0 0.0
    %9051 = vmatprep.subr.mxu0 0.0
    %9052 = vmatpush1.msra.mxu0 0.0
    %9053 = vmatprep.subr.mxu0 0.0
    %9054 = vmatpush1.msra.mxu0 0.0
    %9055 = vmatprep.subr.mxu0 0.0
    %9056 = vmatpush1.msra.mxu0 0.0
    %9057 = vmatprep.mubr.f32.mxu0 0.0
    %9058 = vmatmul.mubr.f32.gmra.mrb[0].mxu0 %v8964
    %v9059 = vpop.f32.mrb[0].mxu0
    %v9060 = vadd.f32 0.0, %v9059
    %v9061 = vpop.f32.mrb[0].mxu0
    %9062 = vmatprep.mubr.f32.mxu0 0.0
    %9063 = vmatmul.mubr.f32.gmra.mrb[0].mxu0 %v8967
    %v9064 = vpop.f32.mrb[0].mxu0
    %v9065 = vadd.f32 0.0, %v9064
    %v9066 = vpop.f32.mrb[0].mxu0
    %9067 = vmatprep.mubr.f32.mxu0 0.0
    %9068 = vmatmul.mubr.f32.gmra.mrb[0].mxu0 %v8970
    %v9069 = vpop.f32.mrb[0].mxu0
    %v9070 = vadd.f32 0.0, %v9069
    %v9071 = vpop.f32.mrb[0].mxu0
    %9072 = vmatprep.mubr.f32.mxu0 0.0
    %9073 = vmatmul.mubr.f32.gmra.mrb[0].mxu0 %v8973
    %v9074 = vpop.f32.mrb[0].mxu0
    %v9075 = vadd.f32 0.0, %v9074
    %v9076 = vpop.f32.mrb[0].mxu0
    %9077 = vmatprep.mubr.f32.mxu0 0.0
    %9078 = vmatmul.mubr.f32.gmra.mrb[0].mxu0 %v8976
    %v9079 = vpop.f32.mrb[0].mxu0
    %v9080 = vadd.f32 0.0, %v9079
    %v9081 = vpop.f32.mrb[0].mxu0
    %9082 = vmatprep.mubr.f32.mxu0 0.0
    %9083 = vmatmul.mubr.f32.gmra.mrb[0].mxu0 %v8979
    %v9084 = vpop.f32.mrb[0].mxu0
    %v9085 = vadd.f32 0.0, %v9084
    %v9086 = vpop.f32.mrb[0].mxu0
    %9087 = vmatprep.mubr.f32.mxu0 0.0
    %9088 = vmatmul.mubr.f32.gmra.mrb[0].mxu0 %v8982
    %v9089 = vpop.f32.mrb[0].mxu0
    %v9090 = vadd.f32 0.0, %v9089
    %v9091 = vpop.f32.mrb[0].mxu0
    %9092 = vmatprep.mubr.f32.mxu0 0.0
    %9093 = vmatmul.mubr.f32.gmra.mrb[0].mxu0 %v8985
    %v9094 = vpop.f32.mrb[0].mxu0
    %v9095 = vadd.f32 0.0, %v9094
    %v9096 = vpop.f32.mrb[0].mxu0
    %9097 = vmatprep.mubr.f32.mxu0 0.0
    %9098 = vmatmul.mubr.f32.gmra.mrb[0].mxu0 %v8988
    %v9099 = vpop.f32.mrb[0].mxu0
    %v9100 = vadd.f32 0.0, %v9099
    %v9101 = vpop.f32.mrb[0].mxu0
    %9102 = vmatprep.mubr.f32.mxu0 0.0
    %9103 = vmatmul.mubr.f32.gmra.mrb[0].mxu0 %v8991
    %v9104 = vpop.f32.mrb[0].mxu0
    %v9105 = vadd.f32 0.0, %v9104
    %v9106 = vpop.f32.mrb[0].mxu0
    %9107 = vdwg.mxu0
    %s9108 = scalar_lea.vmem %s10, 56
    %v9109 = vld [vmem:[%s9108] sm:$0xff]
    %v9111 = vsel %vm1233, %v9060, 0
    %v9114 = vsel %vm1233, %v9065, 0
    %v9117 = vsel %vm1233, %v9070, 0
    %v9120 = vsel %vm1233, %v9075, 0
    %v9123 = vsel %vm1233, %v9080, 0
    %v9126 = vsel %vm1233, %v9085, 0
    %v9129 = vsel %vm1233, %v9090, 0
    %v9132 = vsel %vm1233, %v9095, 0
    %v9135 = vsel %vm1233, %v9100, 0
    %v9138 = vsel %vm1233, %v9105, 0
    %9140 = vmatprep.subr.mxu0 0.0
    %9141 = vmatpush1.msra.mxu0 %v9109
    %9142 = vmatprep.subr.mxu0 0.0
    %9143 = vmatpush1.msra.mxu0 0.0
    %9144 = vmatprep.subr.mxu0 0.0
    %9145 = vmatpush1.msra.mxu0 0.0
    %9146 = vmatprep.subr.mxu0 0.0
    %9147 = vmatpush1.msra.mxu0 0.0
    %9148 = vmatprep.subr.mxu0 0.0
    %9149 = vmatpush1.msra.mxu0 0.0
    %9150 = vmatprep.subr.mxu0 0.0
    %9151 = vmatpush1.msra.mxu0 0.0
    %9152 = vmatprep.subr.mxu0 0.0
    %9153 = vmatpush1.msra.mxu0 0.0
    %9154 = vmatprep.subr.mxu0 0.0
    %9155 = vmatpush1.msra.mxu0 0.0
    %9156 = vmatprep.subr.mxu0 0.0
    %9157 = vmatpush1.msra.mxu0 0.0
    %9158 = vmatprep.subr.mxu0 0.0
    %9159 = vmatpush1.msra.mxu0 0.0
    %9160 = vmatprep.subr.mxu0 0.0
    %9161 = vmatpush1.msra.mxu0 0.0
    %9162 = vmatprep.subr.mxu0 0.0
    %9163 = vmatpush1.msra.mxu0 0.0
    %9164 = vmatprep.subr.mxu0 0.0
    %9165 = vmatpush1.msra.mxu0 0.0
    %9166 = vmatprep.subr.mxu0 0.0
    %9167 = vmatpush1.msra.mxu0 0.0
    %9168 = vmatprep.subr.mxu0 0.0
    %9169 = vmatpush1.msra.mxu0 0.0
    %9170 = vmatprep.subr.mxu0 0.0
    %9171 = vmatpush1.msra.mxu0 0.0
    %9172 = vmatprep.subr.mxu0 0.0
    %9173 = vmatpush1.msra.mxu0 0.0
    %9174 = vmatprep.subr.mxu0 0.0
    %9175 = vmatpush1.msra.mxu0 0.0
    %9176 = vmatprep.subr.mxu0 0.0
    %9177 = vmatpush1.msra.mxu0 0.0
    %9178 = vmatprep.subr.mxu0 0.0
    %9179 = vmatpush1.msra.mxu0 0.0
    %9180 = vmatprep.subr.mxu0 0.0
    %9181 = vmatpush1.msra.mxu0 0.0
    %9182 = vmatprep.subr.mxu0 0.0
    %9183 = vmatpush1.msra.mxu0 0.0
    %9184 = vmatprep.subr.mxu0 0.0
    %9185 = vmatpush1.msra.mxu0 0.0
    %9186 = vmatprep.subr.mxu0 0.0
    %9187 = vmatpush1.msra.mxu0 0.0
    %9188 = vmatprep.subr.mxu0 0.0
    %9189 = vmatpush1.msra.mxu0 0.0
    %9190 = vmatprep.subr.mxu0 0.0
    %9191 = vmatpush1.msra.mxu0 0.0
    %9192 = vmatprep.subr.mxu0 0.0
    %9193 = vmatpush1.msra.mxu0 0.0
    %9194 = vmatprep.subr.mxu0 0.0
    %9195 = vmatpush1.msra.mxu0 0.0
    %9196 = vmatprep.subr.mxu0 0.0
    %9197 = vmatpush1.msra.mxu0 0.0
    %9198 = vmatprep.subr.mxu0 0.0
    %9199 = vmatpush1.msra.mxu0 0.0
    %9200 = vmatprep.subr.mxu0 0.0
    %9201 = vmatpush1.msra.mxu0 0.0
    %9202 = vmatprep.subr.mxu0 0.0
    %9203 = vmatpush1.msra.mxu0 0.0
    %9204 = vmatprep.mubr.f32.mxu0 0.0
    %9205 = vmatmul.mubr.f32.gmra.mrb[0].mxu0 %v9111
    %v9206 = vpop.f32.mrb[0].mxu0
    %v9207 = vadd.f32 0.0, %v9206
    %v9208 = vpop.f32.mrb[0].mxu0
    %9209 = vmatprep.mubr.f32.mxu0 0.0
    %9210 = vmatmul.mubr.f32.gmra.mrb[0].mxu0 %v9114
    %v9211 = vpop.f32.mrb[0].mxu0
    %v9212 = vadd.f32 0.0, %v9211
    %v9213 = vpop.f32.mrb[0].mxu0
    %9214 = vmatprep.mubr.f32.mxu0 0.0
    %9215 = vmatmul.mubr.f32.gmra.mrb[0].mxu0 %v9117
    %v9216 = vpop.f32.mrb[0].mxu0
    %v9217 = vadd.f32 0.0, %v9216
    %v9218 = vpop.f32.mrb[0].mxu0
    %9219 = vmatprep.mubr.f32.mxu0 0.0
    %9220 = vmatmul.mubr.f32.gmra.mrb[0].mxu0 %v9120
    %v9221 = vpop.f32.mrb[0].mxu0
    %v9222 = vadd.f32 0.0, %v9221
    %v9223 = vpop.f32.mrb[0].mxu0
    %9224 = vmatprep.mubr.f32.mxu0 0.0
    %9225 = vmatmul.mubr.f32.gmra.mrb[0].mxu0 %v9123
    %v9226 = vpop.f32.mrb[0].mxu0
    %v9227 = vadd.f32 0.0, %v9226
    %v9228 = vpop.f32.mrb[0].mxu0
    %9229 = vmatprep.mubr.f32.mxu0 0.0
    %9230 = vmatmul.mubr.f32.gmra.mrb[0].mxu0 %v9126
    %v9231 = vpop.f32.mrb[0].mxu0
    %v9232 = vadd.f32 0.0, %v9231
    %v9233 = vpop.f32.mrb[0].mxu0
    %9234 = vmatprep.mubr.f32.mxu0 0.0
    %9235 = vmatmul.mubr.f32.gmra.mrb[0].mxu0 %v9129
    %v9236 = vpop.f32.mrb[0].mxu0
    %v9237 = vadd.f32 0.0, %v9236
    %v9238 = vpop.f32.mrb[0].mxu0
    %9239 = vmatprep.mubr.f32.mxu0 0.0
    %9240 = vmatmul.mubr.f32.gmra.mrb[0].mxu0 %v9132
    %v9241 = vpop.f32.mrb[0].mxu0
    %v9242 = vadd.f32 0.0, %v9241
    %v9243 = vpop.f32.mrb[0].mxu0
    %9244 = vmatprep.mubr.f32.mxu0 0.0
    %9245 = vmatmul.mubr.f32.gmra.mrb[0].mxu0 %v9135
    %v9246 = vpop.f32.mrb[0].mxu0
    %v9247 = vadd.f32 0.0, %v9246
    %v9248 = vpop.f32.mrb[0].mxu0
    %9249 = vmatprep.mubr.f32.mxu0 0.0
    %9250 = vmatmul.mubr.f32.gmra.mrb[0].mxu0 %v9138
    %v9251 = vpop.f32.mrb[0].mxu0
    %v9252 = vadd.f32 0.0, %v9251
    %v9253 = vpop.f32.mrb[0].mxu0
    %9254 = vdwg.mxu0
    %v9255 = vadd.f32 %v8299, %v9207
    %v9256 = vadd.f32 %v8300, %v9212
    %v9257 = vadd.f32 %v8301, %v9217
    %v9258 = vadd.f32 %v8302, %v9222
    %v9259 = vadd.f32 %v8303, %v9227
    %v9260 = vadd.f32 %v8304, %v9232
    %v9261 = vadd.f32 %v8305, %v9237
    %v9262 = vadd.f32 %v8306, %v9242
    %v9263 = vadd.f32 %v8307, %v9247
    %v9264 = vadd.f32 %v8308, %v9252
    %v9265 = vadd.f32 %v5254, %v9255
    %v9266 = vadd.f32 %v5255, %v9256
    %v9267 = vadd.f32 %v5256, %v9257
    %v9268 = vadd.f32 %v5257, %v9258
    %v9269 = vadd.f32 %v5258, %v9259
    %v9270 = vadd.f32 %v5259, %v9260
    %v9271 = vadd.f32 %v5260, %v9261
    %v9272 = vadd.f32 %v5261, %v9262
    %v9273 = vadd.f32 %v5262, %v9263
    %v9274 = vadd.f32 %v5263, %v9264
    %v9275 = vlaneseq
    %v9276 = vshrl.u32 %v9275, 7
    %v9277 = vsub.s32 5, %v9276
    %v9278 = vrot.slane %v5265, %v9277
    %v9279 = vadd.f32 %v9265, %v9278
    %v9280 = vadd.f32 %v9266, %v9278
    %v9281 = vadd.f32 %v9267, %v9278
    %v9282 = vadd.f32 %v9268, %v9278
    %v9283 = vadd.f32 %v9269, %v9278
    %v9284 = vadd.f32 %v9270, %v9278
    %v9285 = vadd.f32 %v9271, %v9278
    %v9286 = vadd.f32 %v9272, %v9278
    %v9287 = vadd.f32 %v9273, %v9278
    %v9288 = vadd.f32 %v9274, %v9278
    %v9289 = vsel %vm674, %v9279, 0.0
    %9290 = vadd.xlane.f32.xlu0 %v9289
    %v9291 = vpop.xlane.xlu0 %9290
    %v9292 = vsel %vm674, %v9280, 0.0
    %9293 = vadd.xlane.f32.xlu0 %v9292
    %v9294 = vpop.xlane.xlu0 %9293
    %v9295 = vsel %vm674, %v9281, 0.0
    %9296 = vadd.xlane.f32.xlu0 %v9295
    %v9297 = vpop.xlane.xlu0 %9296
    %v9298 = vsel %vm674, %v9282, 0.0
    %9299 = vadd.xlane.f32.xlu0 %v9298
    %v9300 = vpop.xlane.xlu0 %9299
    %v9301 = vsel %vm674, %v9283, 0.0
    %9302 = vadd.xlane.f32.xlu0 %v9301
    %v9303 = vpop.xlane.xlu0 %9302
    %v9304 = vsel %vm674, %v9284, 0.0
    %9305 = vadd.xlane.f32.xlu0 %v9304
    %v9306 = vpop.xlane.xlu0 %9305
    %v9307 = vsel %vm674, %v9285, 0.0
    %9308 = vadd.xlane.f32.xlu0 %v9307
    %v9309 = vpop.xlane.xlu0 %9308
    %v9310 = vsel %vm674, %v9286, 0.0
    %9311 = vadd.xlane.f32.xlu0 %v9310
    %v9312 = vpop.xlane.xlu0 %9311
    %v9313 = vsel %vm674, %v9287, 0.0
    %9314 = vadd.xlane.f32.xlu0 %v9313
    %v9315 = vpop.xlane.xlu0 %9314
    %v9316 = vsel %vm674, %v9288, 0.0
    %9317 = vadd.xlane.f32.xlu0 %v9316
    %v9318 = vpop.xlane.xlu0 %9317
    %v9319 = vmul.f32 %v9291, %v705
    %v9320 = vmul.f32 %v9294, %v705
    %v9321 = vmul.f32 %v9297, %v705
    %v9322 = vmul.f32 %v9300, %v705
    %v9323 = vmul.f32 %v9303, %v705
    %v9324 = vmul.f32 %v9306, %v705
    %v9325 = vmul.f32 %v9309, %v705
    %v9326 = vmul.f32 %v9312, %v705
    %v9327 = vmul.f32 %v9315, %v705
    %v9328 = vmul.f32 %v9318, %v705
    %v9329 = vsub.f32 %v9279, %v9319
    %v9330 = vsub.f32 %v9280, %v9320
    %v9331 = vsub.f32 %v9281, %v9321
    %v9332 = vsub.f32 %v9282, %v9322
    %v9333 = vsub.f32 %v9283, %v9323
    %v9334 = vsub.f32 %v9284, %v9324
    %v9335 = vsub.f32 %v9285, %v9325
    %v9336 = vsub.f32 %v9286, %v9326
    %v9337 = vsub.f32 %v9287, %v9327
    %v9338 = vsub.f32 %v9288, %v9328
    %v9339 = vmul.f32 %v9329, %v9329
    %v9340 = vmul.f32 %v9330, %v9330
    %v9341 = vmul.f32 %v9331, %v9331
    %v9342 = vmul.f32 %v9332, %v9332
    %v9343 = vmul.f32 %v9333, %v9333
    %v9344 = vmul.f32 %v9334, %v9334
    %v9345 = vmul.f32 %v9335, %v9335
    %v9346 = vmul.f32 %v9336, %v9336
    %v9347 = vmul.f32 %v9337, %v9337
    %v9348 = vmul.f32 %v9338, %v9338
    %v9349 = vsel %vm674, %v9339, 0.0
    %9350 = vadd.xlane.f32.xlu0 %v9349
    %v9351 = vpop.xlane.xlu0 %9350
    %v9352 = vsel %vm674, %v9340, 0.0
    %9353 = vadd.xlane.f32.xlu0 %v9352
    %v9354 = vpop.xlane.xlu0 %9353
    %v9355 = vsel %vm674, %v9341, 0.0
    %9356 = vadd.xlane.f32.xlu0 %v9355
    %v9357 = vpop.xlane.xlu0 %9356
    %v9358 = vsel %vm674, %v9342, 0.0
    %9359 = vadd.xlane.f32.xlu0 %v9358
    %v9360 = vpop.xlane.xlu0 %9359
    %v9361 = vsel %vm674, %v9343, 0.0
    %9362 = vadd.xlane.f32.xlu0 %v9361
    %v9363 = vpop.xlane.xlu0 %9362
    %v9364 = vsel %vm674, %v9344, 0.0
    %9365 = vadd.xlane.f32.xlu0 %v9364
    %v9366 = vpop.xlane.xlu0 %9365
    %v9367 = vsel %vm674, %v9345, 0.0
    %9368 = vadd.xlane.f32.xlu0 %v9367
    %v9369 = vpop.xlane.xlu0 %9368
    %v9370 = vsel %vm674, %v9346, 0.0
    %9371 = vadd.xlane.f32.xlu0 %v9370
    %v9372 = vpop.xlane.xlu0 %9371
    %v9373 = vsel %vm674, %v9347, 0.0
    %9374 = vadd.xlane.f32.xlu0 %v9373
    %v9375 = vpop.xlane.xlu0 %9374
    %v9376 = vsel %vm674, %v9348, 0.0
    %9377 = vadd.xlane.f32.xlu0 %v9376
    %v9378 = vpop.xlane.xlu0 %9377
    %v9379 = vmul.f32 %v9351, %v705
    %v9380 = vmul.f32 %v9354, %v705
    %v9381 = vmul.f32 %v9357, %v705
    %v9382 = vmul.f32 %v9360, %v705
    %v9383 = vmul.f32 %v9363, %v705
    %v9384 = vmul.f32 %v9366, %v705
    %v9385 = vmul.f32 %v9369, %v705
    %v9386 = vmul.f32 %v9372, %v705
    %v9387 = vmul.f32 %v9375, %v705
    %v9388 = vmul.f32 %v9378, %v705
    %v9389 = vadd.f32 %v9379, 1e-05
    %v9390 = vadd.f32 %v9380, 1e-05
    %v9391 = vadd.f32 %v9381, 1e-05
    %v9392 = vadd.f32 %v9382, 1e-05
    %v9393 = vadd.f32 %v9383, 1e-05
    %v9394 = vadd.f32 %v9384, 1e-05
    %v9395 = vadd.f32 %v9385, 1e-05
    %v9396 = vadd.f32 %v9386, 1e-05
    %v9397 = vadd.f32 %v9387, 1e-05
    %v9398 = vadd.f32 %v9388, 1e-05
    %v9399 = vrsqrt.pop %v9389
    %v9400 = vrsqrt.pop %v9390
    %v9401 = vrsqrt.pop %v9391
    %v9402 = vrsqrt.pop %v9392
    %v9403 = vrsqrt.pop %v9393
    %v9404 = vrsqrt.pop %v9394
    %v9405 = vrsqrt.pop %v9395
    %v9406 = vrsqrt.pop %v9396
    %v9407 = vrsqrt.pop %v9397
    %v9408 = vrsqrt.pop %v9398
    %v9409 = vmul.f32 %v9329, %v9399
    %v9410 = vmul.f32 %v9330, %v9400
    %v9411 = vmul.f32 %v9331, %v9401
    %v9412 = vmul.f32 %v9332, %v9402
    %v9413 = vmul.f32 %v9333, %v9403
    %v9414 = vmul.f32 %v9334, %v9404
    %v9415 = vmul.f32 %v9335, %v9405
    %v9416 = vmul.f32 %v9336, %v9406
    %v9417 = vmul.f32 %v9337, %v9407
    %v9418 = vmul.f32 %v9338, %v9408
    %v9419 = vlaneseq
    %v9420 = vshrl.u32 %v9419, 7
    %v9421 = vsub.s32 6, %v9420
    %v9422 = vrot.slane %v5265, %v9421
    %v9423 = vmul.f32 %v9409, %v9422
    %v9424 = vmul.f32 %v9410, %v9422
    %v9425 = vmul.f32 %v9411, %v9422
    %v9426 = vmul.f32 %v9412, %v9422
    %v9427 = vmul.f32 %v9413, %v9422
    %v9428 = vmul.f32 %v9414, %v9422
    %v9429 = vmul.f32 %v9415, %v9422
    %v9430 = vmul.f32 %v9416, %v9422
    %v9431 = vmul.f32 %v9417, %v9422
    %v9432 = vmul.f32 %v9418, %v9422
    %v9433 = vlaneseq
    %v9434 = vshrl.u32 %v9433, 7
    %v9435 = vsub.s32 7, %v9434
    %v9436 = vrot.slane %v5265, %v9435
    %v9437 = vadd.f32 %v9423, %v9436
    %v9438 = vadd.f32 %v9424, %v9436
    %v9439 = vadd.f32 %v9425, %v9436
    %v9440 = vadd.f32 %v9426, %v9436
    %v9441 = vadd.f32 %v9427, %v9436
    %v9442 = vadd.f32 %v9428, %v9436
    %v9443 = vadd.f32 %v9429, %v9436
    %v9444 = vadd.f32 %v9430, %v9436
    %v9445 = vadd.f32 %v9431, %v9436
    %v9446 = vadd.f32 %v9432, %v9436
    %s9447 = scalar_lea.vmem %s11, 32
    %v9448 = vld [vmem:[%s9447] sm:$0xff]
    %v9449 = vld [vmem:[%s9447 + $0x8] sm:$0xff]
    %v9450 = vld [vmem:[%s9447 + $0x10] sm:$0xff]
    %v9451 = vld [vmem:[%s9447 + $0x18] sm:$0xff]
    %v9452 = vlaneseq
    %v9453 = vshrl.u32 %v9452, 7
    %v9454 = vsub.s32 0, %v9453
    %v9455 = vrot.slane %v5266, %v9454
    %v9457 = vsel %vm674, %v9437, 0
    %v9460 = vsel %vm674, %v9438, 0
    %v9463 = vsel %vm674, %v9439, 0
    %v9466 = vsel %vm674, %v9440, 0
    %v9469 = vsel %vm674, %v9441, 0
    %v9472 = vsel %vm674, %v9442, 0
    %v9475 = vsel %vm674, %v9443, 0
    %v9478 = vsel %vm674, %v9444, 0
    %v9481 = vsel %vm674, %v9445, 0
    %v9484 = vsel %vm674, %v9446, 0
    %9486 = vmatprep.subr.mxu0 0.0
    %9487 = vmatpush1.msra.mxu0 %v9448
    %9488 = vmatprep.subr.mxu0 0.0
    %9489 = vmatpush1.msra.mxu0 %v9449
    %9490 = vmatprep.subr.mxu0 0.0
    %9491 = vmatpush1.msra.mxu0 %v9450
    %9492 = vmatprep.subr.mxu0 0.0
    %9493 = vmatpush1.msra.mxu0 %v9451
    %9494 = vmatprep.subr.mxu0 0.0
    %9495 = vmatpush1.msra.mxu0 0.0
    %9496 = vmatprep.subr.mxu0 0.0
    %9497 = vmatpush1.msra.mxu0 0.0
    %9498 = vmatprep.subr.mxu0 0.0
    %9499 = vmatpush1.msra.mxu0 0.0
    %9500 = vmatprep.subr.mxu0 0.0
    %9501 = vmatpush1.msra.mxu0 0.0
    %9502 = vmatprep.subr.mxu0 0.0
    %9503 = vmatpush1.msra.mxu0 0.0
    %9504 = vmatprep.subr.mxu0 0.0
    %9505 = vmatpush1.msra.mxu0 0.0
    %9506 = vmatprep.subr.mxu0 0.0
    %9507 = vmatpush1.msra.mxu0 0.0
    %9508 = vmatprep.subr.mxu0 0.0
    %9509 = vmatpush1.msra.mxu0 0.0
    %9510 = vmatprep.subr.mxu0 0.0
    %9511 = vmatpush1.msra.mxu0 0.0
    %9512 = vmatprep.subr.mxu0 0.0
    %9513 = vmatpush1.msra.mxu0 0.0
    %9514 = vmatprep.subr.mxu0 0.0
    %9515 = vmatpush1.msra.mxu0 0.0
    %9516 = vmatprep.subr.mxu0 0.0
    %9517 = vmatpush1.msra.mxu0 0.0
    %9518 = vmatprep.subr.mxu0 0.0
    %9519 = vmatpush1.msra.mxu0 0.0
    %9520 = vmatprep.subr.mxu0 0.0
    %9521 = vmatpush1.msra.mxu0 0.0
    %9522 = vmatprep.subr.mxu0 0.0
    %9523 = vmatpush1.msra.mxu0 0.0
    %9524 = vmatprep.subr.mxu0 0.0
    %9525 = vmatpush1.msra.mxu0 0.0
    %9526 = vmatprep.subr.mxu0 0.0
    %9527 = vmatpush1.msra.mxu0 0.0
    %9528 = vmatprep.subr.mxu0 0.0
    %9529 = vmatpush1.msra.mxu0 0.0
    %9530 = vmatprep.subr.mxu0 0.0
    %9531 = vmatpush1.msra.mxu0 0.0
    %9532 = vmatprep.subr.mxu0 0.0
    %9533 = vmatpush1.msra.mxu0 0.0
    %9534 = vmatprep.subr.mxu0 0.0
    %9535 = vmatpush1.msra.mxu0 0.0
    %9536 = vmatprep.subr.mxu0 0.0
    %9537 = vmatpush1.msra.mxu0 0.0
    %9538 = vmatprep.subr.mxu0 0.0
    %9539 = vmatpush1.msra.mxu0 0.0
    %9540 = vmatprep.subr.mxu0 0.0
    %9541 = vmatpush1.msra.mxu0 0.0
    %9542 = vmatprep.subr.mxu0 0.0
    %9543 = vmatpush1.msra.mxu0 0.0
    %9544 = vmatprep.subr.mxu0 0.0
    %9545 = vmatpush1.msra.mxu0 0.0
    %9546 = vmatprep.subr.mxu0 0.0
    %9547 = vmatpush1.msra.mxu0 0.0
    %9548 = vmatprep.subr.mxu0 0.0
    %9549 = vmatpush1.msra.mxu0 0.0
    %9550 = vmatprep.mubr.f32.mxu0 0.0
    %9551 = vmatmul.mubr.f32.gmra.mrb[0].mxu0 %v9457
    %v9552 = vpop.f32.mrb[0].mxu0
    %v9553 = vadd.f32 %v9455, %v9552
    %v9554 = vpop.f32.mrb[0].mxu0
    %9555 = vmatprep.mubr.f32.mxu0 0.0
    %9556 = vmatmul.mubr.f32.gmra.mrb[0].mxu0 %v9460
    %v9557 = vpop.f32.mrb[0].mxu0
    %v9558 = vadd.f32 %v9455, %v9557
    %v9559 = vpop.f32.mrb[0].mxu0
    %9560 = vmatprep.mubr.f32.mxu0 0.0
    %9561 = vmatmul.mubr.f32.gmra.mrb[0].mxu0 %v9463
    %v9562 = vpop.f32.mrb[0].mxu0
    %v9563 = vadd.f32 %v9455, %v9562
    %v9564 = vpop.f32.mrb[0].mxu0
    %9565 = vmatprep.mubr.f32.mxu0 0.0
    %9566 = vmatmul.mubr.f32.gmra.mrb[0].mxu0 %v9466
    %v9567 = vpop.f32.mrb[0].mxu0
    %v9568 = vadd.f32 %v9455, %v9567
    %v9569 = vpop.f32.mrb[0].mxu0
    %9570 = vmatprep.mubr.f32.mxu0 0.0
    %9571 = vmatmul.mubr.f32.gmra.mrb[0].mxu0 %v9469
    %v9572 = vpop.f32.mrb[0].mxu0
    %v9573 = vadd.f32 %v9455, %v9572
    %v9574 = vpop.f32.mrb[0].mxu0
    %9575 = vmatprep.mubr.f32.mxu0 0.0
    %9576 = vmatmul.mubr.f32.gmra.mrb[0].mxu0 %v9472
    %v9577 = vpop.f32.mrb[0].mxu0
    %v9578 = vadd.f32 %v9455, %v9577
    %v9579 = vpop.f32.mrb[0].mxu0
    %9580 = vmatprep.mubr.f32.mxu0 0.0
    %9581 = vmatmul.mubr.f32.gmra.mrb[0].mxu0 %v9475
    %v9582 = vpop.f32.mrb[0].mxu0
    %v9583 = vadd.f32 %v9455, %v9582
    %v9584 = vpop.f32.mrb[0].mxu0
    %9585 = vmatprep.mubr.f32.mxu0 0.0
    %9586 = vmatmul.mubr.f32.gmra.mrb[0].mxu0 %v9478
    %v9587 = vpop.f32.mrb[0].mxu0
    %v9588 = vadd.f32 %v9455, %v9587
    %v9589 = vpop.f32.mrb[0].mxu0
    %9590 = vmatprep.mubr.f32.mxu0 0.0
    %9591 = vmatmul.mubr.f32.gmra.mrb[0].mxu0 %v9481
    %v9592 = vpop.f32.mrb[0].mxu0
    %v9593 = vadd.f32 %v9455, %v9592
    %v9594 = vpop.f32.mrb[0].mxu0
    %9595 = vmatprep.mubr.f32.mxu0 0.0
    %9596 = vmatmul.mubr.f32.gmra.mrb[0].mxu0 %v9484
    %v9597 = vpop.f32.mrb[0].mxu0
    %v9598 = vadd.f32 %v9455, %v9597
    %v9599 = vpop.f32.mrb[0].mxu0
    %9600 = vdwg.mxu0
    %v9601 = vmul.f32 %v9553, 0.5
    %v9602 = vmul.f32 %v9558, 0.5
    %v9603 = vmul.f32 %v9563, 0.5
    %v9604 = vmul.f32 %v9568, 0.5
    %v9605 = vmul.f32 %v9573, 0.5
    %v9606 = vmul.f32 %v9578, 0.5
    %v9607 = vmul.f32 %v9583, 0.5
    %v9608 = vmul.f32 %v9588, 0.5
    %v9609 = vmul.f32 %v9593, 0.5
    %v9610 = vmul.f32 %v9598, 0.5
    %v9611 = vmul.f32 %v9553, 0.044715
    %v9612 = vmul.f32 %v9558, 0.044715
    %v9613 = vmul.f32 %v9563, 0.044715
    %v9614 = vmul.f32 %v9568, 0.044715
    %v9615 = vmul.f32 %v9573, 0.044715
    %v9616 = vmul.f32 %v9578, 0.044715
    %v9617 = vmul.f32 %v9583, 0.044715
    %v9618 = vmul.f32 %v9588, 0.044715
    %v9619 = vmul.f32 %v9593, 0.044715
    %v9620 = vmul.f32 %v9598, 0.044715
    %v9621 = vmul.f32 %v9611, %v9553
    %v9622 = vmul.f32 %v9612, %v9558
    %v9623 = vmul.f32 %v9613, %v9563
    %v9624 = vmul.f32 %v9614, %v9568
    %v9625 = vmul.f32 %v9615, %v9573
    %v9626 = vmul.f32 %v9616, %v9578
    %v9627 = vmul.f32 %v9617, %v9583
    %v9628 = vmul.f32 %v9618, %v9588
    %v9629 = vmul.f32 %v9619, %v9593
    %v9630 = vmul.f32 %v9620, %v9598
    %v9631 = vmul.f32 %v9621, %v9553
    %v9632 = vmul.f32 %v9622, %v9558
    %v9633 = vmul.f32 %v9623, %v9563
    %v9634 = vmul.f32 %v9624, %v9568
    %v9635 = vmul.f32 %v9625, %v9573
    %v9636 = vmul.f32 %v9626, %v9578
    %v9637 = vmul.f32 %v9627, %v9583
    %v9638 = vmul.f32 %v9628, %v9588
    %v9639 = vmul.f32 %v9629, %v9593
    %v9640 = vmul.f32 %v9630, %v9598
    %v9641 = vadd.f32 %v9553, %v9631
    %v9642 = vadd.f32 %v9558, %v9632
    %v9643 = vadd.f32 %v9563, %v9633
    %v9644 = vadd.f32 %v9568, %v9634
    %v9645 = vadd.f32 %v9573, %v9635
    %v9646 = vadd.f32 %v9578, %v9636
    %v9647 = vadd.f32 %v9583, %v9637
    %v9648 = vadd.f32 %v9588, %v9638
    %v9649 = vadd.f32 %v9593, %v9639
    %v9650 = vadd.f32 %v9598, %v9640
    %v9651 = vmul.f32 %v9641, 0.7978846
    %v9652 = vmul.f32 %v9642, 0.7978846
    %v9653 = vmul.f32 %v9643, 0.7978846
    %v9654 = vmul.f32 %v9644, 0.7978846
    %v9655 = vmul.f32 %v9645, 0.7978846
    %v9656 = vmul.f32 %v9646, 0.7978846
    %v9657 = vmul.f32 %v9647, 0.7978846
    %v9658 = vmul.f32 %v9648, 0.7978846
    %v9659 = vmul.f32 %v9649, 0.7978846
    %v9660 = vmul.f32 %v9650, 0.7978846
    %v9661 = vtanh.pop %v9651
    %v9662 = vtanh.pop %v9652
    %v9663 = vtanh.pop %v9653
    %v9664 = vtanh.pop %v9654
    %v9665 = vtanh.pop %v9655
    %v9666 = vtanh.pop %v9656
    %v9667 = vtanh.pop %v9657
    %v9668 = vtanh.pop %v9658
    %v9669 = vtanh.pop %v9659
    %v9670 = vtanh.pop %v9660
    %v9671 = vadd.f32 %v9661, 1.0
    %v9672 = vadd.f32 %v9662, 1.0
    %v9673 = vadd.f32 %v9663, 1.0
    %v9674 = vadd.f32 %v9664, 1.0
    %v9675 = vadd.f32 %v9665, 1.0
    %v9676 = vadd.f32 %v9666, 1.0
    %v9677 = vadd.f32 %v9667, 1.0
    %v9678 = vadd.f32 %v9668, 1.0
    %v9679 = vadd.f32 %v9669, 1.0
    %v9680 = vadd.f32 %v9670, 1.0
    %v9681 = vmul.f32 %v9601, %v9671
    %v9682 = vmul.f32 %v9602, %v9672
    %v9683 = vmul.f32 %v9603, %v9673
    %v9684 = vmul.f32 %v9604, %v9674
    %v9685 = vmul.f32 %v9605, %v9675
    %v9686 = vmul.f32 %v9606, %v9676
    %v9687 = vmul.f32 %v9607, %v9677
    %v9688 = vmul.f32 %v9608, %v9678
    %v9689 = vmul.f32 %v9609, %v9679
    %v9690 = vmul.f32 %v9610, %v9680
    %s9691 = scalar_lea.vmem %s12, 64
    %v9692 = vld [vmem:[%s9691] sm:$0xff]
    %v9693 = vld [vmem:[%s9691 + $0x8] sm:$0xff]
    %v9694 = vld [vmem:[%s9691 + $0x10] sm:$0xff]
    %v9695 = vld [vmem:[%s9691 + $0x18] sm:$0xff]
    %v9696 = vld [vmem:[%s9691 + $0x20] sm:$0xff]
    %v9697 = vld [vmem:[%s9691 + $0x28] sm:$0xff]
    %v9698 = vld [vmem:[%s9691 + $0x30] sm:$0xff]
    %v9699 = vld [vmem:[%s9691 + $0x38] sm:$0xff]
    %v9700 = vlaneseq
    %v9701 = vshrl.u32 %v9700, 7
    %v9702 = vsub.s32 1, %v9701
    %v9703 = vrot.slane %v5266, %v9702
    %v9705 = vsel %vm277, %v9681, 0
    %v9708 = vsel %vm277, %v9682, 0
    %v9711 = vsel %vm277, %v9683, 0
    %v9714 = vsel %vm277, %v9684, 0
    %v9717 = vsel %vm277, %v9685, 0
    %v9720 = vsel %vm277, %v9686, 0
    %v9723 = vsel %vm277, %v9687, 0
    %v9726 = vsel %vm277, %v9688, 0
    %v9729 = vsel %vm277, %v9689, 0
    %v9732 = vsel %vm277, %v9690, 0
    %9734 = vmatprep.subr.mxu0 0.0
    %9735 = vmatpush1.msra.mxu0 %v9692
    %9736 = vmatprep.subr.mxu0 0.0
    %9737 = vmatpush1.msra.mxu0 %v9693
    %9738 = vmatprep.subr.mxu0 0.0
    %9739 = vmatpush1.msra.mxu0 %v9694
    %9740 = vmatprep.subr.mxu0 0.0
    %9741 = vmatpush1.msra.mxu0 %v9695
    %9742 = vmatprep.subr.mxu0 0.0
    %9743 = vmatpush1.msra.mxu0 %v9696
    %9744 = vmatprep.subr.mxu0 0.0
    %9745 = vmatpush1.msra.mxu0 %v9697
    %9746 = vmatprep.subr.mxu0 0.0
    %9747 = vmatpush1.msra.mxu0 %v9698
    %9748 = vmatprep.subr.mxu0 0.0
    %9749 = vmatpush1.msra.mxu0 %v9699
    %9750 = vmatprep.subr.mxu0 0.0
    %9751 = vmatpush1.msra.mxu0 0.0
    %9752 = vmatprep.subr.mxu0 0.0
    %9753 = vmatpush1.msra.mxu0 0.0
    %9754 = vmatprep.subr.mxu0 0.0
    %9755 = vmatpush1.msra.mxu0 0.0
    %9756 = vmatprep.subr.mxu0 0.0
    %9757 = vmatpush1.msra.mxu0 0.0
    %9758 = vmatprep.subr.mxu0 0.0
    %9759 = vmatpush1.msra.mxu0 0.0
    %9760 = vmatprep.subr.mxu0 0.0
    %9761 = vmatpush1.msra.mxu0 0.0
    %9762 = vmatprep.subr.mxu0 0.0
    %9763 = vmatpush1.msra.mxu0 0.0
    %9764 = vmatprep.subr.mxu0 0.0
    %9765 = vmatpush1.msra.mxu0 0.0
    %9766 = vmatprep.subr.mxu0 0.0
    %9767 = vmatpush1.msra.mxu0 0.0
    %9768 = vmatprep.subr.mxu0 0.0
    %9769 = vmatpush1.msra.mxu0 0.0
    %9770 = vmatprep.subr.mxu0 0.0
    %9771 = vmatpush1.msra.mxu0 0.0
    %9772 = vmatprep.subr.mxu0 0.0
    %9773 = vmatpush1.msra.mxu0 0.0
    %9774 = vmatprep.subr.mxu0 0.0
    %9775 = vmatpush1.msra.mxu0 0.0
    %9776 = vmatprep.subr.mxu0 0.0
    %9777 = vmatpush1.msra.mxu0 0.0
    %9778 = vmatprep.subr.mxu0 0.0
    %9779 = vmatpush1.msra.mxu0 0.0
    %9780 = vmatprep.subr.mxu0 0.0
    %9781 = vmatpush1.msra.mxu0 0.0
    %9782 = vmatprep.subr.mxu0 0.0
    %9783 = vmatpush1.msra.mxu0 0.0
    %9784 = vmatprep.subr.mxu0 0.0
    %9785 = vmatpush1.msra.mxu0 0.0
    %9786 = vmatprep.subr.mxu0 0.0
    %9787 = vmatpush1.msra.mxu0 0.0
    %9788 = vmatprep.subr.mxu0 0.0
    %9789 = vmatpush1.msra.mxu0 0.0
    %9790 = vmatprep.subr.mxu0 0.0
    %9791 = vmatpush1.msra.mxu0 0.0
    %9792 = vmatprep.subr.mxu0 0.0
    %9793 = vmatpush1.msra.mxu0 0.0
    %9794 = vmatprep.subr.mxu0 0.0
    %9795 = vmatpush1.msra.mxu0 0.0
    %9796 = vmatprep.subr.mxu0 0.0
    %9797 = vmatpush1.msra.mxu0 0.0
    %9798 = vmatprep.mubr.f32.mxu0 0.0
    %9799 = vmatmul.mubr.f32.gmra.mrb[0].mxu0 %v9705
    %v9800 = vpop.f32.mrb[0].mxu0
    %v9801 = vpop.f32.mrb[0].mxu0
    %9802 = vmatprep.mubr.f32.mxu0 0.0
    %9803 = vmatmul.mubr.f32.gmra.mrb[0].mxu0 %v9708
    %v9804 = vpop.f32.mrb[0].mxu0
    %v9805 = vpop.f32.mrb[0].mxu0
    %9806 = vmatprep.mubr.f32.mxu0 0.0
    %9807 = vmatmul.mubr.f32.gmra.mrb[0].mxu0 %v9711
    %v9808 = vpop.f32.mrb[0].mxu0
    %v9809 = vpop.f32.mrb[0].mxu0
    %9810 = vmatprep.mubr.f32.mxu0 0.0
    %9811 = vmatmul.mubr.f32.gmra.mrb[0].mxu0 %v9714
    %v9812 = vpop.f32.mrb[0].mxu0
    %v9813 = vpop.f32.mrb[0].mxu0
    %9814 = vmatprep.mubr.f32.mxu0 0.0
    %9815 = vmatmul.mubr.f32.gmra.mrb[0].mxu0 %v9717
    %v9816 = vpop.f32.mrb[0].mxu0
    %v9817 = vadd.f32 %v9703, %v9816
    %v9818 = vpop.f32.mrb[0].mxu0
    %9819 = vmatprep.mubr.f32.mxu0 0.0
    %9820 = vmatmul.mubr.f32.gmra.mrb[0].mxu0 %v9720
    %v9821 = vpop.f32.mrb[0].mxu0
    %v9822 = vpop.f32.mrb[0].mxu0
    %9823 = vmatprep.mubr.f32.mxu0 0.0
    %9824 = vmatmul.mubr.f32.gmra.mrb[0].mxu0 %v9723
    %v9825 = vpop.f32.mrb[0].mxu0
    %v9826 = vpop.f32.mrb[0].mxu0
    %9827 = vmatprep.mubr.f32.mxu0 0.0
    %9828 = vmatmul.mubr.f32.gmra.mrb[0].mxu0 %v9726
    %v9829 = vpop.f32.mrb[0].mxu0
    %v9830 = vpop.f32.mrb[0].mxu0
    %9831 = vmatprep.mubr.f32.mxu0 0.0
    %9832 = vmatmul.mubr.f32.gmra.mrb[0].mxu0 %v9729
    %v9833 = vpop.f32.mrb[0].mxu0
    %v9834 = vpop.f32.mrb[0].mxu0
    %9835 = vmatprep.mubr.f32.mxu0 0.0
    %9836 = vmatmul.mubr.f32.gmra.mrb[0].mxu0 %v9732
    %v9837 = vpop.f32.mrb[0].mxu0
    %v9838 = vadd.f32 %v9703, %v9837
    %v9839 = vpop.f32.mrb[0].mxu0
    %9840 = vdwg.mxu0
    %v9841 = vadd.f32 %v9283, %v9817
    %v9842 = vadd.f32 %v9288, %v9838
    %v9843 = vld [vmem:[%s14] sm:$0x3]
    %v9845 = vrot.slane %v9842, 7
    %vm9847 = vcmask 1040384
    %v9848 = vsel %vm9847, %v9841, %v9845
    %vm9849 = vcmask 254976
    %v9850 = vsel %vm9849, %v9848, 0.0
    %9851 = vadd.xlane.f32.xlu0 %v9850
    %v9852 = vpop.xlane.xlu0 %9851
    %v9853 = vmul.f32 %v9852, %v705
    %v9854 = vsub.f32 %v9848, %v9853
    %v9855 = vmul.f32 %v9854, %v9854
    %v9856 = vsel %vm9849, %v9855, 0.0
    %9857 = vadd.xlane.f32.xlu0 %v9856
    %v9858 = vpop.xlane.xlu0 %9857
    %v9859 = vmul.f32 %v9858, %v705
    %v9860 = vadd.f32 %v9859, 1e-05
    %v9861 = vrsqrt.pop %v9860
    %v9862 = vmul.f32 %v9854, %v9861
    %v9863 = vlaneseq
    %v9864 = vshrl.u32 %v9863, 7
    %v9865 = vsub.s32 0, %v9864
    %v9866 = vrot.slane %v9843, %v9865
    %v9867 = vmul.f32 %v9862, %v9866
    %v9868 = vlaneseq
    %v9869 = vshrl.u32 %v9868, 7
    %v9870 = vsub.s32 1, %v9869
    %v9871 = vrot.slane %v9843, %v9870
    %v9872 = vadd.f32 %v9867, %v9871
    %9873 = vst.msk [vmem:[#allocation2] sm:$0x3] %vm9849, %v9872
    // Predicated region
    $region62: #{forward.1} parent=1 // pred_check
      _
    $region63: #{forward.1} parent=1 // pred_check_branch
      %9875 = sbr.rel (0) target = $region65
    $region64: #{forward.1} parent=1 // pred_region
      %s9877 = ssub.s32 32, 32
      %9878 = vsyncadd [#allocation3], %s9877
      %s9880 = sshll.u32 [#allocation2], 4
      %s9881 = int_to_ptr.vmem [resolvable:$true] %s9880
      %9883 = dma.vmem_to_hbm [thread:$0]  %s9881, 32, %s15, [#allocation3]
    $region65: #{forward.1} parent=1 // pred_fallthru
      _
    // Predicated region
    $region66: #{forward.1} parent=1 // pred_check
      _
    $region67: #{forward.1} parent=1 // pred_check_branch
      %9885 = sbr.rel (0) target = $region69
    $region68: #{forward.1} parent=1 // pred_region
      %9886 = dma.done [#allocation3], 32
    $region69: #{forward.1} parent=1 // pred_fallthru
      _
    %9887 = vsyncpa [#allocation3], 1

</llo_original>
